<compile_context>
chip_gen: v6e
topology: v6e:2x2x1
jax: 0.10.0
libtpu: 0.0.40
codegen_flags: <defaults>
</compile_context>

<pallas_src>
import functools

import jax
import jax.numpy as jnp
from jax.experimental import pallas as pl
from jax.experimental.pallas import tpu as pltpu


# ----------------------------------------------------------------------------
# Small helpers
# ----------------------------------------------------------------------------

def _round_up(x, m):
    return ((x + m - 1) // m) * m


def _pad128(c):
    return _round_up(c, 128)


@functools.lru_cache(maxsize=None)
def _vmem_limit_bytes():
    """Generation-aware scoped-VMEM limit (v7x only has 64 MiB physical)."""
    try:
        phys = int(pltpu.get_tpu_info().vmem_capacity_bytes)
    except Exception:
        phys = 0
    if phys <= 0:
        phys = 64 * 1024 * 1024          # conservative default (v7x-sized)
    return max(32 * 1024 * 1024, min(100 * 1024 * 1024, (phys * 3) // 4))


# ----------------------------------------------------------------------------
# Pallas kernels
# ----------------------------------------------------------------------------

def _sa_mlp_kernel(x_ref, w1_ref, b1_ref, w2_ref, b2_ref, w3_ref, b3_ref, o_ref,
                   *, ns):
    # x_ref: [tg*ns, cin] bf16; w*: [c_prev, c_next] bf16; b*: [1, c_next] f32
    rows, cin = x_ref.shape
    x = x_ref[...]

    if cin <= 8:
        # SA1 (cin == 3): a K=3 matmul wastes a full MXU pass (K pads to 128),
        # so run the first layer as broadcast FMAs on the VPU instead.
        x32 = x.astype(jnp.float32)
        w1 = w1_ref[...].astype(jnp.float32)
        h = b1_ref[...]
        for k in range(cin):
            h = h + x32[:, k:k + 1] * w1[k:k + 1, :]
        h = jnp.maximum(h, 0.0)
    else:
        h = jnp.maximum(
            jnp.dot(x, w1_ref[...], preferred_element_type=jnp.float32)
            + b1_ref[...], 0.0)

    h = jnp.maximum(
        jnp.dot(h.astype(jnp.bfloat16), w2_ref[...],
                preferred_element_type=jnp.float32) + b2_ref[...], 0.0)
    h = jnp.maximum(
        jnp.dot(h.astype(jnp.bfloat16), w3_ref[...],
                preferred_element_type=jnp.float32) + b3_ref[...], 0.0)

    c_out = h.shape[-1]
    # ns is a multiple of 8 and c_out a multiple of 128 (asserted in the wrapper),
    # so this reshape is a free re-view; max-pool over the nsample axis.
    o_ref[...] = jnp.max(h.reshape(rows // ns, ns, c_out), axis=1).astype(o_ref.dtype)


def sa_mlp_pallas(feats, layers):
    """feats: [G, ns, cin]. layers: 3x (w [c_prev, c_next] bf16, b [1, c_next] f32).

    Returns max-pooled per-group features [G, c_out] bf16.
    """
    G, ns, cin = feats.shape
    (w1, b1), (w2, b2), (w3, b3) = layers
    c1, c2, c3 = w1.shape[1], w2.shape[1], w3.shape[1]
    assert ns % 8 == 0, "nsample must be a multiple of 8 for the free in-kernel reshape"
    assert c3 % 128 == 0, "output channels must be a multiple of 128"

    # Lane-dense input: pad the channel dim to a 128 multiple; zero rows in w1
    # keep the math identical.  (SA1's cin=3 stays unpadded -> VPU path.)
    feats = feats.astype(jnp.bfloat16)
    cin_p = _pad128(cin) if cin > 8 else cin
    if cin_p != cin:
        feats = jnp.pad(feats, ((0, 0), (0, 0), (0, cin_p - cin)))
        w1 = jnp.pad(w1, ((0, cin_p - cin), (0, 0)))

    vmem_limit = _vmem_limit_bytes()
    # weights + biases (the pipeline double-buffers them even though their
    # index_map is constant)
    fixed = 2 * sum(_round_up(w.shape[0], 16) * _pad128(w.shape[1]) * 2
                    + 8 * _pad128(b.shape[1]) * 4
                    for w, b in ((w1, b1), (w2, b2), (w3, b3)))
    c1p, c2p, c3p = _pad128(c1), _pad128(c2), _pad128(c3)
    per_group = (ns * (2 * _pad128(cin_p) * 2        # input tile, bf16, x2 buffers
                       + 4 * (c1p + c2p + c3p)       # f32 intermediates (upper bound)
                       + 2 * (c1p + c2p))            # bf16 re-cast copies
                 + 2 * 2 * c3p)                      # pooled output tile, bf16, x2
    budget = (vmem_limit * 3) // 4 - fixed
    tg_fit = max(8, budget // max(per_group, 1))

    if G <= 16:
        # Tiny G: single full-array block (block dims equal to the full array dims
        # are always legal) -> no pad-to-8 garbage compute.
        tg, Gp = G, G
    else:
        tg = max(8, (min(512, tg_fit, G) // 8) * 8)
        # Keep >= 4 balanced grid steps: DMA/compute overlap + megacore balance
        # on v7x; tg re-derived to minimize Gp - G padding.
        n_steps = max(-(-G // tg), min(4, -(-G // 8)))
        tg = _round_up(-(-G // n_steps), 8)
        Gp = _round_up(G, tg)

    if Gp != G:
        feats = jnp.pad(feats, ((0, Gp - G), (0, 0), (0, 0)))
    x2d = feats.reshape(Gp * ns, cin_p)

    def rep(a):  # replicated (full) block for weights / biases
        nd = a.ndim
        return pl.BlockSpec(a.shape, lambda g, _nd=nd: (0,) * _nd)

    out = pl.pallas_call(
        functools.partial(_sa_mlp_kernel, ns=ns),
        out_shape=jax.ShapeDtypeStruct((Gp, c3), jnp.bfloat16),
        grid=(Gp // tg,),
        in_specs=[pl.BlockSpec((tg * ns, cin_p), lambda g: (g, 0)),
                  rep(w1), rep(b1), rep(w2), rep(b2), rep(w3), rep(b3)],
        out_specs=pl.BlockSpec((tg, c3), lambda g: (g, 0)),
        compiler_params=pltpu.CompilerParams(
            dimension_semantics=("parallel",),
            vmem_limit_bytes=vmem_limit),
    )(x2d, w1, b1, w2, b2, w3, b3)
    return out[:G]


def _sa3_head_kernel(x_ref, w1_ref, b1_ref, w2_ref, b2_ref, w3_ref, b3_ref,
                     f1w_ref, f1b_ref, f2w_ref, f2b_ref, f3w_ref, f3b_ref,
                     o_ref, *, ns, n_cls):
    # x_ref: [B*ns, cin] bf16.  SA3 MLP -> max-pool over all ns points -> FC head.
    rows = x_ref.shape[0]
    h = jnp.maximum(
        jnp.dot(x_ref[...], w1_ref[...], preferred_element_type=jnp.float32)
        + b1_ref[...], 0.0)
    h = jnp.maximum(
        jnp.dot(h.astype(jnp.bfloat16), w2_ref[...],
                preferred_element_type=jnp.float32) + b2_ref[...], 0.0)
    h = jnp.maximum(
        jnp.dot(h.astype(jnp.bfloat16), w3_ref[...],
                preferred_element_type=jnp.float32) + b3_ref[...], 0.0)
    c_out = h.shape[-1]
    pooled = jnp.max(h.reshape(rows // ns, ns, c_out), axis=1)      # [B, 1024] f32

    # FC head (Dropout is identity in eval mode, BN folded into weights).
    t = jnp.maximum(
        jnp.dot(pooled.astype(jnp.bfloat16), f1w_ref[...],
                preferred_element_type=jnp.float32) + f1b_ref[...], 0.0)
    t = jnp.maximum(
        jnp.dot(t.astype(jnp.bfloat16), f2w_ref[...],
                preferred_element_type=jnp.float32) + f2b_ref[...], 0.0)
    logits = (jnp.dot(t.astype(jnp.bfloat16), f3w_ref[...],
                      preferred_element_type=jnp.float32) + f3b_ref[...])
    # class dim is padded to 128 lanes; mask the pad columns out of the softmax
    # (mask constant and logits stay f32 so -1e30 does not overflow).
    col = jax.lax.broadcasted_iota(jnp.int32, logits.shape, 1)
    logits = jnp.where(col < n_cls, logits, jnp.float32(-1e30))
    m = jnp.max(logits, axis=-1, keepdims=True)
    lse = jnp.log(jnp.sum(jnp.exp(logits - m), axis=-1, keepdims=True)) + m
    o_ref[...] = logits - lse                 # log_softmax (valid lanes)


def sa3_head_pallas(feats, sa_layers, head_layers):
    """feats: [B, ns, cin] (group_all grouping).  Fused SA3 MLP + pool + FC head."""
    B, ns, cin = feats.shape
    assert ns % 8 == 0
    (w1, b1), (w2, b2), (w3, b3) = sa_layers
    (h1w, h1b), (h2w, h2b), (h3w, h3b) = head_layers
    assert w3.shape[1] % 128 == 0
    n_cls = h3w.shape[1]
    c_pad = _pad128(n_cls)
    if c_pad != n_cls:                        # pad class dim to a full lane width
        h3w = jnp.pad(h3w, ((0, 0), (0, c_pad - n_cls)))
        h3b = jnp.pad(h3b, ((0, 0), (0, c_pad - n_cls)))

    feats = feats.astype(jnp.bfloat16)
    cin_p = _pad128(cin) if cin > 8 else cin
    if cin_p != cin:
        feats = jnp.pad(feats, ((0, 0), (0, 0), (0, cin_p - cin)))
        w1 = jnp.pad(w1, ((0, cin_p - cin), (0, 0)))
    x2d = feats.reshape(B * ns, cin_p)

    out = pl.pallas_call(
        functools.partial(_sa3_head_kernel, ns=ns, n_cls=n_cls),
        out_shape=jax.ShapeDtypeStruct((B, c_pad), jnp.float32),
        compiler_params=pltpu.CompilerParams(
            vmem_limit_bytes=_vmem_limit_bytes()),
    )(x2d, w1, b1, w2, b2, w3, b3, h1w, h1b, h2w, h2b, h3w, h3b)
    return out[:, :n_cls]


# ----------------------------------------------------------------------------
# Plain-JAX glue: FPS, ball query, grouping (data-dependent top-k / gather)
# ----------------------------------------------------------------------------

def square_distance(src, dst):
    # src [B, S, 3], dst [B, N, 3] -> [B, S, N]
    d = -2.0 * jnp.einsum("bsc,bnc->bsn", src, dst)
    d = d + jnp.sum(src ** 2, -1)[:, :, None]
    d = d + jnp.sum(dst ** 2, -1)[:, None, :]
    return d


def index_points(points, idx):
    # points [B, N, C], idx [B, ...] -> [B, ..., C]
    B = points.shape[0]
    batch = jnp.arange(B).reshape((B,) + (1,) * (idx.ndim - 1))
    return points[batch, idx]


def farthest_point_sample(xyz, npoint):
    # xyz: [B, N, 3] -> [B, npoint] int32.
    # TODO(synk): PyTorch uses a random start index; we start at 0 (deterministic).
    B, N, _ = xyz.shape

    def body(i, state):
        centroids, distance, farthest = state
        centroids = centroids.at[:, i].set(farthest)
        centroid = xyz[jnp.arange(B), farthest]            # [B, 3]
        dist = jnp.sum((xyz - centroid[:, None, :]) ** 2, -1)
        distance = jnp.minimum(distance, dist)
        farthest = jnp.argmax(distance, axis=-1).astype(jnp.int32)
        return centroids, distance, farthest

    centroids = jnp.zeros((B, npoint), jnp.int32)
    distance = jnp.full((B, N), 1e10, jnp.float32)
    farthest = jnp.zeros((B,), jnp.int32)
    centroids, _, _ = jax.lax.fori_loop(0, npoint, body, (centroids, distance, farthest))
    return centroids


def query_ball_point(radius, nsample, xyz, new_xyz):
    B, N, _ = xyz.shape
    S = new_xyz.shape[1]
    sqrdists = square_distance(new_xyz, xyz)                       # [B, S, N]
    group_idx = jnp.broadcast_to(jnp.arange(N, dtype=jnp.int32), (B, S, N))
    group_idx = jnp.where(sqrdists > radius ** 2, jnp.int32(N), group_idx)
    # PyTorch sorts the (index-or-N) array and keeps the first nsample entries,
    # i.e. the nsample smallest indices; lax.top_k avoids the full O(N log N) sort.
    neg_small, _ = jax.lax.top_k(-group_idx, nsample)              # descending(-idx)
    group_idx = -neg_small                                         # ascending idx
    group_first = jnp.broadcast_to(group_idx[:, :, :1], (B, S, nsample))
    group_idx = jnp.where(group_idx == N, group_first, group_idx)
    return group_idx


def sample_and_group(npoint, radius, nsample, xyz, points):
    # xyz [B, N, 3] f32, points [B, N, D] bf16 or None
    fps_idx = farthest_point_sample(xyz, npoint)
    new_xyz = index_points(xyz, fps_idx)                           # [B, S, 3] f32
    idx = query_ball_point(radius, nsample, xyz, new_xyz)          # [B, S, ns]
    grouped_xyz = index_points(xyz, idx)                           # [B, S, ns, 3]
    grouped_xyz_norm = (grouped_xyz - new_xyz[:, :, None, :]).astype(jnp.bfloat16)
    if points is not None:
        grouped_points = index_points(points, idx).astype(jnp.bfloat16)
        new_points = jnp.concatenate([grouped_xyz_norm, grouped_points], axis=-1)
    else:
        new_points = grouped_xyz_norm
    return new_xyz, new_points


def sa_level(xyz, points, layers, npoint, radius, nsample):
    # xyz: [B, N, 3] f32 channels-last; points: [B, N, D] bf16 or None
    new_xyz, new_points = sample_and_group(npoint, radius, nsample, xyz, points)
    B, S, ns, cin = new_points.shape
    feats = sa_mlp_pallas(new_points.reshape(B * S, ns, cin), layers)  # [B*S, C_out] bf16
    return new_xyz, feats.reshape(B, S, -1)


def sa3_and_head(xyz, points, sa_layers, head_layers):
    # group_all grouping: new_xyz = 0, grouped features = concat([xyz, points], -1)
    B, N, _ = xyz.shape
    feats = jnp.concatenate(
        [xyz.astype(jnp.bfloat16), points.astype(jnp.bfloat16)], axis=-1)  # [B, N, 3+D]
    return sa3_head_pallas(feats, sa_layers, head_layers)


# ----------------------------------------------------------------------------
# Parameters (deterministic synthetic init; BN folded into matmul weights, bf16)
# ----------------------------------------------------------------------------

def _fold_bn(w, b, gamma, beta, mean, var, eps=1e-5):
    # w: [C_out, C_in] (PyTorch layout), b: [C_out]
    # -> (folded weight [C_in, C_out] bf16, bias [1, C_out] f32)
    scale = gamma / jnp.sqrt(var + eps)
    w_f = (w * scale[:, None]).T.astype(jnp.bfloat16)
    b_f = ((b - mean) * scale + beta)[None, :].astype(jnp.float32)
    return w_f, b_f


def _init_weight(key, c_out, c_in, scale=0.1):
    kw, kb = jax.random.split(key)
    w = scale * jax.random.normal(kw, (c_out, c_in), jnp.float32)
    b = scale * jax.random.normal(kb, (c_out,), jnp.float32)
    return w, b


def _init_bn(key, c):
    kg, kb = jax.random.split(key)
    gamma = 1.0 + 0.1 * jax.random.normal(kg, (c,), jnp.float32)
    beta = 0.1 * jax.random.normal(kb, (c,), jnp.float32)
    mean = jnp.zeros((c,), jnp.float32)   # running stats of a fresh BN layer
    var = jnp.ones((c,), jnp.float32)
    return gamma, beta, mean, var


def init_params(key):
    # channel widths exactly as in the PyTorch module
    sa_channels = [(3, [64, 64, 128]),
                   (128 + 3, [128, 128, 256]),
                   (256 + 3, [256, 512, 1024])]
    params = {"sa": []}
    for cin, mlp in sa_channels:
        layers, last = [], cin
        for cout in mlp:
            key, k1, k2 = jax.random.split(key, 3)
            w, b = _init_weight(k1, cout, last)
            layers.append(_fold_bn(w, b, *_init_bn(k2, cout)))
            last = cout
        params["sa"].append(tuple(layers))
    key, k1, k2, k3, k4, k5 = jax.random.split(key, 6)
    head = []
    w, b = _init_weight(k1, 512, 1024)
    head.append(_fold_bn(w, b, *_init_bn(k2, 512)))
    w, b = _init_weight(k3, 256, 512)
    head.append(_fold_bn(w, b, *_init_bn(k4, 256)))
    w, b = _init_weight(k5, 40, 256)
    head.append((w.T.astype(jnp.bfloat16), b[None, :].astype(jnp.float32)))  # fc3: no BN
    params["head"] = tuple(head)
    return params


# ----------------------------------------------------------------------------
# Full forward
# ----------------------------------------------------------------------------

@functools.partial(jax.jit, static_argnames=("cfg",))
def pointnet2_forward(xyz, params, cfg):
    # xyz: [B, 3, N] channel-first (PyTorch convention)
    (np1, r1, ns1), (np2, r2, ns2) = cfg
    pts = jnp.transpose(xyz, (0, 2, 1))                            # [B, N, 3]
    l1_xyz, l1_pts = sa_level(pts, None, params["sa"][0], np1, r1, ns1)
    l2_xyz, l2_pts = sa_level(l1_xyz, l1_pts, params["sa"][1], np2, r2, ns2)
    # TODO(synk): training-mode Dropout (random mask) and batch-statistic BatchNorm
    # are not reproduced; forward is implemented in eval/inference semantics.
    return sa3_and_head(l2_xyz, l2_pts, params["sa"][2], params["head"])


if __name__ == "__main__":
    key = jax.random.PRNGKey(0)
    kx, kp = jax.random.split(key)
    B, N = 2, 128
    # Scaled-down point counts for a small example (module defaults: N=1024,
    # npoint=512/128, nsample=32/64).  Radii and all channel widths (64/64/128,
    # 128/128/256, 256/512/1024, 1024->512->256->40) match the module exactly.
    cfg = ((32, 0.2, 16), (16, 0.4, 16))
    xyz = jax.random.uniform(kx, (B, 3, N), dtype=jnp.float32)
    params = init_params(kp)

    out = pointnet2_forward(xyz, params, cfg)
    out = jax.block_until_ready(out)

    assert out.shape == (B, 40), out.shape
    assert bool(jnp.all(jnp.isfinite(out)))
    # log-softmax rows must exponentiate to ~1
    assert bool(jnp.allclose(jnp.sum(jnp.exp(out), axis=-1), 1.0, atol=1e-4))
    print("KERNEL_OK")
</pallas_src>

<mosaic_0001>
module attributes {stable_mosaic.version = 11 : i64} {
  func.func @_sa_mlp_kernel(%arg0: i32, %arg1: memref<256x3xbf16, #tpu.memory_space<vmem>>, %arg2: memref<3x64xbf16, #tpu.memory_space<vmem>>, %arg3: memref<1x64xf32, #tpu.memory_space<vmem>>, %arg4: memref<64x64xbf16, #tpu.memory_space<vmem>>, %arg5: memref<1x64xf32, #tpu.memory_space<vmem>>, %arg6: memref<64x128xbf16, #tpu.memory_space<vmem>>, %arg7: memref<1x128xf32, #tpu.memory_space<vmem>>, %arg8: memref<16x128xbf16, #tpu.memory_space<vmem>>) attributes {dimension_semantics = [#tpu.dimension_semantics<parallel>], iteration_bounds = array<i64: 4>, scalar_prefetch = 0 : i64, scratch_operands = 0 : i64, tpu.core_type = #tpu.core_type<tc>, window_params = [{transform_indices = @transform_0, window_bounds = array<i64: 256, 3>}, {pipeline_mode = #tpu.pipeline_mode<synchronous>, transform_indices = @transform_1, window_bounds = array<i64: 3, 64>}, {pipeline_mode = #tpu.pipeline_mode<synchronous>, transform_indices = @transform_2, window_bounds = array<i64: 1, 64>}, {pipeline_mode = #tpu.pipeline_mode<synchronous>, transform_indices = @transform_3, window_bounds = array<i64: 64, 64>}, {pipeline_mode = #tpu.pipeline_mode<synchronous>, transform_indices = @transform_4, window_bounds = array<i64: 1, 64>}, {pipeline_mode = #tpu.pipeline_mode<synchronous>, transform_indices = @transform_5, window_bounds = array<i64: 64, 128>}, {pipeline_mode = #tpu.pipeline_mode<synchronous>, transform_indices = @transform_6, window_bounds = array<i64: 1, 128>}, {transform_indices = @transform_7, window_bounds = array<i64: 16, 128>}]} {
    %c0 = arith.constant 0 : index
    %c0_0 = arith.constant 0 : index
    %0 = vector.load %arg1[%c0, %c0_0] : memref<256x3xbf16, #tpu.memory_space<vmem>>, vector<256x3xbf16>
    %1 = arith.extf %0 : vector<256x3xbf16> to vector<256x3xf32>
    %c0_1 = arith.constant 0 : index
    %c0_2 = arith.constant 0 : index
    %2 = vector.load %arg2[%c0_1, %c0_2] : memref<3x64xbf16, #tpu.memory_space<vmem>>, vector<3x64xbf16>
    %3 = arith.extf %2 : vector<3x64xbf16> to vector<3x64xf32>
    %c0_3 = arith.constant 0 : index
    %c0_4 = arith.constant 0 : index
    %4 = vector.load %arg3[%c0_3, %c0_4] : memref<1x64xf32, #tpu.memory_space<vmem>>, vector<1x64xf32>
    %5 = vector.extract_strided_slice %1 {offsets = [0, 0], sizes = [256, 1], strides = [1, 1]} : vector<256x3xf32> to vector<256x1xf32>
    %6 = vector.extract_strided_slice %3 {offsets = [0, 0], sizes = [1, 64], strides = [1, 1]} : vector<3x64xf32> to vector<1x64xf32>
    %7 = vector.broadcast %5 : vector<256x1xf32> to vector<256x64xf32>
    %8 = vector.broadcast %6 : vector<1x64xf32> to vector<256x64xf32>
    %9 = arith.mulf %7, %8 : vector<256x64xf32>
    %10 = vector.broadcast %4 : vector<1x64xf32> to vector<256x64xf32>
    %11 = arith.addf %10, %9 : vector<256x64xf32>
    %12 = vector.extract_strided_slice %1 {offsets = [0, 1], sizes = [256, 1], strides = [1, 1]} : vector<256x3xf32> to vector<256x1xf32>
    %13 = vector.extract_strided_slice %3 {offsets = [1, 0], sizes = [1, 64], strides = [1, 1]} : vector<3x64xf32> to vector<1x64xf32>
    %14 = vector.broadcast %12 : vector<256x1xf32> to vector<256x64xf32>
    %15 = vector.broadcast %13 : vector<1x64xf32> to vector<256x64xf32>
    %16 = arith.mulf %14, %15 : vector<256x64xf32>
    %17 = arith.addf %11, %16 : vector<256x64xf32>
    %18 = vector.extract_strided_slice %1 {offsets = [0, 2], sizes = [256, 1], strides = [1, 1]} : vector<256x3xf32> to vector<256x1xf32>
    %19 = vector.extract_strided_slice %3 {offsets = [2, 0], sizes = [1, 64], strides = [1, 1]} : vector<3x64xf32> to vector<1x64xf32>
    %20 = vector.broadcast %18 : vector<256x1xf32> to vector<256x64xf32>
    %21 = vector.broadcast %19 : vector<1x64xf32> to vector<256x64xf32>
    %22 = arith.mulf %20, %21 : vector<256x64xf32>
    %23 = arith.addf %17, %22 : vector<256x64xf32>
    %cst = arith.constant 0.000000e+00 : f32
    %24 = vector.broadcast %cst : f32 to vector<256x64xf32>
    %25 = arith.maximumf %23, %24 : vector<256x64xf32>
    %26 = arith.truncf %25 : vector<256x64xf32> to vector<256x64xbf16>
    %c0_5 = arith.constant 0 : index
    %c0_6 = arith.constant 0 : index
    %27 = vector.load %arg4[%c0_5, %c0_6] : memref<64x64xbf16, #tpu.memory_space<vmem>>, vector<64x64xbf16>
    %cst_7 = arith.constant dense<0.000000e+00> : vector<256x64xf32>
    %28 = tpu.matmul %26, %27, %cst_7 {dimension_numbers = #tpu.dot_dimension_numbers<[1], [0], [0], [1], [0, 0, 1, 1], [], []>} : vector<256x64xbf16>, vector<64x64xbf16>, vector<256x64xf32> -> vector<256x64xf32>
    %c0_8 = arith.constant 0 : index
    %c0_9 = arith.constant 0 : index
    %29 = vector.load %arg5[%c0_8, %c0_9] : memref<1x64xf32, #tpu.memory_space<vmem>>, vector<1x64xf32>
    %30 = vector.broadcast %29 : vector<1x64xf32> to vector<256x64xf32>
    %31 = arith.addf %28, %30 : vector<256x64xf32>
    %cst_10 = arith.constant 0.000000e+00 : f32
    %32 = vector.broadcast %cst_10 : f32 to vector<256x64xf32>
    %33 = arith.maximumf %31, %32 : vector<256x64xf32>
    %34 = arith.truncf %33 : vector<256x64xf32> to vector<256x64xbf16>
    %c0_11 = arith.constant 0 : index
    %c0_12 = arith.constant 0 : index
    %35 = vector.load %arg6[%c0_11, %c0_12] : memref<64x128xbf16, #tpu.memory_space<vmem>>, vector<64x128xbf16>
    %cst_13 = arith.constant dense<0.000000e+00> : vector<256x128xf32>
    %36 = tpu.matmul %34, %35, %cst_13 {dimension_numbers = #tpu.dot_dimension_numbers<[1], [0], [0], [1], [0, 0, 1, 1], [], []>} : vector<256x64xbf16>, vector<64x128xbf16>, vector<256x128xf32> -> vector<256x128xf32>
    %c0_14 = arith.constant 0 : index
    %c0_15 = arith.constant 0 : index
    %37 = vector.load %arg7[%c0_14, %c0_15] : memref<1x128xf32, #tpu.memory_space<vmem>>, vector<1x128xf32>
    %38 = vector.broadcast %37 : vector<1x128xf32> to vector<256x128xf32>
    %39 = arith.addf %36, %38 : vector<256x128xf32>
    %cst_16 = arith.constant 0.000000e+00 : f32
    %40 = vector.broadcast %cst_16 : f32 to vector<256x128xf32>
    %41 = arith.maximumf %39, %40 : vector<256x128xf32>
    %42 = vector.shape_cast %41 : vector<256x128xf32> to vector<16x16x128xf32>
    %cst_17 = arith.constant dense<0xFF800000> : vector<16x128xf32>
    %43 = vector.multi_reduction <maximumf>, %42, %cst_17 [1] : vector<16x16x128xf32> to vector<16x128xf32>
    %44 = arith.truncf %43 : vector<16x128xf32> to vector<16x128xbf16>
    %c0_18 = arith.constant 0 : index
    %c0_19 = arith.constant 0 : index
    %45 = vector.load %arg8[%c0_18, %c0_19] : memref<16x128xbf16, #tpu.memory_space<vmem>>, vector<16x128xbf16>
    tpu.vector_store %arg8[%c0_18, %c0_19], %44 {strides = array<i32>} : memref<16x128xbf16, #tpu.memory_space<vmem>>, vector<16x128xbf16>,
    return
  }
  func.func @transform_0(%arg0: i32) -> (i32, i32) {
    %c0_i32 = arith.constant 0 : i32
    %c0_i32_0 = arith.constant 0 : i32
    return %arg0, %c0_i32 : i32, i32
  }
  func.func @transform_1(%arg0: i32) -> (i32, i32) {
    %c0_i32 = arith.constant 0 : i32
    %c0_i32_0 = arith.constant 0 : i32
    %c0_i32_1 = arith.constant 0 : i32
    return %c0_i32, %c0_i32_0 : i32, i32
  }
  func.func @transform_2(%arg0: i32) -> (i32, i32) {
    %c0_i32 = arith.constant 0 : i32
    %c0_i32_0 = arith.constant 0 : i32
    %c0_i32_1 = arith.constant 0 : i32
    return %c0_i32, %c0_i32_0 : i32, i32
  }
  func.func @transform_3(%arg0: i32) -> (i32, i32) {
    %c0_i32 = arith.constant 0 : i32
    %c0_i32_0 = arith.constant 0 : i32
    %c0_i32_1 = arith.constant 0 : i32
    return %c0_i32, %c0_i32_0 : i32, i32
  }
  func.func @transform_4(%arg0: i32) -> (i32, i32) {
    %c0_i32 = arith.constant 0 : i32
    %c0_i32_0 = arith.constant 0 : i32
    %c0_i32_1 = arith.constant 0 : i32
    return %c0_i32, %c0_i32_0 : i32, i32
  }
  func.func @transform_5(%arg0: i32) -> (i32, i32) {
    %c0_i32 = arith.constant 0 : i32
    %c0_i32_0 = arith.constant 0 : i32
    %c0_i32_1 = arith.constant 0 : i32
    return %c0_i32, %c0_i32_0 : i32, i32
  }
  func.func @transform_6(%arg0: i32) -> (i32, i32) {
    %c0_i32 = arith.constant 0 : i32
    %c0_i32_0 = arith.constant 0 : i32
    %c0_i32_1 = arith.constant 0 : i32
    return %c0_i32, %c0_i32_0 : i32, i32
  }
  func.func @transform_7(%arg0: i32) -> (i32, i32) {
    %c0_i32 = arith.constant 0 : i32
    %c0_i32_0 = arith.constant 0 : i32
    return %arg0, %c0_i32 : i32, i32
  }
}

module attributes {stable_mosaic.version = 11 : i64} {
  func.func @_sa_mlp_kernel(%arg0: i32, %arg1: memref<128x256xbf16, #tpu.memory_space<vmem>>, %arg2: memref<256x128xbf16, #tpu.memory_space<vmem>>, %arg3: memref<1x128xf32, #tpu.memory_space<vmem>>, %arg4: memref<128x128xbf16, #tpu.memory_space<vmem>>, %arg5: memref<1x128xf32, #tpu.memory_space<vmem>>, %arg6: memref<128x256xbf16, #tpu.memory_space<vmem>>, %arg7: memref<1x256xf32, #tpu.memory_space<vmem>>, %arg8: memref<8x256xbf16, #tpu.memory_space<vmem>>) attributes {dimension_semantics = [#tpu.dimension_semantics<parallel>], iteration_bounds = array<i64: 4>, scalar_prefetch = 0 : i64, scratch_operands = 0 : i64, tpu.core_type = #tpu.core_type<tc>, window_params = [{transform_indices = @transform_0, window_bounds = array<i64: 128, 256>}, {pipeline_mode = #tpu.pipeline_mode<synchronous>, transform_indices = @transform_1, window_bounds = array<i64: 256, 128>}, {pipeline_mode = #tpu.pipeline_mode<synchronous>, transform_indices = @transform_2, window_bounds = array<i64: 1, 128>}, {pipeline_mode = #tpu.pipeline_mode<synchronous>, transform_indices = @transform_3, window_bounds = array<i64: 128, 128>}, {pipeline_mode = #tpu.pipeline_mode<synchronous>, transform_indices = @transform_4, window_bounds = array<i64: 1, 128>}, {pipeline_mode = #tpu.pipeline_mode<synchronous>, transform_indices = @transform_5, window_bounds = array<i64: 128, 256>}, {pipeline_mode = #tpu.pipeline_mode<synchronous>, transform_indices = @transform_6, window_bounds = array<i64: 1, 256>}, {transform_indices = @transform_7, window_bounds = array<i64: 8, 256>}]} {
    %c0 = arith.constant 0 : index
    %c0_0 = arith.constant 0 : index
    %0 = vector.load %arg1[%c0, %c0_0] : memref<128x256xbf16, #tpu.memory_space<vmem>>, vector<128x256xbf16>
    %c0_1 = arith.constant 0 : index
    %c0_2 = arith.constant 0 : index
    %1 = vector.load %arg2[%c0_1, %c0_2] : memref<256x128xbf16, #tpu.memory_space<vmem>>, vector<256x128xbf16>
    %cst = arith.constant dense<0.000000e+00> : vector<128x128xf32>
    %2 = tpu.matmul %0, %1, %cst {dimension_numbers = #tpu.dot_dimension_numbers<[1], [0], [0], [1], [0, 0, 1, 1], [], []>} : vector<128x256xbf16>, vector<256x128xbf16>, vector<128x128xf32> -> vector<128x128xf32>
    %c0_3 = arith.constant 0 : index
    %c0_4 = arith.constant 0 : index
    %3 = vector.load %arg3[%c0_3, %c0_4] : memref<1x128xf32, #tpu.memory_space<vmem>>, vector<1x128xf32>
    %4 = vector.broadcast %3 : vector<1x128xf32> to vector<128x128xf32>
    %5 = arith.addf %2, %4 : vector<128x128xf32>
    %cst_5 = arith.constant 0.000000e+00 : f32
    %6 = vector.broadcast %cst_5 : f32 to vector<128x128xf32>
    %7 = arith.maximumf %5, %6 : vector<128x128xf32>
    %8 = arith.truncf %7 : vector<128x128xf32> to vector<128x128xbf16>
    %c0_6 = arith.constant 0 : index
    %c0_7 = arith.constant 0 : index
    %9 = vector.load %arg4[%c0_6, %c0_7] : memref<128x128xbf16, #tpu.memory_space<vmem>>, vector<128x128xbf16>
    %cst_8 = arith.constant dense<0.000000e+00> : vector<128x128xf32>
    %10 = tpu.matmul %8, %9, %cst_8 {dimension_numbers = #tpu.dot_dimension_numbers<[1], [0], [0], [1], [0, 0, 1, 1], [], []>} : vector<128x128xbf16>, vector<128x128xbf16>, vector<128x128xf32> -> vector<128x128xf32>
    %c0_9 = arith.constant 0 : index
    %c0_10 = arith.constant 0 : index
    %11 = vector.load %arg5[%c0_9, %c0_10] : memref<1x128xf32, #tpu.memory_space<vmem>>, vector<1x128xf32>
    %12 = vector.broadcast %11 : vector<1x128xf32> to vector<128x128xf32>
    %13 = arith.addf %10, %12 : vector<128x128xf32>
    %cst_11 = arith.constant 0.000000e+00 : f32
    %14 = vector.broadcast %cst_11 : f32 to vector<128x128xf32>
    %15 = arith.maximumf %13, %14 : vector<128x128xf32>
    %16 = arith.truncf %15 : vector<128x128xf32> to vector<128x128xbf16>
    %c0_12 = arith.constant 0 : index
    %c0_13 = arith.constant 0 : index
    %17 = vector.load %arg6[%c0_12, %c0_13] : memref<128x256xbf16, #tpu.memory_space<vmem>>, vector<128x256xbf16>
    %cst_14 = arith.constant dense<0.000000e+00> : vector<128x256xf32>
    %18 = tpu.matmul %16, %17, %cst_14 {dimension_numbers = #tpu.dot_dimension_numbers<[1], [0], [0], [1], [0, 0, 1, 1], [], []>} : vector<128x128xbf16>, vector<128x256xbf16>, vector<128x256xf32> -> vector<128x256xf32>
    %c0_15 = arith.constant 0 : index
    %c0_16 = arith.constant 0 : index
    %19 = vector.load %arg7[%c0_15, %c0_16] : memref<1x256xf32, #tpu.memory_space<vmem>>, vector<1x256xf32>
    %20 = vector.broadcast %19 : vector<1x256xf32> to vector<128x256xf32>
    %21 = arith.addf %18, %20 : vector<128x256xf32>
    %cst_17 = arith.constant 0.000000e+00 : f32
    %22 = vector.broadcast %cst_17 : f32 to vector<128x256xf32>
    %23 = arith.maximumf %21, %22 : vector<128x256xf32>
    %24 = vector.shape_cast %23 : vector<128x256xf32> to vector<8x16x256xf32>
    %cst_18 = arith.constant dense<0xFF800000> : vector<8x256xf32>
    %25 = vector.multi_reduction <maximumf>, %24, %cst_18 [1] : vector<8x16x256xf32> to vector<8x256xf32>
    %26 = arith.truncf %25 : vector<8x256xf32> to vector<8x256xbf16>
    %c0_19 = arith.constant 0 : index
    %c0_20 = arith.constant 0 : index
    %27 = vector.load %arg8[%c0_19, %c0_20] : memref<8x256xbf16, #tpu.memory_space<vmem>>, vector<8x256xbf16>
    tpu.vector_store %arg8[%c0_19, %c0_20], %26 {strides = array<i32>} : memref<8x256xbf16, #tpu.memory_space<vmem>>, vector<8x256xbf16>,
    return
  }
  func.func @transform_0(%arg0: i32) -> (i32, i32) {
    %c0_i32 = arith.constant 0 : i32
    %c0_i32_0 = arith.constant 0 : i32
    return %arg0, %c0_i32 : i32, i32
  }
  func.func @transform_1(%arg0: i32) -> (i32, i32) {
    %c0_i32 = arith.constant 0 : i32
    %c0_i32_0 = arith.constant 0 : i32
    %c0_i32_1 = arith.constant 0 : i32
    return %c0_i32, %c0_i32_0 : i32, i32
  }
  func.func @transform_2(%arg0: i32) -> (i32, i32) {
    %c0_i32 = arith.constant 0 : i32
    %c0_i32_0 = arith.constant 0 : i32
    %c0_i32_1 = arith.constant 0 : i32
    return %c0_i32, %c0_i32_0 : i32, i32
  }
  func.func @transform_3(%arg0: i32) -> (i32, i32) {
    %c0_i32 = arith.constant 0 : i32
    %c0_i32_0 = arith.constant 0 : i32
    %c0_i32_1 = arith.constant 0 : i32
    return %c0_i32, %c0_i32_0 : i32, i32
  }
  func.func @transform_4(%arg0: i32) -> (i32, i32) {
    %c0_i32 = arith.constant 0 : i32
    %c0_i32_0 = arith.constant 0 : i32
    %c0_i32_1 = arith.constant 0 : i32
    return %c0_i32, %c0_i32_0 : i32, i32
  }
  func.func @transform_5(%arg0: i32) -> (i32, i32) {
    %c0_i32 = arith.constant 0 : i32
    %c0_i32_0 = arith.constant 0 : i32
    %c0_i32_1 = arith.constant 0 : i32
    return %c0_i32, %c0_i32_0 : i32, i32
  }
  func.func @transform_6(%arg0: i32) -> (i32, i32) {
    %c0_i32 = arith.constant 0 : i32
    %c0_i32_0 = arith.constant 0 : i32
    %c0_i32_1 = arith.constant 0 : i32
    return %c0_i32, %c0_i32_0 : i32, i32
  }
  func.func @transform_7(%arg0: i32) -> (i32, i32) {
    %c0_i32 = arith.constant 0 : i32
    %c0_i32_0 = arith.constant 0 : i32
    return %arg0, %c0_i32 : i32, i32
  }
}

module attributes {stable_mosaic.version = 11 : i64} {
  func.func @_sa3_head_kernel(%arg0: memref<32x384xbf16, #tpu.memory_space<vmem>>, %arg1: memref<384x256xbf16, #tpu.memory_space<vmem>>, %arg2: memref<1x256xf32, #tpu.memory_space<vmem>>, %arg3: memref<256x512xbf16, #tpu.memory_space<vmem>>, %arg4: memref<1x512xf32, #tpu.memory_space<vmem>>, %arg5: memref<512x1024xbf16, #tpu.memory_space<vmem>>, %arg6: memref<1x1024xf32, #tpu.memory_space<vmem>>, %arg7: memref<1024x512xbf16, #tpu.memory_space<vmem>>, %arg8: memref<1x512xf32, #tpu.memory_space<vmem>>, %arg9: memref<512x256xbf16, #tpu.memory_space<vmem>>, %arg10: memref<1x256xf32, #tpu.memory_space<vmem>>, %arg11: memref<256x128xbf16, #tpu.memory_space<vmem>>, %arg12: memref<1x128xf32, #tpu.memory_space<vmem>>, %arg13: memref<2x128xf32, #tpu.memory_space<vmem>>) attributes {dimension_semantics = [], scalar_prefetch = 0 : i64, scratch_operands = 0 : i64, tpu.core_type = #tpu.core_type<tc>} {
    %c0 = arith.constant 0 : index
    %c0_0 = arith.constant 0 : index
    %0 = vector.load %arg0[%c0, %c0_0] : memref<32x384xbf16, #tpu.memory_space<vmem>>, vector<32x384xbf16>
    %c0_1 = arith.constant 0 : index
    %c0_2 = arith.constant 0 : index
    %1 = vector.load %arg1[%c0_1, %c0_2] : memref<384x256xbf16, #tpu.memory_space<vmem>>, vector<384x256xbf16>
    %cst = arith.constant dense<0.000000e+00> : vector<32x256xf32>
    %2 = tpu.matmul %0, %1, %cst {dimension_numbers = #tpu.dot_dimension_numbers<[1], [0], [0], [1], [0, 0, 1, 1], [], []>} : vector<32x384xbf16>, vector<384x256xbf16>, vector<32x256xf32> -> vector<32x256xf32>
    %c0_3 = arith.constant 0 : index
    %c0_4 = arith.constant 0 : index
    %3 = vector.load %arg2[%c0_3, %c0_4] : memref<1x256xf32, #tpu.memory_space<vmem>>, vector<1x256xf32>
    %4 = vector.broadcast %3 : vector<1x256xf32> to vector<32x256xf32>
    %5 = arith.addf %2, %4 : vector<32x256xf32>
    %cst_5 = arith.constant 0.000000e+00 : f32
    %6 = vector.broadcast %cst_5 : f32 to vector<32x256xf32>
    %7 = arith.maximumf %5, %6 : vector<32x256xf32>
    %8 = arith.truncf %7 : vector<32x256xf32> to vector<32x256xbf16>
    %c0_6 = arith.constant 0 : index
    %c0_7 = arith.constant 0 : index
    %9 = vector.load %arg3[%c0_6, %c0_7] : memref<256x512xbf16, #tpu.memory_space<vmem>>, vector<256x512xbf16>
    %cst_8 = arith.constant dense<0.000000e+00> : vector<32x512xf32>
    %10 = tpu.matmul %8, %9, %cst_8 {dimension_numbers = #tpu.dot_dimension_numbers<[1], [0], [0], [1], [0, 0, 1, 1], [], []>} : vector<32x256xbf16>, vector<256x512xbf16>, vector<32x512xf32> -> vector<32x512xf32>
    %c0_9 = arith.constant 0 : index
    %c0_10 = arith.constant 0 : index
    %11 = vector.load %arg4[%c0_9, %c0_10] : memref<1x512xf32, #tpu.memory_space<vmem>>, vector<1x512xf32>
    %12 = vector.broadcast %11 : vector<1x512xf32> to vector<32x512xf32>
    %13 = arith.addf %10, %12 : vector<32x512xf32>
    %cst_11 = arith.constant 0.000000e+00 : f32
    %14 = vector.broadcast %cst_11 : f32 to vector<32x512xf32>
    %15 = arith.maximumf %13, %14 : vector<32x512xf32>
    %16 = arith.truncf %15 : vector<32x512xf32> to vector<32x512xbf16>
    %c0_12 = arith.constant 0 : index
    %c0_13 = arith.constant 0 : index
    %17 = vector.load %arg5[%c0_12, %c0_13] : memref<512x1024xbf16, #tpu.memory_space<vmem>>, vector<512x1024xbf16>
    %cst_14 = arith.constant dense<0.000000e+00> : vector<32x1024xf32>
    %18 = tpu.matmul %16, %17, %cst_14 {dimension_numbers = #tpu.dot_dimension_numbers<[1], [0], [0], [1], [0, 0, 1, 1], [], []>} : vector<32x512xbf16>, vector<512x1024xbf16>, vector<32x1024xf32> -> vector<32x1024xf32>
    %c0_15 = arith.constant 0 : index
    %c0_16 = arith.constant 0 : index
    %19 = vector.load %arg6[%c0_15, %c0_16] : memref<1x1024xf32, #tpu.memory_space<vmem>>, vector<1x1024xf32>
    %20 = vector.broadcast %19 : vector<1x1024xf32> to vector<32x1024xf32>
    %21 = arith.addf %18, %20 : vector<32x1024xf32>
    %cst_17 = arith.constant 0.000000e+00 : f32
    %22 = vector.broadcast %cst_17 : f32 to vector<32x1024xf32>
    %23 = arith.maximumf %21, %22 : vector<32x1024xf32>
    %24 = vector.shape_cast %23 : vector<32x1024xf32> to vector<2x16x1024xf32>
    %cst_18 = arith.constant dense<0xFF800000> : vector<2x1024xf32>
    %25 = vector.multi_reduction <maximumf>, %24, %cst_18 [1] : vector<2x16x1024xf32> to vector<2x1024xf32>
    %26 = arith.truncf %25 : vector<2x1024xf32> to vector<2x1024xbf16>
    %c0_19 = arith.constant 0 : index
    %c0_20 = arith.constant 0 : index
    %27 = vector.load %arg7[%c0_19, %c0_20] : memref<1024x512xbf16, #tpu.memory_space<vmem>>, vector<1024x512xbf16>
    %cst_21 = arith.constant dense<0.000000e+00> : vector<2x512xf32>
    %28 = tpu.matmul %26, %27, %cst_21 {dimension_numbers = #tpu.dot_dimension_numbers<[1], [0], [0], [1], [0, 0, 1, 1], [], []>} : vector<2x1024xbf16>, vector<1024x512xbf16>, vector<2x512xf32> -> vector<2x512xf32>
    %c0_22 = arith.constant 0 : index
    %c0_23 = arith.constant 0 : index
    %29 = vector.load %arg8[%c0_22, %c0_23] : memref<1x512xf32, #tpu.memory_space<vmem>>, vector<1x512xf32>
    %30 = vector.broadcast %29 : vector<1x512xf32> to vector<2x512xf32>
    %31 = arith.addf %28, %30 : vector<2x512xf32>
    %cst_24 = arith.constant 0.000000e+00 : f32
    %32 = vector.broadcast %cst_24 : f32 to vector<2x512xf32>
    %33 = arith.maximumf %31, %32 : vector<2x512xf32>
    %34 = arith.truncf %33 : vector<2x512xf32> to vector<2x512xbf16>
    %c0_25 = arith.constant 0 : index
    %c0_26 = arith.constant 0 : index
    %35 = vector.load %arg9[%c0_25, %c0_26] : memref<512x256xbf16, #tpu.memory_space<vmem>>, vector<512x256xbf16>
    %cst_27 = arith.constant dense<0.000000e+00> : vector<2x256xf32>
    %36 = tpu.matmul %34, %35, %cst_27 {dimension_numbers = #tpu.dot_dimension_numbers<[1], [0], [0], [1], [0, 0, 1, 1], [], []>} : vector<2x512xbf16>, vector<512x256xbf16>, vector<2x256xf32> -> vector<2x256xf32>
    %c0_28 = arith.constant 0 : index
    %c0_29 = arith.constant 0 : index
    %37 = vector.load %arg10[%c0_28, %c0_29] : memref<1x256xf32, #tpu.memory_space<vmem>>, vector<1x256xf32>
    %38 = vector.broadcast %37 : vector<1x256xf32> to vector<2x256xf32>
    %39 = arith.addf %36, %38 : vector<2x256xf32>
    %cst_30 = arith.constant 0.000000e+00 : f32
    %40 = vector.broadcast %cst_30 : f32 to vector<2x256xf32>
    %41 = arith.maximumf %39, %40 : vector<2x256xf32>
    %42 = arith.truncf %41 : vector<2x256xf32> to vector<2x256xbf16>
    %c0_31 = arith.constant 0 : index
    %c0_32 = arith.constant 0 : index
    %43 = vector.load %arg11[%c0_31, %c0_32] : memref<256x128xbf16, #tpu.memory_space<vmem>>, vector<256x128xbf16>
    %cst_33 = arith.constant dense<0.000000e+00> : vector<2x128xf32>
    %44 = tpu.matmul %42, %43, %cst_33 {dimension_numbers = #tpu.dot_dimension_numbers<[1], [0], [0], [1], [0, 0, 1, 1], [], []>} : vector<2x256xbf16>, vector<256x128xbf16>, vector<2x128xf32> -> vector<2x128xf32>
    %c0_34 = arith.constant 0 : index
    %c0_35 = arith.constant 0 : index
    %45 = vector.load %arg12[%c0_34, %c0_35] : memref<1x128xf32, #tpu.memory_space<vmem>>, vector<1x128xf32>
    %46 = vector.broadcast %45 : vector<1x128xf32> to vector<2x128xf32>
    %47 = arith.addf %44, %46 : vector<2x128xf32>
    %48 = tpu.iota {dimensions = array<i32: 1>} : vector<2x128xi32>
    %c40_i32 = arith.constant 40 : i32
    %49 = vector.broadcast %c40_i32 : i32 to vector<2x128xi32>
    %50 = arith.cmpi slt, %48, %49 : vector<2x128xi32>
    %cst_36 = arith.constant -1.000000e+30 : f32
    %51 = vector.broadcast %cst_36 : f32 to vector<2x128xf32>
    %52 = arith.select %50, %47, %51 : vector<2x128xi1>, vector<2x128xf32>
    %cst_37 = arith.constant dense<0xFF800000> : vector<2xf32>
    %53 = vector.multi_reduction <maximumf>, %52, %cst_37 [1] : vector<2x128xf32> to vector<2xf32>
    %54 = vector.shape_cast %53 : vector<2xf32> to vector<2x1xf32>
    %55 = vector.broadcast %54 : vector<2x1xf32> to vector<2x128xf32>
    %56 = arith.subf %52, %55 : vector<2x128xf32>
    %57 = math.exp %56 : vector<2x128xf32>
    %cst_38 = arith.constant dense<0.000000e+00> : vector<2xf32>
    %58 = vector.multi_reduction <add>, %57, %cst_38 [1] : vector<2x128xf32> to vector<2xf32>
    %59 = vector.shape_cast %58 : vector<2xf32> to vector<2x1xf32>
    %60 = math.log %59 : vector<2x1xf32>
    %61 = arith.addf %60, %54 : vector<2x1xf32>
    %62 = vector.broadcast %61 : vector<2x1xf32> to vector<2x128xf32>
    %63 = arith.subf %52, %62 : vector<2x128xf32>
    %c0_39 = arith.constant 0 : index
    %c0_40 = arith.constant 0 : index
    %64 = vector.load %arg13[%c0_39, %c0_40] : memref<2x128xf32, #tpu.memory_space<vmem>>, vector<2x128xf32>
    tpu.vector_store %arg13[%c0_39, %c0_40], %63 {strides = array<i32>} : memref<2x128xf32, #tpu.memory_space<vmem>>, vector<2x128xf32>,
    return
  }
}

</mosaic_0001>

<llo_original>
// kernel: custom-call.14
$region0: #{custom-call.14}
  %s0 = inlined_call_operand.vmem [shape: f32[2,128], index: 0, kind: output, shape index: {}]

// kernel: custom-call.15
$region0: #{custom-call.15}
  %s0 = inlined_call_operand.vmem [shape: f32[2,32], index: 0, kind: output, shape index: {}]

// kernel: pointnet2_forward.3
$region0: #{pointnet2_forward.3}
  #allocation0 [shape = 'u32[]', space=smem, size = 0x4, offset = 0x4, fixed_abs, tag = 'smem constant byte address 0x4 - core index']
  #allocation1 [shape = 'u32[144,128]{1,0:T(1,128)}', space=vmem, size = 0x12000, scoped, tag = 'internal scratch']
  %s0 = inlined_call_operand.vmem [shape: bf16[1024,3], index: 0, kind: input, shape index: {}]
  %s1 = inlined_call_operand.vmem [shape: bf16[3,64], index: 1, kind: input, shape index: {}]
  %s2 = inlined_call_operand.vmem [shape: f32[1,64], index: 2, kind: input, shape index: {}]
  %s3 = inlined_call_operand.vmem [shape: bf16[64,64], index: 3, kind: input, shape index: {}]
  %s4 = inlined_call_operand.vmem [shape: f32[1,64], index: 4, kind: input, shape index: {}]
  %s5 = inlined_call_operand.vmem [shape: bf16[64,128], index: 5, kind: input, shape index: {}]
  %s6 = inlined_call_operand.vmem [shape: f32[1,128], index: 6, kind: input, shape index: {}]
  %s7 = inlined_call_operand.vmem [shape: bf16[64,128], index: 7, kind: output, shape index: {}]
  %s8 = sld [smem:[#allocation0]]
  $region61: #{pointnet2_forward.3} parent=0
    _
  %s10 = ssub.s32 1, %s8
  %s11 = scalar_select 0, %s10, %s8
  loop: start=0, step=1, limit=6
  $region2: #{pointnet2_forward.3} parent=0 // loop_pre_header
    _
  $region3: #{pointnet2_forward.3} parent=0 // loop_header
    %s13 = sphi 0, %s17
    %p14 = scmp.ge.s32.totalorder %s13, 6
    %s23 = sphi 0, %s25
    %s26 = sphi 0, %s23
    %s27 = sphi 0, %s26
    %s43 = sphi 0, %s27
    %s47 = sphi 0, %s47
    %s49 = sphi 0, %s47
    %s50 = sphi 0, %s49
    %s64 = sphi 0, %s50
    %s68 = sphi 0, %s68
    %s70 = sphi 0, %s68
    %s71 = sphi 0, %s70
    %s85 = sphi 0, %s71
    %s89 = sphi 0, %s89
    %s91 = sphi 0, %s89
    %s92 = sphi 0, %s91
    %s106 = sphi 0, %s92
    %s110 = sphi 0, %s110
    %s112 = sphi 0, %s110
    %s113 = sphi 0, %s112
    %s127 = sphi 0, %s113
    %s131 = sphi 0, %s131
    %s133 = sphi 0, %s131
    %s134 = sphi 0, %s133
    %s148 = sphi 0, %s134
    %s152 = sphi 0, %s152
    %s154 = sphi 0, %s152
    %s155 = sphi 0, %s154
    %s169 = sphi 0, %s155
    %s175 = sphi 0, %s177
    %s178 = sphi 0, %s175
    %s179 = sphi 0, %s178
    %s195 = sphi 0, %s179
  $region4: #{pointnet2_forward.3} parent=0 // loop_header_branch
    %16 = sbr.rel (%p14) target = $region8
  $region5: #{pointnet2_forward.3} parent=0 // loop_body
    %s18 = ssub.s32 %s13, 1
    %s19 = ssub.s32 %s13, 2
    %s20 = sadd.s32 %s13, 1
    %s21 = ssub.s32 %s13, %s20
    %p22 = scmp.eq.s32.totalorder %s21, 0
    %s24 = sadd.s32 %s23, 1
    %s25 = scalar_select %p22, %s23, %s24
    %p28 = pneg %p22
    %p29 = scmp.eq.s32.totalorder %s13, 3
    %p30 = por %p28, %p29
    %p31 = scmp.ne.s32.totalorder %s23, %s26
    %p32 = scmp.eq.s32.totalorder %s13, 0
    %p33 = por %p31, %p32
    %p34 = scmp.ne.s32.totalorder %s23, %s26
    %p35 = scmp.eq.s32.totalorder %s18, 3
    %p36 = por %p34, %p35
    %p37 = scmp.ne.s32.totalorder %s26, %s27
    %p38 = scmp.eq.s32.totalorder %s18, 0
    %p39 = por %p37, %p38
    %p40 = scmp.ne.s32.totalorder %s26, %s27
    %p41 = scmp.eq.s32.totalorder %s19, 3
    %p42 = por %p40, %p41
    %p44 = scmp.ne.s32.totalorder %s27, %s43
    %p45 = scmp.eq.s32.totalorder %s19, 0
    %p46 = por %p44, %p45
    %s48 = sadd.s32 %s47, 1
    %p51 = scmp.eq.s32.totalorder %s13, 3
    %p52 = scmp.ne.s32.totalorder %s47, %s49
    %p53 = scmp.eq.s32.totalorder %s13, 0
    %p54 = por %p52, %p53
    %p55 = scmp.ne.s32.totalorder %s47, %s49
    %p56 = scmp.eq.s32.totalorder %s18, 3
    %p57 = por %p55, %p56
    %p58 = scmp.ne.s32.totalorder %s49, %s50
    %p59 = scmp.eq.s32.totalorder %s18, 0
    %p60 = por %p58, %p59
    %p61 = scmp.ne.s32.totalorder %s49, %s50
    %p62 = scmp.eq.s32.totalorder %s19, 3
    %p63 = por %p61, %p62
    %p65 = scmp.ne.s32.totalorder %s50, %s64
    %p66 = scmp.eq.s32.totalorder %s19, 0
    %p67 = por %p65, %p66
    %s69 = sadd.s32 %s68, 1
    %p72 = scmp.eq.s32.totalorder %s13, 3
    %p73 = scmp.ne.s32.totalorder %s68, %s70
    %p74 = scmp.eq.s32.totalorder %s13, 0
    %p75 = por %p73, %p74
    %p76 = scmp.ne.s32.totalorder %s68, %s70
    %p77 = scmp.eq.s32.totalorder %s18, 3
    %p78 = por %p76, %p77
    %p79 = scmp.ne.s32.totalorder %s70, %s71
    %p80 = scmp.eq.s32.totalorder %s18, 0
    %p81 = por %p79, %p80
    %p82 = scmp.ne.s32.totalorder %s70, %s71
    %p83 = scmp.eq.s32.totalorder %s19, 3
    %p84 = por %p82, %p83
    %p86 = scmp.ne.s32.totalorder %s71, %s85
    %p87 = scmp.eq.s32.totalorder %s19, 0
    %p88 = por %p86, %p87
    %s90 = sadd.s32 %s89, 1
    %p93 = scmp.eq.s32.totalorder %s13, 3
    %p94 = scmp.ne.s32.totalorder %s89, %s91
    %p95 = scmp.eq.s32.totalorder %s13, 0
    %p96 = por %p94, %p95
    %p97 = scmp.ne.s32.totalorder %s89, %s91
    %p98 = scmp.eq.s32.totalorder %s18, 3
    %p99 = por %p97, %p98
    %p100 = scmp.ne.s32.totalorder %s91, %s92
    %p101 = scmp.eq.s32.totalorder %s18, 0
    %p102 = por %p100, %p101
    %p103 = scmp.ne.s32.totalorder %s91, %s92
    %p104 = scmp.eq.s32.totalorder %s19, 3
    %p105 = por %p103, %p104
    %p107 = scmp.ne.s32.totalorder %s92, %s106
    %p108 = scmp.eq.s32.totalorder %s19, 0
    %p109 = por %p107, %p108
    %s111 = sadd.s32 %s110, 1
    %p114 = scmp.eq.s32.totalorder %s13, 3
    %p115 = scmp.ne.s32.totalorder %s110, %s112
    %p116 = scmp.eq.s32.totalorder %s13, 0
    %p117 = por %p115, %p116
    %p118 = scmp.ne.s32.totalorder %s110, %s112
    %p119 = scmp.eq.s32.totalorder %s18, 3
    %p120 = por %p118, %p119
    %p121 = scmp.ne.s32.totalorder %s112, %s113
    %p122 = scmp.eq.s32.totalorder %s18, 0
    %p123 = por %p121, %p122
    %p124 = scmp.ne.s32.totalorder %s112, %s113
    %p125 = scmp.eq.s32.totalorder %s19, 3
    %p126 = por %p124, %p125
    %p128 = scmp.ne.s32.totalorder %s113, %s127
    %p129 = scmp.eq.s32.totalorder %s19, 0
    %p130 = por %p128, %p129
    %s132 = sadd.s32 %s131, 1
    %p135 = scmp.eq.s32.totalorder %s13, 3
    %p136 = scmp.ne.s32.totalorder %s131, %s133
    %p137 = scmp.eq.s32.totalorder %s13, 0
    %p138 = por %p136, %p137
    %p139 = scmp.ne.s32.totalorder %s131, %s133
    %p140 = scmp.eq.s32.totalorder %s18, 3
    %p141 = por %p139, %p140
    %p142 = scmp.ne.s32.totalorder %s133, %s134
    %p143 = scmp.eq.s32.totalorder %s18, 0
    %p144 = por %p142, %p143
    %p145 = scmp.ne.s32.totalorder %s133, %s134
    %p146 = scmp.eq.s32.totalorder %s19, 3
    %p147 = por %p145, %p146
    %p149 = scmp.ne.s32.totalorder %s134, %s148
    %p150 = scmp.eq.s32.totalorder %s19, 0
    %p151 = por %p149, %p150
    %s153 = sadd.s32 %s152, 1
    %p156 = scmp.eq.s32.totalorder %s13, 3
    %p157 = scmp.ne.s32.totalorder %s152, %s154
    %p158 = scmp.eq.s32.totalorder %s13, 0
    %p159 = por %p157, %p158
    %p160 = scmp.ne.s32.totalorder %s152, %s154
    %p161 = scmp.eq.s32.totalorder %s18, 3
    %p162 = por %p160, %p161
    %p163 = scmp.ne.s32.totalorder %s154, %s155
    %p164 = scmp.eq.s32.totalorder %s18, 0
    %p165 = por %p163, %p164
    %p166 = scmp.ne.s32.totalorder %s154, %s155
    %p167 = scmp.eq.s32.totalorder %s19, 3
    %p168 = por %p166, %p167
    %p170 = scmp.ne.s32.totalorder %s155, %s169
    %p171 = scmp.eq.s32.totalorder %s19, 0
    %p172 = por %p170, %p171
    %s173 = ssub.s32 %s13, %s20
    %p174 = scmp.eq.s32.totalorder %s173, 0
    %s176 = sadd.s32 %s175, 1
    %s177 = scalar_select %p174, %s175, %s176
    %p180 = pneg %p174
    %p181 = scmp.eq.s32.totalorder %s13, 3
    %p182 = por %p180, %p181
    %p183 = scmp.ne.s32.totalorder %s175, %s178
    %p184 = scmp.eq.s32.totalorder %s13, 0
    %p185 = por %p183, %p184
    %p186 = scmp.ne.s32.totalorder %s175, %s178
    %p187 = scmp.eq.s32.totalorder %s18, 3
    %p188 = por %p186, %p187
    %p189 = scmp.ne.s32.totalorder %s178, %s179
    %p190 = scmp.eq.s32.totalorder %s18, 0
    %p191 = por %p189, %p190
    %p192 = scmp.ne.s32.totalorder %s178, %s179
    %p193 = scmp.eq.s32.totalorder %s19, 3
    %p194 = por %p192, %p193
    %p196 = scmp.ne.s32.totalorder %s179, %s195
    %p197 = scmp.eq.s32.totalorder %s19, 0
    %p198 = por %p196, %p197
    %p199 = scmp.le.s32.totalorder 1, %s13
    %p200 = scmp.lt.s32.totalorder %s13, 5
    %p201 = pnand %p199, %p200
    %p202 = pneg %p201
    // Predicated region
    $region9: #{pointnet2_forward.3} parent=5 // pred_check
      _
    $region10: #{pointnet2_forward.3} parent=5 // pred_check_branch
      %204 = sbr.rel (%p201) target = $region12
    $region11: #{pointnet2_forward.3} parent=5 // pred_region
      %s205 = ssub.s32 %s13, 1
      // Predicated region
      $region13: #{pointnet2_forward.3} parent=11 // pred_check
        %p206 = pneg %p60
      $region14: #{pointnet2_forward.3} parent=11 // pred_check_branch
        %208 = sbr.rel (%p206) target = $region16
      $region15: #{pointnet2_forward.3} parent=11 // pred_region
        _
      $region16: #{pointnet2_forward.3} parent=11 // pred_fallthru
        _
      // Predicated region
      $region17: #{pointnet2_forward.3} parent=11 // pred_check
        %p209 = pneg %p81
      $region18: #{pointnet2_forward.3} parent=11 // pred_check_branch
        %211 = sbr.rel (%p209) target = $region20
      $region19: #{pointnet2_forward.3} parent=11 // pred_region
        _
      $region20: #{pointnet2_forward.3} parent=11 // pred_fallthru
        _
      // Predicated region
      $region21: #{pointnet2_forward.3} parent=11 // pred_check
        %p212 = pneg %p102
      $region22: #{pointnet2_forward.3} parent=11 // pred_check_branch
        %214 = sbr.rel (%p212) target = $region24
      $region23: #{pointnet2_forward.3} parent=11 // pred_region
        _
      $region24: #{pointnet2_forward.3} parent=11 // pred_fallthru
        _
      // Predicated region
      $region25: #{pointnet2_forward.3} parent=11 // pred_check
        %p215 = pneg %p123
      $region26: #{pointnet2_forward.3} parent=11 // pred_check_branch
        %217 = sbr.rel (%p215) target = $region28
      $region27: #{pointnet2_forward.3} parent=11 // pred_region
        _
      $region28: #{pointnet2_forward.3} parent=11 // pred_fallthru
        _
      // Predicated region
      $region29: #{pointnet2_forward.3} parent=11 // pred_check
        %p218 = pneg %p144
      $region30: #{pointnet2_forward.3} parent=11 // pred_check_branch
        %220 = sbr.rel (%p218) target = $region32
      $region31: #{pointnet2_forward.3} parent=11 // pred_region
        _
      $region32: #{pointnet2_forward.3} parent=11 // pred_fallthru
        _
      // Predicated region
      $region33: #{pointnet2_forward.3} parent=11 // pred_check
        %p221 = pneg %p165
      $region34: #{pointnet2_forward.3} parent=11 // pred_check_branch
        %223 = sbr.rel (%p221) target = $region36
      $region35: #{pointnet2_forward.3} parent=11 // pred_region
        _
      $region36: #{pointnet2_forward.3} parent=11 // pred_fallthru
        _
    $region12: #{pointnet2_forward.3} parent=5 // pred_fallthru
      _
    %p224 = scmp.lt.s32.totalorder %s13, 4
    // Predicated region
    $region37: #{pointnet2_forward.3} parent=5 // pred_check
      %p225 = pneg %p224
    $region38: #{pointnet2_forward.3} parent=5 // pred_check_branch
      %227 = sbr.rel (%p225) target = $region40
    $region39: #{pointnet2_forward.3} parent=5 // pred_region
      // Predicated region
      $region41: #{pointnet2_forward.3} parent=39 // pred_check
        %p228 = pneg %p33
      $region42: #{pointnet2_forward.3} parent=39 // pred_check_branch
        %230 = sbr.rel (%p228) target = $region44
      $region43: #{pointnet2_forward.3} parent=39 // pred_region
        %s231 = smul.u32 32, %s13
        %p232 = scmp.lt.s32.totalorder %s231, 127
        %s233 = scalar_select %p232, %s231, 127
        %s234 = smul.addr %s233, 4
        %s235 = scalar_lea.vmem %s0, %s234
        %s236 = smul.u32 32, %s13
      $region44: #{pointnet2_forward.3} parent=39 // pred_fallthru
        _
    $region40: #{pointnet2_forward.3} parent=5 // pred_fallthru
      _
    %p237 = scmp.le.s32.totalorder 1, %s13
    %p238 = scmp.lt.s32.totalorder %s13, 5
    %p239 = pnand %p237, %p238
    %p240 = pneg %p239
    // Predicated region
    $region45: #{pointnet2_forward.3} parent=5 // pred_check
      _
    $region46: #{pointnet2_forward.3} parent=5 // pred_check_branch
      %242 = sbr.rel (%p239) target = $region48
    $region47: #{pointnet2_forward.3} parent=5 // pred_region
      %s243 = ssub.s32 %s13, 1
      %s244 = smul.u32 32, %s18
      %p245 = scmp.lt.s32.totalorder %s244, 127
      %s246 = scalar_select %p245, %s244, 127
      %s247 = smul.addr %s246, 4
      %s248 = scalar_lea.vmem %s0, %s247
      %p249 = pneg %p39
      %p250 = pneg %p36
      %p251 = pneg %p60
      %p252 = pneg %p57
      %p253 = pneg %p81
      %p254 = pneg %p78
      %p255 = pneg %p102
      %p256 = pneg %p99
      %p257 = pneg %p123
      %p258 = pneg %p120
      %p259 = pneg %p144
      %p260 = pneg %p141
      %p261 = pneg %p165
      %p262 = pneg %p162
      %p263 = pneg %p191
      %p264 = pneg %p188
      %s265 = smul.u32 2, %s18
      %p266 = scmp.lt.s32.totalorder %s265, 7
      %s267 = scalar_select %p266, %s265, 7
      %s268 = smul.addr %s267, 4
      %s269 = scalar_lea.vmem %s7, %s268
      %s270 = smul.u32 32, %s18
      %p271 = scmp.lt.s32.totalorder %s270, 127
      %s272 = scalar_select %p271, %s270, 127
      %s273 = smul.addr %s272, 4
      %s274 = scalar_lea.vmem %s0, %s273
      %s275 = smul.u32 32, %s18
      %s276 = smul.u32 2, %s18
      %p277 = scmp.lt.s32.totalorder %s276, 7
      %s278 = scalar_select %p277, %s276, 7
      %s279 = smul.addr %s278, 4
      %s280 = scalar_lea.vmem %s7, %s279
      %s281 = smul.u32 2, %s18
      %v283 = vld [vmem:[%s274] sm:$0xf]
      %v284 = vld [vmem:[%s274 + $0x4] sm:$0xf]
      %v285 = vld [vmem:[%s274 + $0x8] sm:$0xf]
      %v286 = vld [vmem:[%s274 + $0xc] sm:$0xf]
      %v287 = vld [vmem:[%s274 + $0x10] sm:$0xf]
      %v288 = vld [vmem:[%s274 + $0x14] sm:$0xf]
      %v289 = vld [vmem:[%s274 + $0x18] sm:$0xf]
      %v290 = vld [vmem:[%s274 + $0x1c] sm:$0xf]
      %v291 = vld [vmem:[%s274 + $0x20] sm:$0xf]
      %v292 = vld [vmem:[%s274 + $0x24] sm:$0xf]
      %v293 = vld [vmem:[%s274 + $0x28] sm:$0xf]
      %v294 = vld [vmem:[%s274 + $0x2c] sm:$0xf]
      %v295 = vld [vmem:[%s274 + $0x30] sm:$0xf]
      %v296 = vld [vmem:[%s274 + $0x34] sm:$0xf]
      %v297 = vld [vmem:[%s274 + $0x38] sm:$0xf]
      %v298 = vld [vmem:[%s274 + $0x3c] sm:$0xf]
      %v299 = vld [vmem:[%s274 + $0x40] sm:$0xf]
      %v300 = vld [vmem:[%s274 + $0x44] sm:$0xf]
      %v301 = vld [vmem:[%s274 + $0x48] sm:$0xf]
      %v302 = vld [vmem:[%s274 + $0x4c] sm:$0xf]
      %v303 = vld [vmem:[%s274 + $0x50] sm:$0xf]
      %v304 = vld [vmem:[%s274 + $0x54] sm:$0xf]
      %v305 = vld [vmem:[%s274 + $0x58] sm:$0xf]
      %v306 = vld [vmem:[%s274 + $0x5c] sm:$0xf]
      %v307 = vld [vmem:[%s274 + $0x60] sm:$0xf]
      %v308 = vld [vmem:[%s274 + $0x64] sm:$0xf]
      %v309 = vld [vmem:[%s274 + $0x68] sm:$0xf]
      %v310 = vld [vmem:[%s274 + $0x6c] sm:$0xf]
      %v311 = vld [vmem:[%s274 + $0x70] sm:$0xf]
      %v312 = vld [vmem:[%s274 + $0x74] sm:$0xf]
      %v313 = vld [vmem:[%s274 + $0x78] sm:$0xf]
      %v314 = vld [vmem:[%s274 + $0x7c] sm:$0xf]
      %v315 = vunpack.c.l.bf16 %v283
      %v316 = vunpack.c.l.bf16 %v284
      %v317 = vunpack.c.l.bf16 %v285
      %v318 = vunpack.c.l.bf16 %v286
      %v319 = vunpack.c.l.bf16 %v287
      %v320 = vunpack.c.l.bf16 %v288
      %v321 = vunpack.c.l.bf16 %v289
      %v322 = vunpack.c.l.bf16 %v290
      %v323 = vunpack.c.l.bf16 %v291
      %v324 = vunpack.c.l.bf16 %v292
      %v325 = vunpack.c.l.bf16 %v293
      %v326 = vunpack.c.l.bf16 %v294
      %v327 = vunpack.c.l.bf16 %v295
      %v328 = vunpack.c.l.bf16 %v296
      %v329 = vunpack.c.l.bf16 %v297
      %v330 = vunpack.c.l.bf16 %v298
      %v331 = vunpack.c.l.bf16 %v299
      %v332 = vunpack.c.l.bf16 %v300
      %v333 = vunpack.c.l.bf16 %v301
      %v334 = vunpack.c.l.bf16 %v302
      %v335 = vunpack.c.l.bf16 %v303
      %v336 = vunpack.c.l.bf16 %v304
      %v337 = vunpack.c.l.bf16 %v305
      %v338 = vunpack.c.l.bf16 %v306
      %v339 = vunpack.c.l.bf16 %v307
      %v340 = vunpack.c.l.bf16 %v308
      %v341 = vunpack.c.l.bf16 %v309
      %v342 = vunpack.c.l.bf16 %v310
      %v343 = vunpack.c.l.bf16 %v311
      %v344 = vunpack.c.l.bf16 %v312
      %v345 = vunpack.c.l.bf16 %v313
      %v346 = vunpack.c.l.bf16 %v314
      %v347 = vld [vmem:[%s1] sm:$0x3]
      %v348 = vunpack.c.l.bf16 %v347
      %v349 = vld [vmem:[%s2] sm:$0x1]
      %351 = vset.pattern.permute.xlu0 0
      %352 = vperm.xlu0 %351, %v315
      %v353 = vpop.permute.xlu0 %352
      %356 = vset.pattern.permute.xlu0 0
      %357 = vperm.xlu0 %356, %v316
      %v358 = vpop.permute.xlu0 %357
      %361 = vset.pattern.permute.xlu0 0
      %362 = vperm.xlu0 %361, %v317
      %v363 = vpop.permute.xlu0 %362
      %366 = vset.pattern.permute.xlu0 0
      %367 = vperm.xlu0 %366, %v318
      %v368 = vpop.permute.xlu0 %367
      %371 = vset.pattern.permute.xlu0 0
      %372 = vperm.xlu0 %371, %v319
      %v373 = vpop.permute.xlu0 %372
      %376 = vset.pattern.permute.xlu0 0
      %377 = vperm.xlu0 %376, %v320
      %v378 = vpop.permute.xlu0 %377
      %381 = vset.pattern.permute.xlu0 0
      %382 = vperm.xlu0 %381, %v321
      %v383 = vpop.permute.xlu0 %382
      %386 = vset.pattern.permute.xlu0 0
      %387 = vperm.xlu0 %386, %v322
      %v388 = vpop.permute.xlu0 %387
      %391 = vset.pattern.permute.xlu0 0
      %392 = vperm.xlu0 %391, %v323
      %v393 = vpop.permute.xlu0 %392
      %396 = vset.pattern.permute.xlu0 0
      %397 = vperm.xlu0 %396, %v324
      %v398 = vpop.permute.xlu0 %397
      %401 = vset.pattern.permute.xlu0 0
      %402 = vperm.xlu0 %401, %v325
      %v403 = vpop.permute.xlu0 %402
      %406 = vset.pattern.permute.xlu0 0
      %407 = vperm.xlu0 %406, %v326
      %v408 = vpop.permute.xlu0 %407
      %411 = vset.pattern.permute.xlu0 0
      %412 = vperm.xlu0 %411, %v327
      %v413 = vpop.permute.xlu0 %412
      %416 = vset.pattern.permute.xlu0 0
      %417 = vperm.xlu0 %416, %v328
      %v418 = vpop.permute.xlu0 %417
      %421 = vset.pattern.permute.xlu0 0
      %422 = vperm.xlu0 %421, %v329
      %v423 = vpop.permute.xlu0 %422
      %426 = vset.pattern.permute.xlu0 0
      %427 = vperm.xlu0 %426, %v330
      %v428 = vpop.permute.xlu0 %427
      %431 = vset.pattern.permute.xlu0 0
      %432 = vperm.xlu0 %431, %v331
      %v433 = vpop.permute.xlu0 %432
      %436 = vset.pattern.permute.xlu0 0
      %437 = vperm.xlu0 %436, %v332
      %v438 = vpop.permute.xlu0 %437
      %441 = vset.pattern.permute.xlu0 0
      %442 = vperm.xlu0 %441, %v333
      %v443 = vpop.permute.xlu0 %442
      %446 = vset.pattern.permute.xlu0 0
      %447 = vperm.xlu0 %446, %v334
      %v448 = vpop.permute.xlu0 %447
      %451 = vset.pattern.permute.xlu0 0
      %452 = vperm.xlu0 %451, %v335
      %v453 = vpop.permute.xlu0 %452
      %456 = vset.pattern.permute.xlu0 0
      %457 = vperm.xlu0 %456, %v336
      %v458 = vpop.permute.xlu0 %457
      %461 = vset.pattern.permute.xlu0 0
      %462 = vperm.xlu0 %461, %v337
      %v463 = vpop.permute.xlu0 %462
      %466 = vset.pattern.permute.xlu0 0
      %467 = vperm.xlu0 %466, %v338
      %v468 = vpop.permute.xlu0 %467
      %471 = vset.pattern.permute.xlu0 0
      %472 = vperm.xlu0 %471, %v339
      %v473 = vpop.permute.xlu0 %472
      %476 = vset.pattern.permute.xlu0 0
      %477 = vperm.xlu0 %476, %v340
      %v478 = vpop.permute.xlu0 %477
      %481 = vset.pattern.permute.xlu0 0
      %482 = vperm.xlu0 %481, %v341
      %v483 = vpop.permute.xlu0 %482
      %486 = vset.pattern.permute.xlu0 0
      %487 = vperm.xlu0 %486, %v342
      %v488 = vpop.permute.xlu0 %487
      %491 = vset.pattern.permute.xlu0 0
      %492 = vperm.xlu0 %491, %v343
      %v493 = vpop.permute.xlu0 %492
      %496 = vset.pattern.permute.xlu0 0
      %497 = vperm.xlu0 %496, %v344
      %v498 = vpop.permute.xlu0 %497
      %501 = vset.pattern.permute.xlu0 0
      %502 = vperm.xlu0 %501, %v345
      %v503 = vpop.permute.xlu0 %502
      %506 = vset.pattern.permute.xlu0 0
      %507 = vperm.xlu0 %506, %v346
      %v508 = vpop.permute.xlu0 %507
      %v510 = vlaneseq
      %v511 = vshrl.u32 %v510, 7
      %v512 = vsub.s32 0, %v511
      %v513 = vrot.slane %v348, %v512
      %v514 = vmul.f32 %v353, %v513
      %v515 = vmul.f32 %v358, %v513
      %v516 = vmul.f32 %v363, %v513
      %v517 = vmul.f32 %v368, %v513
      %v518 = vmul.f32 %v373, %v513
      %v519 = vmul.f32 %v378, %v513
      %v520 = vmul.f32 %v383, %v513
      %v521 = vmul.f32 %v388, %v513
      %v522 = vmul.f32 %v393, %v513
      %v523 = vmul.f32 %v398, %v513
      %v524 = vmul.f32 %v403, %v513
      %v525 = vmul.f32 %v408, %v513
      %v526 = vmul.f32 %v413, %v513
      %v527 = vmul.f32 %v418, %v513
      %v528 = vmul.f32 %v423, %v513
      %v529 = vmul.f32 %v428, %v513
      %v530 = vmul.f32 %v433, %v513
      %v531 = vmul.f32 %v438, %v513
      %v532 = vmul.f32 %v443, %v513
      %v533 = vmul.f32 %v448, %v513
      %v534 = vmul.f32 %v453, %v513
      %v535 = vmul.f32 %v458, %v513
      %v536 = vmul.f32 %v463, %v513
      %v537 = vmul.f32 %v468, %v513
      %v538 = vmul.f32 %v473, %v513
      %v539 = vmul.f32 %v478, %v513
      %v540 = vmul.f32 %v483, %v513
      %v541 = vmul.f32 %v488, %v513
      %v542 = vmul.f32 %v493, %v513
      %v543 = vmul.f32 %v498, %v513
      %v544 = vmul.f32 %v503, %v513
      %v545 = vmul.f32 %v508, %v513
      %v547 = vlaneseq
      %v548 = vshrl.u32 %v547, 7
      %v549 = vsub.s32 0, %v548
      %v550 = vrot.slane %v349, %v549
      %v552 = vadd.f32 %v550, %v514
      %v553 = vadd.f32 %v550, %v515
      %v554 = vadd.f32 %v550, %v516
      %v555 = vadd.f32 %v550, %v517
      %v556 = vadd.f32 %v550, %v518
      %v557 = vadd.f32 %v550, %v519
      %v558 = vadd.f32 %v550, %v520
      %v559 = vadd.f32 %v550, %v521
      %v560 = vadd.f32 %v550, %v522
      %v561 = vadd.f32 %v550, %v523
      %v562 = vadd.f32 %v550, %v524
      %v563 = vadd.f32 %v550, %v525
      %v564 = vadd.f32 %v550, %v526
      %v565 = vadd.f32 %v550, %v527
      %v566 = vadd.f32 %v550, %v528
      %v567 = vadd.f32 %v550, %v529
      %v568 = vadd.f32 %v550, %v530
      %v569 = vadd.f32 %v550, %v531
      %v570 = vadd.f32 %v550, %v532
      %v571 = vadd.f32 %v550, %v533
      %v572 = vadd.f32 %v550, %v534
      %v573 = vadd.f32 %v550, %v535
      %v574 = vadd.f32 %v550, %v536
      %v575 = vadd.f32 %v550, %v537
      %v576 = vadd.f32 %v550, %v538
      %v577 = vadd.f32 %v550, %v539
      %v578 = vadd.f32 %v550, %v540
      %v579 = vadd.f32 %v550, %v541
      %v580 = vadd.f32 %v550, %v542
      %v581 = vadd.f32 %v550, %v543
      %v582 = vadd.f32 %v550, %v544
      %v583 = vadd.f32 %v550, %v545
      %584 = vset.pattern.permute.xlu0 1
      %585 = vperm.xlu0 %584, %v315
      %v586 = vpop.permute.xlu0 %585
      %588 = vset.pattern.permute.xlu0 1
      %589 = vperm.xlu0 %588, %v316
      %v590 = vpop.permute.xlu0 %589
      %592 = vset.pattern.permute.xlu0 1
      %593 = vperm.xlu0 %592, %v317
      %v594 = vpop.permute.xlu0 %593
      %596 = vset.pattern.permute.xlu0 1
      %597 = vperm.xlu0 %596, %v318
      %v598 = vpop.permute.xlu0 %597
      %600 = vset.pattern.permute.xlu0 1
      %601 = vperm.xlu0 %600, %v319
      %v602 = vpop.permute.xlu0 %601
      %604 = vset.pattern.permute.xlu0 1
      %605 = vperm.xlu0 %604, %v320
      %v606 = vpop.permute.xlu0 %605
      %608 = vset.pattern.permute.xlu0 1
      %609 = vperm.xlu0 %608, %v321
      %v610 = vpop.permute.xlu0 %609
      %612 = vset.pattern.permute.xlu0 1
      %613 = vperm.xlu0 %612, %v322
      %v614 = vpop.permute.xlu0 %613
      %616 = vset.pattern.permute.xlu0 1
      %617 = vperm.xlu0 %616, %v323
      %v618 = vpop.permute.xlu0 %617
      %620 = vset.pattern.permute.xlu0 1
      %621 = vperm.xlu0 %620, %v324
      %v622 = vpop.permute.xlu0 %621
      %624 = vset.pattern.permute.xlu0 1
      %625 = vperm.xlu0 %624, %v325
      %v626 = vpop.permute.xlu0 %625
      %628 = vset.pattern.permute.xlu0 1
      %629 = vperm.xlu0 %628, %v326
      %v630 = vpop.permute.xlu0 %629
      %632 = vset.pattern.permute.xlu0 1
      %633 = vperm.xlu0 %632, %v327
      %v634 = vpop.permute.xlu0 %633
      %636 = vset.pattern.permute.xlu0 1
      %637 = vperm.xlu0 %636, %v328
      %v638 = vpop.permute.xlu0 %637
      %640 = vset.pattern.permute.xlu0 1
      %641 = vperm.xlu0 %640, %v329
      %v642 = vpop.permute.xlu0 %641
      %644 = vset.pattern.permute.xlu0 1
      %645 = vperm.xlu0 %644, %v330
      %v646 = vpop.permute.xlu0 %645
      %648 = vset.pattern.permute.xlu0 1
      %649 = vperm.xlu0 %648, %v331
      %v650 = vpop.permute.xlu0 %649
      %652 = vset.pattern.permute.xlu0 1
      %653 = vperm.xlu0 %652, %v332
      %v654 = vpop.permute.xlu0 %653
      %656 = vset.pattern.permute.xlu0 1
      %657 = vperm.xlu0 %656, %v333
      %v658 = vpop.permute.xlu0 %657
      %660 = vset.pattern.permute.xlu0 1
      %661 = vperm.xlu0 %660, %v334
      %v662 = vpop.permute.xlu0 %661
      %664 = vset.pattern.permute.xlu0 1
      %665 = vperm.xlu0 %664, %v335
      %v666 = vpop.permute.xlu0 %665
      %668 = vset.pattern.permute.xlu0 1
      %669 = vperm.xlu0 %668, %v336
      %v670 = vpop.permute.xlu0 %669
      %672 = vset.pattern.permute.xlu0 1
      %673 = vperm.xlu0 %672, %v337
      %v674 = vpop.permute.xlu0 %673
      %676 = vset.pattern.permute.xlu0 1
      %677 = vperm.xlu0 %676, %v338
      %v678 = vpop.permute.xlu0 %677
      %680 = vset.pattern.permute.xlu0 1
      %681 = vperm.xlu0 %680, %v339
      %v682 = vpop.permute.xlu0 %681
      %684 = vset.pattern.permute.xlu0 1
      %685 = vperm.xlu0 %684, %v340
      %v686 = vpop.permute.xlu0 %685
      %688 = vset.pattern.permute.xlu0 1
      %689 = vperm.xlu0 %688, %v341
      %v690 = vpop.permute.xlu0 %689
      %692 = vset.pattern.permute.xlu0 1
      %693 = vperm.xlu0 %692, %v342
      %v694 = vpop.permute.xlu0 %693
      %696 = vset.pattern.permute.xlu0 1
      %697 = vperm.xlu0 %696, %v343
      %v698 = vpop.permute.xlu0 %697
      %700 = vset.pattern.permute.xlu0 1
      %701 = vperm.xlu0 %700, %v344
      %v702 = vpop.permute.xlu0 %701
      %704 = vset.pattern.permute.xlu0 1
      %705 = vperm.xlu0 %704, %v345
      %v706 = vpop.permute.xlu0 %705
      %708 = vset.pattern.permute.xlu0 1
      %709 = vperm.xlu0 %708, %v346
      %v710 = vpop.permute.xlu0 %709
      %v712 = vlaneseq
      %v713 = vshrl.u32 %v712, 7
      %v714 = vsub.s32 1, %v713
      %v715 = vrot.slane %v348, %v714
      %v716 = vmul.f32 %v586, %v715
      %v717 = vmul.f32 %v590, %v715
      %v718 = vmul.f32 %v594, %v715
      %v719 = vmul.f32 %v598, %v715
      %v720 = vmul.f32 %v602, %v715
      %v721 = vmul.f32 %v606, %v715
      %v722 = vmul.f32 %v610, %v715
      %v723 = vmul.f32 %v614, %v715
      %v724 = vmul.f32 %v618, %v715
      %v725 = vmul.f32 %v622, %v715
      %v726 = vmul.f32 %v626, %v715
      %v727 = vmul.f32 %v630, %v715
      %v728 = vmul.f32 %v634, %v715
      %v729 = vmul.f32 %v638, %v715
      %v730 = vmul.f32 %v642, %v715
      %v731 = vmul.f32 %v646, %v715
      %v732 = vmul.f32 %v650, %v715
      %v733 = vmul.f32 %v654, %v715
      %v734 = vmul.f32 %v658, %v715
      %v735 = vmul.f32 %v662, %v715
      %v736 = vmul.f32 %v666, %v715
      %v737 = vmul.f32 %v670, %v715
      %v738 = vmul.f32 %v674, %v715
      %v739 = vmul.f32 %v678, %v715
      %v740 = vmul.f32 %v682, %v715
      %v741 = vmul.f32 %v686, %v715
      %v742 = vmul.f32 %v690, %v715
      %v743 = vmul.f32 %v694, %v715
      %v744 = vmul.f32 %v698, %v715
      %v745 = vmul.f32 %v702, %v715
      %v746 = vmul.f32 %v706, %v715
      %v747 = vmul.f32 %v710, %v715
      %v748 = vadd.f32 %v552, %v716
      %v749 = vadd.f32 %v553, %v717
      %v750 = vadd.f32 %v554, %v718
      %v751 = vadd.f32 %v555, %v719
      %v752 = vadd.f32 %v556, %v720
      %v753 = vadd.f32 %v557, %v721
      %v754 = vadd.f32 %v558, %v722
      %v755 = vadd.f32 %v559, %v723
      %v756 = vadd.f32 %v560, %v724
      %v757 = vadd.f32 %v561, %v725
      %v758 = vadd.f32 %v562, %v726
      %v759 = vadd.f32 %v563, %v727
      %v760 = vadd.f32 %v564, %v728
      %v761 = vadd.f32 %v565, %v729
      %v762 = vadd.f32 %v566, %v730
      %v763 = vadd.f32 %v567, %v731
      %v764 = vadd.f32 %v568, %v732
      %v765 = vadd.f32 %v569, %v733
      %v766 = vadd.f32 %v570, %v734
      %v767 = vadd.f32 %v571, %v735
      %v768 = vadd.f32 %v572, %v736
      %v769 = vadd.f32 %v573, %v737
      %v770 = vadd.f32 %v574, %v738
      %v771 = vadd.f32 %v575, %v739
      %v772 = vadd.f32 %v576, %v740
      %v773 = vadd.f32 %v577, %v741
      %v774 = vadd.f32 %v578, %v742
      %v775 = vadd.f32 %v579, %v743
      %v776 = vadd.f32 %v580, %v744
      %v777 = vadd.f32 %v581, %v745
      %v778 = vadd.f32 %v582, %v746
      %v779 = vadd.f32 %v583, %v747
      %780 = vset.pattern.permute.xlu0 2
      %781 = vperm.xlu0 %780, %v315
      %v782 = vpop.permute.xlu0 %781
      %784 = vset.pattern.permute.xlu0 2
      %785 = vperm.xlu0 %784, %v316
      %v786 = vpop.permute.xlu0 %785
      %788 = vset.pattern.permute.xlu0 2
      %789 = vperm.xlu0 %788, %v317
      %v790 = vpop.permute.xlu0 %789
      %792 = vset.pattern.permute.xlu0 2
      %793 = vperm.xlu0 %792, %v318
      %v794 = vpop.permute.xlu0 %793
      %796 = vset.pattern.permute.xlu0 2
      %797 = vperm.xlu0 %796, %v319
      %v798 = vpop.permute.xlu0 %797
      %800 = vset.pattern.permute.xlu0 2
      %801 = vperm.xlu0 %800, %v320
      %v802 = vpop.permute.xlu0 %801
      %804 = vset.pattern.permute.xlu0 2
      %805 = vperm.xlu0 %804, %v321
      %v806 = vpop.permute.xlu0 %805
      %808 = vset.pattern.permute.xlu0 2
      %809 = vperm.xlu0 %808, %v322
      %v810 = vpop.permute.xlu0 %809
      %812 = vset.pattern.permute.xlu0 2
      %813 = vperm.xlu0 %812, %v323
      %v814 = vpop.permute.xlu0 %813
      %816 = vset.pattern.permute.xlu0 2
      %817 = vperm.xlu0 %816, %v324
      %v818 = vpop.permute.xlu0 %817
      %820 = vset.pattern.permute.xlu0 2
      %821 = vperm.xlu0 %820, %v325
      %v822 = vpop.permute.xlu0 %821
      %824 = vset.pattern.permute.xlu0 2
      %825 = vperm.xlu0 %824, %v326
      %v826 = vpop.permute.xlu0 %825
      %828 = vset.pattern.permute.xlu0 2
      %829 = vperm.xlu0 %828, %v327
      %v830 = vpop.permute.xlu0 %829
      %832 = vset.pattern.permute.xlu0 2
      %833 = vperm.xlu0 %832, %v328
      %v834 = vpop.permute.xlu0 %833
      %836 = vset.pattern.permute.xlu0 2
      %837 = vperm.xlu0 %836, %v329
      %v838 = vpop.permute.xlu0 %837
      %840 = vset.pattern.permute.xlu0 2
      %841 = vperm.xlu0 %840, %v330
      %v842 = vpop.permute.xlu0 %841
      %844 = vset.pattern.permute.xlu0 2
      %845 = vperm.xlu0 %844, %v331
      %v846 = vpop.permute.xlu0 %845
      %848 = vset.pattern.permute.xlu0 2
      %849 = vperm.xlu0 %848, %v332
      %v850 = vpop.permute.xlu0 %849
      %852 = vset.pattern.permute.xlu0 2
      %853 = vperm.xlu0 %852, %v333
      %v854 = vpop.permute.xlu0 %853
      %856 = vset.pattern.permute.xlu0 2
      %857 = vperm.xlu0 %856, %v334
      %v858 = vpop.permute.xlu0 %857
      %860 = vset.pattern.permute.xlu0 2
      %861 = vperm.xlu0 %860, %v335
      %v862 = vpop.permute.xlu0 %861
      %864 = vset.pattern.permute.xlu0 2
      %865 = vperm.xlu0 %864, %v336
      %v866 = vpop.permute.xlu0 %865
      %868 = vset.pattern.permute.xlu0 2
      %869 = vperm.xlu0 %868, %v337
      %v870 = vpop.permute.xlu0 %869
      %872 = vset.pattern.permute.xlu0 2
      %873 = vperm.xlu0 %872, %v338
      %v874 = vpop.permute.xlu0 %873
      %876 = vset.pattern.permute.xlu0 2
      %877 = vperm.xlu0 %876, %v339
      %v878 = vpop.permute.xlu0 %877
      %880 = vset.pattern.permute.xlu0 2
      %881 = vperm.xlu0 %880, %v340
      %v882 = vpop.permute.xlu0 %881
      %884 = vset.pattern.permute.xlu0 2
      %885 = vperm.xlu0 %884, %v341
      %v886 = vpop.permute.xlu0 %885
      %888 = vset.pattern.permute.xlu0 2
      %889 = vperm.xlu0 %888, %v342
      %v890 = vpop.permute.xlu0 %889
      %892 = vset.pattern.permute.xlu0 2
      %893 = vperm.xlu0 %892, %v343
      %v894 = vpop.permute.xlu0 %893
      %896 = vset.pattern.permute.xlu0 2
      %897 = vperm.xlu0 %896, %v344
      %v898 = vpop.permute.xlu0 %897
      %900 = vset.pattern.permute.xlu0 2
      %901 = vperm.xlu0 %900, %v345
      %v902 = vpop.permute.xlu0 %901
      %904 = vset.pattern.permute.xlu0 2
      %905 = vperm.xlu0 %904, %v346
      %v906 = vpop.permute.xlu0 %905
      %v908 = vlaneseq
      %v909 = vshrl.u32 %v908, 7
      %v910 = vsub.s32 2, %v909
      %v911 = vrot.slane %v348, %v910
      %v912 = vmul.f32 %v782, %v911
      %v913 = vmul.f32 %v786, %v911
      %v914 = vmul.f32 %v790, %v911
      %v915 = vmul.f32 %v794, %v911
      %v916 = vmul.f32 %v798, %v911
      %v917 = vmul.f32 %v802, %v911
      %v918 = vmul.f32 %v806, %v911
      %v919 = vmul.f32 %v810, %v911
      %v920 = vmul.f32 %v814, %v911
      %v921 = vmul.f32 %v818, %v911
      %v922 = vmul.f32 %v822, %v911
      %v923 = vmul.f32 %v826, %v911
      %v924 = vmul.f32 %v830, %v911
      %v925 = vmul.f32 %v834, %v911
      %v926 = vmul.f32 %v838, %v911
      %v927 = vmul.f32 %v842, %v911
      %v928 = vmul.f32 %v846, %v911
      %v929 = vmul.f32 %v850, %v911
      %v930 = vmul.f32 %v854, %v911
      %v931 = vmul.f32 %v858, %v911
      %v932 = vmul.f32 %v862, %v911
      %v933 = vmul.f32 %v866, %v911
      %v934 = vmul.f32 %v870, %v911
      %v935 = vmul.f32 %v874, %v911
      %v936 = vmul.f32 %v878, %v911
      %v937 = vmul.f32 %v882, %v911
      %v938 = vmul.f32 %v886, %v911
      %v939 = vmul.f32 %v890, %v911
      %v940 = vmul.f32 %v894, %v911
      %v941 = vmul.f32 %v898, %v911
      %v942 = vmul.f32 %v902, %v911
      %v943 = vmul.f32 %v906, %v911
      %v944 = vadd.f32 %v748, %v912
      %v945 = vadd.f32 %v749, %v913
      %v946 = vadd.f32 %v750, %v914
      %v947 = vadd.f32 %v751, %v915
      %v948 = vadd.f32 %v752, %v916
      %v949 = vadd.f32 %v753, %v917
      %v950 = vadd.f32 %v754, %v918
      %v951 = vadd.f32 %v755, %v919
      %v952 = vadd.f32 %v756, %v920
      %v953 = vadd.f32 %v757, %v921
      %v954 = vadd.f32 %v758, %v922
      %v955 = vadd.f32 %v759, %v923
      %v956 = vadd.f32 %v760, %v924
      %v957 = vadd.f32 %v761, %v925
      %v958 = vadd.f32 %v762, %v926
      %v959 = vadd.f32 %v763, %v927
      %v960 = vadd.f32 %v764, %v928
      %v961 = vadd.f32 %v765, %v929
      %v962 = vadd.f32 %v766, %v930
      %v963 = vadd.f32 %v767, %v931
      %v964 = vadd.f32 %v768, %v932
      %v965 = vadd.f32 %v769, %v933
      %v966 = vadd.f32 %v770, %v934
      %v967 = vadd.f32 %v771, %v935
      %v968 = vadd.f32 %v772, %v936
      %v969 = vadd.f32 %v773, %v937
      %v970 = vadd.f32 %v774, %v938
      %v971 = vadd.f32 %v775, %v939
      %v972 = vadd.f32 %v776, %v940
      %v973 = vadd.f32 %v777, %v941
      %v974 = vadd.f32 %v778, %v942
      %v975 = vadd.f32 %v779, %v943
      %v976 = vmax.f32 %v944, 0.0
      %v977 = vmax.f32 %v945, 0.0
      %v978 = vmax.f32 %v946, 0.0
      %v979 = vmax.f32 %v947, 0.0
      %v980 = vmax.f32 %v948, 0.0
      %v981 = vmax.f32 %v949, 0.0
      %v982 = vmax.f32 %v950, 0.0
      %v983 = vmax.f32 %v951, 0.0
      %v984 = vmax.f32 %v952, 0.0
      %v985 = vmax.f32 %v953, 0.0
      %v986 = vmax.f32 %v954, 0.0
      %v987 = vmax.f32 %v955, 0.0
      %v988 = vmax.f32 %v956, 0.0
      %v989 = vmax.f32 %v957, 0.0
      %v990 = vmax.f32 %v958, 0.0
      %v991 = vmax.f32 %v959, 0.0
      %v992 = vmax.f32 %v960, 0.0
      %v993 = vmax.f32 %v961, 0.0
      %v994 = vmax.f32 %v962, 0.0
      %v995 = vmax.f32 %v963, 0.0
      %v996 = vmax.f32 %v964, 0.0
      %v997 = vmax.f32 %v965, 0.0
      %v998 = vmax.f32 %v966, 0.0
      %v999 = vmax.f32 %v967, 0.0
      %v1000 = vmax.f32 %v968, 0.0
      %v1001 = vmax.f32 %v969, 0.0
      %v1002 = vmax.f32 %v970, 0.0
      %v1003 = vmax.f32 %v971, 0.0
      %v1004 = vmax.f32 %v972, 0.0
      %v1005 = vmax.f32 %v973, 0.0
      %v1006 = vmax.f32 %v974, 0.0
      %v1007 = vmax.f32 %v975, 0.0
      %v1008 = vpack.c.bf16 %v977, %v976
      %v1009 = vpack.c.bf16 %v979, %v978
      %v1010 = vpack.c.bf16 %v981, %v980
      %v1011 = vpack.c.bf16 %v983, %v982
      %v1012 = vpack.c.bf16 %v985, %v984
      %v1013 = vpack.c.bf16 %v987, %v986
      %v1014 = vpack.c.bf16 %v989, %v988
      %v1015 = vpack.c.bf16 %v991, %v990
      %v1016 = vpack.c.bf16 %v993, %v992
      %v1017 = vpack.c.bf16 %v995, %v994
      %v1018 = vpack.c.bf16 %v997, %v996
      %v1019 = vpack.c.bf16 %v999, %v998
      %v1020 = vpack.c.bf16 %v1001, %v1000
      %v1021 = vpack.c.bf16 %v1003, %v1002
      %v1022 = vpack.c.bf16 %v1005, %v1004
      %v1023 = vpack.c.bf16 %v1007, %v1006
      %v1024 = vld [vmem:[%s3] sm:$0xf]
      %v1025 = vld [vmem:[%s3 + $0x4] sm:$0xf]
      %v1026 = vld [vmem:[%s3 + $0x8] sm:$0xf]
      %v1027 = vld [vmem:[%s3 + $0xc] sm:$0xf]
      %v1028 = vld [vmem:[%s3 + $0x10] sm:$0xf]
      %v1029 = vld [vmem:[%s3 + $0x14] sm:$0xf]
      %v1030 = vld [vmem:[%s3 + $0x18] sm:$0xf]
      %v1031 = vld [vmem:[%s3 + $0x1c] sm:$0xf]
      %v1032 = vld [vmem:[%s4] sm:$0x1]
      %v1034 = vlaneseq
      %v1035 = vshrl.u32 %v1034, 7
      %v1036 = vsub.s32 0, %v1035
      %v1037 = vrot.slane %v1032, %v1036
      %v1047 = vunpack.c.l.b16 %v1024
      %v1048 = vunpack.c.l.b16 %v1025
      %v1049 = vunpack.c.l.b16 %v1026
      %v1050 = vunpack.c.l.b16 %v1027
      %v1051 = vunpack.c.l.b16 %v1028
      %v1052 = vunpack.c.l.b16 %v1029
      %v1053 = vunpack.c.l.b16 %v1030
      %v1054 = vunpack.c.l.b16 %v1031
      %v1055 = vpack.c.b16 %v1048, %v1047
      %v1056 = vpack.c.b16 %v1050, %v1049
      %v1057 = vpack.c.b16 %v1052, %v1051
      %v1058 = vpack.c.b16 %v1054, %v1053
      %vm1063 = vcmask 523264
      %v1065 = vsel %vm1063, %v1008, 0
      %v1068 = vsel %vm1063, %v1009, 0
      %v1071 = vsel %vm1063, %v1010, 0
      %v1074 = vsel %vm1063, %v1011, 0
      %v1077 = vsel %vm1063, %v1012, 0
      %v1080 = vsel %vm1063, %v1013, 0
      %v1083 = vsel %vm1063, %v1014, 0
      %v1086 = vsel %vm1063, %v1015, 0
      %v1089 = vsel %vm1063, %v1016, 0
      %v1092 = vsel %vm1063, %v1017, 0
      %v1095 = vsel %vm1063, %v1018, 0
      %v1098 = vsel %vm1063, %v1019, 0
      %v1101 = vsel %vm1063, %v1020, 0
      %v1104 = vsel %vm1063, %v1021, 0
      %v1107 = vsel %vm1063, %v1022, 0
      %v1110 = vsel %vm1063, %v1023, 0
      %1112 = vmatprep.subr.bf16.mxu0 0
      %1113 = vmatpush1.bf16.msra.mxu0 0
      %1114 = vmatprep.subr.bf16.mxu0 0
      %1115 = vmatpush1.bf16.msra.mxu0 0
      %1116 = vmatprep.subr.bf16.mxu0 0
      %1117 = vmatpush1.bf16.msra.mxu0 0
      %1118 = vmatprep.subr.bf16.mxu0 0
      %1119 = vmatpush1.bf16.msra.mxu0 0
      %1120 = vmatprep.subr.bf16.mxu0 0
      %1121 = vmatpush1.bf16.msra.mxu0 %v1058
      %1122 = vmatprep.subr.bf16.mxu0 0
      %1123 = vmatpush1.bf16.msra.mxu0 %v1057
      %1124 = vmatprep.subr.bf16.mxu0 0
      %1125 = vmatpush1.bf16.msra.mxu0 %v1056
      %1126 = vmatprep.subr.bf16.mxu0 0
      %1127 = vmatpush1.bf16.msra.mxu0 %v1055
      %1128 = vmatprep.subr.bf16.mxu0 0
      %1129 = vmatpush2.bf16.msra.mxu0 0
      %1130 = vmatprep.subr.bf16.mxu0 0
      %1131 = vmatpush2.bf16.msra.mxu0 0
      %1132 = vmatprep.subr.bf16.mxu0 0
      %1133 = vmatpush2.bf16.msra.mxu0 0
      %1134 = vmatprep.subr.bf16.mxu0 0
      %1135 = vmatpush2.bf16.msra.mxu0 0
      %1136 = vmatprep.subr.bf16.mxu0 0
      %1137 = vmatpush2.bf16.msra.mxu0 0
      %1138 = vmatprep.subr.bf16.mxu0 0
      %1139 = vmatpush2.bf16.msra.mxu0 0
      %1140 = vmatprep.subr.bf16.mxu0 0
      %1141 = vmatpush2.bf16.msra.mxu0 0
      %1142 = vmatprep.subr.bf16.mxu0 0
      %1143 = vmatpush2.bf16.msra.mxu0 0
      %1144 = vmatprep.mubr.bf16.mxu0 0
      %1145 = vmatmul.mubr.bf16.gmra.mxu0 %v1065
      %v1146 = vpop.f32.mrf.mxu0
      %v1147 = vadd.f32 %v1037, %v1146
      %v1148 = vpop.f32.mrf.mxu0
      %v1149 = vpop.f32.mrf.mxu0
      %v1150 = vadd.f32 %v1037, %v1149
      %v1151 = vpop.f32.mrf.mxu0
      %1152 = vmatprep.mubr.bf16.mxu0 0
      %1153 = vmatmul.mubr.bf16.gmra.mxu0 %v1068
      %v1154 = vpop.f32.mrf.mxu0
      %v1155 = vadd.f32 %v1037, %v1154
      %v1156 = vpop.f32.mrf.mxu0
      %v1157 = vpop.f32.mrf.mxu0
      %v1158 = vadd.f32 %v1037, %v1157
      %v1159 = vpop.f32.mrf.mxu0
      %1160 = vmatprep.mubr.bf16.mxu0 0
      %1161 = vmatmul.mubr.bf16.gmra.mxu0 %v1071
      %v1162 = vpop.f32.mrf.mxu0
      %v1163 = vadd.f32 %v1037, %v1162
      %v1164 = vpop.f32.mrf.mxu0
      %v1165 = vpop.f32.mrf.mxu0
      %v1166 = vadd.f32 %v1037, %v1165
      %v1167 = vpop.f32.mrf.mxu0
      %1168 = vmatprep.mubr.bf16.mxu0 0
      %1169 = vmatmul.mubr.bf16.gmra.mxu0 %v1074
      %v1170 = vpop.f32.mrf.mxu0
      %v1171 = vadd.f32 %v1037, %v1170
      %v1172 = vpop.f32.mrf.mxu0
      %v1173 = vpop.f32.mrf.mxu0
      %v1174 = vadd.f32 %v1037, %v1173
      %v1175 = vpop.f32.mrf.mxu0
      %1176 = vmatprep.mubr.bf16.mxu0 0
      %1177 = vmatmul.mubr.bf16.gmra.mxu0 %v1077
      %v1178 = vpop.f32.mrf.mxu0
      %v1179 = vadd.f32 %v1037, %v1178
      %v1180 = vpop.f32.mrf.mxu0
      %v1181 = vpop.f32.mrf.mxu0
      %v1182 = vadd.f32 %v1037, %v1181
      %v1183 = vpop.f32.mrf.mxu0
      %1184 = vmatprep.mubr.bf16.mxu0 0
      %1185 = vmatmul.mubr.bf16.gmra.mxu0 %v1080
      %v1186 = vpop.f32.mrf.mxu0
      %v1187 = vadd.f32 %v1037, %v1186
      %v1188 = vpop.f32.mrf.mxu0
      %v1189 = vpop.f32.mrf.mxu0
      %v1190 = vadd.f32 %v1037, %v1189
      %v1191 = vpop.f32.mrf.mxu0
      %1192 = vmatprep.mubr.bf16.mxu0 0
      %1193 = vmatmul.mubr.bf16.gmra.mxu0 %v1083
      %v1194 = vpop.f32.mrf.mxu0
      %v1195 = vadd.f32 %v1037, %v1194
      %v1196 = vpop.f32.mrf.mxu0
      %v1197 = vpop.f32.mrf.mxu0
      %v1198 = vadd.f32 %v1037, %v1197
      %v1199 = vpop.f32.mrf.mxu0
      %1200 = vmatprep.mubr.bf16.mxu0 0
      %1201 = vmatmul.mubr.bf16.gmra.mxu0 %v1086
      %v1202 = vpop.f32.mrf.mxu0
      %v1203 = vadd.f32 %v1037, %v1202
      %v1204 = vpop.f32.mrf.mxu0
      %v1205 = vpop.f32.mrf.mxu0
      %v1206 = vadd.f32 %v1037, %v1205
      %v1207 = vpop.f32.mrf.mxu0
      %1208 = vmatprep.mubr.bf16.mxu0 0
      %1209 = vmatmul.mubr.bf16.gmra.mxu0 %v1089
      %v1210 = vpop.f32.mrf.mxu0
      %v1211 = vadd.f32 %v1037, %v1210
      %v1212 = vpop.f32.mrf.mxu0
      %v1213 = vpop.f32.mrf.mxu0
      %v1214 = vadd.f32 %v1037, %v1213
      %v1215 = vpop.f32.mrf.mxu0
      %1216 = vmatprep.mubr.bf16.mxu0 0
      %1217 = vmatmul.mubr.bf16.gmra.mxu0 %v1092
      %v1218 = vpop.f32.mrf.mxu0
      %v1219 = vadd.f32 %v1037, %v1218
      %v1220 = vpop.f32.mrf.mxu0
      %v1221 = vpop.f32.mrf.mxu0
      %v1222 = vadd.f32 %v1037, %v1221
      %v1223 = vpop.f32.mrf.mxu0
      %1224 = vmatprep.mubr.bf16.mxu0 0
      %1225 = vmatmul.mubr.bf16.gmra.mxu0 %v1095
      %v1226 = vpop.f32.mrf.mxu0
      %v1227 = vadd.f32 %v1037, %v1226
      %v1228 = vpop.f32.mrf.mxu0
      %v1229 = vpop.f32.mrf.mxu0
      %v1230 = vadd.f32 %v1037, %v1229
      %v1231 = vpop.f32.mrf.mxu0
      %1232 = vmatprep.mubr.bf16.mxu0 0
      %1233 = vmatmul.mubr.bf16.gmra.mxu0 %v1098
      %v1234 = vpop.f32.mrf.mxu0
      %v1235 = vadd.f32 %v1037, %v1234
      %v1236 = vpop.f32.mrf.mxu0
      %v1237 = vpop.f32.mrf.mxu0
      %v1238 = vadd.f32 %v1037, %v1237
      %v1239 = vpop.f32.mrf.mxu0
      %1240 = vmatprep.mubr.bf16.mxu0 0
      %1241 = vmatmul.mubr.bf16.gmra.mxu0 %v1101
      %v1242 = vpop.f32.mrf.mxu0
      %v1243 = vadd.f32 %v1037, %v1242
      %v1244 = vpop.f32.mrf.mxu0
      %v1245 = vpop.f32.mrf.mxu0
      %v1246 = vadd.f32 %v1037, %v1245
      %v1247 = vpop.f32.mrf.mxu0
      %1248 = vmatprep.mubr.bf16.mxu0 0
      %1249 = vmatmul.mubr.bf16.gmra.mxu0 %v1104
      %v1250 = vpop.f32.mrf.mxu0
      %v1251 = vadd.f32 %v1037, %v1250
      %v1252 = vpop.f32.mrf.mxu0
      %v1253 = vpop.f32.mrf.mxu0
      %v1254 = vadd.f32 %v1037, %v1253
      %v1255 = vpop.f32.mrf.mxu0
      %1256 = vmatprep.mubr.bf16.mxu0 0
      %1257 = vmatmul.mubr.bf16.gmra.mxu0 %v1107
      %v1258 = vpop.f32.mrf.mxu0
      %v1259 = vadd.f32 %v1037, %v1258
      %v1260 = vpop.f32.mrf.mxu0
      %v1261 = vpop.f32.mrf.mxu0
      %v1262 = vadd.f32 %v1037, %v1261
      %v1263 = vpop.f32.mrf.mxu0
      %1264 = vmatprep.mubr.bf16.mxu0 0
      %1265 = vmatmul.mubr.bf16.gmra.mxu0 %v1110
      %v1266 = vpop.f32.mrf.mxu0
      %v1267 = vadd.f32 %v1037, %v1266
      %v1268 = vpop.f32.mrf.mxu0
      %v1269 = vpop.f32.mrf.mxu0
      %v1270 = vadd.f32 %v1037, %v1269
      %v1271 = vpop.f32.mrf.mxu0
      %1272 = vdwg.mxu0
      %v1273 = vmax.f32 %v1147, 0.0
      %v1274 = vmax.f32 %v1150, 0.0
      %v1275 = vmax.f32 %v1155, 0.0
      %v1276 = vmax.f32 %v1158, 0.0
      %v1277 = vmax.f32 %v1163, 0.0
      %v1278 = vmax.f32 %v1166, 0.0
      %v1279 = vmax.f32 %v1171, 0.0
      %v1280 = vmax.f32 %v1174, 0.0
      %v1281 = vmax.f32 %v1179, 0.0
      %v1282 = vmax.f32 %v1182, 0.0
      %v1283 = vmax.f32 %v1187, 0.0
      %v1284 = vmax.f32 %v1190, 0.0
      %v1285 = vmax.f32 %v1195, 0.0
      %v1286 = vmax.f32 %v1198, 0.0
      %v1287 = vmax.f32 %v1203, 0.0
      %v1288 = vmax.f32 %v1206, 0.0
      %v1289 = vmax.f32 %v1211, 0.0
      %v1290 = vmax.f32 %v1214, 0.0
      %v1291 = vmax.f32 %v1219, 0.0
      %v1292 = vmax.f32 %v1222, 0.0
      %v1293 = vmax.f32 %v1227, 0.0
      %v1294 = vmax.f32 %v1230, 0.0
      %v1295 = vmax.f32 %v1235, 0.0
      %v1296 = vmax.f32 %v1238, 0.0
      %v1297 = vmax.f32 %v1243, 0.0
      %v1298 = vmax.f32 %v1246, 0.0
      %v1299 = vmax.f32 %v1251, 0.0
      %v1300 = vmax.f32 %v1254, 0.0
      %v1301 = vmax.f32 %v1259, 0.0
      %v1302 = vmax.f32 %v1262, 0.0
      %v1303 = vmax.f32 %v1267, 0.0
      %v1304 = vmax.f32 %v1270, 0.0
      %v1305 = vpack.c.bf16 %v1274, %v1273
      %v1306 = vpack.c.bf16 %v1276, %v1275
      %v1307 = vpack.c.bf16 %v1278, %v1277
      %v1308 = vpack.c.bf16 %v1280, %v1279
      %v1309 = vpack.c.bf16 %v1282, %v1281
      %v1310 = vpack.c.bf16 %v1284, %v1283
      %v1311 = vpack.c.bf16 %v1286, %v1285
      %v1312 = vpack.c.bf16 %v1288, %v1287
      %v1313 = vpack.c.bf16 %v1290, %v1289
      %v1314 = vpack.c.bf16 %v1292, %v1291
      %v1315 = vpack.c.bf16 %v1294, %v1293
      %v1316 = vpack.c.bf16 %v1296, %v1295
      %v1317 = vpack.c.bf16 %v1298, %v1297
      %v1318 = vpack.c.bf16 %v1300, %v1299
      %v1319 = vpack.c.bf16 %v1302, %v1301
      %v1320 = vpack.c.bf16 %v1304, %v1303
      %v1321 = vld [vmem:[%s5] sm:$0xf]
      %v1322 = vld [vmem:[%s5 + $0x4] sm:$0xf]
      %v1323 = vld [vmem:[%s5 + $0x8] sm:$0xf]
      %v1324 = vld [vmem:[%s5 + $0xc] sm:$0xf]
      %v1325 = vld [vmem:[%s5 + $0x10] sm:$0xf]
      %v1326 = vld [vmem:[%s5 + $0x14] sm:$0xf]
      %v1327 = vld [vmem:[%s5 + $0x18] sm:$0xf]
      %v1328 = vld [vmem:[%s5 + $0x1c] sm:$0xf]
      %v1329 = vld [vmem:[%s6] sm:$0x1]
      %v1331 = vlaneseq
      %v1332 = vshrl.u32 %v1331, 7
      %v1333 = vsub.s32 0, %v1332
      %v1334 = vrot.slane %v1329, %v1333
      %v1344 = vunpack.c.l.b16 %v1321
      %v1345 = vunpack.c.l.b16 %v1322
      %v1346 = vunpack.c.l.b16 %v1323
      %v1347 = vunpack.c.l.b16 %v1324
      %v1348 = vunpack.c.l.b16 %v1325
      %v1349 = vunpack.c.l.b16 %v1326
      %v1350 = vunpack.c.l.b16 %v1327
      %v1351 = vunpack.c.l.b16 %v1328
      %v1352 = vpack.c.b16 %v1345, %v1344
      %v1353 = vpack.c.b16 %v1347, %v1346
      %v1354 = vpack.c.b16 %v1349, %v1348
      %v1355 = vpack.c.b16 %v1351, %v1350
      %v1361 = vsel %vm1063, %v1305, 0
      %v1364 = vsel %vm1063, %v1306, 0
      %v1367 = vsel %vm1063, %v1307, 0
      %v1370 = vsel %vm1063, %v1308, 0
      %v1373 = vsel %vm1063, %v1309, 0
      %v1376 = vsel %vm1063, %v1310, 0
      %v1379 = vsel %vm1063, %v1311, 0
      %v1382 = vsel %vm1063, %v1312, 0
      %v1385 = vsel %vm1063, %v1313, 0
      %v1388 = vsel %vm1063, %v1314, 0
      %v1391 = vsel %vm1063, %v1315, 0
      %v1394 = vsel %vm1063, %v1316, 0
      %v1397 = vsel %vm1063, %v1317, 0
      %v1400 = vsel %vm1063, %v1318, 0
      %v1403 = vsel %vm1063, %v1319, 0
      %v1406 = vsel %vm1063, %v1320, 0
      %1408 = vmatprep.subr.bf16.mxu0 0
      %1409 = vmatpush1.bf16.msra.mxu0 0
      %1410 = vmatprep.subr.bf16.mxu0 0
      %1411 = vmatpush1.bf16.msra.mxu0 0
      %1412 = vmatprep.subr.bf16.mxu0 0
      %1413 = vmatpush1.bf16.msra.mxu0 0
      %1414 = vmatprep.subr.bf16.mxu0 0
      %1415 = vmatpush1.bf16.msra.mxu0 0
      %1416 = vmatprep.subr.bf16.mxu0 0
      %1417 = vmatpush1.bf16.msra.mxu0 %v1355
      %1418 = vmatprep.subr.bf16.mxu0 0
      %1419 = vmatpush1.bf16.msra.mxu0 %v1354
      %1420 = vmatprep.subr.bf16.mxu0 0
      %1421 = vmatpush1.bf16.msra.mxu0 %v1353
      %1422 = vmatprep.subr.bf16.mxu0 0
      %1423 = vmatpush1.bf16.msra.mxu0 %v1352
      %1424 = vmatprep.subr.bf16.mxu0 0
      %1425 = vmatpush2.bf16.msra.mxu0 0
      %1426 = vmatprep.subr.bf16.mxu0 0
      %1427 = vmatpush2.bf16.msra.mxu0 0
      %1428 = vmatprep.subr.bf16.mxu0 0
      %1429 = vmatpush2.bf16.msra.mxu0 0
      %1430 = vmatprep.subr.bf16.mxu0 0
      %1431 = vmatpush2.bf16.msra.mxu0 0
      %1432 = vmatprep.subr.bf16.mxu0 0
      %1433 = vmatpush2.bf16.msra.mxu0 0
      %1434 = vmatprep.subr.bf16.mxu0 0
      %1435 = vmatpush2.bf16.msra.mxu0 0
      %1436 = vmatprep.subr.bf16.mxu0 0
      %1437 = vmatpush2.bf16.msra.mxu0 0
      %1438 = vmatprep.subr.bf16.mxu0 0
      %1439 = vmatpush2.bf16.msra.mxu0 0
      %1440 = vmatprep.mubr.bf16.mxu0 0
      %1441 = vmatmul.mubr.bf16.gmra.mxu0 %v1361
      %v1442 = vpop.f32.mrf.mxu0
      %v1443 = vadd.f32 %v1334, %v1442
      %v1444 = vpop.f32.mrf.mxu0
      %v1445 = vpop.f32.mrf.mxu0
      %v1446 = vadd.f32 %v1334, %v1445
      %v1447 = vpop.f32.mrf.mxu0
      %1448 = vmatprep.mubr.bf16.mxu0 0
      %1449 = vmatmul.mubr.bf16.gmra.mxu0 %v1364
      %v1450 = vpop.f32.mrf.mxu0
      %v1451 = vadd.f32 %v1334, %v1450
      %v1452 = vpop.f32.mrf.mxu0
      %v1453 = vpop.f32.mrf.mxu0
      %v1454 = vadd.f32 %v1334, %v1453
      %v1455 = vpop.f32.mrf.mxu0
      %1456 = vmatprep.mubr.bf16.mxu0 0
      %1457 = vmatmul.mubr.bf16.gmra.mxu0 %v1367
      %v1458 = vpop.f32.mrf.mxu0
      %v1459 = vadd.f32 %v1334, %v1458
      %v1460 = vpop.f32.mrf.mxu0
      %v1461 = vpop.f32.mrf.mxu0
      %v1462 = vadd.f32 %v1334, %v1461
      %v1463 = vpop.f32.mrf.mxu0
      %1464 = vmatprep.mubr.bf16.mxu0 0
      %1465 = vmatmul.mubr.bf16.gmra.mxu0 %v1370
      %v1466 = vpop.f32.mrf.mxu0
      %v1467 = vadd.f32 %v1334, %v1466
      %v1468 = vpop.f32.mrf.mxu0
      %v1469 = vpop.f32.mrf.mxu0
      %v1470 = vadd.f32 %v1334, %v1469
      %v1471 = vpop.f32.mrf.mxu0
      %1472 = vmatprep.mubr.bf16.mxu0 0
      %1473 = vmatmul.mubr.bf16.gmra.mxu0 %v1373
      %v1474 = vpop.f32.mrf.mxu0
      %v1475 = vadd.f32 %v1334, %v1474
      %v1476 = vpop.f32.mrf.mxu0
      %v1477 = vpop.f32.mrf.mxu0
      %v1478 = vadd.f32 %v1334, %v1477
      %v1479 = vpop.f32.mrf.mxu0
      %1480 = vmatprep.mubr.bf16.mxu0 0
      %1481 = vmatmul.mubr.bf16.gmra.mxu0 %v1376
      %v1482 = vpop.f32.mrf.mxu0
      %v1483 = vadd.f32 %v1334, %v1482
      %v1484 = vpop.f32.mrf.mxu0
      %v1485 = vpop.f32.mrf.mxu0
      %v1486 = vadd.f32 %v1334, %v1485
      %v1487 = vpop.f32.mrf.mxu0
      %1488 = vmatprep.mubr.bf16.mxu0 0
      %1489 = vmatmul.mubr.bf16.gmra.mxu0 %v1379
      %v1490 = vpop.f32.mrf.mxu0
      %v1491 = vadd.f32 %v1334, %v1490
      %v1492 = vpop.f32.mrf.mxu0
      %v1493 = vpop.f32.mrf.mxu0
      %v1494 = vadd.f32 %v1334, %v1493
      %v1495 = vpop.f32.mrf.mxu0
      %1496 = vmatprep.mubr.bf16.mxu0 0
      %1497 = vmatmul.mubr.bf16.gmra.mxu0 %v1382
      %v1498 = vpop.f32.mrf.mxu0
      %v1499 = vadd.f32 %v1334, %v1498
      %v1500 = vpop.f32.mrf.mxu0
      %v1501 = vpop.f32.mrf.mxu0
      %v1502 = vadd.f32 %v1334, %v1501
      %v1503 = vpop.f32.mrf.mxu0
      %1504 = vmatprep.mubr.bf16.mxu0 0
      %1505 = vmatmul.mubr.bf16.gmra.mxu0 %v1385
      %v1506 = vpop.f32.mrf.mxu0
      %v1507 = vadd.f32 %v1334, %v1506
      %v1508 = vpop.f32.mrf.mxu0
      %v1509 = vpop.f32.mrf.mxu0
      %v1510 = vadd.f32 %v1334, %v1509
      %v1511 = vpop.f32.mrf.mxu0
      %1512 = vmatprep.mubr.bf16.mxu0 0
      %1513 = vmatmul.mubr.bf16.gmra.mxu0 %v1388
      %v1514 = vpop.f32.mrf.mxu0
      %v1515 = vadd.f32 %v1334, %v1514
      %v1516 = vpop.f32.mrf.mxu0
      %v1517 = vpop.f32.mrf.mxu0
      %v1518 = vadd.f32 %v1334, %v1517
      %v1519 = vpop.f32.mrf.mxu0
      %1520 = vmatprep.mubr.bf16.mxu0 0
      %1521 = vmatmul.mubr.bf16.gmra.mxu0 %v1391
      %v1522 = vpop.f32.mrf.mxu0
      %v1523 = vadd.f32 %v1334, %v1522
      %v1524 = vpop.f32.mrf.mxu0
      %v1525 = vpop.f32.mrf.mxu0
      %v1526 = vadd.f32 %v1334, %v1525
      %v1527 = vpop.f32.mrf.mxu0
      %1528 = vmatprep.mubr.bf16.mxu0 0
      %1529 = vmatmul.mubr.bf16.gmra.mxu0 %v1394
      %v1530 = vpop.f32.mrf.mxu0
      %v1531 = vadd.f32 %v1334, %v1530
      %v1532 = vpop.f32.mrf.mxu0
      %v1533 = vpop.f32.mrf.mxu0
      %v1534 = vadd.f32 %v1334, %v1533
      %v1535 = vpop.f32.mrf.mxu0
      %1536 = vmatprep.mubr.bf16.mxu0 0
      %1537 = vmatmul.mubr.bf16.gmra.mxu0 %v1397
      %v1538 = vpop.f32.mrf.mxu0
      %v1539 = vadd.f32 %v1334, %v1538
      %v1540 = vpop.f32.mrf.mxu0
      %v1541 = vpop.f32.mrf.mxu0
      %v1542 = vadd.f32 %v1334, %v1541
      %v1543 = vpop.f32.mrf.mxu0
      %1544 = vmatprep.mubr.bf16.mxu0 0
      %1545 = vmatmul.mubr.bf16.gmra.mxu0 %v1400
      %v1546 = vpop.f32.mrf.mxu0
      %v1547 = vadd.f32 %v1334, %v1546
      %v1548 = vpop.f32.mrf.mxu0
      %v1549 = vpop.f32.mrf.mxu0
      %v1550 = vadd.f32 %v1334, %v1549
      %v1551 = vpop.f32.mrf.mxu0
      %1552 = vmatprep.mubr.bf16.mxu0 0
      %1553 = vmatmul.mubr.bf16.gmra.mxu0 %v1403
      %v1554 = vpop.f32.mrf.mxu0
      %v1555 = vadd.f32 %v1334, %v1554
      %v1556 = vpop.f32.mrf.mxu0
      %v1557 = vpop.f32.mrf.mxu0
      %v1558 = vadd.f32 %v1334, %v1557
      %v1559 = vpop.f32.mrf.mxu0
      %1560 = vmatprep.mubr.bf16.mxu0 0
      %1561 = vmatmul.mubr.bf16.gmra.mxu0 %v1406
      %v1562 = vpop.f32.mrf.mxu0
      %v1563 = vadd.f32 %v1334, %v1562
      %v1564 = vpop.f32.mrf.mxu0
      %v1565 = vpop.f32.mrf.mxu0
      %v1566 = vadd.f32 %v1334, %v1565
      %v1567 = vpop.f32.mrf.mxu0
      %1568 = vdwg.mxu0
      %v1569 = vmax.f32 %v1443, 0.0
      %v1570 = vmax.f32 %v1446, 0.0
      %v1571 = vmax.f32 %v1451, 0.0
      %v1572 = vmax.f32 %v1454, 0.0
      %v1573 = vmax.f32 %v1459, 0.0
      %v1574 = vmax.f32 %v1462, 0.0
      %v1575 = vmax.f32 %v1467, 0.0
      %v1576 = vmax.f32 %v1470, 0.0
      %v1577 = vmax.f32 %v1475, 0.0
      %v1578 = vmax.f32 %v1478, 0.0
      %v1579 = vmax.f32 %v1483, 0.0
      %v1580 = vmax.f32 %v1486, 0.0
      %v1581 = vmax.f32 %v1491, 0.0
      %v1582 = vmax.f32 %v1494, 0.0
      %v1583 = vmax.f32 %v1499, 0.0
      %v1584 = vmax.f32 %v1502, 0.0
      %v1585 = vmax.f32 %v1507, 0.0
      %v1586 = vmax.f32 %v1510, 0.0
      %v1587 = vmax.f32 %v1515, 0.0
      %v1588 = vmax.f32 %v1518, 0.0
      %v1589 = vmax.f32 %v1523, 0.0
      %v1590 = vmax.f32 %v1526, 0.0
      %v1591 = vmax.f32 %v1531, 0.0
      %v1592 = vmax.f32 %v1534, 0.0
      %v1593 = vmax.f32 %v1539, 0.0
      %v1594 = vmax.f32 %v1542, 0.0
      %v1595 = vmax.f32 %v1547, 0.0
      %v1596 = vmax.f32 %v1550, 0.0
      %v1597 = vmax.f32 %v1555, 0.0
      %v1598 = vmax.f32 %v1558, 0.0
      %v1599 = vmax.f32 %v1563, 0.0
      %v1600 = vmax.f32 %v1566, 0.0
      %v1601 = vmax.f32 %v1569, %v1570
      %v1602 = vrot.slane %v1601, 4
      %v1603 = vmax.f32 %v1601, %v1602
      %v1604 = vrot.slane %v1603, 2
      %v1605 = vmax.f32 %v1603, %v1604
      %v1606 = vrot.slane %v1605, 1
      %v1607 = vmax.f32 %v1605, %v1606
      %v1608 = vmax.f32 %v1571, %v1572
      %v1609 = vrot.slane %v1608, 4
      %v1610 = vmax.f32 %v1608, %v1609
      %v1611 = vrot.slane %v1610, 2
      %v1612 = vmax.f32 %v1610, %v1611
      %v1613 = vrot.slane %v1612, 1
      %v1614 = vmax.f32 %v1612, %v1613
      %v1615 = vmax.f32 %v1573, %v1574
      %v1616 = vrot.slane %v1615, 4
      %v1617 = vmax.f32 %v1615, %v1616
      %v1618 = vrot.slane %v1617, 2
      %v1619 = vmax.f32 %v1617, %v1618
      %v1620 = vrot.slane %v1619, 1
      %v1621 = vmax.f32 %v1619, %v1620
      %v1622 = vmax.f32 %v1575, %v1576
      %v1623 = vrot.slane %v1622, 4
      %v1624 = vmax.f32 %v1622, %v1623
      %v1625 = vrot.slane %v1624, 2
      %v1626 = vmax.f32 %v1624, %v1625
      %v1627 = vrot.slane %v1626, 1
      %v1628 = vmax.f32 %v1626, %v1627
      %v1629 = vmax.f32 %v1577, %v1578
      %v1630 = vrot.slane %v1629, 4
      %v1631 = vmax.f32 %v1629, %v1630
      %v1632 = vrot.slane %v1631, 2
      %v1633 = vmax.f32 %v1631, %v1632
      %v1634 = vrot.slane %v1633, 1
      %v1635 = vmax.f32 %v1633, %v1634
      %v1636 = vmax.f32 %v1579, %v1580
      %v1637 = vrot.slane %v1636, 4
      %v1638 = vmax.f32 %v1636, %v1637
      %v1639 = vrot.slane %v1638, 2
      %v1640 = vmax.f32 %v1638, %v1639
      %v1641 = vrot.slane %v1640, 1
      %v1642 = vmax.f32 %v1640, %v1641
      %v1643 = vmax.f32 %v1581, %v1582
      %v1644 = vrot.slane %v1643, 4
      %v1645 = vmax.f32 %v1643, %v1644
      %v1646 = vrot.slane %v1645, 2
      %v1647 = vmax.f32 %v1645, %v1646
      %v1648 = vrot.slane %v1647, 1
      %v1649 = vmax.f32 %v1647, %v1648
      %v1650 = vmax.f32 %v1583, %v1584
      %v1651 = vrot.slane %v1650, 4
      %v1652 = vmax.f32 %v1650, %v1651
      %v1653 = vrot.slane %v1652, 2
      %v1654 = vmax.f32 %v1652, %v1653
      %v1655 = vrot.slane %v1654, 1
      %v1656 = vmax.f32 %v1654, %v1655
      %v1657 = vmax.f32 %v1585, %v1586
      %v1658 = vrot.slane %v1657, 4
      %v1659 = vmax.f32 %v1657, %v1658
      %v1660 = vrot.slane %v1659, 2
      %v1661 = vmax.f32 %v1659, %v1660
      %v1662 = vrot.slane %v1661, 1
      %v1663 = vmax.f32 %v1661, %v1662
      %v1664 = vmax.f32 %v1587, %v1588
      %v1665 = vrot.slane %v1664, 4
      %v1666 = vmax.f32 %v1664, %v1665
      %v1667 = vrot.slane %v1666, 2
      %v1668 = vmax.f32 %v1666, %v1667
      %v1669 = vrot.slane %v1668, 1
      %v1670 = vmax.f32 %v1668, %v1669
      %v1671 = vmax.f32 %v1589, %v1590
      %v1672 = vrot.slane %v1671, 4
      %v1673 = vmax.f32 %v1671, %v1672
      %v1674 = vrot.slane %v1673, 2
      %v1675 = vmax.f32 %v1673, %v1674
      %v1676 = vrot.slane %v1675, 1
      %v1677 = vmax.f32 %v1675, %v1676
      %v1678 = vmax.f32 %v1591, %v1592
      %v1679 = vrot.slane %v1678, 4
      %v1680 = vmax.f32 %v1678, %v1679
      %v1681 = vrot.slane %v1680, 2
      %v1682 = vmax.f32 %v1680, %v1681
      %v1683 = vrot.slane %v1682, 1
      %v1684 = vmax.f32 %v1682, %v1683
      %v1685 = vmax.f32 %v1593, %v1594
      %v1686 = vrot.slane %v1685, 4
      %v1687 = vmax.f32 %v1685, %v1686
      %v1688 = vrot.slane %v1687, 2
      %v1689 = vmax.f32 %v1687, %v1688
      %v1690 = vrot.slane %v1689, 1
      %v1691 = vmax.f32 %v1689, %v1690
      %v1692 = vmax.f32 %v1595, %v1596
      %v1693 = vrot.slane %v1692, 4
      %v1694 = vmax.f32 %v1692, %v1693
      %v1695 = vrot.slane %v1694, 2
      %v1696 = vmax.f32 %v1694, %v1695
      %v1697 = vrot.slane %v1696, 1
      %v1698 = vmax.f32 %v1696, %v1697
      %v1699 = vmax.f32 %v1597, %v1598
      %v1700 = vrot.slane %v1699, 4
      %v1701 = vmax.f32 %v1699, %v1700
      %v1702 = vrot.slane %v1701, 2
      %v1703 = vmax.f32 %v1701, %v1702
      %v1704 = vrot.slane %v1703, 1
      %v1705 = vmax.f32 %v1703, %v1704
      %v1706 = vmax.f32 %v1599, %v1600
      %v1707 = vrot.slane %v1706, 4
      %v1708 = vmax.f32 %v1706, %v1707
      %v1709 = vrot.slane %v1708, 2
      %v1710 = vmax.f32 %v1708, %v1709
      %v1711 = vrot.slane %v1710, 1
      %v1712 = vmax.f32 %v1710, %v1711
      %v1713 = vpack.c.bf16 %v1607, %v1607
      %v1714 = vpack.c.bf16 %v1614, %v1614
      %v1715 = vpack.c.bf16 %v1621, %v1621
      %v1716 = vpack.c.bf16 %v1628, %v1628
      %v1717 = vpack.c.bf16 %v1635, %v1635
      %v1718 = vpack.c.bf16 %v1642, %v1642
      %v1719 = vpack.c.bf16 %v1649, %v1649
      %v1720 = vpack.c.bf16 %v1656, %v1656
      %v1721 = vpack.c.bf16 %v1663, %v1663
      %v1722 = vpack.c.bf16 %v1670, %v1670
      %v1723 = vpack.c.bf16 %v1677, %v1677
      %v1724 = vpack.c.bf16 %v1684, %v1684
      %v1725 = vpack.c.bf16 %v1691, %v1691
      %v1726 = vpack.c.bf16 %v1698, %v1698
      %v1727 = vpack.c.bf16 %v1705, %v1705
      %v1728 = vpack.c.bf16 %v1712, %v1712
      %v1745 = vunpack.c.l.b16 %v1713
      %v1746 = vunpack.c.l.b16 %v1714
      %v1747 = vunpack.c.l.b16 %v1715
      %v1748 = vunpack.c.l.b16 %v1716
      %v1749 = vunpack.c.l.b16 %v1717
      %v1750 = vunpack.c.l.b16 %v1718
      %v1751 = vunpack.c.l.b16 %v1719
      %v1752 = vunpack.c.l.b16 %v1720
      %v1753 = vunpack.c.l.b16 %v1721
      %v1754 = vunpack.c.l.b16 %v1722
      %v1755 = vunpack.c.l.b16 %v1723
      %v1756 = vunpack.c.l.b16 %v1724
      %v1757 = vunpack.c.l.b16 %v1725
      %v1758 = vunpack.c.l.b16 %v1726
      %v1759 = vunpack.c.l.b16 %v1727
      %v1760 = vunpack.c.l.b16 %v1728
      %v1761 = vpack.c.b16 %v1745, %v1745
      %v1762 = vpack.c.b16 %v1746, %v1746
      %v1763 = vpack.c.b16 %v1747, %v1747
      %v1764 = vpack.c.b16 %v1748, %v1748
      %v1765 = vpack.c.b16 %v1749, %v1749
      %v1766 = vpack.c.b16 %v1750, %v1750
      %v1767 = vpack.c.b16 %v1751, %v1751
      %v1768 = vpack.c.b16 %v1752, %v1752
      %v1769 = vpack.c.b16 %v1753, %v1753
      %v1770 = vpack.c.b16 %v1754, %v1754
      %v1771 = vpack.c.b16 %v1755, %v1755
      %v1772 = vpack.c.b16 %v1756, %v1756
      %v1773 = vpack.c.b16 %v1757, %v1757
      %v1774 = vpack.c.b16 %v1758, %v1758
      %v1775 = vpack.c.b16 %v1759, %v1759
      %v1776 = vpack.c.b16 %v1760, %v1760
      %v1777 = vunpack.c.l.b16 %v1761
      %v1778 = vunpack.c.l.b16 %v1762
      %v1779 = vunpack.c.l.b16 %v1763
      %v1780 = vunpack.c.l.b16 %v1764
      %v1781 = vunpack.c.l.b16 %v1765
      %v1782 = vunpack.c.l.b16 %v1766
      %v1783 = vunpack.c.l.b16 %v1767
      %v1784 = vunpack.c.l.b16 %v1768
      %v1785 = vunpack.c.l.b16 %v1769
      %v1786 = vunpack.c.l.b16 %v1770
      %v1787 = vunpack.c.l.b16 %v1771
      %v1788 = vunpack.c.l.b16 %v1772
      %v1789 = vunpack.c.l.b16 %v1773
      %v1790 = vunpack.c.l.b16 %v1774
      %v1791 = vunpack.c.l.b16 %v1775
      %v1792 = vunpack.c.l.b16 %v1776
      %vm1793 = vcmask 1041409
      %v1794 = vsel %vm1793, %v1778, %v1777
      %vm1795 = vcmask 1042434
      %v1796 = vsel %vm1795, %v1779, %v1794
      %vm1797 = vcmask 1043459
      %v1798 = vsel %vm1797, %v1780, %v1796
      %vm1799 = vcmask 1044484
      %v1800 = vsel %vm1799, %v1781, %v1798
      %vm1801 = vcmask 1045509
      %v1802 = vsel %vm1801, %v1782, %v1800
      %vm1803 = vcmask 1046534
      %v1804 = vsel %vm1803, %v1783, %v1802
      %vm1805 = vcmask 1047559
      %v1806 = vsel %vm1805, %v1784, %v1804
      %v1807 = vsel %vm1793, %v1786, %v1785
      %v1808 = vsel %vm1795, %v1787, %v1807
      %v1809 = vsel %vm1797, %v1788, %v1808
      %v1810 = vsel %vm1799, %v1789, %v1809
      %v1811 = vsel %vm1801, %v1790, %v1810
      %v1812 = vsel %vm1803, %v1791, %v1811
      %v1813 = vsel %vm1805, %v1792, %v1812
      %v1814 = vpack.c.b16 %v1806, %v1806
      %v1815 = vpack.c.b16 %v1813, %v1813
      %1818 = vst [vmem:[%s280] sm:$0xf] %v1814
      %1819 = vst [vmem:[%s280 + $0x4] sm:$0xf] %v1815
      %s1820 = smul.u32 2, %s18
      %p1821 = scmp.lt.s32.totalorder %s1820, 7
      %s1822 = scalar_select %p1821, %s1820, 7
      %s1823 = smul.addr %s1822, 4
      %s1824 = scalar_lea.vmem %s7, %s1823
      // Predicated region
      $region49: #{pointnet2_forward.3} parent=47 // pred_check
        %p1825 = pneg %p188
      $region50: #{pointnet2_forward.3} parent=47 // pred_check_branch
        %1827 = sbr.rel (%p1825) target = $region52
      $region51: #{pointnet2_forward.3} parent=47 // pred_region
        %s1828 = smul.u32 2, %s18
      $region52: #{pointnet2_forward.3} parent=47 // pred_fallthru
        _
    $region48: #{pointnet2_forward.3} parent=5 // pred_fallthru
      _
    %p1829 = scmp.le.s32.totalorder 2, %s13
    // Predicated region
    $region53: #{pointnet2_forward.3} parent=5 // pred_check
      %p1830 = pneg %p1829
    $region54: #{pointnet2_forward.3} parent=5 // pred_check_branch
      %1832 = sbr.rel (%p1830) target = $region56
    $region55: #{pointnet2_forward.3} parent=5 // pred_region
      %s1833 = ssub.s32 %s13, 2
      // Predicated region
      $region57: #{pointnet2_forward.3} parent=55 // pred_check
        %p1834 = pneg %p194
      $region58: #{pointnet2_forward.3} parent=55 // pred_check_branch
        %1836 = sbr.rel (%p1834) target = $region60
      $region59: #{pointnet2_forward.3} parent=55 // pred_region
        %s1837 = smul.u32 2, %s19
        %p1838 = scmp.lt.s32.totalorder %s1837, 7
        %s1839 = scalar_select %p1838, %s1837, 7
        %s1840 = smul.addr %s1839, 4
        %s1841 = scalar_lea.vmem %s7, %s1840
      $region60: #{pointnet2_forward.3} parent=55 // pred_fallthru
        _
    $region56: #{pointnet2_forward.3} parent=5 // pred_fallthru
      _
  $region6: #{pointnet2_forward.3} parent=0 // loop_footer
    %s17 = sadd.s32 1, %s13
  $region7: #{pointnet2_forward.3} parent=0 // loop_footer_branch
    %12 = sbr.rel target = $region3
  $region8: #{pointnet2_forward.3} parent=0 // loop_exit
    _

// kernel: pointnet2_forward.4
$region0: #{pointnet2_forward.4}
  #allocation0 [shape = 'u32[]', space=smem, size = 0x4, offset = 0x4, fixed_abs, tag = 'smem constant byte address 0x4 - core index']
  #allocation1 [shape = 'u32[144,128]{1,0:T(1,128)}', space=vmem, size = 0x12000, scoped, tag = 'internal scratch']
  %s0 = inlined_call_operand.vmem [shape: bf16[512,256], index: 0, kind: input, shape index: {}]
  %s1 = inlined_call_operand.vmem [shape: bf16[256,128], index: 1, kind: input, shape index: {}]
  %s2 = inlined_call_operand.vmem [shape: f32[1,128], index: 2, kind: input, shape index: {}]
  %s3 = inlined_call_operand.vmem [shape: bf16[128,128], index: 3, kind: input, shape index: {}]
  %s4 = inlined_call_operand.vmem [shape: f32[1,128], index: 4, kind: input, shape index: {}]
  %s5 = inlined_call_operand.vmem [shape: bf16[128,256], index: 5, kind: input, shape index: {}]
  %s6 = inlined_call_operand.vmem [shape: f32[1,256], index: 6, kind: input, shape index: {}]
  %s7 = inlined_call_operand.vmem [shape: bf16[32,256], index: 7, kind: output, shape index: {}]
  %s8 = sld [smem:[#allocation0]]
  $region61: #{pointnet2_forward.4} parent=0
    _
  %s10 = ssub.s32 1, %s8
  %s11 = scalar_select 0, %s10, %s8
  loop: start=0, step=1, limit=6
  $region2: #{pointnet2_forward.4} parent=0 // loop_pre_header
    _
  $region3: #{pointnet2_forward.4} parent=0 // loop_header
    %s13 = sphi 0, %s17
    %p14 = scmp.ge.s32.totalorder %s13, 6
    %s23 = sphi 0, %s25
    %s26 = sphi 0, %s23
    %s27 = sphi 0, %s26
    %s43 = sphi 0, %s27
    %s47 = sphi 0, %s47
    %s49 = sphi 0, %s47
    %s50 = sphi 0, %s49
    %s64 = sphi 0, %s50
    %s68 = sphi 0, %s68
    %s70 = sphi 0, %s68
    %s71 = sphi 0, %s70
    %s85 = sphi 0, %s71
    %s89 = sphi 0, %s89
    %s91 = sphi 0, %s89
    %s92 = sphi 0, %s91
    %s106 = sphi 0, %s92
    %s110 = sphi 0, %s110
    %s112 = sphi 0, %s110
    %s113 = sphi 0, %s112
    %s127 = sphi 0, %s113
    %s131 = sphi 0, %s131
    %s133 = sphi 0, %s131
    %s134 = sphi 0, %s133
    %s148 = sphi 0, %s134
    %s152 = sphi 0, %s152
    %s154 = sphi 0, %s152
    %s155 = sphi 0, %s154
    %s169 = sphi 0, %s155
    %s175 = sphi 0, %s177
    %s178 = sphi 0, %s175
    %s179 = sphi 0, %s178
    %s195 = sphi 0, %s179
  $region4: #{pointnet2_forward.4} parent=0 // loop_header_branch
    %16 = sbr.rel (%p14) target = $region8
  $region5: #{pointnet2_forward.4} parent=0 // loop_body
    %s18 = ssub.s32 %s13, 1
    %s19 = ssub.s32 %s13, 2
    %s20 = sadd.s32 %s13, 1
    %s21 = ssub.s32 %s13, %s20
    %p22 = scmp.eq.s32.totalorder %s21, 0
    %s24 = sadd.s32 %s23, 1
    %s25 = scalar_select %p22, %s23, %s24
    %p28 = pneg %p22
    %p29 = scmp.eq.s32.totalorder %s13, 3
    %p30 = por %p28, %p29
    %p31 = scmp.ne.s32.totalorder %s23, %s26
    %p32 = scmp.eq.s32.totalorder %s13, 0
    %p33 = por %p31, %p32
    %p34 = scmp.ne.s32.totalorder %s23, %s26
    %p35 = scmp.eq.s32.totalorder %s18, 3
    %p36 = por %p34, %p35
    %p37 = scmp.ne.s32.totalorder %s26, %s27
    %p38 = scmp.eq.s32.totalorder %s18, 0
    %p39 = por %p37, %p38
    %p40 = scmp.ne.s32.totalorder %s26, %s27
    %p41 = scmp.eq.s32.totalorder %s19, 3
    %p42 = por %p40, %p41
    %p44 = scmp.ne.s32.totalorder %s27, %s43
    %p45 = scmp.eq.s32.totalorder %s19, 0
    %p46 = por %p44, %p45
    %s48 = sadd.s32 %s47, 1
    %p51 = scmp.eq.s32.totalorder %s13, 3
    %p52 = scmp.ne.s32.totalorder %s47, %s49
    %p53 = scmp.eq.s32.totalorder %s13, 0
    %p54 = por %p52, %p53
    %p55 = scmp.ne.s32.totalorder %s47, %s49
    %p56 = scmp.eq.s32.totalorder %s18, 3
    %p57 = por %p55, %p56
    %p58 = scmp.ne.s32.totalorder %s49, %s50
    %p59 = scmp.eq.s32.totalorder %s18, 0
    %p60 = por %p58, %p59
    %p61 = scmp.ne.s32.totalorder %s49, %s50
    %p62 = scmp.eq.s32.totalorder %s19, 3
    %p63 = por %p61, %p62
    %p65 = scmp.ne.s32.totalorder %s50, %s64
    %p66 = scmp.eq.s32.totalorder %s19, 0
    %p67 = por %p65, %p66
    %s69 = sadd.s32 %s68, 1
    %p72 = scmp.eq.s32.totalorder %s13, 3
    %p73 = scmp.ne.s32.totalorder %s68, %s70
    %p74 = scmp.eq.s32.totalorder %s13, 0
    %p75 = por %p73, %p74
    %p76 = scmp.ne.s32.totalorder %s68, %s70
    %p77 = scmp.eq.s32.totalorder %s18, 3
    %p78 = por %p76, %p77
    %p79 = scmp.ne.s32.totalorder %s70, %s71
    %p80 = scmp.eq.s32.totalorder %s18, 0
    %p81 = por %p79, %p80
    %p82 = scmp.ne.s32.totalorder %s70, %s71
    %p83 = scmp.eq.s32.totalorder %s19, 3
    %p84 = por %p82, %p83
    %p86 = scmp.ne.s32.totalorder %s71, %s85
    %p87 = scmp.eq.s32.totalorder %s19, 0
    %p88 = por %p86, %p87
    %s90 = sadd.s32 %s89, 1
    %p93 = scmp.eq.s32.totalorder %s13, 3
    %p94 = scmp.ne.s32.totalorder %s89, %s91
    %p95 = scmp.eq.s32.totalorder %s13, 0
    %p96 = por %p94, %p95
    %p97 = scmp.ne.s32.totalorder %s89, %s91
    %p98 = scmp.eq.s32.totalorder %s18, 3
    %p99 = por %p97, %p98
    %p100 = scmp.ne.s32.totalorder %s91, %s92
    %p101 = scmp.eq.s32.totalorder %s18, 0
    %p102 = por %p100, %p101
    %p103 = scmp.ne.s32.totalorder %s91, %s92
    %p104 = scmp.eq.s32.totalorder %s19, 3
    %p105 = por %p103, %p104
    %p107 = scmp.ne.s32.totalorder %s92, %s106
    %p108 = scmp.eq.s32.totalorder %s19, 0
    %p109 = por %p107, %p108
    %s111 = sadd.s32 %s110, 1
    %p114 = scmp.eq.s32.totalorder %s13, 3
    %p115 = scmp.ne.s32.totalorder %s110, %s112
    %p116 = scmp.eq.s32.totalorder %s13, 0
    %p117 = por %p115, %p116
    %p118 = scmp.ne.s32.totalorder %s110, %s112
    %p119 = scmp.eq.s32.totalorder %s18, 3
    %p120 = por %p118, %p119
    %p121 = scmp.ne.s32.totalorder %s112, %s113
    %p122 = scmp.eq.s32.totalorder %s18, 0
    %p123 = por %p121, %p122
    %p124 = scmp.ne.s32.totalorder %s112, %s113
    %p125 = scmp.eq.s32.totalorder %s19, 3
    %p126 = por %p124, %p125
    %p128 = scmp.ne.s32.totalorder %s113, %s127
    %p129 = scmp.eq.s32.totalorder %s19, 0
    %p130 = por %p128, %p129
    %s132 = sadd.s32 %s131, 1
    %p135 = scmp.eq.s32.totalorder %s13, 3
    %p136 = scmp.ne.s32.totalorder %s131, %s133
    %p137 = scmp.eq.s32.totalorder %s13, 0
    %p138 = por %p136, %p137
    %p139 = scmp.ne.s32.totalorder %s131, %s133
    %p140 = scmp.eq.s32.totalorder %s18, 3
    %p141 = por %p139, %p140
    %p142 = scmp.ne.s32.totalorder %s133, %s134
    %p143 = scmp.eq.s32.totalorder %s18, 0
    %p144 = por %p142, %p143
    %p145 = scmp.ne.s32.totalorder %s133, %s134
    %p146 = scmp.eq.s32.totalorder %s19, 3
    %p147 = por %p145, %p146
    %p149 = scmp.ne.s32.totalorder %s134, %s148
    %p150 = scmp.eq.s32.totalorder %s19, 0
    %p151 = por %p149, %p150
    %s153 = sadd.s32 %s152, 1
    %p156 = scmp.eq.s32.totalorder %s13, 3
    %p157 = scmp.ne.s32.totalorder %s152, %s154
    %p158 = scmp.eq.s32.totalorder %s13, 0
    %p159 = por %p157, %p158
    %p160 = scmp.ne.s32.totalorder %s152, %s154
    %p161 = scmp.eq.s32.totalorder %s18, 3
    %p162 = por %p160, %p161
    %p163 = scmp.ne.s32.totalorder %s154, %s155
    %p164 = scmp.eq.s32.totalorder %s18, 0
    %p165 = por %p163, %p164
    %p166 = scmp.ne.s32.totalorder %s154, %s155
    %p167 = scmp.eq.s32.totalorder %s19, 3
    %p168 = por %p166, %p167
    %p170 = scmp.ne.s32.totalorder %s155, %s169
    %p171 = scmp.eq.s32.totalorder %s19, 0
    %p172 = por %p170, %p171
    %s173 = ssub.s32 %s13, %s20
    %p174 = scmp.eq.s32.totalorder %s173, 0
    %s176 = sadd.s32 %s175, 1
    %s177 = scalar_select %p174, %s175, %s176
    %p180 = pneg %p174
    %p181 = scmp.eq.s32.totalorder %s13, 3
    %p182 = por %p180, %p181
    %p183 = scmp.ne.s32.totalorder %s175, %s178
    %p184 = scmp.eq.s32.totalorder %s13, 0
    %p185 = por %p183, %p184
    %p186 = scmp.ne.s32.totalorder %s175, %s178
    %p187 = scmp.eq.s32.totalorder %s18, 3
    %p188 = por %p186, %p187
    %p189 = scmp.ne.s32.totalorder %s178, %s179
    %p190 = scmp.eq.s32.totalorder %s18, 0
    %p191 = por %p189, %p190
    %p192 = scmp.ne.s32.totalorder %s178, %s179
    %p193 = scmp.eq.s32.totalorder %s19, 3
    %p194 = por %p192, %p193
    %p196 = scmp.ne.s32.totalorder %s179, %s195
    %p197 = scmp.eq.s32.totalorder %s19, 0
    %p198 = por %p196, %p197
    %p199 = scmp.le.s32.totalorder 1, %s13
    %p200 = scmp.lt.s32.totalorder %s13, 5
    %p201 = pnand %p199, %p200
    %p202 = pneg %p201
    // Predicated region
    $region9: #{pointnet2_forward.4} parent=5 // pred_check
      _
    $region10: #{pointnet2_forward.4} parent=5 // pred_check_branch
      %204 = sbr.rel (%p201) target = $region12
    $region11: #{pointnet2_forward.4} parent=5 // pred_region
      %s205 = ssub.s32 %s13, 1
      // Predicated region
      $region13: #{pointnet2_forward.4} parent=11 // pred_check
        %p206 = pneg %p60
      $region14: #{pointnet2_forward.4} parent=11 // pred_check_branch
        %208 = sbr.rel (%p206) target = $region16
      $region15: #{pointnet2_forward.4} parent=11 // pred_region
        _
      $region16: #{pointnet2_forward.4} parent=11 // pred_fallthru
        _
      // Predicated region
      $region17: #{pointnet2_forward.4} parent=11 // pred_check
        %p209 = pneg %p81
      $region18: #{pointnet2_forward.4} parent=11 // pred_check_branch
        %211 = sbr.rel (%p209) target = $region20
      $region19: #{pointnet2_forward.4} parent=11 // pred_region
        _
      $region20: #{pointnet2_forward.4} parent=11 // pred_fallthru
        _
      // Predicated region
      $region21: #{pointnet2_forward.4} parent=11 // pred_check
        %p212 = pneg %p102
      $region22: #{pointnet2_forward.4} parent=11 // pred_check_branch
        %214 = sbr.rel (%p212) target = $region24
      $region23: #{pointnet2_forward.4} parent=11 // pred_region
        _
      $region24: #{pointnet2_forward.4} parent=11 // pred_fallthru
        _
      // Predicated region
      $region25: #{pointnet2_forward.4} parent=11 // pred_check
        %p215 = pneg %p123
      $region26: #{pointnet2_forward.4} parent=11 // pred_check_branch
        %217 = sbr.rel (%p215) target = $region28
      $region27: #{pointnet2_forward.4} parent=11 // pred_region
        _
      $region28: #{pointnet2_forward.4} parent=11 // pred_fallthru
        _
      // Predicated region
      $region29: #{pointnet2_forward.4} parent=11 // pred_check
        %p218 = pneg %p144
      $region30: #{pointnet2_forward.4} parent=11 // pred_check_branch
        %220 = sbr.rel (%p218) target = $region32
      $region31: #{pointnet2_forward.4} parent=11 // pred_region
        _
      $region32: #{pointnet2_forward.4} parent=11 // pred_fallthru
        _
      // Predicated region
      $region33: #{pointnet2_forward.4} parent=11 // pred_check
        %p221 = pneg %p165
      $region34: #{pointnet2_forward.4} parent=11 // pred_check_branch
        %223 = sbr.rel (%p221) target = $region36
      $region35: #{pointnet2_forward.4} parent=11 // pred_region
        _
      $region36: #{pointnet2_forward.4} parent=11 // pred_fallthru
        _
    $region12: #{pointnet2_forward.4} parent=5 // pred_fallthru
      _
    %p224 = scmp.lt.s32.totalorder %s13, 4
    // Predicated region
    $region37: #{pointnet2_forward.4} parent=5 // pred_check
      %p225 = pneg %p224
    $region38: #{pointnet2_forward.4} parent=5 // pred_check_branch
      %227 = sbr.rel (%p225) target = $region40
    $region39: #{pointnet2_forward.4} parent=5 // pred_region
      // Predicated region
      $region41: #{pointnet2_forward.4} parent=39 // pred_check
        %p228 = pneg %p33
      $region42: #{pointnet2_forward.4} parent=39 // pred_check_branch
        %230 = sbr.rel (%p228) target = $region44
      $region43: #{pointnet2_forward.4} parent=39 // pred_region
        %s231 = smul.u32 16, %s13
        %p232 = scmp.lt.s32.totalorder %s231, 63
        %s233 = scalar_select %p232, %s231, 63
        %s234 = smul.addr %s233, 2
        %s235 = smul.addr %s234, 4
        %s236 = scalar_lea.vmem %s0, %s235
        %s237 = smul.u32 16, %s13
      $region44: #{pointnet2_forward.4} parent=39 // pred_fallthru
        _
    $region40: #{pointnet2_forward.4} parent=5 // pred_fallthru
      _
    %p238 = scmp.le.s32.totalorder 1, %s13
    %p239 = scmp.lt.s32.totalorder %s13, 5
    %p240 = pnand %p238, %p239
    %p241 = pneg %p240
    // Predicated region
    $region45: #{pointnet2_forward.4} parent=5 // pred_check
      _
    $region46: #{pointnet2_forward.4} parent=5 // pred_check_branch
      %243 = sbr.rel (%p240) target = $region48
    $region47: #{pointnet2_forward.4} parent=5 // pred_region
      %s244 = ssub.s32 %s13, 1
      %s245 = smul.u32 16, %s18
      %p246 = scmp.lt.s32.totalorder %s245, 63
      %s247 = scalar_select %p246, %s245, 63
      %s248 = smul.addr %s247, 2
      %s249 = smul.addr %s248, 4
      %s250 = scalar_lea.vmem %s0, %s249
      %p251 = pneg %p39
      %p252 = pneg %p36
      %p253 = pneg %p60
      %p254 = pneg %p57
      %p255 = pneg %p81
      %p256 = pneg %p78
      %p257 = pneg %p102
      %p258 = pneg %p99
      %p259 = pneg %p123
      %p260 = pneg %p120
      %p261 = pneg %p144
      %p262 = pneg %p141
      %p263 = pneg %p165
      %p264 = pneg %p162
      %p265 = pneg %p191
      %p266 = pneg %p188
      %p267 = scmp.lt.s32.totalorder %s18, 3
      %s268 = scalar_select %p267, %s18, 3
      %s269 = smul.addr %s268, 2
      %s270 = smul.addr %s269, 4
      %s271 = scalar_lea.vmem %s7, %s270
      %s272 = smul.u32 16, %s18
      %p273 = scmp.lt.s32.totalorder %s272, 63
      %s274 = scalar_select %p273, %s272, 63
      %s275 = smul.addr %s274, 2
      %s276 = smul.addr %s275, 4
      %s277 = scalar_lea.vmem %s0, %s276
      %s278 = smul.u32 16, %s18
      %p279 = scmp.lt.s32.totalorder %s18, 3
      %s280 = scalar_select %p279, %s18, 3
      %s281 = smul.addr %s280, 2
      %s282 = smul.addr %s281, 4
      %s283 = scalar_lea.vmem %s7, %s282
      %v285 = vld [vmem:[%s277] sm:$0xff]
      %v286 = vld [vmem:[%s277 + $0x8] sm:$0xff]
      %v287 = vld [vmem:[%s277 + $0x10] sm:$0xff]
      %v288 = vld [vmem:[%s277 + $0x18] sm:$0xff]
      %v289 = vld [vmem:[%s277 + $0x20] sm:$0xff]
      %v290 = vld [vmem:[%s277 + $0x28] sm:$0xff]
      %v291 = vld [vmem:[%s277 + $0x30] sm:$0xff]
      %v292 = vld [vmem:[%s277 + $0x38] sm:$0xff]
      %v293 = vld [vmem:[%s277 + $0x40] sm:$0xff]
      %v294 = vld [vmem:[%s277 + $0x48] sm:$0xff]
      %v295 = vld [vmem:[%s277 + $0x50] sm:$0xff]
      %v296 = vld [vmem:[%s277 + $0x58] sm:$0xff]
      %v297 = vld [vmem:[%s277 + $0x60] sm:$0xff]
      %v298 = vld [vmem:[%s277 + $0x68] sm:$0xff]
      %v299 = vld [vmem:[%s277 + $0x70] sm:$0xff]
      %v300 = vld [vmem:[%s277 + $0x78] sm:$0xff]
      %v301 = vld [vmem:[%s1] sm:$0xf]
      %v302 = vld [vmem:[%s1 + $0x4] sm:$0xf]
      %v303 = vld [vmem:[%s1 + $0x8] sm:$0xf]
      %v304 = vld [vmem:[%s1 + $0xc] sm:$0xf]
      %v305 = vld [vmem:[%s1 + $0x10] sm:$0xf]
      %v306 = vld [vmem:[%s1 + $0x14] sm:$0xf]
      %v307 = vld [vmem:[%s1 + $0x18] sm:$0xf]
      %v308 = vld [vmem:[%s1 + $0x1c] sm:$0xf]
      %v309 = vld [vmem:[%s1 + $0x20] sm:$0xf]
      %v310 = vld [vmem:[%s1 + $0x24] sm:$0xf]
      %v311 = vld [vmem:[%s1 + $0x28] sm:$0xf]
      %v312 = vld [vmem:[%s1 + $0x2c] sm:$0xf]
      %v313 = vld [vmem:[%s1 + $0x30] sm:$0xf]
      %v314 = vld [vmem:[%s1 + $0x34] sm:$0xf]
      %v315 = vld [vmem:[%s1 + $0x38] sm:$0xf]
      %v316 = vld [vmem:[%s1 + $0x3c] sm:$0xf]
      %v317 = vld [vmem:[%s1 + $0x40] sm:$0xf]
      %v318 = vld [vmem:[%s1 + $0x44] sm:$0xf]
      %v319 = vld [vmem:[%s1 + $0x48] sm:$0xf]
      %v320 = vld [vmem:[%s1 + $0x4c] sm:$0xf]
      %v321 = vld [vmem:[%s1 + $0x50] sm:$0xf]
      %v322 = vld [vmem:[%s1 + $0x54] sm:$0xf]
      %v323 = vld [vmem:[%s1 + $0x58] sm:$0xf]
      %v324 = vld [vmem:[%s1 + $0x5c] sm:$0xf]
      %v325 = vld [vmem:[%s1 + $0x60] sm:$0xf]
      %v326 = vld [vmem:[%s1 + $0x64] sm:$0xf]
      %v327 = vld [vmem:[%s1 + $0x68] sm:$0xf]
      %v328 = vld [vmem:[%s1 + $0x6c] sm:$0xf]
      %v329 = vld [vmem:[%s1 + $0x70] sm:$0xf]
      %v330 = vld [vmem:[%s1 + $0x74] sm:$0xf]
      %v331 = vld [vmem:[%s1 + $0x78] sm:$0xf]
      %v332 = vld [vmem:[%s1 + $0x7c] sm:$0xf]
      %v333 = vld [vmem:[%s2] sm:$0x1]
      %v335 = vlaneseq
      %v336 = vshrl.u32 %v335, 7
      %v337 = vsub.s32 0, %v336
      %v338 = vrot.slane %v333, %v337
      %v356 = vunpack.c.l.b16 %v285
      %v357 = vunpack.c.h.b16 %v285
      %v358 = vunpack.c.l.b16 %v286
      %v359 = vunpack.c.h.b16 %v286
      %v360 = vunpack.c.l.b16 %v287
      %v361 = vunpack.c.h.b16 %v287
      %v362 = vunpack.c.l.b16 %v288
      %v363 = vunpack.c.h.b16 %v288
      %v364 = vunpack.c.l.b16 %v289
      %v365 = vunpack.c.h.b16 %v289
      %v366 = vunpack.c.l.b16 %v290
      %v367 = vunpack.c.h.b16 %v290
      %v368 = vunpack.c.l.b16 %v291
      %v369 = vunpack.c.h.b16 %v291
      %v370 = vunpack.c.l.b16 %v292
      %v371 = vunpack.c.h.b16 %v292
      %v372 = vunpack.c.l.b16 %v293
      %v373 = vunpack.c.h.b16 %v293
      %v374 = vunpack.c.l.b16 %v294
      %v375 = vunpack.c.h.b16 %v294
      %v376 = vunpack.c.l.b16 %v295
      %v377 = vunpack.c.h.b16 %v295
      %v378 = vunpack.c.l.b16 %v296
      %v379 = vunpack.c.h.b16 %v296
      %v380 = vunpack.c.l.b16 %v297
      %v381 = vunpack.c.h.b16 %v297
      %v382 = vunpack.c.l.b16 %v298
      %v383 = vunpack.c.h.b16 %v298
      %v384 = vunpack.c.l.b16 %v299
      %v385 = vunpack.c.h.b16 %v299
      %v386 = vunpack.c.l.b16 %v300
      %v387 = vunpack.c.h.b16 %v300
      %v388 = vpack.c.b16 %v358, %v356
      %v389 = vpack.c.b16 %v359, %v357
      %v390 = vpack.c.b16 %v362, %v360
      %v391 = vpack.c.b16 %v363, %v361
      %v392 = vpack.c.b16 %v366, %v364
      %v393 = vpack.c.b16 %v367, %v365
      %v394 = vpack.c.b16 %v370, %v368
      %v395 = vpack.c.b16 %v371, %v369
      %v396 = vpack.c.b16 %v374, %v372
      %v397 = vpack.c.b16 %v375, %v373
      %v398 = vpack.c.b16 %v378, %v376
      %v399 = vpack.c.b16 %v379, %v377
      %v400 = vpack.c.b16 %v382, %v380
      %v401 = vpack.c.b16 %v383, %v381
      %v402 = vpack.c.b16 %v386, %v384
      %v403 = vpack.c.b16 %v387, %v385
      %v452 = vunpack.c.l.b16 %v301
      %v453 = vunpack.c.l.b16 %v302
      %v454 = vunpack.c.l.b16 %v303
      %v455 = vunpack.c.l.b16 %v304
      %v456 = vunpack.c.l.b16 %v305
      %v457 = vunpack.c.l.b16 %v306
      %v458 = vunpack.c.l.b16 %v307
      %v459 = vunpack.c.l.b16 %v308
      %v460 = vunpack.c.l.b16 %v309
      %v461 = vunpack.c.l.b16 %v310
      %v462 = vunpack.c.l.b16 %v311
      %v463 = vunpack.c.l.b16 %v312
      %v464 = vunpack.c.l.b16 %v313
      %v465 = vunpack.c.l.b16 %v314
      %v466 = vunpack.c.l.b16 %v315
      %v467 = vunpack.c.l.b16 %v316
      %v468 = vunpack.c.l.b16 %v317
      %v469 = vunpack.c.l.b16 %v318
      %v470 = vunpack.c.l.b16 %v319
      %v471 = vunpack.c.l.b16 %v320
      %v472 = vunpack.c.l.b16 %v321
      %v473 = vunpack.c.l.b16 %v322
      %v474 = vunpack.c.l.b16 %v323
      %v475 = vunpack.c.l.b16 %v324
      %v476 = vunpack.c.l.b16 %v325
      %v477 = vunpack.c.l.b16 %v326
      %v478 = vunpack.c.l.b16 %v327
      %v479 = vunpack.c.l.b16 %v328
      %v480 = vunpack.c.l.b16 %v329
      %v481 = vunpack.c.l.b16 %v330
      %v482 = vunpack.c.l.b16 %v331
      %v483 = vunpack.c.l.b16 %v332
      %v484 = vpack.c.b16 %v453, %v452
      %v485 = vpack.c.b16 %v455, %v454
      %v486 = vpack.c.b16 %v457, %v456
      %v487 = vpack.c.b16 %v459, %v458
      %v488 = vpack.c.b16 %v461, %v460
      %v489 = vpack.c.b16 %v463, %v462
      %v490 = vpack.c.b16 %v465, %v464
      %v491 = vpack.c.b16 %v467, %v466
      %v492 = vpack.c.b16 %v469, %v468
      %v493 = vpack.c.b16 %v471, %v470
      %v494 = vpack.c.b16 %v473, %v472
      %v495 = vpack.c.b16 %v475, %v474
      %v496 = vpack.c.b16 %v477, %v476
      %v497 = vpack.c.b16 %v479, %v478
      %v498 = vpack.c.b16 %v481, %v480
      %v499 = vpack.c.b16 %v483, %v482
      %516 = vmatprep.subr.bf16.mxu0 0
      %517 = vmatpush1.bf16.msra.mxu0 %v491
      %518 = vmatprep.subr.bf16.mxu0 0
      %519 = vmatpush1.bf16.msra.mxu0 %v490
      %520 = vmatprep.subr.bf16.mxu0 0
      %521 = vmatpush1.bf16.msra.mxu0 %v489
      %522 = vmatprep.subr.bf16.mxu0 0
      %523 = vmatpush1.bf16.msra.mxu0 %v488
      %524 = vmatprep.subr.bf16.mxu0 0
      %525 = vmatpush1.bf16.msra.mxu0 %v487
      %526 = vmatprep.subr.bf16.mxu0 0
      %527 = vmatpush1.bf16.msra.mxu0 %v486
      %528 = vmatprep.subr.bf16.mxu0 0
      %529 = vmatpush1.bf16.msra.mxu0 %v485
      %530 = vmatprep.subr.bf16.mxu0 0
      %531 = vmatpush1.bf16.msra.mxu0 %v484
      %532 = vmatprep.subr.bf16.mxu0 0
      %533 = vmatpush2.bf16.msra.mxu0 %v499
      %534 = vmatprep.subr.bf16.mxu0 0
      %535 = vmatpush2.bf16.msra.mxu0 %v498
      %536 = vmatprep.subr.bf16.mxu0 0
      %537 = vmatpush2.bf16.msra.mxu0 %v497
      %538 = vmatprep.subr.bf16.mxu0 0
      %539 = vmatpush2.bf16.msra.mxu0 %v496
      %540 = vmatprep.subr.bf16.mxu0 0
      %541 = vmatpush2.bf16.msra.mxu0 %v495
      %542 = vmatprep.subr.bf16.mxu0 0
      %543 = vmatpush2.bf16.msra.mxu0 %v494
      %544 = vmatprep.subr.bf16.mxu0 0
      %545 = vmatpush2.bf16.msra.mxu0 %v493
      %546 = vmatprep.subr.bf16.mxu0 0
      %547 = vmatpush2.bf16.msra.mxu0 %v492
      %548 = vmatprep.mubr.bf16.mxu0 %v389
      %549 = vmatmul.mubr.bf16.gmra.mxu0 %v388
      %v550 = vpop.f32.mrf.mxu0
      %v551 = vadd.f32 %v338, %v550
      %v552 = vpop.f32.mrf.mxu0
      %v553 = vpop.f32.mrf.mxu0
      %v554 = vadd.f32 %v338, %v553
      %v555 = vpop.f32.mrf.mxu0
      %556 = vmatprep.mubr.bf16.mxu0 %v391
      %557 = vmatmul.mubr.bf16.gmra.mxu0 %v390
      %v558 = vpop.f32.mrf.mxu0
      %v559 = vadd.f32 %v338, %v558
      %v560 = vpop.f32.mrf.mxu0
      %v561 = vpop.f32.mrf.mxu0
      %v562 = vadd.f32 %v338, %v561
      %v563 = vpop.f32.mrf.mxu0
      %564 = vmatprep.mubr.bf16.mxu0 %v393
      %565 = vmatmul.mubr.bf16.gmra.mxu0 %v392
      %v566 = vpop.f32.mrf.mxu0
      %v567 = vadd.f32 %v338, %v566
      %v568 = vpop.f32.mrf.mxu0
      %v569 = vpop.f32.mrf.mxu0
      %v570 = vadd.f32 %v338, %v569
      %v571 = vpop.f32.mrf.mxu0
      %572 = vmatprep.mubr.bf16.mxu0 %v395
      %573 = vmatmul.mubr.bf16.gmra.mxu0 %v394
      %v574 = vpop.f32.mrf.mxu0
      %v575 = vadd.f32 %v338, %v574
      %v576 = vpop.f32.mrf.mxu0
      %v577 = vpop.f32.mrf.mxu0
      %v578 = vadd.f32 %v338, %v577
      %v579 = vpop.f32.mrf.mxu0
      %580 = vmatprep.mubr.bf16.mxu0 %v397
      %581 = vmatmul.mubr.bf16.gmra.mxu0 %v396
      %v582 = vpop.f32.mrf.mxu0
      %v583 = vadd.f32 %v338, %v582
      %v584 = vpop.f32.mrf.mxu0
      %v585 = vpop.f32.mrf.mxu0
      %v586 = vadd.f32 %v338, %v585
      %v587 = vpop.f32.mrf.mxu0
      %588 = vmatprep.mubr.bf16.mxu0 %v399
      %589 = vmatmul.mubr.bf16.gmra.mxu0 %v398
      %v590 = vpop.f32.mrf.mxu0
      %v591 = vadd.f32 %v338, %v590
      %v592 = vpop.f32.mrf.mxu0
      %v593 = vpop.f32.mrf.mxu0
      %v594 = vadd.f32 %v338, %v593
      %v595 = vpop.f32.mrf.mxu0
      %596 = vmatprep.mubr.bf16.mxu0 %v401
      %597 = vmatmul.mubr.bf16.gmra.mxu0 %v400
      %v598 = vpop.f32.mrf.mxu0
      %v599 = vadd.f32 %v338, %v598
      %v600 = vpop.f32.mrf.mxu0
      %v601 = vpop.f32.mrf.mxu0
      %v602 = vadd.f32 %v338, %v601
      %v603 = vpop.f32.mrf.mxu0
      %604 = vmatprep.mubr.bf16.mxu0 %v403
      %605 = vmatmul.mubr.bf16.gmra.mxu0 %v402
      %v606 = vpop.f32.mrf.mxu0
      %v607 = vadd.f32 %v338, %v606
      %v608 = vpop.f32.mrf.mxu0
      %v609 = vpop.f32.mrf.mxu0
      %v610 = vadd.f32 %v338, %v609
      %v611 = vpop.f32.mrf.mxu0
      %612 = vdwg.mxu0
      %v613 = vmax.f32 %v551, 0.0
      %v614 = vmax.f32 %v554, 0.0
      %v615 = vmax.f32 %v559, 0.0
      %v616 = vmax.f32 %v562, 0.0
      %v617 = vmax.f32 %v567, 0.0
      %v618 = vmax.f32 %v570, 0.0
      %v619 = vmax.f32 %v575, 0.0
      %v620 = vmax.f32 %v578, 0.0
      %v621 = vmax.f32 %v583, 0.0
      %v622 = vmax.f32 %v586, 0.0
      %v623 = vmax.f32 %v591, 0.0
      %v624 = vmax.f32 %v594, 0.0
      %v625 = vmax.f32 %v599, 0.0
      %v626 = vmax.f32 %v602, 0.0
      %v627 = vmax.f32 %v607, 0.0
      %v628 = vmax.f32 %v610, 0.0
      %v629 = vpack.c.bf16 %v614, %v613
      %v630 = vpack.c.bf16 %v616, %v615
      %v631 = vpack.c.bf16 %v618, %v617
      %v632 = vpack.c.bf16 %v620, %v619
      %v633 = vpack.c.bf16 %v622, %v621
      %v634 = vpack.c.bf16 %v624, %v623
      %v635 = vpack.c.bf16 %v626, %v625
      %v636 = vpack.c.bf16 %v628, %v627
      %v637 = vld [vmem:[%s3] sm:$0xf]
      %v638 = vld [vmem:[%s3 + $0x4] sm:$0xf]
      %v639 = vld [vmem:[%s3 + $0x8] sm:$0xf]
      %v640 = vld [vmem:[%s3 + $0xc] sm:$0xf]
      %v641 = vld [vmem:[%s3 + $0x10] sm:$0xf]
      %v642 = vld [vmem:[%s3 + $0x14] sm:$0xf]
      %v643 = vld [vmem:[%s3 + $0x18] sm:$0xf]
      %v644 = vld [vmem:[%s3 + $0x1c] sm:$0xf]
      %v645 = vld [vmem:[%s3 + $0x20] sm:$0xf]
      %v646 = vld [vmem:[%s3 + $0x24] sm:$0xf]
      %v647 = vld [vmem:[%s3 + $0x28] sm:$0xf]
      %v648 = vld [vmem:[%s3 + $0x2c] sm:$0xf]
      %v649 = vld [vmem:[%s3 + $0x30] sm:$0xf]
      %v650 = vld [vmem:[%s3 + $0x34] sm:$0xf]
      %v651 = vld [vmem:[%s3 + $0x38] sm:$0xf]
      %v652 = vld [vmem:[%s3 + $0x3c] sm:$0xf]
      %v653 = vld [vmem:[%s4] sm:$0x1]
      %v655 = vlaneseq
      %v656 = vshrl.u32 %v655, 7
      %v657 = vsub.s32 0, %v656
      %v658 = vrot.slane %v653, %v657
      %v676 = vunpack.c.l.b16 %v637
      %v677 = vunpack.c.l.b16 %v638
      %v678 = vunpack.c.l.b16 %v639
      %v679 = vunpack.c.l.b16 %v640
      %v680 = vunpack.c.l.b16 %v641
      %v681 = vunpack.c.l.b16 %v642
      %v682 = vunpack.c.l.b16 %v643
      %v683 = vunpack.c.l.b16 %v644
      %v684 = vunpack.c.l.b16 %v645
      %v685 = vunpack.c.l.b16 %v646
      %v686 = vunpack.c.l.b16 %v647
      %v687 = vunpack.c.l.b16 %v648
      %v688 = vunpack.c.l.b16 %v649
      %v689 = vunpack.c.l.b16 %v650
      %v690 = vunpack.c.l.b16 %v651
      %v691 = vunpack.c.l.b16 %v652
      %v692 = vpack.c.b16 %v677, %v676
      %v693 = vpack.c.b16 %v679, %v678
      %v694 = vpack.c.b16 %v681, %v680
      %v695 = vpack.c.b16 %v683, %v682
      %v696 = vpack.c.b16 %v685, %v684
      %v697 = vpack.c.b16 %v687, %v686
      %v698 = vpack.c.b16 %v689, %v688
      %v699 = vpack.c.b16 %v691, %v690
      %708 = vmatprep.subr.bf16.mxu0 0
      %709 = vmatpush1.bf16.msra.mxu0 %v699
      %710 = vmatprep.subr.bf16.mxu0 0
      %711 = vmatpush1.bf16.msra.mxu0 %v698
      %712 = vmatprep.subr.bf16.mxu0 0
      %713 = vmatpush1.bf16.msra.mxu0 %v697
      %714 = vmatprep.subr.bf16.mxu0 0
      %715 = vmatpush1.bf16.msra.mxu0 %v696
      %716 = vmatprep.subr.bf16.mxu0 0
      %717 = vmatpush1.bf16.msra.mxu0 %v695
      %718 = vmatprep.subr.bf16.mxu0 0
      %719 = vmatpush1.bf16.msra.mxu0 %v694
      %720 = vmatprep.subr.bf16.mxu0 0
      %721 = vmatpush1.bf16.msra.mxu0 %v693
      %722 = vmatprep.subr.bf16.mxu0 0
      %723 = vmatpush1.bf16.msra.mxu0 %v692
      %724 = vmatprep.subr.bf16.mxu0 0
      %725 = vmatpush2.bf16.msra.mxu0 0
      %726 = vmatprep.subr.bf16.mxu0 0
      %727 = vmatpush2.bf16.msra.mxu0 0
      %728 = vmatprep.subr.bf16.mxu0 0
      %729 = vmatpush2.bf16.msra.mxu0 0
      %730 = vmatprep.subr.bf16.mxu0 0
      %731 = vmatpush2.bf16.msra.mxu0 0
      %732 = vmatprep.subr.bf16.mxu0 0
      %733 = vmatpush2.bf16.msra.mxu0 0
      %734 = vmatprep.subr.bf16.mxu0 0
      %735 = vmatpush2.bf16.msra.mxu0 0
      %736 = vmatprep.subr.bf16.mxu0 0
      %737 = vmatpush2.bf16.msra.mxu0 0
      %738 = vmatprep.subr.bf16.mxu0 0
      %739 = vmatpush2.bf16.msra.mxu0 0
      %740 = vmatprep.mubr.bf16.mxu0 0
      %741 = vmatmul.mubr.bf16.gmra.mxu0 %v629
      %v742 = vpop.f32.mrf.mxu0
      %v743 = vadd.f32 %v658, %v742
      %v744 = vpop.f32.mrf.mxu0
      %v745 = vpop.f32.mrf.mxu0
      %v746 = vadd.f32 %v658, %v745
      %v747 = vpop.f32.mrf.mxu0
      %748 = vmatprep.mubr.bf16.mxu0 0
      %749 = vmatmul.mubr.bf16.gmra.mxu0 %v630
      %v750 = vpop.f32.mrf.mxu0
      %v751 = vadd.f32 %v658, %v750
      %v752 = vpop.f32.mrf.mxu0
      %v753 = vpop.f32.mrf.mxu0
      %v754 = vadd.f32 %v658, %v753
      %v755 = vpop.f32.mrf.mxu0
      %756 = vmatprep.mubr.bf16.mxu0 0
      %757 = vmatmul.mubr.bf16.gmra.mxu0 %v631
      %v758 = vpop.f32.mrf.mxu0
      %v759 = vadd.f32 %v658, %v758
      %v760 = vpop.f32.mrf.mxu0
      %v761 = vpop.f32.mrf.mxu0
      %v762 = vadd.f32 %v658, %v761
      %v763 = vpop.f32.mrf.mxu0
      %764 = vmatprep.mubr.bf16.mxu0 0
      %765 = vmatmul.mubr.bf16.gmra.mxu0 %v632
      %v766 = vpop.f32.mrf.mxu0
      %v767 = vadd.f32 %v658, %v766
      %v768 = vpop.f32.mrf.mxu0
      %v769 = vpop.f32.mrf.mxu0
      %v770 = vadd.f32 %v658, %v769
      %v771 = vpop.f32.mrf.mxu0
      %772 = vmatprep.mubr.bf16.mxu0 0
      %773 = vmatmul.mubr.bf16.gmra.mxu0 %v633
      %v774 = vpop.f32.mrf.mxu0
      %v775 = vadd.f32 %v658, %v774
      %v776 = vpop.f32.mrf.mxu0
      %v777 = vpop.f32.mrf.mxu0
      %v778 = vadd.f32 %v658, %v777
      %v779 = vpop.f32.mrf.mxu0
      %780 = vmatprep.mubr.bf16.mxu0 0
      %781 = vmatmul.mubr.bf16.gmra.mxu0 %v634
      %v782 = vpop.f32.mrf.mxu0
      %v783 = vadd.f32 %v658, %v782
      %v784 = vpop.f32.mrf.mxu0
      %v785 = vpop.f32.mrf.mxu0
      %v786 = vadd.f32 %v658, %v785
      %v787 = vpop.f32.mrf.mxu0
      %788 = vmatprep.mubr.bf16.mxu0 0
      %789 = vmatmul.mubr.bf16.gmra.mxu0 %v635
      %v790 = vpop.f32.mrf.mxu0
      %v791 = vadd.f32 %v658, %v790
      %v792 = vpop.f32.mrf.mxu0
      %v793 = vpop.f32.mrf.mxu0
      %v794 = vadd.f32 %v658, %v793
      %v795 = vpop.f32.mrf.mxu0
      %796 = vmatprep.mubr.bf16.mxu0 0
      %797 = vmatmul.mubr.bf16.gmra.mxu0 %v636
      %v798 = vpop.f32.mrf.mxu0
      %v799 = vadd.f32 %v658, %v798
      %v800 = vpop.f32.mrf.mxu0
      %v801 = vpop.f32.mrf.mxu0
      %v802 = vadd.f32 %v658, %v801
      %v803 = vpop.f32.mrf.mxu0
      %804 = vdwg.mxu0
      %v805 = vmax.f32 %v743, 0.0
      %v806 = vmax.f32 %v746, 0.0
      %v807 = vmax.f32 %v751, 0.0
      %v808 = vmax.f32 %v754, 0.0
      %v809 = vmax.f32 %v759, 0.0
      %v810 = vmax.f32 %v762, 0.0
      %v811 = vmax.f32 %v767, 0.0
      %v812 = vmax.f32 %v770, 0.0
      %v813 = vmax.f32 %v775, 0.0
      %v814 = vmax.f32 %v778, 0.0
      %v815 = vmax.f32 %v783, 0.0
      %v816 = vmax.f32 %v786, 0.0
      %v817 = vmax.f32 %v791, 0.0
      %v818 = vmax.f32 %v794, 0.0
      %v819 = vmax.f32 %v799, 0.0
      %v820 = vmax.f32 %v802, 0.0
      %v821 = vpack.c.bf16 %v806, %v805
      %v822 = vpack.c.bf16 %v808, %v807
      %v823 = vpack.c.bf16 %v810, %v809
      %v824 = vpack.c.bf16 %v812, %v811
      %v825 = vpack.c.bf16 %v814, %v813
      %v826 = vpack.c.bf16 %v816, %v815
      %v827 = vpack.c.bf16 %v818, %v817
      %v828 = vpack.c.bf16 %v820, %v819
      %v829 = vld [vmem:[%s5] sm:$0xff]
      %v830 = vld [vmem:[%s5 + $0x8] sm:$0xff]
      %v831 = vld [vmem:[%s5 + $0x10] sm:$0xff]
      %v832 = vld [vmem:[%s5 + $0x18] sm:$0xff]
      %v833 = vld [vmem:[%s5 + $0x20] sm:$0xff]
      %v834 = vld [vmem:[%s5 + $0x28] sm:$0xff]
      %v835 = vld [vmem:[%s5 + $0x30] sm:$0xff]
      %v836 = vld [vmem:[%s5 + $0x38] sm:$0xff]
      %v837 = vld [vmem:[%s5 + $0x40] sm:$0xff]
      %v838 = vld [vmem:[%s5 + $0x48] sm:$0xff]
      %v839 = vld [vmem:[%s5 + $0x50] sm:$0xff]
      %v840 = vld [vmem:[%s5 + $0x58] sm:$0xff]
      %v841 = vld [vmem:[%s5 + $0x60] sm:$0xff]
      %v842 = vld [vmem:[%s5 + $0x68] sm:$0xff]
      %v843 = vld [vmem:[%s5 + $0x70] sm:$0xff]
      %v844 = vld [vmem:[%s5 + $0x78] sm:$0xff]
      %v845 = vld [vmem:[%s6] sm:$0x3]
      %v847 = vlaneseq
      %v848 = vshrl.u32 %v847, 7
      %v849 = vsub.s32 0, %v848
      %v850 = vrot.slane %v845, %v849
      %v851 = vlaneseq
      %v852 = vshrl.u32 %v851, 7
      %v853 = vsub.s32 1, %v852
      %v854 = vrot.slane %v845, %v853
      %v873 = vunpack.c.l.b16 %v829
      %v874 = vunpack.c.h.b16 %v829
      %v875 = vunpack.c.l.b16 %v830
      %v876 = vunpack.c.h.b16 %v830
      %v877 = vunpack.c.l.b16 %v831
      %v878 = vunpack.c.h.b16 %v831
      %v879 = vunpack.c.l.b16 %v832
      %v880 = vunpack.c.h.b16 %v832
      %v881 = vunpack.c.l.b16 %v833
      %v882 = vunpack.c.h.b16 %v833
      %v883 = vunpack.c.l.b16 %v834
      %v884 = vunpack.c.h.b16 %v834
      %v885 = vunpack.c.l.b16 %v835
      %v886 = vunpack.c.h.b16 %v835
      %v887 = vunpack.c.l.b16 %v836
      %v888 = vunpack.c.h.b16 %v836
      %v889 = vunpack.c.l.b16 %v837
      %v890 = vunpack.c.h.b16 %v837
      %v891 = vunpack.c.l.b16 %v838
      %v892 = vunpack.c.h.b16 %v838
      %v893 = vunpack.c.l.b16 %v839
      %v894 = vunpack.c.h.b16 %v839
      %v895 = vunpack.c.l.b16 %v840
      %v896 = vunpack.c.h.b16 %v840
      %v897 = vunpack.c.l.b16 %v841
      %v898 = vunpack.c.h.b16 %v841
      %v899 = vunpack.c.l.b16 %v842
      %v900 = vunpack.c.h.b16 %v842
      %v901 = vunpack.c.l.b16 %v843
      %v902 = vunpack.c.h.b16 %v843
      %v903 = vunpack.c.l.b16 %v844
      %v904 = vunpack.c.h.b16 %v844
      %v905 = vpack.c.b16 %v875, %v873
      %v906 = vpack.c.b16 %v876, %v874
      %v907 = vpack.c.b16 %v879, %v877
      %v908 = vpack.c.b16 %v880, %v878
      %v909 = vpack.c.b16 %v883, %v881
      %v910 = vpack.c.b16 %v884, %v882
      %v911 = vpack.c.b16 %v887, %v885
      %v912 = vpack.c.b16 %v888, %v886
      %v913 = vpack.c.b16 %v891, %v889
      %v914 = vpack.c.b16 %v892, %v890
      %v915 = vpack.c.b16 %v895, %v893
      %v916 = vpack.c.b16 %v896, %v894
      %v917 = vpack.c.b16 %v899, %v897
      %v918 = vpack.c.b16 %v900, %v898
      %v919 = vpack.c.b16 %v903, %v901
      %v920 = vpack.c.b16 %v904, %v902
      %937 = vmatprep.subr.bf16.mxu0 %v920
      %938 = vmatpush1.bf16.msra.mxu0 %v919
      %939 = vmatprep.subr.bf16.mxu0 %v918
      %940 = vmatpush1.bf16.msra.mxu0 %v917
      %941 = vmatprep.subr.bf16.mxu0 %v916
      %942 = vmatpush1.bf16.msra.mxu0 %v915
      %943 = vmatprep.subr.bf16.mxu0 %v914
      %944 = vmatpush1.bf16.msra.mxu0 %v913
      %945 = vmatprep.subr.bf16.mxu0 %v912
      %946 = vmatpush1.bf16.msra.mxu0 %v911
      %947 = vmatprep.subr.bf16.mxu0 %v910
      %948 = vmatpush1.bf16.msra.mxu0 %v909
      %949 = vmatprep.subr.bf16.mxu0 %v908
      %950 = vmatpush1.bf16.msra.mxu0 %v907
      %951 = vmatprep.subr.bf16.mxu0 %v906
      %952 = vmatpush1.bf16.msra.mxu0 %v905
      %953 = vmatprep.subr.bf16.mxu0 0
      %954 = vmatpush2.bf16.msra.mxu0 0
      %955 = vmatprep.subr.bf16.mxu0 0
      %956 = vmatpush2.bf16.msra.mxu0 0
      %957 = vmatprep.subr.bf16.mxu0 0
      %958 = vmatpush2.bf16.msra.mxu0 0
      %959 = vmatprep.subr.bf16.mxu0 0
      %960 = vmatpush2.bf16.msra.mxu0 0
      %961 = vmatprep.subr.bf16.mxu0 0
      %962 = vmatpush2.bf16.msra.mxu0 0
      %963 = vmatprep.subr.bf16.mxu0 0
      %964 = vmatpush2.bf16.msra.mxu0 0
      %965 = vmatprep.subr.bf16.mxu0 0
      %966 = vmatpush2.bf16.msra.mxu0 0
      %967 = vmatprep.subr.bf16.mxu0 0
      %968 = vmatpush2.bf16.msra.mxu0 0
      %969 = vmatprep.mubr.bf16.mxu0 0
      %970 = vmatmul.mubr.bf16.gmra.mxu0 %v821
      %v971 = vpop.f32.mrf.mxu0
      %v972 = vadd.f32 %v850, %v971
      %v973 = vpop.f32.mrf.mxu0
      %v974 = vadd.f32 %v854, %v973
      %v975 = vpop.f32.mrf.mxu0
      %v976 = vadd.f32 %v850, %v975
      %v977 = vpop.f32.mrf.mxu0
      %v978 = vadd.f32 %v854, %v977
      %979 = vmatprep.mubr.bf16.mxu0 0
      %980 = vmatmul.mubr.bf16.gmra.mxu0 %v822
      %v981 = vpop.f32.mrf.mxu0
      %v982 = vadd.f32 %v850, %v981
      %v983 = vpop.f32.mrf.mxu0
      %v984 = vadd.f32 %v854, %v983
      %v985 = vpop.f32.mrf.mxu0
      %v986 = vadd.f32 %v850, %v985
      %v987 = vpop.f32.mrf.mxu0
      %v988 = vadd.f32 %v854, %v987
      %989 = vmatprep.mubr.bf16.mxu0 0
      %990 = vmatmul.mubr.bf16.gmra.mxu0 %v823
      %v991 = vpop.f32.mrf.mxu0
      %v992 = vadd.f32 %v850, %v991
      %v993 = vpop.f32.mrf.mxu0
      %v994 = vadd.f32 %v854, %v993
      %v995 = vpop.f32.mrf.mxu0
      %v996 = vadd.f32 %v850, %v995
      %v997 = vpop.f32.mrf.mxu0
      %v998 = vadd.f32 %v854, %v997
      %999 = vmatprep.mubr.bf16.mxu0 0
      %1000 = vmatmul.mubr.bf16.gmra.mxu0 %v824
      %v1001 = vpop.f32.mrf.mxu0
      %v1002 = vadd.f32 %v850, %v1001
      %v1003 = vpop.f32.mrf.mxu0
      %v1004 = vadd.f32 %v854, %v1003
      %v1005 = vpop.f32.mrf.mxu0
      %v1006 = vadd.f32 %v850, %v1005
      %v1007 = vpop.f32.mrf.mxu0
      %v1008 = vadd.f32 %v854, %v1007
      %1009 = vmatprep.mubr.bf16.mxu0 0
      %1010 = vmatmul.mubr.bf16.gmra.mxu0 %v825
      %v1011 = vpop.f32.mrf.mxu0
      %v1012 = vadd.f32 %v850, %v1011
      %v1013 = vpop.f32.mrf.mxu0
      %v1014 = vadd.f32 %v854, %v1013
      %v1015 = vpop.f32.mrf.mxu0
      %v1016 = vadd.f32 %v850, %v1015
      %v1017 = vpop.f32.mrf.mxu0
      %v1018 = vadd.f32 %v854, %v1017
      %1019 = vmatprep.mubr.bf16.mxu0 0
      %1020 = vmatmul.mubr.bf16.gmra.mxu0 %v826
      %v1021 = vpop.f32.mrf.mxu0
      %v1022 = vadd.f32 %v850, %v1021
      %v1023 = vpop.f32.mrf.mxu0
      %v1024 = vadd.f32 %v854, %v1023
      %v1025 = vpop.f32.mrf.mxu0
      %v1026 = vadd.f32 %v850, %v1025
      %v1027 = vpop.f32.mrf.mxu0
      %v1028 = vadd.f32 %v854, %v1027
      %1029 = vmatprep.mubr.bf16.mxu0 0
      %1030 = vmatmul.mubr.bf16.gmra.mxu0 %v827
      %v1031 = vpop.f32.mrf.mxu0
      %v1032 = vadd.f32 %v850, %v1031
      %v1033 = vpop.f32.mrf.mxu0
      %v1034 = vadd.f32 %v854, %v1033
      %v1035 = vpop.f32.mrf.mxu0
      %v1036 = vadd.f32 %v850, %v1035
      %v1037 = vpop.f32.mrf.mxu0
      %v1038 = vadd.f32 %v854, %v1037
      %1039 = vmatprep.mubr.bf16.mxu0 0
      %1040 = vmatmul.mubr.bf16.gmra.mxu0 %v828
      %v1041 = vpop.f32.mrf.mxu0
      %v1042 = vadd.f32 %v850, %v1041
      %v1043 = vpop.f32.mrf.mxu0
      %v1044 = vadd.f32 %v854, %v1043
      %v1045 = vpop.f32.mrf.mxu0
      %v1046 = vadd.f32 %v850, %v1045
      %v1047 = vpop.f32.mrf.mxu0
      %v1048 = vadd.f32 %v854, %v1047
      %1049 = vdwg.mxu0
      %v1050 = vmax.f32 %v972, 0.0
      %v1051 = vmax.f32 %v974, 0.0
      %v1052 = vmax.f32 %v976, 0.0
      %v1053 = vmax.f32 %v978, 0.0
      %v1054 = vmax.f32 %v982, 0.0
      %v1055 = vmax.f32 %v984, 0.0
      %v1056 = vmax.f32 %v986, 0.0
      %v1057 = vmax.f32 %v988, 0.0
      %v1058 = vmax.f32 %v992, 0.0
      %v1059 = vmax.f32 %v994, 0.0
      %v1060 = vmax.f32 %v996, 0.0
      %v1061 = vmax.f32 %v998, 0.0
      %v1062 = vmax.f32 %v1002, 0.0
      %v1063 = vmax.f32 %v1004, 0.0
      %v1064 = vmax.f32 %v1006, 0.0
      %v1065 = vmax.f32 %v1008, 0.0
      %v1066 = vmax.f32 %v1012, 0.0
      %v1067 = vmax.f32 %v1014, 0.0
      %v1068 = vmax.f32 %v1016, 0.0
      %v1069 = vmax.f32 %v1018, 0.0
      %v1070 = vmax.f32 %v1022, 0.0
      %v1071 = vmax.f32 %v1024, 0.0
      %v1072 = vmax.f32 %v1026, 0.0
      %v1073 = vmax.f32 %v1028, 0.0
      %v1074 = vmax.f32 %v1032, 0.0
      %v1075 = vmax.f32 %v1034, 0.0
      %v1076 = vmax.f32 %v1036, 0.0
      %v1077 = vmax.f32 %v1038, 0.0
      %v1078 = vmax.f32 %v1042, 0.0
      %v1079 = vmax.f32 %v1044, 0.0
      %v1080 = vmax.f32 %v1046, 0.0
      %v1081 = vmax.f32 %v1048, 0.0
      %v1082 = vmax.f32 %v1050, %v1052
      %v1083 = vrot.slane %v1082, 4
      %v1084 = vmax.f32 %v1082, %v1083
      %v1085 = vrot.slane %v1084, 2
      %v1086 = vmax.f32 %v1084, %v1085
      %v1087 = vrot.slane %v1086, 1
      %v1088 = vmax.f32 %v1086, %v1087
      %v1089 = vmax.f32 %v1051, %v1053
      %v1090 = vrot.slane %v1089, 4
      %v1091 = vmax.f32 %v1089, %v1090
      %v1092 = vrot.slane %v1091, 2
      %v1093 = vmax.f32 %v1091, %v1092
      %v1094 = vrot.slane %v1093, 1
      %v1095 = vmax.f32 %v1093, %v1094
      %v1096 = vmax.f32 %v1054, %v1056
      %v1097 = vrot.slane %v1096, 4
      %v1098 = vmax.f32 %v1096, %v1097
      %v1099 = vrot.slane %v1098, 2
      %v1100 = vmax.f32 %v1098, %v1099
      %v1101 = vrot.slane %v1100, 1
      %v1102 = vmax.f32 %v1100, %v1101
      %v1103 = vmax.f32 %v1055, %v1057
      %v1104 = vrot.slane %v1103, 4
      %v1105 = vmax.f32 %v1103, %v1104
      %v1106 = vrot.slane %v1105, 2
      %v1107 = vmax.f32 %v1105, %v1106
      %v1108 = vrot.slane %v1107, 1
      %v1109 = vmax.f32 %v1107, %v1108
      %v1110 = vmax.f32 %v1058, %v1060
      %v1111 = vrot.slane %v1110, 4
      %v1112 = vmax.f32 %v1110, %v1111
      %v1113 = vrot.slane %v1112, 2
      %v1114 = vmax.f32 %v1112, %v1113
      %v1115 = vrot.slane %v1114, 1
      %v1116 = vmax.f32 %v1114, %v1115
      %v1117 = vmax.f32 %v1059, %v1061
      %v1118 = vrot.slane %v1117, 4
      %v1119 = vmax.f32 %v1117, %v1118
      %v1120 = vrot.slane %v1119, 2
      %v1121 = vmax.f32 %v1119, %v1120
      %v1122 = vrot.slane %v1121, 1
      %v1123 = vmax.f32 %v1121, %v1122
      %v1124 = vmax.f32 %v1062, %v1064
      %v1125 = vrot.slane %v1124, 4
      %v1126 = vmax.f32 %v1124, %v1125
      %v1127 = vrot.slane %v1126, 2
      %v1128 = vmax.f32 %v1126, %v1127
      %v1129 = vrot.slane %v1128, 1
      %v1130 = vmax.f32 %v1128, %v1129
      %v1131 = vmax.f32 %v1063, %v1065
      %v1132 = vrot.slane %v1131, 4
      %v1133 = vmax.f32 %v1131, %v1132
      %v1134 = vrot.slane %v1133, 2
      %v1135 = vmax.f32 %v1133, %v1134
      %v1136 = vrot.slane %v1135, 1
      %v1137 = vmax.f32 %v1135, %v1136
      %v1138 = vmax.f32 %v1066, %v1068
      %v1139 = vrot.slane %v1138, 4
      %v1140 = vmax.f32 %v1138, %v1139
      %v1141 = vrot.slane %v1140, 2
      %v1142 = vmax.f32 %v1140, %v1141
      %v1143 = vrot.slane %v1142, 1
      %v1144 = vmax.f32 %v1142, %v1143
      %v1145 = vmax.f32 %v1067, %v1069
      %v1146 = vrot.slane %v1145, 4
      %v1147 = vmax.f32 %v1145, %v1146
      %v1148 = vrot.slane %v1147, 2
      %v1149 = vmax.f32 %v1147, %v1148
      %v1150 = vrot.slane %v1149, 1
      %v1151 = vmax.f32 %v1149, %v1150
      %v1152 = vmax.f32 %v1070, %v1072
      %v1153 = vrot.slane %v1152, 4
      %v1154 = vmax.f32 %v1152, %v1153
      %v1155 = vrot.slane %v1154, 2
      %v1156 = vmax.f32 %v1154, %v1155
      %v1157 = vrot.slane %v1156, 1
      %v1158 = vmax.f32 %v1156, %v1157
      %v1159 = vmax.f32 %v1071, %v1073
      %v1160 = vrot.slane %v1159, 4
      %v1161 = vmax.f32 %v1159, %v1160
      %v1162 = vrot.slane %v1161, 2
      %v1163 = vmax.f32 %v1161, %v1162
      %v1164 = vrot.slane %v1163, 1
      %v1165 = vmax.f32 %v1163, %v1164
      %v1166 = vmax.f32 %v1074, %v1076
      %v1167 = vrot.slane %v1166, 4
      %v1168 = vmax.f32 %v1166, %v1167
      %v1169 = vrot.slane %v1168, 2
      %v1170 = vmax.f32 %v1168, %v1169
      %v1171 = vrot.slane %v1170, 1
      %v1172 = vmax.f32 %v1170, %v1171
      %v1173 = vmax.f32 %v1075, %v1077
      %v1174 = vrot.slane %v1173, 4
      %v1175 = vmax.f32 %v1173, %v1174
      %v1176 = vrot.slane %v1175, 2
      %v1177 = vmax.f32 %v1175, %v1176
      %v1178 = vrot.slane %v1177, 1
      %v1179 = vmax.f32 %v1177, %v1178
      %v1180 = vmax.f32 %v1078, %v1080
      %v1181 = vrot.slane %v1180, 4
      %v1182 = vmax.f32 %v1180, %v1181
      %v1183 = vrot.slane %v1182, 2
      %v1184 = vmax.f32 %v1182, %v1183
      %v1185 = vrot.slane %v1184, 1
      %v1186 = vmax.f32 %v1184, %v1185
      %v1187 = vmax.f32 %v1079, %v1081
      %v1188 = vrot.slane %v1187, 4
      %v1189 = vmax.f32 %v1187, %v1188
      %v1190 = vrot.slane %v1189, 2
      %v1191 = vmax.f32 %v1189, %v1190
      %v1192 = vrot.slane %v1191, 1
      %v1193 = vmax.f32 %v1191, %v1192
      %v1194 = vpack.c.bf16 %v1088, %v1088
      %v1195 = vpack.c.bf16 %v1095, %v1095
      %v1196 = vpack.c.bf16 %v1102, %v1102
      %v1197 = vpack.c.bf16 %v1109, %v1109
      %v1198 = vpack.c.bf16 %v1116, %v1116
      %v1199 = vpack.c.bf16 %v1123, %v1123
      %v1200 = vpack.c.bf16 %v1130, %v1130
      %v1201 = vpack.c.bf16 %v1137, %v1137
      %v1202 = vpack.c.bf16 %v1144, %v1144
      %v1203 = vpack.c.bf16 %v1151, %v1151
      %v1204 = vpack.c.bf16 %v1158, %v1158
      %v1205 = vpack.c.bf16 %v1165, %v1165
      %v1206 = vpack.c.bf16 %v1172, %v1172
      %v1207 = vpack.c.bf16 %v1179, %v1179
      %v1208 = vpack.c.bf16 %v1186, %v1186
      %v1209 = vpack.c.bf16 %v1193, %v1193
      %v1226 = vunpack.c.l.b16 %v1194
      %v1227 = vunpack.c.l.b16 %v1195
      %v1228 = vunpack.c.l.b16 %v1196
      %v1229 = vunpack.c.l.b16 %v1197
      %v1230 = vunpack.c.l.b16 %v1198
      %v1231 = vunpack.c.l.b16 %v1199
      %v1232 = vunpack.c.l.b16 %v1200
      %v1233 = vunpack.c.l.b16 %v1201
      %v1234 = vunpack.c.l.b16 %v1202
      %v1235 = vunpack.c.l.b16 %v1203
      %v1236 = vunpack.c.l.b16 %v1204
      %v1237 = vunpack.c.l.b16 %v1205
      %v1238 = vunpack.c.l.b16 %v1206
      %v1239 = vunpack.c.l.b16 %v1207
      %v1240 = vunpack.c.l.b16 %v1208
      %v1241 = vunpack.c.l.b16 %v1209
      %v1242 = vpack.c.b16 %v1227, %v1226
      %v1243 = vpack.c.b16 %v1229, %v1228
      %v1244 = vpack.c.b16 %v1231, %v1230
      %v1245 = vpack.c.b16 %v1233, %v1232
      %v1246 = vpack.c.b16 %v1235, %v1234
      %v1247 = vpack.c.b16 %v1237, %v1236
      %v1248 = vpack.c.b16 %v1239, %v1238
      %v1249 = vpack.c.b16 %v1241, %v1240
      %v1250 = vunpack.c.l.b16 %v1242
      %v1251 = vunpack.c.h.b16 %v1242
      %v1252 = vunpack.c.l.b16 %v1243
      %v1253 = vunpack.c.h.b16 %v1243
      %v1254 = vunpack.c.l.b16 %v1244
      %v1255 = vunpack.c.h.b16 %v1244
      %v1256 = vunpack.c.l.b16 %v1245
      %v1257 = vunpack.c.h.b16 %v1245
      %v1258 = vunpack.c.l.b16 %v1246
      %v1259 = vunpack.c.h.b16 %v1246
      %v1260 = vunpack.c.l.b16 %v1247
      %v1261 = vunpack.c.h.b16 %v1247
      %v1262 = vunpack.c.l.b16 %v1248
      %v1263 = vunpack.c.h.b16 %v1248
      %v1264 = vunpack.c.l.b16 %v1249
      %v1265 = vunpack.c.h.b16 %v1249
      %vm1266 = vcmask 1041409
      %v1267 = vsel %vm1266, %v1252, %v1250
      %vm1268 = vcmask 1042434
      %v1269 = vsel %vm1268, %v1254, %v1267
      %vm1270 = vcmask 1043459
      %v1271 = vsel %vm1270, %v1256, %v1269
      %vm1272 = vcmask 1044484
      %v1273 = vsel %vm1272, %v1258, %v1271
      %vm1274 = vcmask 1045509
      %v1275 = vsel %vm1274, %v1260, %v1273
      %vm1276 = vcmask 1046534
      %v1277 = vsel %vm1276, %v1262, %v1275
      %vm1278 = vcmask 1047559
      %v1279 = vsel %vm1278, %v1264, %v1277
      %v1280 = vsel %vm1266, %v1253, %v1251
      %v1281 = vsel %vm1268, %v1255, %v1280
      %v1282 = vsel %vm1270, %v1257, %v1281
      %v1283 = vsel %vm1272, %v1259, %v1282
      %v1284 = vsel %vm1274, %v1261, %v1283
      %v1285 = vsel %vm1276, %v1263, %v1284
      %v1286 = vsel %vm1278, %v1265, %v1285
      %v1287 = vpack.c.b16 %v1286, %v1279
      %1289 = vst [vmem:[%s283] sm:$0xff] %v1287
      %p1290 = scmp.lt.s32.totalorder %s18, 3
      %s1291 = scalar_select %p1290, %s18, 3
      %s1292 = smul.addr %s1291, 2
      %s1293 = smul.addr %s1292, 4
      %s1294 = scalar_lea.vmem %s7, %s1293
      // Predicated region
      $region49: #{pointnet2_forward.4} parent=47 // pred_check
        %p1295 = pneg %p188
      $region50: #{pointnet2_forward.4} parent=47 // pred_check_branch
        %1297 = sbr.rel (%p1295) target = $region52
      $region51: #{pointnet2_forward.4} parent=47 // pred_region
        _
      $region52: #{pointnet2_forward.4} parent=47 // pred_fallthru
        _
    $region48: #{pointnet2_forward.4} parent=5 // pred_fallthru
      _
    %p1298 = scmp.le.s32.totalorder 2, %s13
    // Predicated region
    $region53: #{pointnet2_forward.4} parent=5 // pred_check
      %p1299 = pneg %p1298
    $region54: #{pointnet2_forward.4} parent=5 // pred_check_branch
      %1301 = sbr.rel (%p1299) target = $region56
    $region55: #{pointnet2_forward.4} parent=5 // pred_region
      %s1302 = ssub.s32 %s13, 2
      // Predicated region
      $region57: #{pointnet2_forward.4} parent=55 // pred_check
        %p1303 = pneg %p194
      $region58: #{pointnet2_forward.4} parent=55 // pred_check_branch
        %1305 = sbr.rel (%p1303) target = $region60
      $region59: #{pointnet2_forward.4} parent=55 // pred_region
        %p1306 = scmp.lt.s32.totalorder %s19, 3
        %s1307 = scalar_select %p1306, %s19, 3
        %s1308 = smul.addr %s1307, 2
        %s1309 = smul.addr %s1308, 4
        %s1310 = scalar_lea.vmem %s7, %s1309
      $region60: #{pointnet2_forward.4} parent=55 // pred_fallthru
        _
    $region56: #{pointnet2_forward.4} parent=5 // pred_fallthru
      _
  $region6: #{pointnet2_forward.4} parent=0 // loop_footer
    %s17 = sadd.s32 1, %s13
  $region7: #{pointnet2_forward.4} parent=0 // loop_footer_branch
    %12 = sbr.rel target = $region3
  $region8: #{pointnet2_forward.4} parent=0 // loop_exit
    _

// kernel: pointnet2_forward.5
$region0: #{pointnet2_forward.5}
  #allocation0 [shape = 'u32[]', space=smem, size = 0x4, offset = 0x4, fixed_abs, tag = 'smem constant byte address 0x4 - core index']
  #allocation1 [shape = 'u32[144,128]{1,0:T(1,128)}', space=vmem, size = 0x12000, scoped, tag = 'internal scratch']
  %s0 = inlined_call_operand.vmem [shape: bf16[32,384], index: 0, kind: input, shape index: {}]
  %s1 = inlined_call_operand.vmem [shape: bf16[384,256], index: 1, kind: input, shape index: {}]
  %s2 = inlined_call_operand.vmem [shape: f32[1,256], index: 2, kind: input, shape index: {}]
  %s3 = inlined_call_operand.vmem [shape: bf16[256,512], index: 3, kind: input, shape index: {}]
  %s4 = inlined_call_operand.vmem [shape: f32[1,512], index: 4, kind: input, shape index: {}]
  %s5 = inlined_call_operand.vmem [shape: bf16[512,1024], index: 5, kind: input, shape index: {}]
  %s6 = inlined_call_operand.vmem [shape: f32[1,1024], index: 6, kind: input, shape index: {}]
  %s7 = inlined_call_operand.vmem [shape: bf16[1024,512], index: 7, kind: input, shape index: {}]
  %s8 = inlined_call_operand.vmem [shape: f32[1,512], index: 8, kind: input, shape index: {}]
  %s9 = inlined_call_operand.vmem [shape: bf16[512,256], index: 9, kind: input, shape index: {}]
  %s10 = inlined_call_operand.vmem [shape: f32[1,256], index: 10, kind: input, shape index: {}]
  %s11 = inlined_call_operand.vmem [shape: bf16[256,128], index: 11, kind: input, shape index: {}]
  %s12 = inlined_call_operand.vmem [shape: f32[1,128], index: 12, kind: input, shape index: {}]
  %s13 = inlined_call_operand.hbm [shape: f32[2,128], index: 13, kind: output, shape index: {}]
  %s14 = sld [smem:[#allocation0]]
  $region62: #{pointnet2_forward.5} parent=0
    _
  %s16 = ssub.s32 1, %s14
  %s17 = scalar_select 0, %s16, %s14
  $region1: #{pointnet2_forward.5} parent=0
    #allocation2 [shape = 'u8[1024]{0}', space=vmem, size = 0x400, scoped, tag = 'output window, operand 0, single buffered']
    #allocation3 [shape = 's32[1]{0}', space=sflag, size = 0x4, scoped, tag = 'scoped memory for pointnet2_forward.5']
    %18 = vsyncpa [#allocation3], 0
    // Predicated region
    $region2: #{pointnet2_forward.5} parent=1 // pred_check
      _
    $region3: #{pointnet2_forward.5} parent=1 // pred_check_branch
      %20 = sbr.rel (0) target = $region5
    $region4: #{pointnet2_forward.5} parent=1 // pred_region
      _
    $region5: #{pointnet2_forward.5} parent=1 // pred_fallthru
      _
    // Predicated region
    $region6: #{pointnet2_forward.5} parent=1 // pred_check
      _
    $region7: #{pointnet2_forward.5} parent=1 // pred_check_branch
      %22 = sbr.rel (0) target = $region9
    $region8: #{pointnet2_forward.5} parent=1 // pred_region
      _
    $region9: #{pointnet2_forward.5} parent=1 // pred_fallthru
      _
    // Predicated region
    $region10: #{pointnet2_forward.5} parent=1 // pred_check
      _
    $region11: #{pointnet2_forward.5} parent=1 // pred_check_branch
      %24 = sbr.rel (0) target = $region13
    $region12: #{pointnet2_forward.5} parent=1 // pred_region
      _
    $region13: #{pointnet2_forward.5} parent=1 // pred_fallthru
      _
    // Predicated region
    $region14: #{pointnet2_forward.5} parent=1 // pred_check
      _
    $region15: #{pointnet2_forward.5} parent=1 // pred_check_branch
      %26 = sbr.rel (0) target = $region17
    $region16: #{pointnet2_forward.5} parent=1 // pred_region
      _
    $region17: #{pointnet2_forward.5} parent=1 // pred_fallthru
      _
    // Predicated region
    $region18: #{pointnet2_forward.5} parent=1 // pred_check
      _
    $region19: #{pointnet2_forward.5} parent=1 // pred_check_branch
      %28 = sbr.rel (0) target = $region21
    $region20: #{pointnet2_forward.5} parent=1 // pred_region
      _
    $region21: #{pointnet2_forward.5} parent=1 // pred_fallthru
      _
    // Predicated region
    $region22: #{pointnet2_forward.5} parent=1 // pred_check
      _
    $region23: #{pointnet2_forward.5} parent=1 // pred_check_branch
      %30 = sbr.rel (0) target = $region25
    $region24: #{pointnet2_forward.5} parent=1 // pred_region
      _
    $region25: #{pointnet2_forward.5} parent=1 // pred_fallthru
      _
    // Predicated region
    $region26: #{pointnet2_forward.5} parent=1 // pred_check
      _
    $region27: #{pointnet2_forward.5} parent=1 // pred_check_branch
      %32 = sbr.rel (0) target = $region29
    $region28: #{pointnet2_forward.5} parent=1 // pred_region
      _
    $region29: #{pointnet2_forward.5} parent=1 // pred_fallthru
      _
    // Predicated region
    $region30: #{pointnet2_forward.5} parent=1 // pred_check
      _
    $region31: #{pointnet2_forward.5} parent=1 // pred_check_branch
      %34 = sbr.rel (0) target = $region33
    $region32: #{pointnet2_forward.5} parent=1 // pred_region
      _
    $region33: #{pointnet2_forward.5} parent=1 // pred_fallthru
      _
    // Predicated region
    $region34: #{pointnet2_forward.5} parent=1 // pred_check
      _
    $region35: #{pointnet2_forward.5} parent=1 // pred_check_branch
      %36 = sbr.rel (0) target = $region37
    $region36: #{pointnet2_forward.5} parent=1 // pred_region
      _
    $region37: #{pointnet2_forward.5} parent=1 // pred_fallthru
      _
    // Predicated region
    $region38: #{pointnet2_forward.5} parent=1 // pred_check
      _
    $region39: #{pointnet2_forward.5} parent=1 // pred_check_branch
      %38 = sbr.rel (0) target = $region41
    $region40: #{pointnet2_forward.5} parent=1 // pred_region
      _
    $region41: #{pointnet2_forward.5} parent=1 // pred_fallthru
      _
    // Predicated region
    $region42: #{pointnet2_forward.5} parent=1 // pred_check
      _
    $region43: #{pointnet2_forward.5} parent=1 // pred_check_branch
      %40 = sbr.rel (0) target = $region45
    $region44: #{pointnet2_forward.5} parent=1 // pred_region
      _
    $region45: #{pointnet2_forward.5} parent=1 // pred_fallthru
      _
    // Predicated region
    $region46: #{pointnet2_forward.5} parent=1 // pred_check
      _
    $region47: #{pointnet2_forward.5} parent=1 // pred_check_branch
      %42 = sbr.rel (0) target = $region49
    $region48: #{pointnet2_forward.5} parent=1 // pred_region
      _
    $region49: #{pointnet2_forward.5} parent=1 // pred_fallthru
      _
    // Predicated region
    $region50: #{pointnet2_forward.5} parent=1 // pred_check
      _
    $region51: #{pointnet2_forward.5} parent=1 // pred_check_branch
      %44 = sbr.rel (0) target = $region53
    $region52: #{pointnet2_forward.5} parent=1 // pred_region
      _
    $region53: #{pointnet2_forward.5} parent=1 // pred_fallthru
      _
    %v46 = vld [vmem:[%s0] sm:$0xff]
    %v47 = vld [vmem:[%s0 + $0x8] sm:$0xf]
    %v48 = vld [vmem:[%s0 + $0xc] sm:$0xff]
    %v49 = vld [vmem:[%s0 + $0x14] sm:$0xf]
    %v50 = vld [vmem:[%s0 + $0x18] sm:$0xff]
    %v51 = vld [vmem:[%s0 + $0x20] sm:$0xf]
    %v52 = vld [vmem:[%s0 + $0x24] sm:$0xff]
    %v53 = vld [vmem:[%s0 + $0x2c] sm:$0xf]
    %v54 = vld [vmem:[%s1] sm:$0xff]
    %v55 = vld [vmem:[%s1 + $0x8] sm:$0xff]
    %v56 = vld [vmem:[%s1 + $0x10] sm:$0xff]
    %v57 = vld [vmem:[%s1 + $0x18] sm:$0xff]
    %v58 = vld [vmem:[%s1 + $0x20] sm:$0xff]
    %v59 = vld [vmem:[%s1 + $0x28] sm:$0xff]
    %v60 = vld [vmem:[%s1 + $0x30] sm:$0xff]
    %v61 = vld [vmem:[%s1 + $0x38] sm:$0xff]
    %v62 = vld [vmem:[%s1 + $0x40] sm:$0xff]
    %v63 = vld [vmem:[%s1 + $0x48] sm:$0xff]
    %v64 = vld [vmem:[%s1 + $0x50] sm:$0xff]
    %v65 = vld [vmem:[%s1 + $0x58] sm:$0xff]
    %v66 = vld [vmem:[%s1 + $0x60] sm:$0xff]
    %v67 = vld [vmem:[%s1 + $0x68] sm:$0xff]
    %v68 = vld [vmem:[%s1 + $0x70] sm:$0xff]
    %v69 = vld [vmem:[%s1 + $0x78] sm:$0xff]
    %v70 = vld [vmem:[%s1 + $0x80] sm:$0xff]
    %v71 = vld [vmem:[%s1 + $0x88] sm:$0xff]
    %v72 = vld [vmem:[%s1 + $0x90] sm:$0xff]
    %v73 = vld [vmem:[%s1 + $0x98] sm:$0xff]
    %v74 = vld [vmem:[%s1 + $0xa0] sm:$0xff]
    %v75 = vld [vmem:[%s1 + $0xa8] sm:$0xff]
    %v76 = vld [vmem:[%s1 + $0xb0] sm:$0xff]
    %v77 = vld [vmem:[%s1 + $0xb8] sm:$0xff]
    %v78 = vld [vmem:[%s1 + $0xc0] sm:$0xff]
    %v79 = vld [vmem:[%s1 + $0xc8] sm:$0xff]
    %v80 = vld [vmem:[%s1 + $0xd0] sm:$0xff]
    %v81 = vld [vmem:[%s1 + $0xd8] sm:$0xff]
    %v82 = vld [vmem:[%s1 + $0xe0] sm:$0xff]
    %v83 = vld [vmem:[%s1 + $0xe8] sm:$0xff]
    %v84 = vld [vmem:[%s1 + $0xf0] sm:$0xff]
    %v85 = vld [vmem:[%s1 + $0xf8] sm:$0xff]
    %v86 = vld [vmem:[%s1 + $0x100] sm:$0xff]
    %v87 = vld [vmem:[%s1 + $0x108] sm:$0xff]
    %v88 = vld [vmem:[%s1 + $0x110] sm:$0xff]
    %v89 = vld [vmem:[%s1 + $0x118] sm:$0xff]
    %v90 = vld [vmem:[%s1 + $0x120] sm:$0xff]
    %v91 = vld [vmem:[%s1 + $0x128] sm:$0xff]
    %v92 = vld [vmem:[%s1 + $0x130] sm:$0xff]
    %v93 = vld [vmem:[%s1 + $0x138] sm:$0xff]
    %v94 = vld [vmem:[%s1 + $0x140] sm:$0xff]
    %v95 = vld [vmem:[%s1 + $0x148] sm:$0xff]
    %v96 = vld [vmem:[%s1 + $0x150] sm:$0xff]
    %v97 = vld [vmem:[%s1 + $0x158] sm:$0xff]
    %v98 = vld [vmem:[%s1 + $0x160] sm:$0xff]
    %v99 = vld [vmem:[%s1 + $0x168] sm:$0xff]
    %v100 = vld [vmem:[%s1 + $0x170] sm:$0xff]
    %v101 = vld [vmem:[%s1 + $0x178] sm:$0xff]
    %v102 = vld [vmem:[%s2] sm:$0x3]
    %v104 = vlaneseq
    %v105 = vshrl.u32 %v104, 7
    %v106 = vsub.s32 0, %v105
    %v107 = vrot.slane %v102, %v106
    %v108 = vlaneseq
    %v109 = vshrl.u32 %v108, 7
    %v110 = vsub.s32 1, %v109
    %v111 = vrot.slane %v102, %v110
    %v122 = vunpack.c.l.b16 %v46
    %v123 = vunpack.c.h.b16 %v46
    %v124 = vunpack.c.l.b16 %v47
    %v125 = vunpack.c.l.b16 %v48
    %v126 = vunpack.c.h.b16 %v48
    %v127 = vunpack.c.l.b16 %v49
    %v128 = vunpack.c.l.b16 %v50
    %v129 = vunpack.c.h.b16 %v50
    %v130 = vunpack.c.l.b16 %v51
    %v131 = vunpack.c.l.b16 %v52
    %v132 = vunpack.c.h.b16 %v52
    %v133 = vunpack.c.l.b16 %v53
    %v134 = vpack.c.b16 %v125, %v122
    %v135 = vpack.c.b16 %v126, %v123
    %v136 = vpack.c.b16 %v127, %v124
    %v137 = vpack.c.b16 %v131, %v128
    %v138 = vpack.c.b16 %v132, %v129
    %v139 = vpack.c.b16 %v133, %v130
    %v194 = vunpack.c.l.b16 %v54
    %v195 = vunpack.c.h.b16 %v54
    %v196 = vunpack.c.l.b16 %v55
    %v197 = vunpack.c.h.b16 %v55
    %v198 = vunpack.c.l.b16 %v56
    %v199 = vunpack.c.h.b16 %v56
    %v200 = vunpack.c.l.b16 %v57
    %v201 = vunpack.c.h.b16 %v57
    %v202 = vunpack.c.l.b16 %v58
    %v203 = vunpack.c.h.b16 %v58
    %v204 = vunpack.c.l.b16 %v59
    %v205 = vunpack.c.h.b16 %v59
    %v206 = vunpack.c.l.b16 %v60
    %v207 = vunpack.c.h.b16 %v60
    %v208 = vunpack.c.l.b16 %v61
    %v209 = vunpack.c.h.b16 %v61
    %v210 = vunpack.c.l.b16 %v62
    %v211 = vunpack.c.h.b16 %v62
    %v212 = vunpack.c.l.b16 %v63
    %v213 = vunpack.c.h.b16 %v63
    %v214 = vunpack.c.l.b16 %v64
    %v215 = vunpack.c.h.b16 %v64
    %v216 = vunpack.c.l.b16 %v65
    %v217 = vunpack.c.h.b16 %v65
    %v218 = vunpack.c.l.b16 %v66
    %v219 = vunpack.c.h.b16 %v66
    %v220 = vunpack.c.l.b16 %v67
    %v221 = vunpack.c.h.b16 %v67
    %v222 = vunpack.c.l.b16 %v68
    %v223 = vunpack.c.h.b16 %v68
    %v224 = vunpack.c.l.b16 %v69
    %v225 = vunpack.c.h.b16 %v69
    %v226 = vunpack.c.l.b16 %v70
    %v227 = vunpack.c.h.b16 %v70
    %v228 = vunpack.c.l.b16 %v71
    %v229 = vunpack.c.h.b16 %v71
    %v230 = vunpack.c.l.b16 %v72
    %v231 = vunpack.c.h.b16 %v72
    %v232 = vunpack.c.l.b16 %v73
    %v233 = vunpack.c.h.b16 %v73
    %v234 = vunpack.c.l.b16 %v74
    %v235 = vunpack.c.h.b16 %v74
    %v236 = vunpack.c.l.b16 %v75
    %v237 = vunpack.c.h.b16 %v75
    %v238 = vunpack.c.l.b16 %v76
    %v239 = vunpack.c.h.b16 %v76
    %v240 = vunpack.c.l.b16 %v77
    %v241 = vunpack.c.h.b16 %v77
    %v242 = vunpack.c.l.b16 %v78
    %v243 = vunpack.c.h.b16 %v78
    %v244 = vunpack.c.l.b16 %v79
    %v245 = vunpack.c.h.b16 %v79
    %v246 = vunpack.c.l.b16 %v80
    %v247 = vunpack.c.h.b16 %v80
    %v248 = vunpack.c.l.b16 %v81
    %v249 = vunpack.c.h.b16 %v81
    %v250 = vunpack.c.l.b16 %v82
    %v251 = vunpack.c.h.b16 %v82
    %v252 = vunpack.c.l.b16 %v83
    %v253 = vunpack.c.h.b16 %v83
    %v254 = vunpack.c.l.b16 %v84
    %v255 = vunpack.c.h.b16 %v84
    %v256 = vunpack.c.l.b16 %v85
    %v257 = vunpack.c.h.b16 %v85
    %v258 = vunpack.c.l.b16 %v86
    %v259 = vunpack.c.h.b16 %v86
    %v260 = vunpack.c.l.b16 %v87
    %v261 = vunpack.c.h.b16 %v87
    %v262 = vunpack.c.l.b16 %v88
    %v263 = vunpack.c.h.b16 %v88
    %v264 = vunpack.c.l.b16 %v89
    %v265 = vunpack.c.h.b16 %v89
    %v266 = vunpack.c.l.b16 %v90
    %v267 = vunpack.c.h.b16 %v90
    %v268 = vunpack.c.l.b16 %v91
    %v269 = vunpack.c.h.b16 %v91
    %v270 = vunpack.c.l.b16 %v92
    %v271 = vunpack.c.h.b16 %v92
    %v272 = vunpack.c.l.b16 %v93
    %v273 = vunpack.c.h.b16 %v93
    %v274 = vunpack.c.l.b16 %v94
    %v275 = vunpack.c.h.b16 %v94
    %v276 = vunpack.c.l.b16 %v95
    %v277 = vunpack.c.h.b16 %v95
    %v278 = vunpack.c.l.b16 %v96
    %v279 = vunpack.c.h.b16 %v96
    %v280 = vunpack.c.l.b16 %v97
    %v281 = vunpack.c.h.b16 %v97
    %v282 = vunpack.c.l.b16 %v98
    %v283 = vunpack.c.h.b16 %v98
    %v284 = vunpack.c.l.b16 %v99
    %v285 = vunpack.c.h.b16 %v99
    %v286 = vunpack.c.l.b16 %v100
    %v287 = vunpack.c.h.b16 %v100
    %v288 = vunpack.c.l.b16 %v101
    %v289 = vunpack.c.h.b16 %v101
    %v290 = vpack.c.b16 %v196, %v194
    %v291 = vpack.c.b16 %v197, %v195
    %v292 = vpack.c.b16 %v200, %v198
    %v293 = vpack.c.b16 %v201, %v199
    %v294 = vpack.c.b16 %v204, %v202
    %v295 = vpack.c.b16 %v205, %v203
    %v296 = vpack.c.b16 %v208, %v206
    %v297 = vpack.c.b16 %v209, %v207
    %v298 = vpack.c.b16 %v212, %v210
    %v299 = vpack.c.b16 %v213, %v211
    %v300 = vpack.c.b16 %v216, %v214
    %v301 = vpack.c.b16 %v217, %v215
    %v302 = vpack.c.b16 %v220, %v218
    %v303 = vpack.c.b16 %v221, %v219
    %v304 = vpack.c.b16 %v224, %v222
    %v305 = vpack.c.b16 %v225, %v223
    %v306 = vpack.c.b16 %v228, %v226
    %v307 = vpack.c.b16 %v229, %v227
    %v308 = vpack.c.b16 %v232, %v230
    %v309 = vpack.c.b16 %v233, %v231
    %v310 = vpack.c.b16 %v236, %v234
    %v311 = vpack.c.b16 %v237, %v235
    %v312 = vpack.c.b16 %v240, %v238
    %v313 = vpack.c.b16 %v241, %v239
    %v314 = vpack.c.b16 %v244, %v242
    %v315 = vpack.c.b16 %v245, %v243
    %v316 = vpack.c.b16 %v248, %v246
    %v317 = vpack.c.b16 %v249, %v247
    %v318 = vpack.c.b16 %v252, %v250
    %v319 = vpack.c.b16 %v253, %v251
    %v320 = vpack.c.b16 %v256, %v254
    %v321 = vpack.c.b16 %v257, %v255
    %v322 = vpack.c.b16 %v260, %v258
    %v323 = vpack.c.b16 %v261, %v259
    %v324 = vpack.c.b16 %v264, %v262
    %v325 = vpack.c.b16 %v265, %v263
    %v326 = vpack.c.b16 %v268, %v266
    %v327 = vpack.c.b16 %v269, %v267
    %v328 = vpack.c.b16 %v272, %v270
    %v329 = vpack.c.b16 %v273, %v271
    %v330 = vpack.c.b16 %v276, %v274
    %v331 = vpack.c.b16 %v277, %v275
    %v332 = vpack.c.b16 %v280, %v278
    %v333 = vpack.c.b16 %v281, %v279
    %v334 = vpack.c.b16 %v284, %v282
    %v335 = vpack.c.b16 %v285, %v283
    %v336 = vpack.c.b16 %v288, %v286
    %v337 = vpack.c.b16 %v289, %v287
    %386 = vmatprep.subr.bf16.mxu0 %v305
    %387 = vmatpush1.bf16.msra.mxu0 %v304
    %388 = vmatprep.subr.bf16.mxu0 %v303
    %389 = vmatpush1.bf16.msra.mxu0 %v302
    %390 = vmatprep.subr.bf16.mxu0 %v301
    %391 = vmatpush1.bf16.msra.mxu0 %v300
    %392 = vmatprep.subr.bf16.mxu0 %v299
    %393 = vmatpush1.bf16.msra.mxu0 %v298
    %394 = vmatprep.subr.bf16.mxu0 %v297
    %395 = vmatpush1.bf16.msra.mxu0 %v296
    %396 = vmatprep.subr.bf16.mxu0 %v295
    %397 = vmatpush1.bf16.msra.mxu0 %v294
    %398 = vmatprep.subr.bf16.mxu0 %v293
    %399 = vmatpush1.bf16.msra.mxu0 %v292
    %400 = vmatprep.subr.bf16.mxu0 %v291
    %401 = vmatpush1.bf16.msra.mxu0 %v290
    %402 = vmatprep.subr.bf16.mxu0 %v321
    %403 = vmatpush2.bf16.msra.mxu0 %v320
    %404 = vmatprep.subr.bf16.mxu0 %v319
    %405 = vmatpush2.bf16.msra.mxu0 %v318
    %406 = vmatprep.subr.bf16.mxu0 %v317
    %407 = vmatpush2.bf16.msra.mxu0 %v316
    %408 = vmatprep.subr.bf16.mxu0 %v315
    %409 = vmatpush2.bf16.msra.mxu0 %v314
    %410 = vmatprep.subr.bf16.mxu0 %v313
    %411 = vmatpush2.bf16.msra.mxu0 %v312
    %412 = vmatprep.subr.bf16.mxu0 %v311
    %413 = vmatpush2.bf16.msra.mxu0 %v310
    %414 = vmatprep.subr.bf16.mxu0 %v309
    %415 = vmatpush2.bf16.msra.mxu0 %v308
    %416 = vmatprep.subr.bf16.mxu0 %v307
    %417 = vmatpush2.bf16.msra.mxu0 %v306
    %418 = vmatprep.mubr.bf16.mxu0 %v135
    %419 = vmatmul.mubr.bf16.gmra.mxu0 %v134
    %v420 = vpop.f32.mrf.mxu0
    %v421 = vadd.f32 %v107, %v420
    %v422 = vpop.f32.mrf.mxu0
    %v423 = vadd.f32 %v111, %v422
    %v424 = vpop.f32.mrf.mxu0
    %v425 = vadd.f32 %v107, %v424
    %v426 = vpop.f32.mrf.mxu0
    %v427 = vadd.f32 %v111, %v426
    %428 = vmatprep.mubr.bf16.mxu0 %v138
    %429 = vmatmul.mubr.bf16.gmra.mxu0 %v137
    %v430 = vpop.f32.mrf.mxu0
    %v431 = vadd.f32 %v107, %v430
    %v432 = vpop.f32.mrf.mxu0
    %v433 = vadd.f32 %v111, %v432
    %v434 = vpop.f32.mrf.mxu0
    %v435 = vadd.f32 %v107, %v434
    %v436 = vpop.f32.mrf.mxu0
    %v437 = vadd.f32 %v111, %v436
    %438 = vdwg.mxu0
    %439 = vmatprep.subr.bf16.mxu0 %v337
    %440 = vmatpush1.bf16.msra.mxu0 %v336
    %441 = vmatprep.subr.bf16.mxu0 %v335
    %442 = vmatpush1.bf16.msra.mxu0 %v334
    %443 = vmatprep.subr.bf16.mxu0 %v333
    %444 = vmatpush1.bf16.msra.mxu0 %v332
    %445 = vmatprep.subr.bf16.mxu0 %v331
    %446 = vmatpush1.bf16.msra.mxu0 %v330
    %447 = vmatprep.subr.bf16.mxu0 %v329
    %448 = vmatpush1.bf16.msra.mxu0 %v328
    %449 = vmatprep.subr.bf16.mxu0 %v327
    %450 = vmatpush1.bf16.msra.mxu0 %v326
    %451 = vmatprep.subr.bf16.mxu0 %v325
    %452 = vmatpush1.bf16.msra.mxu0 %v324
    %453 = vmatprep.subr.bf16.mxu0 %v323
    %454 = vmatpush1.bf16.msra.mxu0 %v322
    %455 = vmatprep.subr.bf16.mxu0 0
    %456 = vmatpush2.bf16.msra.mxu0 0
    %457 = vmatprep.subr.bf16.mxu0 0
    %458 = vmatpush2.bf16.msra.mxu0 0
    %459 = vmatprep.subr.bf16.mxu0 0
    %460 = vmatpush2.bf16.msra.mxu0 0
    %461 = vmatprep.subr.bf16.mxu0 0
    %462 = vmatpush2.bf16.msra.mxu0 0
    %463 = vmatprep.subr.bf16.mxu0 0
    %464 = vmatpush2.bf16.msra.mxu0 0
    %465 = vmatprep.subr.bf16.mxu0 0
    %466 = vmatpush2.bf16.msra.mxu0 0
    %467 = vmatprep.subr.bf16.mxu0 0
    %468 = vmatpush2.bf16.msra.mxu0 0
    %469 = vmatprep.subr.bf16.mxu0 0
    %470 = vmatpush2.bf16.msra.mxu0 0
    %471 = vmatprep.mubr.bf16.mxu0 0
    %472 = vmatmul.mubr.bf16.gmra.mxu0 %v136
    %v473 = vpop.f32.mrf.mxu0
    %v474 = vadd.f32 %v421, %v473
    %v475 = vpop.f32.mrf.mxu0
    %v476 = vadd.f32 %v423, %v475
    %v477 = vpop.f32.mrf.mxu0
    %v478 = vadd.f32 %v425, %v477
    %v479 = vpop.f32.mrf.mxu0
    %v480 = vadd.f32 %v427, %v479
    %481 = vmatprep.mubr.bf16.mxu0 0
    %482 = vmatmul.mubr.bf16.gmra.mxu0 %v139
    %v483 = vpop.f32.mrf.mxu0
    %v484 = vadd.f32 %v431, %v483
    %v485 = vpop.f32.mrf.mxu0
    %v486 = vadd.f32 %v433, %v485
    %v487 = vpop.f32.mrf.mxu0
    %v488 = vadd.f32 %v435, %v487
    %v489 = vpop.f32.mrf.mxu0
    %v490 = vadd.f32 %v437, %v489
    %491 = vdwg.mxu0
    %v492 = vmax.f32 %v474, 0.0
    %v493 = vmax.f32 %v476, 0.0
    %v494 = vmax.f32 %v478, 0.0
    %v495 = vmax.f32 %v480, 0.0
    %v496 = vmax.f32 %v484, 0.0
    %v497 = vmax.f32 %v486, 0.0
    %v498 = vmax.f32 %v488, 0.0
    %v499 = vmax.f32 %v490, 0.0
    %v500 = vpack.c.bf16 %v494, %v492
    %v501 = vpack.c.bf16 %v495, %v493
    %v502 = vpack.c.bf16 %v498, %v496
    %v503 = vpack.c.bf16 %v499, %v497
    %v504 = vld [vmem:[%s3] sm:$0xff]
    %v505 = vld [vmem:[%s3 + $0x8] sm:$0xff]
    %v506 = vld [vmem:[%s3 + $0x10] sm:$0xff]
    %v507 = vld [vmem:[%s3 + $0x18] sm:$0xff]
    %v508 = vld [vmem:[%s3 + $0x20] sm:$0xff]
    %v509 = vld [vmem:[%s3 + $0x28] sm:$0xff]
    %v510 = vld [vmem:[%s3 + $0x30] sm:$0xff]
    %v511 = vld [vmem:[%s3 + $0x38] sm:$0xff]
    %v512 = vld [vmem:[%s3 + $0x40] sm:$0xff]
    %v513 = vld [vmem:[%s3 + $0x48] sm:$0xff]
    %v514 = vld [vmem:[%s3 + $0x50] sm:$0xff]
    %v515 = vld [vmem:[%s3 + $0x58] sm:$0xff]
    %v516 = vld [vmem:[%s3 + $0x60] sm:$0xff]
    %v517 = vld [vmem:[%s3 + $0x68] sm:$0xff]
    %v518 = vld [vmem:[%s3 + $0x70] sm:$0xff]
    %v519 = vld [vmem:[%s3 + $0x78] sm:$0xff]
    %v520 = vld [vmem:[%s3 + $0x80] sm:$0xff]
    %v521 = vld [vmem:[%s3 + $0x88] sm:$0xff]
    %v522 = vld [vmem:[%s3 + $0x90] sm:$0xff]
    %v523 = vld [vmem:[%s3 + $0x98] sm:$0xff]
    %v524 = vld [vmem:[%s3 + $0xa0] sm:$0xff]
    %v525 = vld [vmem:[%s3 + $0xa8] sm:$0xff]
    %v526 = vld [vmem:[%s3 + $0xb0] sm:$0xff]
    %v527 = vld [vmem:[%s3 + $0xb8] sm:$0xff]
    %v528 = vld [vmem:[%s3 + $0xc0] sm:$0xff]
    %v529 = vld [vmem:[%s3 + $0xc8] sm:$0xff]
    %v530 = vld [vmem:[%s3 + $0xd0] sm:$0xff]
    %v531 = vld [vmem:[%s3 + $0xd8] sm:$0xff]
    %v532 = vld [vmem:[%s3 + $0xe0] sm:$0xff]
    %v533 = vld [vmem:[%s3 + $0xe8] sm:$0xff]
    %v534 = vld [vmem:[%s3 + $0xf0] sm:$0xff]
    %v535 = vld [vmem:[%s3 + $0xf8] sm:$0xff]
    %v536 = vld [vmem:[%s3 + $0x100] sm:$0xff]
    %v537 = vld [vmem:[%s3 + $0x108] sm:$0xff]
    %v538 = vld [vmem:[%s3 + $0x110] sm:$0xff]
    %v539 = vld [vmem:[%s3 + $0x118] sm:$0xff]
    %v540 = vld [vmem:[%s3 + $0x120] sm:$0xff]
    %v541 = vld [vmem:[%s3 + $0x128] sm:$0xff]
    %v542 = vld [vmem:[%s3 + $0x130] sm:$0xff]
    %v543 = vld [vmem:[%s3 + $0x138] sm:$0xff]
    %v544 = vld [vmem:[%s3 + $0x140] sm:$0xff]
    %v545 = vld [vmem:[%s3 + $0x148] sm:$0xff]
    %v546 = vld [vmem:[%s3 + $0x150] sm:$0xff]
    %v547 = vld [vmem:[%s3 + $0x158] sm:$0xff]
    %v548 = vld [vmem:[%s3 + $0x160] sm:$0xff]
    %v549 = vld [vmem:[%s3 + $0x168] sm:$0xff]
    %v550 = vld [vmem:[%s3 + $0x170] sm:$0xff]
    %v551 = vld [vmem:[%s3 + $0x178] sm:$0xff]
    %v552 = vld [vmem:[%s3 + $0x180] sm:$0xff]
    %v553 = vld [vmem:[%s3 + $0x188] sm:$0xff]
    %v554 = vld [vmem:[%s3 + $0x190] sm:$0xff]
    %v555 = vld [vmem:[%s3 + $0x198] sm:$0xff]
    %v556 = vld [vmem:[%s3 + $0x1a0] sm:$0xff]
    %v557 = vld [vmem:[%s3 + $0x1a8] sm:$0xff]
    %v558 = vld [vmem:[%s3 + $0x1b0] sm:$0xff]
    %v559 = vld [vmem:[%s3 + $0x1b8] sm:$0xff]
    %v560 = vld [vmem:[%s3 + $0x1c0] sm:$0xff]
    %v561 = vld [vmem:[%s3 + $0x1c8] sm:$0xff]
    %v562 = vld [vmem:[%s3 + $0x1d0] sm:$0xff]
    %v563 = vld [vmem:[%s3 + $0x1d8] sm:$0xff]
    %v564 = vld [vmem:[%s3 + $0x1e0] sm:$0xff]
    %v565 = vld [vmem:[%s3 + $0x1e8] sm:$0xff]
    %v566 = vld [vmem:[%s3 + $0x1f0] sm:$0xff]
    %v567 = vld [vmem:[%s3 + $0x1f8] sm:$0xff]
    %v568 = vld [vmem:[%s4] sm:$0xf]
    %v570 = vlaneseq
    %v571 = vshrl.u32 %v570, 7
    %v572 = vsub.s32 0, %v571
    %v573 = vrot.slane %v568, %v572
    %v574 = vlaneseq
    %v575 = vshrl.u32 %v574, 7
    %v576 = vsub.s32 1, %v575
    %v577 = vrot.slane %v568, %v576
    %v578 = vlaneseq
    %v579 = vshrl.u32 %v578, 7
    %v580 = vsub.s32 2, %v579
    %v581 = vrot.slane %v568, %v580
    %v582 = vlaneseq
    %v583 = vshrl.u32 %v582, 7
    %v584 = vsub.s32 3, %v583
    %v585 = vrot.slane %v568, %v584
    %v654 = vunpack.c.l.b16 %v504
    %v655 = vunpack.c.h.b16 %v504
    %v656 = vunpack.c.l.b16 %v505
    %v657 = vunpack.c.h.b16 %v505
    %v658 = vunpack.c.l.b16 %v506
    %v659 = vunpack.c.h.b16 %v506
    %v660 = vunpack.c.l.b16 %v507
    %v661 = vunpack.c.h.b16 %v507
    %v662 = vunpack.c.l.b16 %v508
    %v663 = vunpack.c.h.b16 %v508
    %v664 = vunpack.c.l.b16 %v509
    %v665 = vunpack.c.h.b16 %v509
    %v666 = vunpack.c.l.b16 %v510
    %v667 = vunpack.c.h.b16 %v510
    %v668 = vunpack.c.l.b16 %v511
    %v669 = vunpack.c.h.b16 %v511
    %v670 = vunpack.c.l.b16 %v512
    %v671 = vunpack.c.h.b16 %v512
    %v672 = vunpack.c.l.b16 %v513
    %v673 = vunpack.c.h.b16 %v513
    %v674 = vunpack.c.l.b16 %v514
    %v675 = vunpack.c.h.b16 %v514
    %v676 = vunpack.c.l.b16 %v515
    %v677 = vunpack.c.h.b16 %v515
    %v678 = vunpack.c.l.b16 %v516
    %v679 = vunpack.c.h.b16 %v516
    %v680 = vunpack.c.l.b16 %v517
    %v681 = vunpack.c.h.b16 %v517
    %v682 = vunpack.c.l.b16 %v518
    %v683 = vunpack.c.h.b16 %v518
    %v684 = vunpack.c.l.b16 %v519
    %v685 = vunpack.c.h.b16 %v519
    %v686 = vunpack.c.l.b16 %v520
    %v687 = vunpack.c.h.b16 %v520
    %v688 = vunpack.c.l.b16 %v521
    %v689 = vunpack.c.h.b16 %v521
    %v690 = vunpack.c.l.b16 %v522
    %v691 = vunpack.c.h.b16 %v522
    %v692 = vunpack.c.l.b16 %v523
    %v693 = vunpack.c.h.b16 %v523
    %v694 = vunpack.c.l.b16 %v524
    %v695 = vunpack.c.h.b16 %v524
    %v696 = vunpack.c.l.b16 %v525
    %v697 = vunpack.c.h.b16 %v525
    %v698 = vunpack.c.l.b16 %v526
    %v699 = vunpack.c.h.b16 %v526
    %v700 = vunpack.c.l.b16 %v527
    %v701 = vunpack.c.h.b16 %v527
    %v702 = vunpack.c.l.b16 %v528
    %v703 = vunpack.c.h.b16 %v528
    %v704 = vunpack.c.l.b16 %v529
    %v705 = vunpack.c.h.b16 %v529
    %v706 = vunpack.c.l.b16 %v530
    %v707 = vunpack.c.h.b16 %v530
    %v708 = vunpack.c.l.b16 %v531
    %v709 = vunpack.c.h.b16 %v531
    %v710 = vunpack.c.l.b16 %v532
    %v711 = vunpack.c.h.b16 %v532
    %v712 = vunpack.c.l.b16 %v533
    %v713 = vunpack.c.h.b16 %v533
    %v714 = vunpack.c.l.b16 %v534
    %v715 = vunpack.c.h.b16 %v534
    %v716 = vunpack.c.l.b16 %v535
    %v717 = vunpack.c.h.b16 %v535
    %v718 = vunpack.c.l.b16 %v536
    %v719 = vunpack.c.h.b16 %v536
    %v720 = vunpack.c.l.b16 %v537
    %v721 = vunpack.c.h.b16 %v537
    %v722 = vunpack.c.l.b16 %v538
    %v723 = vunpack.c.h.b16 %v538
    %v724 = vunpack.c.l.b16 %v539
    %v725 = vunpack.c.h.b16 %v539
    %v726 = vunpack.c.l.b16 %v540
    %v727 = vunpack.c.h.b16 %v540
    %v728 = vunpack.c.l.b16 %v541
    %v729 = vunpack.c.h.b16 %v541
    %v730 = vunpack.c.l.b16 %v542
    %v731 = vunpack.c.h.b16 %v542
    %v732 = vunpack.c.l.b16 %v543
    %v733 = vunpack.c.h.b16 %v543
    %v734 = vunpack.c.l.b16 %v544
    %v735 = vunpack.c.h.b16 %v544
    %v736 = vunpack.c.l.b16 %v545
    %v737 = vunpack.c.h.b16 %v545
    %v738 = vunpack.c.l.b16 %v546
    %v739 = vunpack.c.h.b16 %v546
    %v740 = vunpack.c.l.b16 %v547
    %v741 = vunpack.c.h.b16 %v547
    %v742 = vunpack.c.l.b16 %v548
    %v743 = vunpack.c.h.b16 %v548
    %v744 = vunpack.c.l.b16 %v549
    %v745 = vunpack.c.h.b16 %v549
    %v746 = vunpack.c.l.b16 %v550
    %v747 = vunpack.c.h.b16 %v550
    %v748 = vunpack.c.l.b16 %v551
    %v749 = vunpack.c.h.b16 %v551
    %v750 = vunpack.c.l.b16 %v552
    %v751 = vunpack.c.h.b16 %v552
    %v752 = vunpack.c.l.b16 %v553
    %v753 = vunpack.c.h.b16 %v553
    %v754 = vunpack.c.l.b16 %v554
    %v755 = vunpack.c.h.b16 %v554
    %v756 = vunpack.c.l.b16 %v555
    %v757 = vunpack.c.h.b16 %v555
    %v758 = vunpack.c.l.b16 %v556
    %v759 = vunpack.c.h.b16 %v556
    %v760 = vunpack.c.l.b16 %v557
    %v761 = vunpack.c.h.b16 %v557
    %v762 = vunpack.c.l.b16 %v558
    %v763 = vunpack.c.h.b16 %v558
    %v764 = vunpack.c.l.b16 %v559
    %v765 = vunpack.c.h.b16 %v559
    %v766 = vunpack.c.l.b16 %v560
    %v767 = vunpack.c.h.b16 %v560
    %v768 = vunpack.c.l.b16 %v561
    %v769 = vunpack.c.h.b16 %v561
    %v770 = vunpack.c.l.b16 %v562
    %v771 = vunpack.c.h.b16 %v562
    %v772 = vunpack.c.l.b16 %v563
    %v773 = vunpack.c.h.b16 %v563
    %v774 = vunpack.c.l.b16 %v564
    %v775 = vunpack.c.h.b16 %v564
    %v776 = vunpack.c.l.b16 %v565
    %v777 = vunpack.c.h.b16 %v565
    %v778 = vunpack.c.l.b16 %v566
    %v779 = vunpack.c.h.b16 %v566
    %v780 = vunpack.c.l.b16 %v567
    %v781 = vunpack.c.h.b16 %v567
    %v782 = vpack.c.b16 %v658, %v654
    %v783 = vpack.c.b16 %v659, %v655
    %v784 = vpack.c.b16 %v660, %v656
    %v785 = vpack.c.b16 %v661, %v657
    %v786 = vpack.c.b16 %v666, %v662
    %v787 = vpack.c.b16 %v667, %v663
    %v788 = vpack.c.b16 %v668, %v664
    %v789 = vpack.c.b16 %v669, %v665
    %v790 = vpack.c.b16 %v674, %v670
    %v791 = vpack.c.b16 %v675, %v671
    %v792 = vpack.c.b16 %v676, %v672
    %v793 = vpack.c.b16 %v677, %v673
    %v794 = vpack.c.b16 %v682, %v678
    %v795 = vpack.c.b16 %v683, %v679
    %v796 = vpack.c.b16 %v684, %v680
    %v797 = vpack.c.b16 %v685, %v681
    %v798 = vpack.c.b16 %v690, %v686
    %v799 = vpack.c.b16 %v691, %v687
    %v800 = vpack.c.b16 %v692, %v688
    %v801 = vpack.c.b16 %v693, %v689
    %v802 = vpack.c.b16 %v698, %v694
    %v803 = vpack.c.b16 %v699, %v695
    %v804 = vpack.c.b16 %v700, %v696
    %v805 = vpack.c.b16 %v701, %v697
    %v806 = vpack.c.b16 %v706, %v702
    %v807 = vpack.c.b16 %v707, %v703
    %v808 = vpack.c.b16 %v708, %v704
    %v809 = vpack.c.b16 %v709, %v705
    %v810 = vpack.c.b16 %v714, %v710
    %v811 = vpack.c.b16 %v715, %v711
    %v812 = vpack.c.b16 %v716, %v712
    %v813 = vpack.c.b16 %v717, %v713
    %v814 = vpack.c.b16 %v722, %v718
    %v815 = vpack.c.b16 %v723, %v719
    %v816 = vpack.c.b16 %v724, %v720
    %v817 = vpack.c.b16 %v725, %v721
    %v818 = vpack.c.b16 %v730, %v726
    %v819 = vpack.c.b16 %v731, %v727
    %v820 = vpack.c.b16 %v732, %v728
    %v821 = vpack.c.b16 %v733, %v729
    %v822 = vpack.c.b16 %v738, %v734
    %v823 = vpack.c.b16 %v739, %v735
    %v824 = vpack.c.b16 %v740, %v736
    %v825 = vpack.c.b16 %v741, %v737
    %v826 = vpack.c.b16 %v746, %v742
    %v827 = vpack.c.b16 %v747, %v743
    %v828 = vpack.c.b16 %v748, %v744
    %v829 = vpack.c.b16 %v749, %v745
    %v830 = vpack.c.b16 %v754, %v750
    %v831 = vpack.c.b16 %v755, %v751
    %v832 = vpack.c.b16 %v756, %v752
    %v833 = vpack.c.b16 %v757, %v753
    %v834 = vpack.c.b16 %v762, %v758
    %v835 = vpack.c.b16 %v763, %v759
    %v836 = vpack.c.b16 %v764, %v760
    %v837 = vpack.c.b16 %v765, %v761
    %v838 = vpack.c.b16 %v770, %v766
    %v839 = vpack.c.b16 %v771, %v767
    %v840 = vpack.c.b16 %v772, %v768
    %v841 = vpack.c.b16 %v773, %v769
    %v842 = vpack.c.b16 %v778, %v774
    %v843 = vpack.c.b16 %v779, %v775
    %v844 = vpack.c.b16 %v780, %v776
    %v845 = vpack.c.b16 %v781, %v777
    %910 = vmatprep.subr.bf16.mxu0 %v811
    %911 = vmatpush1.bf16.msra.mxu0 %v810
    %912 = vmatprep.subr.bf16.mxu0 %v807
    %913 = vmatpush1.bf16.msra.mxu0 %v806
    %914 = vmatprep.subr.bf16.mxu0 %v803
    %915 = vmatpush1.bf16.msra.mxu0 %v802
    %916 = vmatprep.subr.bf16.mxu0 %v799
    %917 = vmatpush1.bf16.msra.mxu0 %v798
    %918 = vmatprep.subr.bf16.mxu0 %v795
    %919 = vmatpush1.bf16.msra.mxu0 %v794
    %920 = vmatprep.subr.bf16.mxu0 %v791
    %921 = vmatpush1.bf16.msra.mxu0 %v790
    %922 = vmatprep.subr.bf16.mxu0 %v787
    %923 = vmatpush1.bf16.msra.mxu0 %v786
    %924 = vmatprep.subr.bf16.mxu0 %v783
    %925 = vmatpush1.bf16.msra.mxu0 %v782
    %926 = vmatprep.subr.bf16.mxu0 %v843
    %927 = vmatpush2.bf16.msra.mxu0 %v842
    %928 = vmatprep.subr.bf16.mxu0 %v839
    %929 = vmatpush2.bf16.msra.mxu0 %v838
    %930 = vmatprep.subr.bf16.mxu0 %v835
    %931 = vmatpush2.bf16.msra.mxu0 %v834
    %932 = vmatprep.subr.bf16.mxu0 %v831
    %933 = vmatpush2.bf16.msra.mxu0 %v830
    %934 = vmatprep.subr.bf16.mxu0 %v827
    %935 = vmatpush2.bf16.msra.mxu0 %v826
    %936 = vmatprep.subr.bf16.mxu0 %v823
    %937 = vmatpush2.bf16.msra.mxu0 %v822
    %938 = vmatprep.subr.bf16.mxu0 %v819
    %939 = vmatpush2.bf16.msra.mxu0 %v818
    %940 = vmatprep.subr.bf16.mxu0 %v815
    %941 = vmatpush2.bf16.msra.mxu0 %v814
    %942 = vmatprep.mubr.bf16.mxu0 %v501
    %943 = vmatmul.mubr.bf16.gmra.mxu0 %v500
    %v944 = vpop.f32.mrf.mxu0
    %v945 = vadd.f32 %v573, %v944
    %v946 = vpop.f32.mrf.mxu0
    %v947 = vadd.f32 %v577, %v946
    %v948 = vpop.f32.mrf.mxu0
    %v949 = vadd.f32 %v573, %v948
    %v950 = vpop.f32.mrf.mxu0
    %v951 = vadd.f32 %v577, %v950
    %952 = vmatprep.mubr.bf16.mxu0 %v503
    %953 = vmatmul.mubr.bf16.gmra.mxu0 %v502
    %v954 = vpop.f32.mrf.mxu0
    %v955 = vadd.f32 %v573, %v954
    %v956 = vpop.f32.mrf.mxu0
    %v957 = vadd.f32 %v577, %v956
    %v958 = vpop.f32.mrf.mxu0
    %v959 = vadd.f32 %v573, %v958
    %v960 = vpop.f32.mrf.mxu0
    %v961 = vadd.f32 %v577, %v960
    %962 = vdwg.mxu0
    %963 = vmatprep.subr.bf16.mxu0 %v813
    %964 = vmatpush1.bf16.msra.mxu0 %v812
    %965 = vmatprep.subr.bf16.mxu0 %v809
    %966 = vmatpush1.bf16.msra.mxu0 %v808
    %967 = vmatprep.subr.bf16.mxu0 %v805
    %968 = vmatpush1.bf16.msra.mxu0 %v804
    %969 = vmatprep.subr.bf16.mxu0 %v801
    %970 = vmatpush1.bf16.msra.mxu0 %v800
    %971 = vmatprep.subr.bf16.mxu0 %v797
    %972 = vmatpush1.bf16.msra.mxu0 %v796
    %973 = vmatprep.subr.bf16.mxu0 %v793
    %974 = vmatpush1.bf16.msra.mxu0 %v792
    %975 = vmatprep.subr.bf16.mxu0 %v789
    %976 = vmatpush1.bf16.msra.mxu0 %v788
    %977 = vmatprep.subr.bf16.mxu0 %v785
    %978 = vmatpush1.bf16.msra.mxu0 %v784
    %979 = vmatprep.subr.bf16.mxu0 %v845
    %980 = vmatpush2.bf16.msra.mxu0 %v844
    %981 = vmatprep.subr.bf16.mxu0 %v841
    %982 = vmatpush2.bf16.msra.mxu0 %v840
    %983 = vmatprep.subr.bf16.mxu0 %v837
    %984 = vmatpush2.bf16.msra.mxu0 %v836
    %985 = vmatprep.subr.bf16.mxu0 %v833
    %986 = vmatpush2.bf16.msra.mxu0 %v832
    %987 = vmatprep.subr.bf16.mxu0 %v829
    %988 = vmatpush2.bf16.msra.mxu0 %v828
    %989 = vmatprep.subr.bf16.mxu0 %v825
    %990 = vmatpush2.bf16.msra.mxu0 %v824
    %991 = vmatprep.subr.bf16.mxu0 %v821
    %992 = vmatpush2.bf16.msra.mxu0 %v820
    %993 = vmatprep.subr.bf16.mxu0 %v817
    %994 = vmatpush2.bf16.msra.mxu0 %v816
    %995 = vmatprep.mubr.bf16.mxu0 %v501
    %996 = vmatmul.mubr.bf16.gmra.mxu0 %v500
    %v997 = vpop.f32.mrf.mxu0
    %v998 = vadd.f32 %v581, %v997
    %v999 = vpop.f32.mrf.mxu0
    %v1000 = vadd.f32 %v585, %v999
    %v1001 = vpop.f32.mrf.mxu0
    %v1002 = vadd.f32 %v581, %v1001
    %v1003 = vpop.f32.mrf.mxu0
    %v1004 = vadd.f32 %v585, %v1003
    %1005 = vmatprep.mubr.bf16.mxu0 %v503
    %1006 = vmatmul.mubr.bf16.gmra.mxu0 %v502
    %v1007 = vpop.f32.mrf.mxu0
    %v1008 = vadd.f32 %v581, %v1007
    %v1009 = vpop.f32.mrf.mxu0
    %v1010 = vadd.f32 %v585, %v1009
    %v1011 = vpop.f32.mrf.mxu0
    %v1012 = vadd.f32 %v581, %v1011
    %v1013 = vpop.f32.mrf.mxu0
    %v1014 = vadd.f32 %v585, %v1013
    %1015 = vdwg.mxu0
    %v1016 = vmax.f32 %v945, 0.0
    %v1017 = vmax.f32 %v947, 0.0
    %v1018 = vmax.f32 %v998, 0.0
    %v1019 = vmax.f32 %v1000, 0.0
    %v1020 = vmax.f32 %v949, 0.0
    %v1021 = vmax.f32 %v951, 0.0
    %v1022 = vmax.f32 %v1002, 0.0
    %v1023 = vmax.f32 %v1004, 0.0
    %v1024 = vmax.f32 %v955, 0.0
    %v1025 = vmax.f32 %v957, 0.0
    %v1026 = vmax.f32 %v1008, 0.0
    %v1027 = vmax.f32 %v1010, 0.0
    %v1028 = vmax.f32 %v959, 0.0
    %v1029 = vmax.f32 %v961, 0.0
    %v1030 = vmax.f32 %v1012, 0.0
    %v1031 = vmax.f32 %v1014, 0.0
    %v1032 = vpack.c.bf16 %v1020, %v1016
    %v1033 = vpack.c.bf16 %v1021, %v1017
    %v1034 = vpack.c.bf16 %v1022, %v1018
    %v1035 = vpack.c.bf16 %v1023, %v1019
    %v1036 = vpack.c.bf16 %v1028, %v1024
    %v1037 = vpack.c.bf16 %v1029, %v1025
    %v1038 = vpack.c.bf16 %v1030, %v1026
    %v1039 = vpack.c.bf16 %v1031, %v1027
    %v1040 = vld [vmem:[%s5] sm:$0xff]
    %v1041 = vld [vmem:[%s5 + $0x8] sm:$0xff]
    %v1042 = vld [vmem:[%s5 + $0x10] sm:$0xff]
    %v1043 = vld [vmem:[%s5 + $0x18] sm:$0xff]
    %v1044 = vld [vmem:[%s5 + $0x20] sm:$0xff]
    %v1045 = vld [vmem:[%s5 + $0x28] sm:$0xff]
    %v1046 = vld [vmem:[%s5 + $0x30] sm:$0xff]
    %v1047 = vld [vmem:[%s5 + $0x38] sm:$0xff]
    %v1048 = vld [vmem:[%s5 + $0x40] sm:$0xff]
    %v1049 = vld [vmem:[%s5 + $0x48] sm:$0xff]
    %v1050 = vld [vmem:[%s5 + $0x50] sm:$0xff]
    %v1051 = vld [vmem:[%s5 + $0x58] sm:$0xff]
    %v1052 = vld [vmem:[%s5 + $0x60] sm:$0xff]
    %v1053 = vld [vmem:[%s5 + $0x68] sm:$0xff]
    %v1054 = vld [vmem:[%s5 + $0x70] sm:$0xff]
    %v1055 = vld [vmem:[%s5 + $0x78] sm:$0xff]
    %v1056 = vld [vmem:[%s5 + $0x80] sm:$0xff]
    %v1057 = vld [vmem:[%s5 + $0x88] sm:$0xff]
    %v1058 = vld [vmem:[%s5 + $0x90] sm:$0xff]
    %v1059 = vld [vmem:[%s5 + $0x98] sm:$0xff]
    %v1060 = vld [vmem:[%s5 + $0xa0] sm:$0xff]
    %v1061 = vld [vmem:[%s5 + $0xa8] sm:$0xff]
    %v1062 = vld [vmem:[%s5 + $0xb0] sm:$0xff]
    %v1063 = vld [vmem:[%s5 + $0xb8] sm:$0xff]
    %v1064 = vld [vmem:[%s5 + $0xc0] sm:$0xff]
    %v1065 = vld [vmem:[%s5 + $0xc8] sm:$0xff]
    %v1066 = vld [vmem:[%s5 + $0xd0] sm:$0xff]
    %v1067 = vld [vmem:[%s5 + $0xd8] sm:$0xff]
    %v1068 = vld [vmem:[%s5 + $0xe0] sm:$0xff]
    %v1069 = vld [vmem:[%s5 + $0xe8] sm:$0xff]
    %v1070 = vld [vmem:[%s5 + $0xf0] sm:$0xff]
    %v1071 = vld [vmem:[%s5 + $0xf8] sm:$0xff]
    %v1072 = vld [vmem:[%s5 + $0x100] sm:$0xff]
    %v1073 = vld [vmem:[%s5 + $0x108] sm:$0xff]
    %v1074 = vld [vmem:[%s5 + $0x110] sm:$0xff]
    %v1075 = vld [vmem:[%s5 + $0x118] sm:$0xff]
    %v1076 = vld [vmem:[%s5 + $0x120] sm:$0xff]
    %v1077 = vld [vmem:[%s5 + $0x128] sm:$0xff]
    %v1078 = vld [vmem:[%s5 + $0x130] sm:$0xff]
    %v1079 = vld [vmem:[%s5 + $0x138] sm:$0xff]
    %v1080 = vld [vmem:[%s5 + $0x140] sm:$0xff]
    %v1081 = vld [vmem:[%s5 + $0x148] sm:$0xff]
    %v1082 = vld [vmem:[%s5 + $0x150] sm:$0xff]
    %v1083 = vld [vmem:[%s5 + $0x158] sm:$0xff]
    %v1084 = vld [vmem:[%s5 + $0x160] sm:$0xff]
    %v1085 = vld [vmem:[%s5 + $0x168] sm:$0xff]
    %v1086 = vld [vmem:[%s5 + $0x170] sm:$0xff]
    %v1087 = vld [vmem:[%s5 + $0x178] sm:$0xff]
    %v1088 = vld [vmem:[%s5 + $0x180] sm:$0xff]
    %v1089 = vld [vmem:[%s5 + $0x188] sm:$0xff]
    %v1090 = vld [vmem:[%s5 + $0x190] sm:$0xff]
    %v1091 = vld [vmem:[%s5 + $0x198] sm:$0xff]
    %v1092 = vld [vmem:[%s5 + $0x1a0] sm:$0xff]
    %v1093 = vld [vmem:[%s5 + $0x1a8] sm:$0xff]
    %v1094 = vld [vmem:[%s5 + $0x1b0] sm:$0xff]
    %v1095 = vld [vmem:[%s5 + $0x1b8] sm:$0xff]
    %v1096 = vld [vmem:[%s5 + $0x1c0] sm:$0xff]
    %v1097 = vld [vmem:[%s5 + $0x1c8] sm:$0xff]
    %v1098 = vld [vmem:[%s5 + $0x1d0] sm:$0xff]
    %v1099 = vld [vmem:[%s5 + $0x1d8] sm:$0xff]
    %v1100 = vld [vmem:[%s5 + $0x1e0] sm:$0xff]
    %v1101 = vld [vmem:[%s5 + $0x1e8] sm:$0xff]
    %v1102 = vld [vmem:[%s5 + $0x1f0] sm:$0xff]
    %v1103 = vld [vmem:[%s5 + $0x1f8] sm:$0xff]
    %v1104 = vld [vmem:[%s5 + $0x200] sm:$0xff]
    %v1105 = vld [vmem:[%s5 + $0x208] sm:$0xff]
    %v1106 = vld [vmem:[%s5 + $0x210] sm:$0xff]
    %v1107 = vld [vmem:[%s5 + $0x218] sm:$0xff]
    %v1108 = vld [vmem:[%s5 + $0x220] sm:$0xff]
    %v1109 = vld [vmem:[%s5 + $0x228] sm:$0xff]
    %v1110 = vld [vmem:[%s5 + $0x230] sm:$0xff]
    %v1111 = vld [vmem:[%s5 + $0x238] sm:$0xff]
    %v1112 = vld [vmem:[%s5 + $0x240] sm:$0xff]
    %v1113 = vld [vmem:[%s5 + $0x248] sm:$0xff]
    %v1114 = vld [vmem:[%s5 + $0x250] sm:$0xff]
    %v1115 = vld [vmem:[%s5 + $0x258] sm:$0xff]
    %v1116 = vld [vmem:[%s5 + $0x260] sm:$0xff]
    %v1117 = vld [vmem:[%s5 + $0x268] sm:$0xff]
    %v1118 = vld [vmem:[%s5 + $0x270] sm:$0xff]
    %v1119 = vld [vmem:[%s5 + $0x278] sm:$0xff]
    %v1120 = vld [vmem:[%s5 + $0x280] sm:$0xff]
    %v1121 = vld [vmem:[%s5 + $0x288] sm:$0xff]
    %v1122 = vld [vmem:[%s5 + $0x290] sm:$0xff]
    %v1123 = vld [vmem:[%s5 + $0x298] sm:$0xff]
    %v1124 = vld [vmem:[%s5 + $0x2a0] sm:$0xff]
    %v1125 = vld [vmem:[%s5 + $0x2a8] sm:$0xff]
    %v1126 = vld [vmem:[%s5 + $0x2b0] sm:$0xff]
    %v1127 = vld [vmem:[%s5 + $0x2b8] sm:$0xff]
    %v1128 = vld [vmem:[%s5 + $0x2c0] sm:$0xff]
    %v1129 = vld [vmem:[%s5 + $0x2c8] sm:$0xff]
    %v1130 = vld [vmem:[%s5 + $0x2d0] sm:$0xff]
    %v1131 = vld [vmem:[%s5 + $0x2d8] sm:$0xff]
    %v1132 = vld [vmem:[%s5 + $0x2e0] sm:$0xff]
    %v1133 = vld [vmem:[%s5 + $0x2e8] sm:$0xff]
    %v1134 = vld [vmem:[%s5 + $0x2f0] sm:$0xff]
    %v1135 = vld [vmem:[%s5 + $0x2f8] sm:$0xff]
    %v1136 = vld [vmem:[%s5 + $0x300] sm:$0xff]
    %v1137 = vld [vmem:[%s5 + $0x308] sm:$0xff]
    %v1138 = vld [vmem:[%s5 + $0x310] sm:$0xff]
    %v1139 = vld [vmem:[%s5 + $0x318] sm:$0xff]
    %v1140 = vld [vmem:[%s5 + $0x320] sm:$0xff]
    %v1141 = vld [vmem:[%s5 + $0x328] sm:$0xff]
    %v1142 = vld [vmem:[%s5 + $0x330] sm:$0xff]
    %v1143 = vld [vmem:[%s5 + $0x338] sm:$0xff]
    %v1144 = vld [vmem:[%s5 + $0x340] sm:$0xff]
    %v1145 = vld [vmem:[%s5 + $0x348] sm:$0xff]
    %v1146 = vld [vmem:[%s5 + $0x350] sm:$0xff]
    %v1147 = vld [vmem:[%s5 + $0x358] sm:$0xff]
    %v1148 = vld [vmem:[%s5 + $0x360] sm:$0xff]
    %v1149 = vld [vmem:[%s5 + $0x368] sm:$0xff]
    %v1150 = vld [vmem:[%s5 + $0x370] sm:$0xff]
    %v1151 = vld [vmem:[%s5 + $0x378] sm:$0xff]
    %v1152 = vld [vmem:[%s5 + $0x380] sm:$0xff]
    %v1153 = vld [vmem:[%s5 + $0x388] sm:$0xff]
    %v1154 = vld [vmem:[%s5 + $0x390] sm:$0xff]
    %v1155 = vld [vmem:[%s5 + $0x398] sm:$0xff]
    %v1156 = vld [vmem:[%s5 + $0x3a0] sm:$0xff]
    %v1157 = vld [vmem:[%s5 + $0x3a8] sm:$0xff]
    %v1158 = vld [vmem:[%s5 + $0x3b0] sm:$0xff]
    %v1159 = vld [vmem:[%s5 + $0x3b8] sm:$0xff]
    %v1160 = vld [vmem:[%s5 + $0x3c0] sm:$0xff]
    %v1161 = vld [vmem:[%s5 + $0x3c8] sm:$0xff]
    %v1162 = vld [vmem:[%s5 + $0x3d0] sm:$0xff]
    %v1163 = vld [vmem:[%s5 + $0x3d8] sm:$0xff]
    %v1164 = vld [vmem:[%s5 + $0x3e0] sm:$0xff]
    %v1165 = vld [vmem:[%s5 + $0x3e8] sm:$0xff]
    %v1166 = vld [vmem:[%s5 + $0x3f0] sm:$0xff]
    %v1167 = vld [vmem:[%s5 + $0x3f8] sm:$0xff]
    %v1168 = vld [vmem:[%s5 + $0x400] sm:$0xff]
    %v1169 = vld [vmem:[%s5 + $0x408] sm:$0xff]
    %v1170 = vld [vmem:[%s5 + $0x410] sm:$0xff]
    %v1171 = vld [vmem:[%s5 + $0x418] sm:$0xff]
    %v1172 = vld [vmem:[%s5 + $0x420] sm:$0xff]
    %v1173 = vld [vmem:[%s5 + $0x428] sm:$0xff]
    %v1174 = vld [vmem:[%s5 + $0x430] sm:$0xff]
    %v1175 = vld [vmem:[%s5 + $0x438] sm:$0xff]
    %v1176 = vld [vmem:[%s5 + $0x440] sm:$0xff]
    %v1177 = vld [vmem:[%s5 + $0x448] sm:$0xff]
    %v1178 = vld [vmem:[%s5 + $0x450] sm:$0xff]
    %v1179 = vld [vmem:[%s5 + $0x458] sm:$0xff]
    %v1180 = vld [vmem:[%s5 + $0x460] sm:$0xff]
    %v1181 = vld [vmem:[%s5 + $0x468] sm:$0xff]
    %v1182 = vld [vmem:[%s5 + $0x470] sm:$0xff]
    %v1183 = vld [vmem:[%s5 + $0x478] sm:$0xff]
    %v1184 = vld [vmem:[%s5 + $0x480] sm:$0xff]
    %v1185 = vld [vmem:[%s5 + $0x488] sm:$0xff]
    %v1186 = vld [vmem:[%s5 + $0x490] sm:$0xff]
    %v1187 = vld [vmem:[%s5 + $0x498] sm:$0xff]
    %v1188 = vld [vmem:[%s5 + $0x4a0] sm:$0xff]
    %v1189 = vld [vmem:[%s5 + $0x4a8] sm:$0xff]
    %v1190 = vld [vmem:[%s5 + $0x4b0] sm:$0xff]
    %v1191 = vld [vmem:[%s5 + $0x4b8] sm:$0xff]
    %v1192 = vld [vmem:[%s5 + $0x4c0] sm:$0xff]
    %v1193 = vld [vmem:[%s5 + $0x4c8] sm:$0xff]
    %v1194 = vld [vmem:[%s5 + $0x4d0] sm:$0xff]
    %v1195 = vld [vmem:[%s5 + $0x4d8] sm:$0xff]
    %v1196 = vld [vmem:[%s5 + $0x4e0] sm:$0xff]
    %v1197 = vld [vmem:[%s5 + $0x4e8] sm:$0xff]
    %v1198 = vld [vmem:[%s5 + $0x4f0] sm:$0xff]
    %v1199 = vld [vmem:[%s5 + $0x4f8] sm:$0xff]
    %v1200 = vld [vmem:[%s5 + $0x500] sm:$0xff]
    %v1201 = vld [vmem:[%s5 + $0x508] sm:$0xff]
    %v1202 = vld [vmem:[%s5 + $0x510] sm:$0xff]
    %v1203 = vld [vmem:[%s5 + $0x518] sm:$0xff]
    %v1204 = vld [vmem:[%s5 + $0x520] sm:$0xff]
    %v1205 = vld [vmem:[%s5 + $0x528] sm:$0xff]
    %v1206 = vld [vmem:[%s5 + $0x530] sm:$0xff]
    %v1207 = vld [vmem:[%s5 + $0x538] sm:$0xff]
    %v1208 = vld [vmem:[%s5 + $0x540] sm:$0xff]
    %v1209 = vld [vmem:[%s5 + $0x548] sm:$0xff]
    %v1210 = vld [vmem:[%s5 + $0x550] sm:$0xff]
    %v1211 = vld [vmem:[%s5 + $0x558] sm:$0xff]
    %v1212 = vld [vmem:[%s5 + $0x560] sm:$0xff]
    %v1213 = vld [vmem:[%s5 + $0x568] sm:$0xff]
    %v1214 = vld [vmem:[%s5 + $0x570] sm:$0xff]
    %v1215 = vld [vmem:[%s5 + $0x578] sm:$0xff]
    %v1216 = vld [vmem:[%s5 + $0x580] sm:$0xff]
    %v1217 = vld [vmem:[%s5 + $0x588] sm:$0xff]
    %v1218 = vld [vmem:[%s5 + $0x590] sm:$0xff]
    %v1219 = vld [vmem:[%s5 + $0x598] sm:$0xff]
    %v1220 = vld [vmem:[%s5 + $0x5a0] sm:$0xff]
    %v1221 = vld [vmem:[%s5 + $0x5a8] sm:$0xff]
    %v1222 = vld [vmem:[%s5 + $0x5b0] sm:$0xff]
    %v1223 = vld [vmem:[%s5 + $0x5b8] sm:$0xff]
    %v1224 = vld [vmem:[%s5 + $0x5c0] sm:$0xff]
    %v1225 = vld [vmem:[%s5 + $0x5c8] sm:$0xff]
    %v1226 = vld [vmem:[%s5 + $0x5d0] sm:$0xff]
    %v1227 = vld [vmem:[%s5 + $0x5d8] sm:$0xff]
    %v1228 = vld [vmem:[%s5 + $0x5e0] sm:$0xff]
    %v1229 = vld [vmem:[%s5 + $0x5e8] sm:$0xff]
    %v1230 = vld [vmem:[%s5 + $0x5f0] sm:$0xff]
    %v1231 = vld [vmem:[%s5 + $0x5f8] sm:$0xff]
    %v1232 = vld [vmem:[%s5 + $0x600] sm:$0xff]
    %v1233 = vld [vmem:[%s5 + $0x608] sm:$0xff]
    %v1234 = vld [vmem:[%s5 + $0x610] sm:$0xff]
    %v1235 = vld [vmem:[%s5 + $0x618] sm:$0xff]
    %v1236 = vld [vmem:[%s5 + $0x620] sm:$0xff]
    %v1237 = vld [vmem:[%s5 + $0x628] sm:$0xff]
    %v1238 = vld [vmem:[%s5 + $0x630] sm:$0xff]
    %v1239 = vld [vmem:[%s5 + $0x638] sm:$0xff]
    %v1240 = vld [vmem:[%s5 + $0x640] sm:$0xff]
    %v1241 = vld [vmem:[%s5 + $0x648] sm:$0xff]
    %v1242 = vld [vmem:[%s5 + $0x650] sm:$0xff]
    %v1243 = vld [vmem:[%s5 + $0x658] sm:$0xff]
    %v1244 = vld [vmem:[%s5 + $0x660] sm:$0xff]
    %v1245 = vld [vmem:[%s5 + $0x668] sm:$0xff]
    %v1246 = vld [vmem:[%s5 + $0x670] sm:$0xff]
    %v1247 = vld [vmem:[%s5 + $0x678] sm:$0xff]
    %v1248 = vld [vmem:[%s5 + $0x680] sm:$0xff]
    %v1249 = vld [vmem:[%s5 + $0x688] sm:$0xff]
    %v1250 = vld [vmem:[%s5 + $0x690] sm:$0xff]
    %v1251 = vld [vmem:[%s5 + $0x698] sm:$0xff]
    %v1252 = vld [vmem:[%s5 + $0x6a0] sm:$0xff]
    %v1253 = vld [vmem:[%s5 + $0x6a8] sm:$0xff]
    %v1254 = vld [vmem:[%s5 + $0x6b0] sm:$0xff]
    %v1255 = vld [vmem:[%s5 + $0x6b8] sm:$0xff]
    %v1256 = vld [vmem:[%s5 + $0x6c0] sm:$0xff]
    %v1257 = vld [vmem:[%s5 + $0x6c8] sm:$0xff]
    %v1258 = vld [vmem:[%s5 + $0x6d0] sm:$0xff]
    %v1259 = vld [vmem:[%s5 + $0x6d8] sm:$0xff]
    %v1260 = vld [vmem:[%s5 + $0x6e0] sm:$0xff]
    %v1261 = vld [vmem:[%s5 + $0x6e8] sm:$0xff]
    %v1262 = vld [vmem:[%s5 + $0x6f0] sm:$0xff]
    %v1263 = vld [vmem:[%s5 + $0x6f8] sm:$0xff]
    %v1264 = vld [vmem:[%s5 + $0x700] sm:$0xff]
    %v1265 = vld [vmem:[%s5 + $0x708] sm:$0xff]
    %v1266 = vld [vmem:[%s5 + $0x710] sm:$0xff]
    %v1267 = vld [vmem:[%s5 + $0x718] sm:$0xff]
    %v1268 = vld [vmem:[%s5 + $0x720] sm:$0xff]
    %v1269 = vld [vmem:[%s5 + $0x728] sm:$0xff]
    %v1270 = vld [vmem:[%s5 + $0x730] sm:$0xff]
    %v1271 = vld [vmem:[%s5 + $0x738] sm:$0xff]
    %v1272 = vld [vmem:[%s5 + $0x740] sm:$0xff]
    %v1273 = vld [vmem:[%s5 + $0x748] sm:$0xff]
    %v1274 = vld [vmem:[%s5 + $0x750] sm:$0xff]
    %v1275 = vld [vmem:[%s5 + $0x758] sm:$0xff]
    %v1276 = vld [vmem:[%s5 + $0x760] sm:$0xff]
    %v1277 = vld [vmem:[%s5 + $0x768] sm:$0xff]
    %v1278 = vld [vmem:[%s5 + $0x770] sm:$0xff]
    %v1279 = vld [vmem:[%s5 + $0x778] sm:$0xff]
    %v1280 = vld [vmem:[%s5 + $0x780] sm:$0xff]
    %v1281 = vld [vmem:[%s5 + $0x788] sm:$0xff]
    %v1282 = vld [vmem:[%s5 + $0x790] sm:$0xff]
    %v1283 = vld [vmem:[%s5 + $0x798] sm:$0xff]
    %v1284 = vld [vmem:[%s5 + $0x7a0] sm:$0xff]
    %v1285 = vld [vmem:[%s5 + $0x7a8] sm:$0xff]
    %v1286 = vld [vmem:[%s5 + $0x7b0] sm:$0xff]
    %v1287 = vld [vmem:[%s5 + $0x7b8] sm:$0xff]
    %v1288 = vld [vmem:[%s5 + $0x7c0] sm:$0xff]
    %v1289 = vld [vmem:[%s5 + $0x7c8] sm:$0xff]
    %v1290 = vld [vmem:[%s5 + $0x7d0] sm:$0xff]
    %v1291 = vld [vmem:[%s5 + $0x7d8] sm:$0xff]
    %v1292 = vld [vmem:[%s5 + $0x7e0] sm:$0xff]
    %v1293 = vld [vmem:[%s5 + $0x7e8] sm:$0xff]
    %v1294 = vld [vmem:[%s5 + $0x7f0] sm:$0xff]
    %v1295 = vld [vmem:[%s5 + $0x7f8] sm:$0xff]
    %v1296 = vld [vmem:[%s6] sm:$0xff]
    %v1298 = vlaneseq
    %v1299 = vshrl.u32 %v1298, 7
    %v1300 = vsub.s32 0, %v1299
    %v1301 = vrot.slane %v1296, %v1300
    %v1302 = vlaneseq
    %v1303 = vshrl.u32 %v1302, 7
    %v1304 = vsub.s32 1, %v1303
    %v1305 = vrot.slane %v1296, %v1304
    %v1306 = vlaneseq
    %v1307 = vshrl.u32 %v1306, 7
    %v1308 = vsub.s32 2, %v1307
    %v1309 = vrot.slane %v1296, %v1308
    %v1310 = vlaneseq
    %v1311 = vshrl.u32 %v1310, 7
    %v1312 = vsub.s32 3, %v1311
    %v1313 = vrot.slane %v1296, %v1312
    %v1314 = vlaneseq
    %v1315 = vshrl.u32 %v1314, 7
    %v1316 = vsub.s32 4, %v1315
    %v1317 = vrot.slane %v1296, %v1316
    %v1318 = vlaneseq
    %v1319 = vshrl.u32 %v1318, 7
    %v1320 = vsub.s32 5, %v1319
    %v1321 = vrot.slane %v1296, %v1320
    %v1322 = vlaneseq
    %v1323 = vshrl.u32 %v1322, 7
    %v1324 = vsub.s32 6, %v1323
    %v1325 = vrot.slane %v1296, %v1324
    %v1326 = vlaneseq
    %v1327 = vshrl.u32 %v1326, 7
    %v1328 = vsub.s32 7, %v1327
    %v1329 = vrot.slane %v1296, %v1328
    %v1594 = vunpack.c.l.b16 %v1040
    %v1595 = vunpack.c.h.b16 %v1040
    %v1596 = vunpack.c.l.b16 %v1041
    %v1597 = vunpack.c.h.b16 %v1041
    %v1598 = vunpack.c.l.b16 %v1042
    %v1599 = vunpack.c.h.b16 %v1042
    %v1600 = vunpack.c.l.b16 %v1043
    %v1601 = vunpack.c.h.b16 %v1043
    %v1602 = vunpack.c.l.b16 %v1044
    %v1603 = vunpack.c.h.b16 %v1044
    %v1604 = vunpack.c.l.b16 %v1045
    %v1605 = vunpack.c.h.b16 %v1045
    %v1606 = vunpack.c.l.b16 %v1046
    %v1607 = vunpack.c.h.b16 %v1046
    %v1608 = vunpack.c.l.b16 %v1047
    %v1609 = vunpack.c.h.b16 %v1047
    %v1610 = vunpack.c.l.b16 %v1048
    %v1611 = vunpack.c.h.b16 %v1048
    %v1612 = vunpack.c.l.b16 %v1049
    %v1613 = vunpack.c.h.b16 %v1049
    %v1614 = vunpack.c.l.b16 %v1050
    %v1615 = vunpack.c.h.b16 %v1050
    %v1616 = vunpack.c.l.b16 %v1051
    %v1617 = vunpack.c.h.b16 %v1051
    %v1618 = vunpack.c.l.b16 %v1052
    %v1619 = vunpack.c.h.b16 %v1052
    %v1620 = vunpack.c.l.b16 %v1053
    %v1621 = vunpack.c.h.b16 %v1053
    %v1622 = vunpack.c.l.b16 %v1054
    %v1623 = vunpack.c.h.b16 %v1054
    %v1624 = vunpack.c.l.b16 %v1055
    %v1625 = vunpack.c.h.b16 %v1055
    %v1626 = vunpack.c.l.b16 %v1056
    %v1627 = vunpack.c.h.b16 %v1056
    %v1628 = vunpack.c.l.b16 %v1057
    %v1629 = vunpack.c.h.b16 %v1057
    %v1630 = vunpack.c.l.b16 %v1058
    %v1631 = vunpack.c.h.b16 %v1058
    %v1632 = vunpack.c.l.b16 %v1059
    %v1633 = vunpack.c.h.b16 %v1059
    %v1634 = vunpack.c.l.b16 %v1060
    %v1635 = vunpack.c.h.b16 %v1060
    %v1636 = vunpack.c.l.b16 %v1061
    %v1637 = vunpack.c.h.b16 %v1061
    %v1638 = vunpack.c.l.b16 %v1062
    %v1639 = vunpack.c.h.b16 %v1062
    %v1640 = vunpack.c.l.b16 %v1063
    %v1641 = vunpack.c.h.b16 %v1063
    %v1642 = vunpack.c.l.b16 %v1064
    %v1643 = vunpack.c.h.b16 %v1064
    %v1644 = vunpack.c.l.b16 %v1065
    %v1645 = vunpack.c.h.b16 %v1065
    %v1646 = vunpack.c.l.b16 %v1066
    %v1647 = vunpack.c.h.b16 %v1066
    %v1648 = vunpack.c.l.b16 %v1067
    %v1649 = vunpack.c.h.b16 %v1067
    %v1650 = vunpack.c.l.b16 %v1068
    %v1651 = vunpack.c.h.b16 %v1068
    %v1652 = vunpack.c.l.b16 %v1069
    %v1653 = vunpack.c.h.b16 %v1069
    %v1654 = vunpack.c.l.b16 %v1070
    %v1655 = vunpack.c.h.b16 %v1070
    %v1656 = vunpack.c.l.b16 %v1071
    %v1657 = vunpack.c.h.b16 %v1071
    %v1658 = vunpack.c.l.b16 %v1072
    %v1659 = vunpack.c.h.b16 %v1072
    %v1660 = vunpack.c.l.b16 %v1073
    %v1661 = vunpack.c.h.b16 %v1073
    %v1662 = vunpack.c.l.b16 %v1074
    %v1663 = vunpack.c.h.b16 %v1074
    %v1664 = vunpack.c.l.b16 %v1075
    %v1665 = vunpack.c.h.b16 %v1075
    %v1666 = vunpack.c.l.b16 %v1076
    %v1667 = vunpack.c.h.b16 %v1076
    %v1668 = vunpack.c.l.b16 %v1077
    %v1669 = vunpack.c.h.b16 %v1077
    %v1670 = vunpack.c.l.b16 %v1078
    %v1671 = vunpack.c.h.b16 %v1078
    %v1672 = vunpack.c.l.b16 %v1079
    %v1673 = vunpack.c.h.b16 %v1079
    %v1674 = vunpack.c.l.b16 %v1080
    %v1675 = vunpack.c.h.b16 %v1080
    %v1676 = vunpack.c.l.b16 %v1081
    %v1677 = vunpack.c.h.b16 %v1081
    %v1678 = vunpack.c.l.b16 %v1082
    %v1679 = vunpack.c.h.b16 %v1082
    %v1680 = vunpack.c.l.b16 %v1083
    %v1681 = vunpack.c.h.b16 %v1083
    %v1682 = vunpack.c.l.b16 %v1084
    %v1683 = vunpack.c.h.b16 %v1084
    %v1684 = vunpack.c.l.b16 %v1085
    %v1685 = vunpack.c.h.b16 %v1085
    %v1686 = vunpack.c.l.b16 %v1086
    %v1687 = vunpack.c.h.b16 %v1086
    %v1688 = vunpack.c.l.b16 %v1087
    %v1689 = vunpack.c.h.b16 %v1087
    %v1690 = vunpack.c.l.b16 %v1088
    %v1691 = vunpack.c.h.b16 %v1088
    %v1692 = vunpack.c.l.b16 %v1089
    %v1693 = vunpack.c.h.b16 %v1089
    %v1694 = vunpack.c.l.b16 %v1090
    %v1695 = vunpack.c.h.b16 %v1090
    %v1696 = vunpack.c.l.b16 %v1091
    %v1697 = vunpack.c.h.b16 %v1091
    %v1698 = vunpack.c.l.b16 %v1092
    %v1699 = vunpack.c.h.b16 %v1092
    %v1700 = vunpack.c.l.b16 %v1093
    %v1701 = vunpack.c.h.b16 %v1093
    %v1702 = vunpack.c.l.b16 %v1094
    %v1703 = vunpack.c.h.b16 %v1094
    %v1704 = vunpack.c.l.b16 %v1095
    %v1705 = vunpack.c.h.b16 %v1095
    %v1706 = vunpack.c.l.b16 %v1096
    %v1707 = vunpack.c.h.b16 %v1096
    %v1708 = vunpack.c.l.b16 %v1097
    %v1709 = vunpack.c.h.b16 %v1097
    %v1710 = vunpack.c.l.b16 %v1098
    %v1711 = vunpack.c.h.b16 %v1098
    %v1712 = vunpack.c.l.b16 %v1099
    %v1713 = vunpack.c.h.b16 %v1099
    %v1714 = vunpack.c.l.b16 %v1100
    %v1715 = vunpack.c.h.b16 %v1100
    %v1716 = vunpack.c.l.b16 %v1101
    %v1717 = vunpack.c.h.b16 %v1101
    %v1718 = vunpack.c.l.b16 %v1102
    %v1719 = vunpack.c.h.b16 %v1102
    %v1720 = vunpack.c.l.b16 %v1103
    %v1721 = vunpack.c.h.b16 %v1103
    %v1722 = vunpack.c.l.b16 %v1104
    %v1723 = vunpack.c.h.b16 %v1104
    %v1724 = vunpack.c.l.b16 %v1105
    %v1725 = vunpack.c.h.b16 %v1105
    %v1726 = vunpack.c.l.b16 %v1106
    %v1727 = vunpack.c.h.b16 %v1106
    %v1728 = vunpack.c.l.b16 %v1107
    %v1729 = vunpack.c.h.b16 %v1107
    %v1730 = vunpack.c.l.b16 %v1108
    %v1731 = vunpack.c.h.b16 %v1108
    %v1732 = vunpack.c.l.b16 %v1109
    %v1733 = vunpack.c.h.b16 %v1109
    %v1734 = vunpack.c.l.b16 %v1110
    %v1735 = vunpack.c.h.b16 %v1110
    %v1736 = vunpack.c.l.b16 %v1111
    %v1737 = vunpack.c.h.b16 %v1111
    %v1738 = vunpack.c.l.b16 %v1112
    %v1739 = vunpack.c.h.b16 %v1112
    %v1740 = vunpack.c.l.b16 %v1113
    %v1741 = vunpack.c.h.b16 %v1113
    %v1742 = vunpack.c.l.b16 %v1114
    %v1743 = vunpack.c.h.b16 %v1114
    %v1744 = vunpack.c.l.b16 %v1115
    %v1745 = vunpack.c.h.b16 %v1115
    %v1746 = vunpack.c.l.b16 %v1116
    %v1747 = vunpack.c.h.b16 %v1116
    %v1748 = vunpack.c.l.b16 %v1117
    %v1749 = vunpack.c.h.b16 %v1117
    %v1750 = vunpack.c.l.b16 %v1118
    %v1751 = vunpack.c.h.b16 %v1118
    %v1752 = vunpack.c.l.b16 %v1119
    %v1753 = vunpack.c.h.b16 %v1119
    %v1754 = vunpack.c.l.b16 %v1120
    %v1755 = vunpack.c.h.b16 %v1120
    %v1756 = vunpack.c.l.b16 %v1121
    %v1757 = vunpack.c.h.b16 %v1121
    %v1758 = vunpack.c.l.b16 %v1122
    %v1759 = vunpack.c.h.b16 %v1122
    %v1760 = vunpack.c.l.b16 %v1123
    %v1761 = vunpack.c.h.b16 %v1123
    %v1762 = vunpack.c.l.b16 %v1124
    %v1763 = vunpack.c.h.b16 %v1124
    %v1764 = vunpack.c.l.b16 %v1125
    %v1765 = vunpack.c.h.b16 %v1125
    %v1766 = vunpack.c.l.b16 %v1126
    %v1767 = vunpack.c.h.b16 %v1126
    %v1768 = vunpack.c.l.b16 %v1127
    %v1769 = vunpack.c.h.b16 %v1127
    %v1770 = vunpack.c.l.b16 %v1128
    %v1771 = vunpack.c.h.b16 %v1128
    %v1772 = vunpack.c.l.b16 %v1129
    %v1773 = vunpack.c.h.b16 %v1129
    %v1774 = vunpack.c.l.b16 %v1130
    %v1775 = vunpack.c.h.b16 %v1130
    %v1776 = vunpack.c.l.b16 %v1131
    %v1777 = vunpack.c.h.b16 %v1131
    %v1778 = vunpack.c.l.b16 %v1132
    %v1779 = vunpack.c.h.b16 %v1132
    %v1780 = vunpack.c.l.b16 %v1133
    %v1781 = vunpack.c.h.b16 %v1133
    %v1782 = vunpack.c.l.b16 %v1134
    %v1783 = vunpack.c.h.b16 %v1134
    %v1784 = vunpack.c.l.b16 %v1135
    %v1785 = vunpack.c.h.b16 %v1135
    %v1786 = vunpack.c.l.b16 %v1136
    %v1787 = vunpack.c.h.b16 %v1136
    %v1788 = vunpack.c.l.b16 %v1137
    %v1789 = vunpack.c.h.b16 %v1137
    %v1790 = vunpack.c.l.b16 %v1138
    %v1791 = vunpack.c.h.b16 %v1138
    %v1792 = vunpack.c.l.b16 %v1139
    %v1793 = vunpack.c.h.b16 %v1139
    %v1794 = vunpack.c.l.b16 %v1140
    %v1795 = vunpack.c.h.b16 %v1140
    %v1796 = vunpack.c.l.b16 %v1141
    %v1797 = vunpack.c.h.b16 %v1141
    %v1798 = vunpack.c.l.b16 %v1142
    %v1799 = vunpack.c.h.b16 %v1142
    %v1800 = vunpack.c.l.b16 %v1143
    %v1801 = vunpack.c.h.b16 %v1143
    %v1802 = vunpack.c.l.b16 %v1144
    %v1803 = vunpack.c.h.b16 %v1144
    %v1804 = vunpack.c.l.b16 %v1145
    %v1805 = vunpack.c.h.b16 %v1145
    %v1806 = vunpack.c.l.b16 %v1146
    %v1807 = vunpack.c.h.b16 %v1146
    %v1808 = vunpack.c.l.b16 %v1147
    %v1809 = vunpack.c.h.b16 %v1147
    %v1810 = vunpack.c.l.b16 %v1148
    %v1811 = vunpack.c.h.b16 %v1148
    %v1812 = vunpack.c.l.b16 %v1149
    %v1813 = vunpack.c.h.b16 %v1149
    %v1814 = vunpack.c.l.b16 %v1150
    %v1815 = vunpack.c.h.b16 %v1150
    %v1816 = vunpack.c.l.b16 %v1151
    %v1817 = vunpack.c.h.b16 %v1151
    %v1818 = vunpack.c.l.b16 %v1152
    %v1819 = vunpack.c.h.b16 %v1152
    %v1820 = vunpack.c.l.b16 %v1153
    %v1821 = vunpack.c.h.b16 %v1153
    %v1822 = vunpack.c.l.b16 %v1154
    %v1823 = vunpack.c.h.b16 %v1154
    %v1824 = vunpack.c.l.b16 %v1155
    %v1825 = vunpack.c.h.b16 %v1155
    %v1826 = vunpack.c.l.b16 %v1156
    %v1827 = vunpack.c.h.b16 %v1156
    %v1828 = vunpack.c.l.b16 %v1157
    %v1829 = vunpack.c.h.b16 %v1157
    %v1830 = vunpack.c.l.b16 %v1158
    %v1831 = vunpack.c.h.b16 %v1158
    %v1832 = vunpack.c.l.b16 %v1159
    %v1833 = vunpack.c.h.b16 %v1159
    %v1834 = vunpack.c.l.b16 %v1160
    %v1835 = vunpack.c.h.b16 %v1160
    %v1836 = vunpack.c.l.b16 %v1161
    %v1837 = vunpack.c.h.b16 %v1161
    %v1838 = vunpack.c.l.b16 %v1162
    %v1839 = vunpack.c.h.b16 %v1162
    %v1840 = vunpack.c.l.b16 %v1163
    %v1841 = vunpack.c.h.b16 %v1163
    %v1842 = vunpack.c.l.b16 %v1164
    %v1843 = vunpack.c.h.b16 %v1164
    %v1844 = vunpack.c.l.b16 %v1165
    %v1845 = vunpack.c.h.b16 %v1165
    %v1846 = vunpack.c.l.b16 %v1166
    %v1847 = vunpack.c.h.b16 %v1166
    %v1848 = vunpack.c.l.b16 %v1167
    %v1849 = vunpack.c.h.b16 %v1167
    %v1850 = vunpack.c.l.b16 %v1168
    %v1851 = vunpack.c.h.b16 %v1168
    %v1852 = vunpack.c.l.b16 %v1169
    %v1853 = vunpack.c.h.b16 %v1169
    %v1854 = vunpack.c.l.b16 %v1170
    %v1855 = vunpack.c.h.b16 %v1170
    %v1856 = vunpack.c.l.b16 %v1171
    %v1857 = vunpack.c.h.b16 %v1171
    %v1858 = vunpack.c.l.b16 %v1172
    %v1859 = vunpack.c.h.b16 %v1172
    %v1860 = vunpack.c.l.b16 %v1173
    %v1861 = vunpack.c.h.b16 %v1173
    %v1862 = vunpack.c.l.b16 %v1174
    %v1863 = vunpack.c.h.b16 %v1174
    %v1864 = vunpack.c.l.b16 %v1175
    %v1865 = vunpack.c.h.b16 %v1175
    %v1866 = vunpack.c.l.b16 %v1176
    %v1867 = vunpack.c.h.b16 %v1176
    %v1868 = vunpack.c.l.b16 %v1177
    %v1869 = vunpack.c.h.b16 %v1177
    %v1870 = vunpack.c.l.b16 %v1178
    %v1871 = vunpack.c.h.b16 %v1178
    %v1872 = vunpack.c.l.b16 %v1179
    %v1873 = vunpack.c.h.b16 %v1179
    %v1874 = vunpack.c.l.b16 %v1180
    %v1875 = vunpack.c.h.b16 %v1180
    %v1876 = vunpack.c.l.b16 %v1181
    %v1877 = vunpack.c.h.b16 %v1181
    %v1878 = vunpack.c.l.b16 %v1182
    %v1879 = vunpack.c.h.b16 %v1182
    %v1880 = vunpack.c.l.b16 %v1183
    %v1881 = vunpack.c.h.b16 %v1183
    %v1882 = vunpack.c.l.b16 %v1184
    %v1883 = vunpack.c.h.b16 %v1184
    %v1884 = vunpack.c.l.b16 %v1185
    %v1885 = vunpack.c.h.b16 %v1185
    %v1886 = vunpack.c.l.b16 %v1186
    %v1887 = vunpack.c.h.b16 %v1186
    %v1888 = vunpack.c.l.b16 %v1187
    %v1889 = vunpack.c.h.b16 %v1187
    %v1890 = vunpack.c.l.b16 %v1188
    %v1891 = vunpack.c.h.b16 %v1188
    %v1892 = vunpack.c.l.b16 %v1189
    %v1893 = vunpack.c.h.b16 %v1189
    %v1894 = vunpack.c.l.b16 %v1190
    %v1895 = vunpack.c.h.b16 %v1190
    %v1896 = vunpack.c.l.b16 %v1191
    %v1897 = vunpack.c.h.b16 %v1191
    %v1898 = vunpack.c.l.b16 %v1192
    %v1899 = vunpack.c.h.b16 %v1192
    %v1900 = vunpack.c.l.b16 %v1193
    %v1901 = vunpack.c.h.b16 %v1193
    %v1902 = vunpack.c.l.b16 %v1194
    %v1903 = vunpack.c.h.b16 %v1194
    %v1904 = vunpack.c.l.b16 %v1195
    %v1905 = vunpack.c.h.b16 %v1195
    %v1906 = vunpack.c.l.b16 %v1196
    %v1907 = vunpack.c.h.b16 %v1196
    %v1908 = vunpack.c.l.b16 %v1197
    %v1909 = vunpack.c.h.b16 %v1197
    %v1910 = vunpack.c.l.b16 %v1198
    %v1911 = vunpack.c.h.b16 %v1198
    %v1912 = vunpack.c.l.b16 %v1199
    %v1913 = vunpack.c.h.b16 %v1199
    %v1914 = vunpack.c.l.b16 %v1200
    %v1915 = vunpack.c.h.b16 %v1200
    %v1916 = vunpack.c.l.b16 %v1201
    %v1917 = vunpack.c.h.b16 %v1201
    %v1918 = vunpack.c.l.b16 %v1202
    %v1919 = vunpack.c.h.b16 %v1202
    %v1920 = vunpack.c.l.b16 %v1203
    %v1921 = vunpack.c.h.b16 %v1203
    %v1922 = vunpack.c.l.b16 %v1204
    %v1923 = vunpack.c.h.b16 %v1204
    %v1924 = vunpack.c.l.b16 %v1205
    %v1925 = vunpack.c.h.b16 %v1205
    %v1926 = vunpack.c.l.b16 %v1206
    %v1927 = vunpack.c.h.b16 %v1206
    %v1928 = vunpack.c.l.b16 %v1207
    %v1929 = vunpack.c.h.b16 %v1207
    %v1930 = vunpack.c.l.b16 %v1208
    %v1931 = vunpack.c.h.b16 %v1208
    %v1932 = vunpack.c.l.b16 %v1209
    %v1933 = vunpack.c.h.b16 %v1209
    %v1934 = vunpack.c.l.b16 %v1210
    %v1935 = vunpack.c.h.b16 %v1210
    %v1936 = vunpack.c.l.b16 %v1211
    %v1937 = vunpack.c.h.b16 %v1211
    %v1938 = vunpack.c.l.b16 %v1212
    %v1939 = vunpack.c.h.b16 %v1212
    %v1940 = vunpack.c.l.b16 %v1213
    %v1941 = vunpack.c.h.b16 %v1213
    %v1942 = vunpack.c.l.b16 %v1214
    %v1943 = vunpack.c.h.b16 %v1214
    %v1944 = vunpack.c.l.b16 %v1215
    %v1945 = vunpack.c.h.b16 %v1215
    %v1946 = vunpack.c.l.b16 %v1216
    %v1947 = vunpack.c.h.b16 %v1216
    %v1948 = vunpack.c.l.b16 %v1217
    %v1949 = vunpack.c.h.b16 %v1217
    %v1950 = vunpack.c.l.b16 %v1218
    %v1951 = vunpack.c.h.b16 %v1218
    %v1952 = vunpack.c.l.b16 %v1219
    %v1953 = vunpack.c.h.b16 %v1219
    %v1954 = vunpack.c.l.b16 %v1220
    %v1955 = vunpack.c.h.b16 %v1220
    %v1956 = vunpack.c.l.b16 %v1221
    %v1957 = vunpack.c.h.b16 %v1221
    %v1958 = vunpack.c.l.b16 %v1222
    %v1959 = vunpack.c.h.b16 %v1222
    %v1960 = vunpack.c.l.b16 %v1223
    %v1961 = vunpack.c.h.b16 %v1223
    %v1962 = vunpack.c.l.b16 %v1224
    %v1963 = vunpack.c.h.b16 %v1224
    %v1964 = vunpack.c.l.b16 %v1225
    %v1965 = vunpack.c.h.b16 %v1225
    %v1966 = vunpack.c.l.b16 %v1226
    %v1967 = vunpack.c.h.b16 %v1226
    %v1968 = vunpack.c.l.b16 %v1227
    %v1969 = vunpack.c.h.b16 %v1227
    %v1970 = vunpack.c.l.b16 %v1228
    %v1971 = vunpack.c.h.b16 %v1228
    %v1972 = vunpack.c.l.b16 %v1229
    %v1973 = vunpack.c.h.b16 %v1229
    %v1974 = vunpack.c.l.b16 %v1230
    %v1975 = vunpack.c.h.b16 %v1230
    %v1976 = vunpack.c.l.b16 %v1231
    %v1977 = vunpack.c.h.b16 %v1231
    %v1978 = vunpack.c.l.b16 %v1232
    %v1979 = vunpack.c.h.b16 %v1232
    %v1980 = vunpack.c.l.b16 %v1233
    %v1981 = vunpack.c.h.b16 %v1233
    %v1982 = vunpack.c.l.b16 %v1234
    %v1983 = vunpack.c.h.b16 %v1234
    %v1984 = vunpack.c.l.b16 %v1235
    %v1985 = vunpack.c.h.b16 %v1235
    %v1986 = vunpack.c.l.b16 %v1236
    %v1987 = vunpack.c.h.b16 %v1236
    %v1988 = vunpack.c.l.b16 %v1237
    %v1989 = vunpack.c.h.b16 %v1237
    %v1990 = vunpack.c.l.b16 %v1238
    %v1991 = vunpack.c.h.b16 %v1238
    %v1992 = vunpack.c.l.b16 %v1239
    %v1993 = vunpack.c.h.b16 %v1239
    %v1994 = vunpack.c.l.b16 %v1240
    %v1995 = vunpack.c.h.b16 %v1240
    %v1996 = vunpack.c.l.b16 %v1241
    %v1997 = vunpack.c.h.b16 %v1241
    %v1998 = vunpack.c.l.b16 %v1242
    %v1999 = vunpack.c.h.b16 %v1242
    %v2000 = vunpack.c.l.b16 %v1243
    %v2001 = vunpack.c.h.b16 %v1243
    %v2002 = vunpack.c.l.b16 %v1244
    %v2003 = vunpack.c.h.b16 %v1244
    %v2004 = vunpack.c.l.b16 %v1245
    %v2005 = vunpack.c.h.b16 %v1245
    %v2006 = vunpack.c.l.b16 %v1246
    %v2007 = vunpack.c.h.b16 %v1246
    %v2008 = vunpack.c.l.b16 %v1247
    %v2009 = vunpack.c.h.b16 %v1247
    %v2010 = vunpack.c.l.b16 %v1248
    %v2011 = vunpack.c.h.b16 %v1248
    %v2012 = vunpack.c.l.b16 %v1249
    %v2013 = vunpack.c.h.b16 %v1249
    %v2014 = vunpack.c.l.b16 %v1250
    %v2015 = vunpack.c.h.b16 %v1250
    %v2016 = vunpack.c.l.b16 %v1251
    %v2017 = vunpack.c.h.b16 %v1251
    %v2018 = vunpack.c.l.b16 %v1252
    %v2019 = vunpack.c.h.b16 %v1252
    %v2020 = vunpack.c.l.b16 %v1253
    %v2021 = vunpack.c.h.b16 %v1253
    %v2022 = vunpack.c.l.b16 %v1254
    %v2023 = vunpack.c.h.b16 %v1254
    %v2024 = vunpack.c.l.b16 %v1255
    %v2025 = vunpack.c.h.b16 %v1255
    %v2026 = vunpack.c.l.b16 %v1256
    %v2027 = vunpack.c.h.b16 %v1256
    %v2028 = vunpack.c.l.b16 %v1257
    %v2029 = vunpack.c.h.b16 %v1257
    %v2030 = vunpack.c.l.b16 %v1258
    %v2031 = vunpack.c.h.b16 %v1258
    %v2032 = vunpack.c.l.b16 %v1259
    %v2033 = vunpack.c.h.b16 %v1259
    %v2034 = vunpack.c.l.b16 %v1260
    %v2035 = vunpack.c.h.b16 %v1260
    %v2036 = vunpack.c.l.b16 %v1261
    %v2037 = vunpack.c.h.b16 %v1261
    %v2038 = vunpack.c.l.b16 %v1262
    %v2039 = vunpack.c.h.b16 %v1262
    %v2040 = vunpack.c.l.b16 %v1263
    %v2041 = vunpack.c.h.b16 %v1263
    %v2042 = vunpack.c.l.b16 %v1264
    %v2043 = vunpack.c.h.b16 %v1264
    %v2044 = vunpack.c.l.b16 %v1265
    %v2045 = vunpack.c.h.b16 %v1265
    %v2046 = vunpack.c.l.b16 %v1266
    %v2047 = vunpack.c.h.b16 %v1266
    %v2048 = vunpack.c.l.b16 %v1267
    %v2049 = vunpack.c.h.b16 %v1267
    %v2050 = vunpack.c.l.b16 %v1268
    %v2051 = vunpack.c.h.b16 %v1268
    %v2052 = vunpack.c.l.b16 %v1269
    %v2053 = vunpack.c.h.b16 %v1269
    %v2054 = vunpack.c.l.b16 %v1270
    %v2055 = vunpack.c.h.b16 %v1270
    %v2056 = vunpack.c.l.b16 %v1271
    %v2057 = vunpack.c.h.b16 %v1271
    %v2058 = vunpack.c.l.b16 %v1272
    %v2059 = vunpack.c.h.b16 %v1272
    %v2060 = vunpack.c.l.b16 %v1273
    %v2061 = vunpack.c.h.b16 %v1273
    %v2062 = vunpack.c.l.b16 %v1274
    %v2063 = vunpack.c.h.b16 %v1274
    %v2064 = vunpack.c.l.b16 %v1275
    %v2065 = vunpack.c.h.b16 %v1275
    %v2066 = vunpack.c.l.b16 %v1276
    %v2067 = vunpack.c.h.b16 %v1276
    %v2068 = vunpack.c.l.b16 %v1277
    %v2069 = vunpack.c.h.b16 %v1277
    %v2070 = vunpack.c.l.b16 %v1278
    %v2071 = vunpack.c.h.b16 %v1278
    %v2072 = vunpack.c.l.b16 %v1279
    %v2073 = vunpack.c.h.b16 %v1279
    %v2074 = vunpack.c.l.b16 %v1280
    %v2075 = vunpack.c.h.b16 %v1280
    %v2076 = vunpack.c.l.b16 %v1281
    %v2077 = vunpack.c.h.b16 %v1281
    %v2078 = vunpack.c.l.b16 %v1282
    %v2079 = vunpack.c.h.b16 %v1282
    %v2080 = vunpack.c.l.b16 %v1283
    %v2081 = vunpack.c.h.b16 %v1283
    %v2082 = vunpack.c.l.b16 %v1284
    %v2083 = vunpack.c.h.b16 %v1284
    %v2084 = vunpack.c.l.b16 %v1285
    %v2085 = vunpack.c.h.b16 %v1285
    %v2086 = vunpack.c.l.b16 %v1286
    %v2087 = vunpack.c.h.b16 %v1286
    %v2088 = vunpack.c.l.b16 %v1287
    %v2089 = vunpack.c.h.b16 %v1287
    %v2090 = vunpack.c.l.b16 %v1288
    %v2091 = vunpack.c.h.b16 %v1288
    %v2092 = vunpack.c.l.b16 %v1289
    %v2093 = vunpack.c.h.b16 %v1289
    %v2094 = vunpack.c.l.b16 %v1290
    %v2095 = vunpack.c.h.b16 %v1290
    %v2096 = vunpack.c.l.b16 %v1291
    %v2097 = vunpack.c.h.b16 %v1291
    %v2098 = vunpack.c.l.b16 %v1292
    %v2099 = vunpack.c.h.b16 %v1292
    %v2100 = vunpack.c.l.b16 %v1293
    %v2101 = vunpack.c.h.b16 %v1293
    %v2102 = vunpack.c.l.b16 %v1294
    %v2103 = vunpack.c.h.b16 %v1294
    %v2104 = vunpack.c.l.b16 %v1295
    %v2105 = vunpack.c.h.b16 %v1295
    %v2106 = vpack.c.b16 %v1602, %v1594
    %v2107 = vpack.c.b16 %v1603, %v1595
    %v2108 = vpack.c.b16 %v1604, %v1596
    %v2109 = vpack.c.b16 %v1605, %v1597
    %v2110 = vpack.c.b16 %v1606, %v1598
    %v2111 = vpack.c.b16 %v1607, %v1599
    %v2112 = vpack.c.b16 %v1608, %v1600
    %v2113 = vpack.c.b16 %v1609, %v1601
    %v2114 = vpack.c.b16 %v1618, %v1610
    %v2115 = vpack.c.b16 %v1619, %v1611
    %v2116 = vpack.c.b16 %v1620, %v1612
    %v2117 = vpack.c.b16 %v1621, %v1613
    %v2118 = vpack.c.b16 %v1622, %v1614
    %v2119 = vpack.c.b16 %v1623, %v1615
    %v2120 = vpack.c.b16 %v1624, %v1616
    %v2121 = vpack.c.b16 %v1625, %v1617
    %v2122 = vpack.c.b16 %v1634, %v1626
    %v2123 = vpack.c.b16 %v1635, %v1627
    %v2124 = vpack.c.b16 %v1636, %v1628
    %v2125 = vpack.c.b16 %v1637, %v1629
    %v2126 = vpack.c.b16 %v1638, %v1630
    %v2127 = vpack.c.b16 %v1639, %v1631
    %v2128 = vpack.c.b16 %v1640, %v1632
    %v2129 = vpack.c.b16 %v1641, %v1633
    %v2130 = vpack.c.b16 %v1650, %v1642
    %v2131 = vpack.c.b16 %v1651, %v1643
    %v2132 = vpack.c.b16 %v1652, %v1644
    %v2133 = vpack.c.b16 %v1653, %v1645
    %v2134 = vpack.c.b16 %v1654, %v1646
    %v2135 = vpack.c.b16 %v1655, %v1647
    %v2136 = vpack.c.b16 %v1656, %v1648
    %v2137 = vpack.c.b16 %v1657, %v1649
    %v2138 = vpack.c.b16 %v1666, %v1658
    %v2139 = vpack.c.b16 %v1667, %v1659
    %v2140 = vpack.c.b16 %v1668, %v1660
    %v2141 = vpack.c.b16 %v1669, %v1661
    %v2142 = vpack.c.b16 %v1670, %v1662
    %v2143 = vpack.c.b16 %v1671, %v1663
    %v2144 = vpack.c.b16 %v1672, %v1664
    %v2145 = vpack.c.b16 %v1673, %v1665
    %v2146 = vpack.c.b16 %v1682, %v1674
    %v2147 = vpack.c.b16 %v1683, %v1675
    %v2148 = vpack.c.b16 %v1684, %v1676
    %v2149 = vpack.c.b16 %v1685, %v1677
    %v2150 = vpack.c.b16 %v1686, %v1678
    %v2151 = vpack.c.b16 %v1687, %v1679
    %v2152 = vpack.c.b16 %v1688, %v1680
    %v2153 = vpack.c.b16 %v1689, %v1681
    %v2154 = vpack.c.b16 %v1698, %v1690
    %v2155 = vpack.c.b16 %v1699, %v1691
    %v2156 = vpack.c.b16 %v1700, %v1692
    %v2157 = vpack.c.b16 %v1701, %v1693
    %v2158 = vpack.c.b16 %v1702, %v1694
    %v2159 = vpack.c.b16 %v1703, %v1695
    %v2160 = vpack.c.b16 %v1704, %v1696
    %v2161 = vpack.c.b16 %v1705, %v1697
    %v2162 = vpack.c.b16 %v1714, %v1706
    %v2163 = vpack.c.b16 %v1715, %v1707
    %v2164 = vpack.c.b16 %v1716, %v1708
    %v2165 = vpack.c.b16 %v1717, %v1709
    %v2166 = vpack.c.b16 %v1718, %v1710
    %v2167 = vpack.c.b16 %v1719, %v1711
    %v2168 = vpack.c.b16 %v1720, %v1712
    %v2169 = vpack.c.b16 %v1721, %v1713
    %v2170 = vpack.c.b16 %v1730, %v1722
    %v2171 = vpack.c.b16 %v1731, %v1723
    %v2172 = vpack.c.b16 %v1732, %v1724
    %v2173 = vpack.c.b16 %v1733, %v1725
    %v2174 = vpack.c.b16 %v1734, %v1726
    %v2175 = vpack.c.b16 %v1735, %v1727
    %v2176 = vpack.c.b16 %v1736, %v1728
    %v2177 = vpack.c.b16 %v1737, %v1729
    %v2178 = vpack.c.b16 %v1746, %v1738
    %v2179 = vpack.c.b16 %v1747, %v1739
    %v2180 = vpack.c.b16 %v1748, %v1740
    %v2181 = vpack.c.b16 %v1749, %v1741
    %v2182 = vpack.c.b16 %v1750, %v1742
    %v2183 = vpack.c.b16 %v1751, %v1743
    %v2184 = vpack.c.b16 %v1752, %v1744
    %v2185 = vpack.c.b16 %v1753, %v1745
    %v2186 = vpack.c.b16 %v1762, %v1754
    %v2187 = vpack.c.b16 %v1763, %v1755
    %v2188 = vpack.c.b16 %v1764, %v1756
    %v2189 = vpack.c.b16 %v1765, %v1757
    %v2190 = vpack.c.b16 %v1766, %v1758
    %v2191 = vpack.c.b16 %v1767, %v1759
    %v2192 = vpack.c.b16 %v1768, %v1760
    %v2193 = vpack.c.b16 %v1769, %v1761
    %v2194 = vpack.c.b16 %v1778, %v1770
    %v2195 = vpack.c.b16 %v1779, %v1771
    %v2196 = vpack.c.b16 %v1780, %v1772
    %v2197 = vpack.c.b16 %v1781, %v1773
    %v2198 = vpack.c.b16 %v1782, %v1774
    %v2199 = vpack.c.b16 %v1783, %v1775
    %v2200 = vpack.c.b16 %v1784, %v1776
    %v2201 = vpack.c.b16 %v1785, %v1777
    %v2202 = vpack.c.b16 %v1794, %v1786
    %v2203 = vpack.c.b16 %v1795, %v1787
    %v2204 = vpack.c.b16 %v1796, %v1788
    %v2205 = vpack.c.b16 %v1797, %v1789
    %v2206 = vpack.c.b16 %v1798, %v1790
    %v2207 = vpack.c.b16 %v1799, %v1791
    %v2208 = vpack.c.b16 %v1800, %v1792
    %v2209 = vpack.c.b16 %v1801, %v1793
    %v2210 = vpack.c.b16 %v1810, %v1802
    %v2211 = vpack.c.b16 %v1811, %v1803
    %v2212 = vpack.c.b16 %v1812, %v1804
    %v2213 = vpack.c.b16 %v1813, %v1805
    %v2214 = vpack.c.b16 %v1814, %v1806
    %v2215 = vpack.c.b16 %v1815, %v1807
    %v2216 = vpack.c.b16 %v1816, %v1808
    %v2217 = vpack.c.b16 %v1817, %v1809
    %v2218 = vpack.c.b16 %v1826, %v1818
    %v2219 = vpack.c.b16 %v1827, %v1819
    %v2220 = vpack.c.b16 %v1828, %v1820
    %v2221 = vpack.c.b16 %v1829, %v1821
    %v2222 = vpack.c.b16 %v1830, %v1822
    %v2223 = vpack.c.b16 %v1831, %v1823
    %v2224 = vpack.c.b16 %v1832, %v1824
    %v2225 = vpack.c.b16 %v1833, %v1825
    %v2226 = vpack.c.b16 %v1842, %v1834
    %v2227 = vpack.c.b16 %v1843, %v1835
    %v2228 = vpack.c.b16 %v1844, %v1836
    %v2229 = vpack.c.b16 %v1845, %v1837
    %v2230 = vpack.c.b16 %v1846, %v1838
    %v2231 = vpack.c.b16 %v1847, %v1839
    %v2232 = vpack.c.b16 %v1848, %v1840
    %v2233 = vpack.c.b16 %v1849, %v1841
    %v2234 = vpack.c.b16 %v1858, %v1850
    %v2235 = vpack.c.b16 %v1859, %v1851
    %v2236 = vpack.c.b16 %v1860, %v1852
    %v2237 = vpack.c.b16 %v1861, %v1853
    %v2238 = vpack.c.b16 %v1862, %v1854
    %v2239 = vpack.c.b16 %v1863, %v1855
    %v2240 = vpack.c.b16 %v1864, %v1856
    %v2241 = vpack.c.b16 %v1865, %v1857
    %v2242 = vpack.c.b16 %v1874, %v1866
    %v2243 = vpack.c.b16 %v1875, %v1867
    %v2244 = vpack.c.b16 %v1876, %v1868
    %v2245 = vpack.c.b16 %v1877, %v1869
    %v2246 = vpack.c.b16 %v1878, %v1870
    %v2247 = vpack.c.b16 %v1879, %v1871
    %v2248 = vpack.c.b16 %v1880, %v1872
    %v2249 = vpack.c.b16 %v1881, %v1873
    %v2250 = vpack.c.b16 %v1890, %v1882
    %v2251 = vpack.c.b16 %v1891, %v1883
    %v2252 = vpack.c.b16 %v1892, %v1884
    %v2253 = vpack.c.b16 %v1893, %v1885
    %v2254 = vpack.c.b16 %v1894, %v1886
    %v2255 = vpack.c.b16 %v1895, %v1887
    %v2256 = vpack.c.b16 %v1896, %v1888
    %v2257 = vpack.c.b16 %v1897, %v1889
    %v2258 = vpack.c.b16 %v1906, %v1898
    %v2259 = vpack.c.b16 %v1907, %v1899
    %v2260 = vpack.c.b16 %v1908, %v1900
    %v2261 = vpack.c.b16 %v1909, %v1901
    %v2262 = vpack.c.b16 %v1910, %v1902
    %v2263 = vpack.c.b16 %v1911, %v1903
    %v2264 = vpack.c.b16 %v1912, %v1904
    %v2265 = vpack.c.b16 %v1913, %v1905
    %v2266 = vpack.c.b16 %v1922, %v1914
    %v2267 = vpack.c.b16 %v1923, %v1915
    %v2268 = vpack.c.b16 %v1924, %v1916
    %v2269 = vpack.c.b16 %v1925, %v1917
    %v2270 = vpack.c.b16 %v1926, %v1918
    %v2271 = vpack.c.b16 %v1927, %v1919
    %v2272 = vpack.c.b16 %v1928, %v1920
    %v2273 = vpack.c.b16 %v1929, %v1921
    %v2274 = vpack.c.b16 %v1938, %v1930
    %v2275 = vpack.c.b16 %v1939, %v1931
    %v2276 = vpack.c.b16 %v1940, %v1932
    %v2277 = vpack.c.b16 %v1941, %v1933
    %v2278 = vpack.c.b16 %v1942, %v1934
    %v2279 = vpack.c.b16 %v1943, %v1935
    %v2280 = vpack.c.b16 %v1944, %v1936
    %v2281 = vpack.c.b16 %v1945, %v1937
    %v2282 = vpack.c.b16 %v1954, %v1946
    %v2283 = vpack.c.b16 %v1955, %v1947
    %v2284 = vpack.c.b16 %v1956, %v1948
    %v2285 = vpack.c.b16 %v1957, %v1949
    %v2286 = vpack.c.b16 %v1958, %v1950
    %v2287 = vpack.c.b16 %v1959, %v1951
    %v2288 = vpack.c.b16 %v1960, %v1952
    %v2289 = vpack.c.b16 %v1961, %v1953
    %v2290 = vpack.c.b16 %v1970, %v1962
    %v2291 = vpack.c.b16 %v1971, %v1963
    %v2292 = vpack.c.b16 %v1972, %v1964
    %v2293 = vpack.c.b16 %v1973, %v1965
    %v2294 = vpack.c.b16 %v1974, %v1966
    %v2295 = vpack.c.b16 %v1975, %v1967
    %v2296 = vpack.c.b16 %v1976, %v1968
    %v2297 = vpack.c.b16 %v1977, %v1969
    %v2298 = vpack.c.b16 %v1986, %v1978
    %v2299 = vpack.c.b16 %v1987, %v1979
    %v2300 = vpack.c.b16 %v1988, %v1980
    %v2301 = vpack.c.b16 %v1989, %v1981
    %v2302 = vpack.c.b16 %v1990, %v1982
    %v2303 = vpack.c.b16 %v1991, %v1983
    %v2304 = vpack.c.b16 %v1992, %v1984
    %v2305 = vpack.c.b16 %v1993, %v1985
    %v2306 = vpack.c.b16 %v2002, %v1994
    %v2307 = vpack.c.b16 %v2003, %v1995
    %v2308 = vpack.c.b16 %v2004, %v1996
    %v2309 = vpack.c.b16 %v2005, %v1997
    %v2310 = vpack.c.b16 %v2006, %v1998
    %v2311 = vpack.c.b16 %v2007, %v1999
    %v2312 = vpack.c.b16 %v2008, %v2000
    %v2313 = vpack.c.b16 %v2009, %v2001
    %v2314 = vpack.c.b16 %v2018, %v2010
    %v2315 = vpack.c.b16 %v2019, %v2011
    %v2316 = vpack.c.b16 %v2020, %v2012
    %v2317 = vpack.c.b16 %v2021, %v2013
    %v2318 = vpack.c.b16 %v2022, %v2014
    %v2319 = vpack.c.b16 %v2023, %v2015
    %v2320 = vpack.c.b16 %v2024, %v2016
    %v2321 = vpack.c.b16 %v2025, %v2017
    %v2322 = vpack.c.b16 %v2034, %v2026
    %v2323 = vpack.c.b16 %v2035, %v2027
    %v2324 = vpack.c.b16 %v2036, %v2028
    %v2325 = vpack.c.b16 %v2037, %v2029
    %v2326 = vpack.c.b16 %v2038, %v2030
    %v2327 = vpack.c.b16 %v2039, %v2031
    %v2328 = vpack.c.b16 %v2040, %v2032
    %v2329 = vpack.c.b16 %v2041, %v2033
    %v2330 = vpack.c.b16 %v2050, %v2042
    %v2331 = vpack.c.b16 %v2051, %v2043
    %v2332 = vpack.c.b16 %v2052, %v2044
    %v2333 = vpack.c.b16 %v2053, %v2045
    %v2334 = vpack.c.b16 %v2054, %v2046
    %v2335 = vpack.c.b16 %v2055, %v2047
    %v2336 = vpack.c.b16 %v2056, %v2048
    %v2337 = vpack.c.b16 %v2057, %v2049
    %v2338 = vpack.c.b16 %v2066, %v2058
    %v2339 = vpack.c.b16 %v2067, %v2059
    %v2340 = vpack.c.b16 %v2068, %v2060
    %v2341 = vpack.c.b16 %v2069, %v2061
    %v2342 = vpack.c.b16 %v2070, %v2062
    %v2343 = vpack.c.b16 %v2071, %v2063
    %v2344 = vpack.c.b16 %v2072, %v2064
    %v2345 = vpack.c.b16 %v2073, %v2065
    %v2346 = vpack.c.b16 %v2082, %v2074
    %v2347 = vpack.c.b16 %v2083, %v2075
    %v2348 = vpack.c.b16 %v2084, %v2076
    %v2349 = vpack.c.b16 %v2085, %v2077
    %v2350 = vpack.c.b16 %v2086, %v2078
    %v2351 = vpack.c.b16 %v2087, %v2079
    %v2352 = vpack.c.b16 %v2088, %v2080
    %v2353 = vpack.c.b16 %v2089, %v2081
    %v2354 = vpack.c.b16 %v2098, %v2090
    %v2355 = vpack.c.b16 %v2099, %v2091
    %v2356 = vpack.c.b16 %v2100, %v2092
    %v2357 = vpack.c.b16 %v2101, %v2093
    %v2358 = vpack.c.b16 %v2102, %v2094
    %v2359 = vpack.c.b16 %v2103, %v2095
    %v2360 = vpack.c.b16 %v2104, %v2096
    %v2361 = vpack.c.b16 %v2105, %v2097
    %2618 = vmatprep.subr.bf16.mxu0 %v2163
    %2619 = vmatpush1.bf16.msra.mxu0 %v2162
    %2620 = vmatprep.subr.bf16.mxu0 %v2155
    %2621 = vmatpush1.bf16.msra.mxu0 %v2154
    %2622 = vmatprep.subr.bf16.mxu0 %v2147
    %2623 = vmatpush1.bf16.msra.mxu0 %v2146
    %2624 = vmatprep.subr.bf16.mxu0 %v2139
    %2625 = vmatpush1.bf16.msra.mxu0 %v2138
    %2626 = vmatprep.subr.bf16.mxu0 %v2131
    %2627 = vmatpush1.bf16.msra.mxu0 %v2130
    %2628 = vmatprep.subr.bf16.mxu0 %v2123
    %2629 = vmatpush1.bf16.msra.mxu0 %v2122
    %2630 = vmatprep.subr.bf16.mxu0 %v2115
    %2631 = vmatpush1.bf16.msra.mxu0 %v2114
    %2632 = vmatprep.subr.bf16.mxu0 %v2107
    %2633 = vmatpush1.bf16.msra.mxu0 %v2106
    %2634 = vmatprep.subr.bf16.mxu0 %v2227
    %2635 = vmatpush2.bf16.msra.mxu0 %v2226
    %2636 = vmatprep.subr.bf16.mxu0 %v2219
    %2637 = vmatpush2.bf16.msra.mxu0 %v2218
    %2638 = vmatprep.subr.bf16.mxu0 %v2211
    %2639 = vmatpush2.bf16.msra.mxu0 %v2210
    %2640 = vmatprep.subr.bf16.mxu0 %v2203
    %2641 = vmatpush2.bf16.msra.mxu0 %v2202
    %2642 = vmatprep.subr.bf16.mxu0 %v2195
    %2643 = vmatpush2.bf16.msra.mxu0 %v2194
    %2644 = vmatprep.subr.bf16.mxu0 %v2187
    %2645 = vmatpush2.bf16.msra.mxu0 %v2186
    %2646 = vmatprep.subr.bf16.mxu0 %v2179
    %2647 = vmatpush2.bf16.msra.mxu0 %v2178
    %2648 = vmatprep.subr.bf16.mxu0 %v2171
    %2649 = vmatpush2.bf16.msra.mxu0 %v2170
    %2650 = vmatprep.mubr.bf16.mxu0 %v1033
    %2651 = vmatmul.mubr.bf16.gmra.mxu0 %v1032
    %v2652 = vpop.f32.mrf.mxu0
    %v2653 = vadd.f32 %v1301, %v2652
    %v2654 = vpop.f32.mrf.mxu0
    %v2655 = vadd.f32 %v1305, %v2654
    %v2656 = vpop.f32.mrf.mxu0
    %v2657 = vadd.f32 %v1301, %v2656
    %v2658 = vpop.f32.mrf.mxu0
    %v2659 = vadd.f32 %v1305, %v2658
    %2660 = vmatprep.mubr.bf16.mxu0 %v1037
    %2661 = vmatmul.mubr.bf16.gmra.mxu0 %v1036
    %v2662 = vpop.f32.mrf.mxu0
    %v2663 = vadd.f32 %v1301, %v2662
    %v2664 = vpop.f32.mrf.mxu0
    %v2665 = vadd.f32 %v1305, %v2664
    %v2666 = vpop.f32.mrf.mxu0
    %v2667 = vadd.f32 %v1301, %v2666
    %v2668 = vpop.f32.mrf.mxu0
    %v2669 = vadd.f32 %v1305, %v2668
    %2670 = vdwg.mxu0
    %2671 = vmatprep.subr.bf16.mxu0 %v2291
    %2672 = vmatpush1.bf16.msra.mxu0 %v2290
    %2673 = vmatprep.subr.bf16.mxu0 %v2283
    %2674 = vmatpush1.bf16.msra.mxu0 %v2282
    %2675 = vmatprep.subr.bf16.mxu0 %v2275
    %2676 = vmatpush1.bf16.msra.mxu0 %v2274
    %2677 = vmatprep.subr.bf16.mxu0 %v2267
    %2678 = vmatpush1.bf16.msra.mxu0 %v2266
    %2679 = vmatprep.subr.bf16.mxu0 %v2259
    %2680 = vmatpush1.bf16.msra.mxu0 %v2258
    %2681 = vmatprep.subr.bf16.mxu0 %v2251
    %2682 = vmatpush1.bf16.msra.mxu0 %v2250
    %2683 = vmatprep.subr.bf16.mxu0 %v2243
    %2684 = vmatpush1.bf16.msra.mxu0 %v2242
    %2685 = vmatprep.subr.bf16.mxu0 %v2235
    %2686 = vmatpush1.bf16.msra.mxu0 %v2234
    %2687 = vmatprep.subr.bf16.mxu0 %v2355
    %2688 = vmatpush2.bf16.msra.mxu0 %v2354
    %2689 = vmatprep.subr.bf16.mxu0 %v2347
    %2690 = vmatpush2.bf16.msra.mxu0 %v2346
    %2691 = vmatprep.subr.bf16.mxu0 %v2339
    %2692 = vmatpush2.bf16.msra.mxu0 %v2338
    %2693 = vmatprep.subr.bf16.mxu0 %v2331
    %2694 = vmatpush2.bf16.msra.mxu0 %v2330
    %2695 = vmatprep.subr.bf16.mxu0 %v2323
    %2696 = vmatpush2.bf16.msra.mxu0 %v2322
    %2697 = vmatprep.subr.bf16.mxu0 %v2315
    %2698 = vmatpush2.bf16.msra.mxu0 %v2314
    %2699 = vmatprep.subr.bf16.mxu0 %v2307
    %2700 = vmatpush2.bf16.msra.mxu0 %v2306
    %2701 = vmatprep.subr.bf16.mxu0 %v2299
    %2702 = vmatpush2.bf16.msra.mxu0 %v2298
    %2703 = vmatprep.mubr.bf16.mxu0 %v1035
    %2704 = vmatmul.mubr.bf16.gmra.mxu0 %v1034
    %v2705 = vpop.f32.mrf.mxu0
    %v2706 = vadd.f32 %v2653, %v2705
    %v2707 = vpop.f32.mrf.mxu0
    %v2708 = vadd.f32 %v2655, %v2707
    %v2709 = vpop.f32.mrf.mxu0
    %v2710 = vadd.f32 %v2657, %v2709
    %v2711 = vpop.f32.mrf.mxu0
    %v2712 = vadd.f32 %v2659, %v2711
    %2713 = vmatprep.mubr.bf16.mxu0 %v1039
    %2714 = vmatmul.mubr.bf16.gmra.mxu0 %v1038
    %v2715 = vpop.f32.mrf.mxu0
    %v2716 = vadd.f32 %v2663, %v2715
    %v2717 = vpop.f32.mrf.mxu0
    %v2718 = vadd.f32 %v2665, %v2717
    %v2719 = vpop.f32.mrf.mxu0
    %v2720 = vadd.f32 %v2667, %v2719
    %v2721 = vpop.f32.mrf.mxu0
    %v2722 = vadd.f32 %v2669, %v2721
    %2723 = vdwg.mxu0
    %2724 = vmatprep.subr.bf16.mxu0 %v2165
    %2725 = vmatpush1.bf16.msra.mxu0 %v2164
    %2726 = vmatprep.subr.bf16.mxu0 %v2157
    %2727 = vmatpush1.bf16.msra.mxu0 %v2156
    %2728 = vmatprep.subr.bf16.mxu0 %v2149
    %2729 = vmatpush1.bf16.msra.mxu0 %v2148
    %2730 = vmatprep.subr.bf16.mxu0 %v2141
    %2731 = vmatpush1.bf16.msra.mxu0 %v2140
    %2732 = vmatprep.subr.bf16.mxu0 %v2133
    %2733 = vmatpush1.bf16.msra.mxu0 %v2132
    %2734 = vmatprep.subr.bf16.mxu0 %v2125
    %2735 = vmatpush1.bf16.msra.mxu0 %v2124
    %2736 = vmatprep.subr.bf16.mxu0 %v2117
    %2737 = vmatpush1.bf16.msra.mxu0 %v2116
    %2738 = vmatprep.subr.bf16.mxu0 %v2109
    %2739 = vmatpush1.bf16.msra.mxu0 %v2108
    %2740 = vmatprep.subr.bf16.mxu0 %v2229
    %2741 = vmatpush2.bf16.msra.mxu0 %v2228
    %2742 = vmatprep.subr.bf16.mxu0 %v2221
    %2743 = vmatpush2.bf16.msra.mxu0 %v2220
    %2744 = vmatprep.subr.bf16.mxu0 %v2213
    %2745 = vmatpush2.bf16.msra.mxu0 %v2212
    %2746 = vmatprep.subr.bf16.mxu0 %v2205
    %2747 = vmatpush2.bf16.msra.mxu0 %v2204
    %2748 = vmatprep.subr.bf16.mxu0 %v2197
    %2749 = vmatpush2.bf16.msra.mxu0 %v2196
    %2750 = vmatprep.subr.bf16.mxu0 %v2189
    %2751 = vmatpush2.bf16.msra.mxu0 %v2188
    %2752 = vmatprep.subr.bf16.mxu0 %v2181
    %2753 = vmatpush2.bf16.msra.mxu0 %v2180
    %2754 = vmatprep.subr.bf16.mxu0 %v2173
    %2755 = vmatpush2.bf16.msra.mxu0 %v2172
    %2756 = vmatprep.mubr.bf16.mxu0 %v1033
    %2757 = vmatmul.mubr.bf16.gmra.mxu0 %v1032
    %v2758 = vpop.f32.mrf.mxu0
    %v2759 = vadd.f32 %v1309, %v2758
    %v2760 = vpop.f32.mrf.mxu0
    %v2761 = vadd.f32 %v1313, %v2760
    %v2762 = vpop.f32.mrf.mxu0
    %v2763 = vadd.f32 %v1309, %v2762
    %v2764 = vpop.f32.mrf.mxu0
    %v2765 = vadd.f32 %v1313, %v2764
    %2766 = vmatprep.mubr.bf16.mxu0 %v1037
    %2767 = vmatmul.mubr.bf16.gmra.mxu0 %v1036
    %v2768 = vpop.f32.mrf.mxu0
    %v2769 = vadd.f32 %v1309, %v2768
    %v2770 = vpop.f32.mrf.mxu0
    %v2771 = vadd.f32 %v1313, %v2770
    %v2772 = vpop.f32.mrf.mxu0
    %v2773 = vadd.f32 %v1309, %v2772
    %v2774 = vpop.f32.mrf.mxu0
    %v2775 = vadd.f32 %v1313, %v2774
    %2776 = vdwg.mxu0
    %2777 = vmatprep.subr.bf16.mxu0 %v2293
    %2778 = vmatpush1.bf16.msra.mxu0 %v2292
    %2779 = vmatprep.subr.bf16.mxu0 %v2285
    %2780 = vmatpush1.bf16.msra.mxu0 %v2284
    %2781 = vmatprep.subr.bf16.mxu0 %v2277
    %2782 = vmatpush1.bf16.msra.mxu0 %v2276
    %2783 = vmatprep.subr.bf16.mxu0 %v2269
    %2784 = vmatpush1.bf16.msra.mxu0 %v2268
    %2785 = vmatprep.subr.bf16.mxu0 %v2261
    %2786 = vmatpush1.bf16.msra.mxu0 %v2260
    %2787 = vmatprep.subr.bf16.mxu0 %v2253
    %2788 = vmatpush1.bf16.msra.mxu0 %v2252
    %2789 = vmatprep.subr.bf16.mxu0 %v2245
    %2790 = vmatpush1.bf16.msra.mxu0 %v2244
    %2791 = vmatprep.subr.bf16.mxu0 %v2237
    %2792 = vmatpush1.bf16.msra.mxu0 %v2236
    %2793 = vmatprep.subr.bf16.mxu0 %v2357
    %2794 = vmatpush2.bf16.msra.mxu0 %v2356
    %2795 = vmatprep.subr.bf16.mxu0 %v2349
    %2796 = vmatpush2.bf16.msra.mxu0 %v2348
    %2797 = vmatprep.subr.bf16.mxu0 %v2341
    %2798 = vmatpush2.bf16.msra.mxu0 %v2340
    %2799 = vmatprep.subr.bf16.mxu0 %v2333
    %2800 = vmatpush2.bf16.msra.mxu0 %v2332
    %2801 = vmatprep.subr.bf16.mxu0 %v2325
    %2802 = vmatpush2.bf16.msra.mxu0 %v2324
    %2803 = vmatprep.subr.bf16.mxu0 %v2317
    %2804 = vmatpush2.bf16.msra.mxu0 %v2316
    %2805 = vmatprep.subr.bf16.mxu0 %v2309
    %2806 = vmatpush2.bf16.msra.mxu0 %v2308
    %2807 = vmatprep.subr.bf16.mxu0 %v2301
    %2808 = vmatpush2.bf16.msra.mxu0 %v2300
    %2809 = vmatprep.mubr.bf16.mxu0 %v1035
    %2810 = vmatmul.mubr.bf16.gmra.mxu0 %v1034
    %v2811 = vpop.f32.mrf.mxu0
    %v2812 = vadd.f32 %v2759, %v2811
    %v2813 = vpop.f32.mrf.mxu0
    %v2814 = vadd.f32 %v2761, %v2813
    %v2815 = vpop.f32.mrf.mxu0
    %v2816 = vadd.f32 %v2763, %v2815
    %v2817 = vpop.f32.mrf.mxu0
    %v2818 = vadd.f32 %v2765, %v2817
    %2819 = vmatprep.mubr.bf16.mxu0 %v1039
    %2820 = vmatmul.mubr.bf16.gmra.mxu0 %v1038
    %v2821 = vpop.f32.mrf.mxu0
    %v2822 = vadd.f32 %v2769, %v2821
    %v2823 = vpop.f32.mrf.mxu0
    %v2824 = vadd.f32 %v2771, %v2823
    %v2825 = vpop.f32.mrf.mxu0
    %v2826 = vadd.f32 %v2773, %v2825
    %v2827 = vpop.f32.mrf.mxu0
    %v2828 = vadd.f32 %v2775, %v2827
    %2829 = vdwg.mxu0
    %2830 = vmatprep.subr.bf16.mxu0 %v2167
    %2831 = vmatpush1.bf16.msra.mxu0 %v2166
    %2832 = vmatprep.subr.bf16.mxu0 %v2159
    %2833 = vmatpush1.bf16.msra.mxu0 %v2158
    %2834 = vmatprep.subr.bf16.mxu0 %v2151
    %2835 = vmatpush1.bf16.msra.mxu0 %v2150
    %2836 = vmatprep.subr.bf16.mxu0 %v2143
    %2837 = vmatpush1.bf16.msra.mxu0 %v2142
    %2838 = vmatprep.subr.bf16.mxu0 %v2135
    %2839 = vmatpush1.bf16.msra.mxu0 %v2134
    %2840 = vmatprep.subr.bf16.mxu0 %v2127
    %2841 = vmatpush1.bf16.msra.mxu0 %v2126
    %2842 = vmatprep.subr.bf16.mxu0 %v2119
    %2843 = vmatpush1.bf16.msra.mxu0 %v2118
    %2844 = vmatprep.subr.bf16.mxu0 %v2111
    %2845 = vmatpush1.bf16.msra.mxu0 %v2110
    %2846 = vmatprep.subr.bf16.mxu0 %v2231
    %2847 = vmatpush2.bf16.msra.mxu0 %v2230
    %2848 = vmatprep.subr.bf16.mxu0 %v2223
    %2849 = vmatpush2.bf16.msra.mxu0 %v2222
    %2850 = vmatprep.subr.bf16.mxu0 %v2215
    %2851 = vmatpush2.bf16.msra.mxu0 %v2214
    %2852 = vmatprep.subr.bf16.mxu0 %v2207
    %2853 = vmatpush2.bf16.msra.mxu0 %v2206
    %2854 = vmatprep.subr.bf16.mxu0 %v2199
    %2855 = vmatpush2.bf16.msra.mxu0 %v2198
    %2856 = vmatprep.subr.bf16.mxu0 %v2191
    %2857 = vmatpush2.bf16.msra.mxu0 %v2190
    %2858 = vmatprep.subr.bf16.mxu0 %v2183
    %2859 = vmatpush2.bf16.msra.mxu0 %v2182
    %2860 = vmatprep.subr.bf16.mxu0 %v2175
    %2861 = vmatpush2.bf16.msra.mxu0 %v2174
    %2862 = vmatprep.mubr.bf16.mxu0 %v1033
    %2863 = vmatmul.mubr.bf16.gmra.mxu0 %v1032
    %v2864 = vpop.f32.mrf.mxu0
    %v2865 = vadd.f32 %v1317, %v2864
    %v2866 = vpop.f32.mrf.mxu0
    %v2867 = vadd.f32 %v1321, %v2866
    %v2868 = vpop.f32.mrf.mxu0
    %v2869 = vadd.f32 %v1317, %v2868
    %v2870 = vpop.f32.mrf.mxu0
    %v2871 = vadd.f32 %v1321, %v2870
    %2872 = vmatprep.mubr.bf16.mxu0 %v1037
    %2873 = vmatmul.mubr.bf16.gmra.mxu0 %v1036
    %v2874 = vpop.f32.mrf.mxu0
    %v2875 = vadd.f32 %v1317, %v2874
    %v2876 = vpop.f32.mrf.mxu0
    %v2877 = vadd.f32 %v1321, %v2876
    %v2878 = vpop.f32.mrf.mxu0
    %v2879 = vadd.f32 %v1317, %v2878
    %v2880 = vpop.f32.mrf.mxu0
    %v2881 = vadd.f32 %v1321, %v2880
    %2882 = vdwg.mxu0
    %2883 = vmatprep.subr.bf16.mxu0 %v2295
    %2884 = vmatpush1.bf16.msra.mxu0 %v2294
    %2885 = vmatprep.subr.bf16.mxu0 %v2287
    %2886 = vmatpush1.bf16.msra.mxu0 %v2286
    %2887 = vmatprep.subr.bf16.mxu0 %v2279
    %2888 = vmatpush1.bf16.msra.mxu0 %v2278
    %2889 = vmatprep.subr.bf16.mxu0 %v2271
    %2890 = vmatpush1.bf16.msra.mxu0 %v2270
    %2891 = vmatprep.subr.bf16.mxu0 %v2263
    %2892 = vmatpush1.bf16.msra.mxu0 %v2262
    %2893 = vmatprep.subr.bf16.mxu0 %v2255
    %2894 = vmatpush1.bf16.msra.mxu0 %v2254
    %2895 = vmatprep.subr.bf16.mxu0 %v2247
    %2896 = vmatpush1.bf16.msra.mxu0 %v2246
    %2897 = vmatprep.subr.bf16.mxu0 %v2239
    %2898 = vmatpush1.bf16.msra.mxu0 %v2238
    %2899 = vmatprep.subr.bf16.mxu0 %v2359
    %2900 = vmatpush2.bf16.msra.mxu0 %v2358
    %2901 = vmatprep.subr.bf16.mxu0 %v2351
    %2902 = vmatpush2.bf16.msra.mxu0 %v2350
    %2903 = vmatprep.subr.bf16.mxu0 %v2343
    %2904 = vmatpush2.bf16.msra.mxu0 %v2342
    %2905 = vmatprep.subr.bf16.mxu0 %v2335
    %2906 = vmatpush2.bf16.msra.mxu0 %v2334
    %2907 = vmatprep.subr.bf16.mxu0 %v2327
    %2908 = vmatpush2.bf16.msra.mxu0 %v2326
    %2909 = vmatprep.subr.bf16.mxu0 %v2319
    %2910 = vmatpush2.bf16.msra.mxu0 %v2318
    %2911 = vmatprep.subr.bf16.mxu0 %v2311
    %2912 = vmatpush2.bf16.msra.mxu0 %v2310
    %2913 = vmatprep.subr.bf16.mxu0 %v2303
    %2914 = vmatpush2.bf16.msra.mxu0 %v2302
    %2915 = vmatprep.mubr.bf16.mxu0 %v1035
    %2916 = vmatmul.mubr.bf16.gmra.mxu0 %v1034
    %v2917 = vpop.f32.mrf.mxu0
    %v2918 = vadd.f32 %v2865, %v2917
    %v2919 = vpop.f32.mrf.mxu0
    %v2920 = vadd.f32 %v2867, %v2919
    %v2921 = vpop.f32.mrf.mxu0
    %v2922 = vadd.f32 %v2869, %v2921
    %v2923 = vpop.f32.mrf.mxu0
    %v2924 = vadd.f32 %v2871, %v2923
    %2925 = vmatprep.mubr.bf16.mxu0 %v1039
    %2926 = vmatmul.mubr.bf16.gmra.mxu0 %v1038
    %v2927 = vpop.f32.mrf.mxu0
    %v2928 = vadd.f32 %v2875, %v2927
    %v2929 = vpop.f32.mrf.mxu0
    %v2930 = vadd.f32 %v2877, %v2929
    %v2931 = vpop.f32.mrf.mxu0
    %v2932 = vadd.f32 %v2879, %v2931
    %v2933 = vpop.f32.mrf.mxu0
    %v2934 = vadd.f32 %v2881, %v2933
    %2935 = vdwg.mxu0
    %2936 = vmatprep.subr.bf16.mxu0 %v2169
    %2937 = vmatpush1.bf16.msra.mxu0 %v2168
    %2938 = vmatprep.subr.bf16.mxu0 %v2161
    %2939 = vmatpush1.bf16.msra.mxu0 %v2160
    %2940 = vmatprep.subr.bf16.mxu0 %v2153
    %2941 = vmatpush1.bf16.msra.mxu0 %v2152
    %2942 = vmatprep.subr.bf16.mxu0 %v2145
    %2943 = vmatpush1.bf16.msra.mxu0 %v2144
    %2944 = vmatprep.subr.bf16.mxu0 %v2137
    %2945 = vmatpush1.bf16.msra.mxu0 %v2136
    %2946 = vmatprep.subr.bf16.mxu0 %v2129
    %2947 = vmatpush1.bf16.msra.mxu0 %v2128
    %2948 = vmatprep.subr.bf16.mxu0 %v2121
    %2949 = vmatpush1.bf16.msra.mxu0 %v2120
    %2950 = vmatprep.subr.bf16.mxu0 %v2113
    %2951 = vmatpush1.bf16.msra.mxu0 %v2112
    %2952 = vmatprep.subr.bf16.mxu0 %v2233
    %2953 = vmatpush2.bf16.msra.mxu0 %v2232
    %2954 = vmatprep.subr.bf16.mxu0 %v2225
    %2955 = vmatpush2.bf16.msra.mxu0 %v2224
    %2956 = vmatprep.subr.bf16.mxu0 %v2217
    %2957 = vmatpush2.bf16.msra.mxu0 %v2216
    %2958 = vmatprep.subr.bf16.mxu0 %v2209
    %2959 = vmatpush2.bf16.msra.mxu0 %v2208
    %2960 = vmatprep.subr.bf16.mxu0 %v2201
    %2961 = vmatpush2.bf16.msra.mxu0 %v2200
    %2962 = vmatprep.subr.bf16.mxu0 %v2193
    %2963 = vmatpush2.bf16.msra.mxu0 %v2192
    %2964 = vmatprep.subr.bf16.mxu0 %v2185
    %2965 = vmatpush2.bf16.msra.mxu0 %v2184
    %2966 = vmatprep.subr.bf16.mxu0 %v2177
    %2967 = vmatpush2.bf16.msra.mxu0 %v2176
    %2968 = vmatprep.mubr.bf16.mxu0 %v1033
    %2969 = vmatmul.mubr.bf16.gmra.mxu0 %v1032
    %v2970 = vpop.f32.mrf.mxu0
    %v2971 = vadd.f32 %v1325, %v2970
    %v2972 = vpop.f32.mrf.mxu0
    %v2973 = vadd.f32 %v1329, %v2972
    %v2974 = vpop.f32.mrf.mxu0
    %v2975 = vadd.f32 %v1325, %v2974
    %v2976 = vpop.f32.mrf.mxu0
    %v2977 = vadd.f32 %v1329, %v2976
    %2978 = vmatprep.mubr.bf16.mxu0 %v1037
    %2979 = vmatmul.mubr.bf16.gmra.mxu0 %v1036
    %v2980 = vpop.f32.mrf.mxu0
    %v2981 = vadd.f32 %v1325, %v2980
    %v2982 = vpop.f32.mrf.mxu0
    %v2983 = vadd.f32 %v1329, %v2982
    %v2984 = vpop.f32.mrf.mxu0
    %v2985 = vadd.f32 %v1325, %v2984
    %v2986 = vpop.f32.mrf.mxu0
    %v2987 = vadd.f32 %v1329, %v2986
    %2988 = vdwg.mxu0
    %2989 = vmatprep.subr.bf16.mxu0 %v2297
    %2990 = vmatpush1.bf16.msra.mxu0 %v2296
    %2991 = vmatprep.subr.bf16.mxu0 %v2289
    %2992 = vmatpush1.bf16.msra.mxu0 %v2288
    %2993 = vmatprep.subr.bf16.mxu0 %v2281
    %2994 = vmatpush1.bf16.msra.mxu0 %v2280
    %2995 = vmatprep.subr.bf16.mxu0 %v2273
    %2996 = vmatpush1.bf16.msra.mxu0 %v2272
    %2997 = vmatprep.subr.bf16.mxu0 %v2265
    %2998 = vmatpush1.bf16.msra.mxu0 %v2264
    %2999 = vmatprep.subr.bf16.mxu0 %v2257
    %3000 = vmatpush1.bf16.msra.mxu0 %v2256
    %3001 = vmatprep.subr.bf16.mxu0 %v2249
    %3002 = vmatpush1.bf16.msra.mxu0 %v2248
    %3003 = vmatprep.subr.bf16.mxu0 %v2241
    %3004 = vmatpush1.bf16.msra.mxu0 %v2240
    %3005 = vmatprep.subr.bf16.mxu0 %v2361
    %3006 = vmatpush2.bf16.msra.mxu0 %v2360
    %3007 = vmatprep.subr.bf16.mxu0 %v2353
    %3008 = vmatpush2.bf16.msra.mxu0 %v2352
    %3009 = vmatprep.subr.bf16.mxu0 %v2345
    %3010 = vmatpush2.bf16.msra.mxu0 %v2344
    %3011 = vmatprep.subr.bf16.mxu0 %v2337
    %3012 = vmatpush2.bf16.msra.mxu0 %v2336
    %3013 = vmatprep.subr.bf16.mxu0 %v2329
    %3014 = vmatpush2.bf16.msra.mxu0 %v2328
    %3015 = vmatprep.subr.bf16.mxu0 %v2321
    %3016 = vmatpush2.bf16.msra.mxu0 %v2320
    %3017 = vmatprep.subr.bf16.mxu0 %v2313
    %3018 = vmatpush2.bf16.msra.mxu0 %v2312
    %3019 = vmatprep.subr.bf16.mxu0 %v2305
    %3020 = vmatpush2.bf16.msra.mxu0 %v2304
    %3021 = vmatprep.mubr.bf16.mxu0 %v1035
    %3022 = vmatmul.mubr.bf16.gmra.mxu0 %v1034
    %v3023 = vpop.f32.mrf.mxu0
    %v3024 = vadd.f32 %v2971, %v3023
    %v3025 = vpop.f32.mrf.mxu0
    %v3026 = vadd.f32 %v2973, %v3025
    %v3027 = vpop.f32.mrf.mxu0
    %v3028 = vadd.f32 %v2975, %v3027
    %v3029 = vpop.f32.mrf.mxu0
    %v3030 = vadd.f32 %v2977, %v3029
    %3031 = vmatprep.mubr.bf16.mxu0 %v1039
    %3032 = vmatmul.mubr.bf16.gmra.mxu0 %v1038
    %v3033 = vpop.f32.mrf.mxu0
    %v3034 = vadd.f32 %v2981, %v3033
    %v3035 = vpop.f32.mrf.mxu0
    %v3036 = vadd.f32 %v2983, %v3035
    %v3037 = vpop.f32.mrf.mxu0
    %v3038 = vadd.f32 %v2985, %v3037
    %v3039 = vpop.f32.mrf.mxu0
    %v3040 = vadd.f32 %v2987, %v3039
    %3041 = vdwg.mxu0
    %v3042 = vmax.f32 %v2706, 0.0
    %v3043 = vmax.f32 %v2708, 0.0
    %v3044 = vmax.f32 %v2812, 0.0
    %v3045 = vmax.f32 %v2814, 0.0
    %v3046 = vmax.f32 %v2918, 0.0
    %v3047 = vmax.f32 %v2920, 0.0
    %v3048 = vmax.f32 %v3024, 0.0
    %v3049 = vmax.f32 %v3026, 0.0
    %v3050 = vmax.f32 %v2710, 0.0
    %v3051 = vmax.f32 %v2712, 0.0
    %v3052 = vmax.f32 %v2816, 0.0
    %v3053 = vmax.f32 %v2818, 0.0
    %v3054 = vmax.f32 %v2922, 0.0
    %v3055 = vmax.f32 %v2924, 0.0
    %v3056 = vmax.f32 %v3028, 0.0
    %v3057 = vmax.f32 %v3030, 0.0
    %v3058 = vmax.f32 %v2716, 0.0
    %v3059 = vmax.f32 %v2718, 0.0
    %v3060 = vmax.f32 %v2822, 0.0
    %v3061 = vmax.f32 %v2824, 0.0
    %v3062 = vmax.f32 %v2928, 0.0
    %v3063 = vmax.f32 %v2930, 0.0
    %v3064 = vmax.f32 %v3034, 0.0
    %v3065 = vmax.f32 %v3036, 0.0
    %v3066 = vmax.f32 %v2720, 0.0
    %v3067 = vmax.f32 %v2722, 0.0
    %v3068 = vmax.f32 %v2826, 0.0
    %v3069 = vmax.f32 %v2828, 0.0
    %v3070 = vmax.f32 %v2932, 0.0
    %v3071 = vmax.f32 %v2934, 0.0
    %v3072 = vmax.f32 %v3038, 0.0
    %v3073 = vmax.f32 %v3040, 0.0
    %v3074 = vmax.f32 %v3042, %v3050
    %v3075 = vrot.slane %v3074, 4
    %v3076 = vmax.f32 %v3074, %v3075
    %v3077 = vrot.slane %v3076, 2
    %v3078 = vmax.f32 %v3076, %v3077
    %v3079 = vrot.slane %v3078, 1
    %v3080 = vmax.f32 %v3078, %v3079
    %v3081 = vmax.f32 %v3043, %v3051
    %v3082 = vrot.slane %v3081, 4
    %v3083 = vmax.f32 %v3081, %v3082
    %v3084 = vrot.slane %v3083, 2
    %v3085 = vmax.f32 %v3083, %v3084
    %v3086 = vrot.slane %v3085, 1
    %v3087 = vmax.f32 %v3085, %v3086
    %v3088 = vmax.f32 %v3044, %v3052
    %v3089 = vrot.slane %v3088, 4
    %v3090 = vmax.f32 %v3088, %v3089
    %v3091 = vrot.slane %v3090, 2
    %v3092 = vmax.f32 %v3090, %v3091
    %v3093 = vrot.slane %v3092, 1
    %v3094 = vmax.f32 %v3092, %v3093
    %v3095 = vmax.f32 %v3045, %v3053
    %v3096 = vrot.slane %v3095, 4
    %v3097 = vmax.f32 %v3095, %v3096
    %v3098 = vrot.slane %v3097, 2
    %v3099 = vmax.f32 %v3097, %v3098
    %v3100 = vrot.slane %v3099, 1
    %v3101 = vmax.f32 %v3099, %v3100
    %v3102 = vmax.f32 %v3046, %v3054
    %v3103 = vrot.slane %v3102, 4
    %v3104 = vmax.f32 %v3102, %v3103
    %v3105 = vrot.slane %v3104, 2
    %v3106 = vmax.f32 %v3104, %v3105
    %v3107 = vrot.slane %v3106, 1
    %v3108 = vmax.f32 %v3106, %v3107
    %v3109 = vmax.f32 %v3047, %v3055
    %v3110 = vrot.slane %v3109, 4
    %v3111 = vmax.f32 %v3109, %v3110
    %v3112 = vrot.slane %v3111, 2
    %v3113 = vmax.f32 %v3111, %v3112
    %v3114 = vrot.slane %v3113, 1
    %v3115 = vmax.f32 %v3113, %v3114
    %v3116 = vmax.f32 %v3048, %v3056
    %v3117 = vrot.slane %v3116, 4
    %v3118 = vmax.f32 %v3116, %v3117
    %v3119 = vrot.slane %v3118, 2
    %v3120 = vmax.f32 %v3118, %v3119
    %v3121 = vrot.slane %v3120, 1
    %v3122 = vmax.f32 %v3120, %v3121
    %v3123 = vmax.f32 %v3049, %v3057
    %v3124 = vrot.slane %v3123, 4
    %v3125 = vmax.f32 %v3123, %v3124
    %v3126 = vrot.slane %v3125, 2
    %v3127 = vmax.f32 %v3125, %v3126
    %v3128 = vrot.slane %v3127, 1
    %v3129 = vmax.f32 %v3127, %v3128
    %v3130 = vmax.f32 %v3058, %v3066
    %v3131 = vrot.slane %v3130, 4
    %v3132 = vmax.f32 %v3130, %v3131
    %v3133 = vrot.slane %v3132, 2
    %v3134 = vmax.f32 %v3132, %v3133
    %v3135 = vrot.slane %v3134, 1
    %v3136 = vmax.f32 %v3134, %v3135
    %v3137 = vmax.f32 %v3059, %v3067
    %v3138 = vrot.slane %v3137, 4
    %v3139 = vmax.f32 %v3137, %v3138
    %v3140 = vrot.slane %v3139, 2
    %v3141 = vmax.f32 %v3139, %v3140
    %v3142 = vrot.slane %v3141, 1
    %v3143 = vmax.f32 %v3141, %v3142
    %v3144 = vmax.f32 %v3060, %v3068
    %v3145 = vrot.slane %v3144, 4
    %v3146 = vmax.f32 %v3144, %v3145
    %v3147 = vrot.slane %v3146, 2
    %v3148 = vmax.f32 %v3146, %v3147
    %v3149 = vrot.slane %v3148, 1
    %v3150 = vmax.f32 %v3148, %v3149
    %v3151 = vmax.f32 %v3061, %v3069
    %v3152 = vrot.slane %v3151, 4
    %v3153 = vmax.f32 %v3151, %v3152
    %v3154 = vrot.slane %v3153, 2
    %v3155 = vmax.f32 %v3153, %v3154
    %v3156 = vrot.slane %v3155, 1
    %v3157 = vmax.f32 %v3155, %v3156
    %v3158 = vmax.f32 %v3062, %v3070
    %v3159 = vrot.slane %v3158, 4
    %v3160 = vmax.f32 %v3158, %v3159
    %v3161 = vrot.slane %v3160, 2
    %v3162 = vmax.f32 %v3160, %v3161
    %v3163 = vrot.slane %v3162, 1
    %v3164 = vmax.f32 %v3162, %v3163
    %v3165 = vmax.f32 %v3063, %v3071
    %v3166 = vrot.slane %v3165, 4
    %v3167 = vmax.f32 %v3165, %v3166
    %v3168 = vrot.slane %v3167, 2
    %v3169 = vmax.f32 %v3167, %v3168
    %v3170 = vrot.slane %v3169, 1
    %v3171 = vmax.f32 %v3169, %v3170
    %v3172 = vmax.f32 %v3064, %v3072
    %v3173 = vrot.slane %v3172, 4
    %v3174 = vmax.f32 %v3172, %v3173
    %v3175 = vrot.slane %v3174, 2
    %v3176 = vmax.f32 %v3174, %v3175
    %v3177 = vrot.slane %v3176, 1
    %v3178 = vmax.f32 %v3176, %v3177
    %v3179 = vmax.f32 %v3065, %v3073
    %v3180 = vrot.slane %v3179, 4
    %v3181 = vmax.f32 %v3179, %v3180
    %v3182 = vrot.slane %v3181, 2
    %v3183 = vmax.f32 %v3181, %v3182
    %v3184 = vrot.slane %v3183, 1
    %v3185 = vmax.f32 %v3183, %v3184
    %v3186 = vpack.c.bf16 %v3080, %v3080
    %v3187 = vpack.c.bf16 %v3087, %v3087
    %v3188 = vpack.c.bf16 %v3094, %v3094
    %v3189 = vpack.c.bf16 %v3101, %v3101
    %v3190 = vpack.c.bf16 %v3108, %v3108
    %v3191 = vpack.c.bf16 %v3115, %v3115
    %v3192 = vpack.c.bf16 %v3122, %v3122
    %v3193 = vpack.c.bf16 %v3129, %v3129
    %v3194 = vpack.c.bf16 %v3136, %v3136
    %v3195 = vpack.c.bf16 %v3143, %v3143
    %v3196 = vpack.c.bf16 %v3150, %v3150
    %v3197 = vpack.c.bf16 %v3157, %v3157
    %v3198 = vpack.c.bf16 %v3164, %v3164
    %v3199 = vpack.c.bf16 %v3171, %v3171
    %v3200 = vpack.c.bf16 %v3178, %v3178
    %v3201 = vpack.c.bf16 %v3185, %v3185
    %v3202 = vld [vmem:[%s7] sm:$0xff]
    %v3203 = vld [vmem:[%s7 + $0x8] sm:$0xff]
    %v3204 = vld [vmem:[%s7 + $0x10] sm:$0xff]
    %v3205 = vld [vmem:[%s7 + $0x18] sm:$0xff]
    %v3206 = vld [vmem:[%s7 + $0x20] sm:$0xff]
    %v3207 = vld [vmem:[%s7 + $0x28] sm:$0xff]
    %v3208 = vld [vmem:[%s7 + $0x30] sm:$0xff]
    %v3209 = vld [vmem:[%s7 + $0x38] sm:$0xff]
    %v3210 = vld [vmem:[%s7 + $0x40] sm:$0xff]
    %v3211 = vld [vmem:[%s7 + $0x48] sm:$0xff]
    %v3212 = vld [vmem:[%s7 + $0x50] sm:$0xff]
    %v3213 = vld [vmem:[%s7 + $0x58] sm:$0xff]
    %v3214 = vld [vmem:[%s7 + $0x60] sm:$0xff]
    %v3215 = vld [vmem:[%s7 + $0x68] sm:$0xff]
    %v3216 = vld [vmem:[%s7 + $0x70] sm:$0xff]
    %v3217 = vld [vmem:[%s7 + $0x78] sm:$0xff]
    %v3218 = vld [vmem:[%s7 + $0x80] sm:$0xff]
    %v3219 = vld [vmem:[%s7 + $0x88] sm:$0xff]
    %v3220 = vld [vmem:[%s7 + $0x90] sm:$0xff]
    %v3221 = vld [vmem:[%s7 + $0x98] sm:$0xff]
    %v3222 = vld [vmem:[%s7 + $0xa0] sm:$0xff]
    %v3223 = vld [vmem:[%s7 + $0xa8] sm:$0xff]
    %v3224 = vld [vmem:[%s7 + $0xb0] sm:$0xff]
    %v3225 = vld [vmem:[%s7 + $0xb8] sm:$0xff]
    %v3226 = vld [vmem:[%s7 + $0xc0] sm:$0xff]
    %v3227 = vld [vmem:[%s7 + $0xc8] sm:$0xff]
    %v3228 = vld [vmem:[%s7 + $0xd0] sm:$0xff]
    %v3229 = vld [vmem:[%s7 + $0xd8] sm:$0xff]
    %v3230 = vld [vmem:[%s7 + $0xe0] sm:$0xff]
    %v3231 = vld [vmem:[%s7 + $0xe8] sm:$0xff]
    %v3232 = vld [vmem:[%s7 + $0xf0] sm:$0xff]
    %v3233 = vld [vmem:[%s7 + $0xf8] sm:$0xff]
    %v3234 = vld [vmem:[%s7 + $0x100] sm:$0xff]
    %v3235 = vld [vmem:[%s7 + $0x108] sm:$0xff]
    %v3236 = vld [vmem:[%s7 + $0x110] sm:$0xff]
    %v3237 = vld [vmem:[%s7 + $0x118] sm:$0xff]
    %v3238 = vld [vmem:[%s7 + $0x120] sm:$0xff]
    %v3239 = vld [vmem:[%s7 + $0x128] sm:$0xff]
    %v3240 = vld [vmem:[%s7 + $0x130] sm:$0xff]
    %v3241 = vld [vmem:[%s7 + $0x138] sm:$0xff]
    %v3242 = vld [vmem:[%s7 + $0x140] sm:$0xff]
    %v3243 = vld [vmem:[%s7 + $0x148] sm:$0xff]
    %v3244 = vld [vmem:[%s7 + $0x150] sm:$0xff]
    %v3245 = vld [vmem:[%s7 + $0x158] sm:$0xff]
    %v3246 = vld [vmem:[%s7 + $0x160] sm:$0xff]
    %v3247 = vld [vmem:[%s7 + $0x168] sm:$0xff]
    %v3248 = vld [vmem:[%s7 + $0x170] sm:$0xff]
    %v3249 = vld [vmem:[%s7 + $0x178] sm:$0xff]
    %v3250 = vld [vmem:[%s7 + $0x180] sm:$0xff]
    %v3251 = vld [vmem:[%s7 + $0x188] sm:$0xff]
    %v3252 = vld [vmem:[%s7 + $0x190] sm:$0xff]
    %v3253 = vld [vmem:[%s7 + $0x198] sm:$0xff]
    %v3254 = vld [vmem:[%s7 + $0x1a0] sm:$0xff]
    %v3255 = vld [vmem:[%s7 + $0x1a8] sm:$0xff]
    %v3256 = vld [vmem:[%s7 + $0x1b0] sm:$0xff]
    %v3257 = vld [vmem:[%s7 + $0x1b8] sm:$0xff]
    %v3258 = vld [vmem:[%s7 + $0x1c0] sm:$0xff]
    %v3259 = vld [vmem:[%s7 + $0x1c8] sm:$0xff]
    %v3260 = vld [vmem:[%s7 + $0x1d0] sm:$0xff]
    %v3261 = vld [vmem:[%s7 + $0x1d8] sm:$0xff]
    %v3262 = vld [vmem:[%s7 + $0x1e0] sm:$0xff]
    %v3263 = vld [vmem:[%s7 + $0x1e8] sm:$0xff]
    %v3264 = vld [vmem:[%s7 + $0x1f0] sm:$0xff]
    %v3265 = vld [vmem:[%s7 + $0x1f8] sm:$0xff]
    %v3266 = vld [vmem:[%s7 + $0x200] sm:$0xff]
    %v3267 = vld [vmem:[%s7 + $0x208] sm:$0xff]
    %v3268 = vld [vmem:[%s7 + $0x210] sm:$0xff]
    %v3269 = vld [vmem:[%s7 + $0x218] sm:$0xff]
    %v3270 = vld [vmem:[%s7 + $0x220] sm:$0xff]
    %v3271 = vld [vmem:[%s7 + $0x228] sm:$0xff]
    %v3272 = vld [vmem:[%s7 + $0x230] sm:$0xff]
    %v3273 = vld [vmem:[%s7 + $0x238] sm:$0xff]
    %v3274 = vld [vmem:[%s7 + $0x240] sm:$0xff]
    %v3275 = vld [vmem:[%s7 + $0x248] sm:$0xff]
    %v3276 = vld [vmem:[%s7 + $0x250] sm:$0xff]
    %v3277 = vld [vmem:[%s7 + $0x258] sm:$0xff]
    %v3278 = vld [vmem:[%s7 + $0x260] sm:$0xff]
    %v3279 = vld [vmem:[%s7 + $0x268] sm:$0xff]
    %v3280 = vld [vmem:[%s7 + $0x270] sm:$0xff]
    %v3281 = vld [vmem:[%s7 + $0x278] sm:$0xff]
    %v3282 = vld [vmem:[%s7 + $0x280] sm:$0xff]
    %v3283 = vld [vmem:[%s7 + $0x288] sm:$0xff]
    %v3284 = vld [vmem:[%s7 + $0x290] sm:$0xff]
    %v3285 = vld [vmem:[%s7 + $0x298] sm:$0xff]
    %v3286 = vld [vmem:[%s7 + $0x2a0] sm:$0xff]
    %v3287 = vld [vmem:[%s7 + $0x2a8] sm:$0xff]
    %v3288 = vld [vmem:[%s7 + $0x2b0] sm:$0xff]
    %v3289 = vld [vmem:[%s7 + $0x2b8] sm:$0xff]
    %v3290 = vld [vmem:[%s7 + $0x2c0] sm:$0xff]
    %v3291 = vld [vmem:[%s7 + $0x2c8] sm:$0xff]
    %v3292 = vld [vmem:[%s7 + $0x2d0] sm:$0xff]
    %v3293 = vld [vmem:[%s7 + $0x2d8] sm:$0xff]
    %v3294 = vld [vmem:[%s7 + $0x2e0] sm:$0xff]
    %v3295 = vld [vmem:[%s7 + $0x2e8] sm:$0xff]
    %v3296 = vld [vmem:[%s7 + $0x2f0] sm:$0xff]
    %v3297 = vld [vmem:[%s7 + $0x2f8] sm:$0xff]
    %v3298 = vld [vmem:[%s7 + $0x300] sm:$0xff]
    %v3299 = vld [vmem:[%s7 + $0x308] sm:$0xff]
    %v3300 = vld [vmem:[%s7 + $0x310] sm:$0xff]
    %v3301 = vld [vmem:[%s7 + $0x318] sm:$0xff]
    %v3302 = vld [vmem:[%s7 + $0x320] sm:$0xff]
    %v3303 = vld [vmem:[%s7 + $0x328] sm:$0xff]
    %v3304 = vld [vmem:[%s7 + $0x330] sm:$0xff]
    %v3305 = vld [vmem:[%s7 + $0x338] sm:$0xff]
    %v3306 = vld [vmem:[%s7 + $0x340] sm:$0xff]
    %v3307 = vld [vmem:[%s7 + $0x348] sm:$0xff]
    %v3308 = vld [vmem:[%s7 + $0x350] sm:$0xff]
    %v3309 = vld [vmem:[%s7 + $0x358] sm:$0xff]
    %v3310 = vld [vmem:[%s7 + $0x360] sm:$0xff]
    %v3311 = vld [vmem:[%s7 + $0x368] sm:$0xff]
    %v3312 = vld [vmem:[%s7 + $0x370] sm:$0xff]
    %v3313 = vld [vmem:[%s7 + $0x378] sm:$0xff]
    %v3314 = vld [vmem:[%s7 + $0x380] sm:$0xff]
    %v3315 = vld [vmem:[%s7 + $0x388] sm:$0xff]
    %v3316 = vld [vmem:[%s7 + $0x390] sm:$0xff]
    %v3317 = vld [vmem:[%s7 + $0x398] sm:$0xff]
    %v3318 = vld [vmem:[%s7 + $0x3a0] sm:$0xff]
    %v3319 = vld [vmem:[%s7 + $0x3a8] sm:$0xff]
    %v3320 = vld [vmem:[%s7 + $0x3b0] sm:$0xff]
    %v3321 = vld [vmem:[%s7 + $0x3b8] sm:$0xff]
    %v3322 = vld [vmem:[%s7 + $0x3c0] sm:$0xff]
    %v3323 = vld [vmem:[%s7 + $0x3c8] sm:$0xff]
    %v3324 = vld [vmem:[%s7 + $0x3d0] sm:$0xff]
    %v3325 = vld [vmem:[%s7 + $0x3d8] sm:$0xff]
    %v3326 = vld [vmem:[%s7 + $0x3e0] sm:$0xff]
    %v3327 = vld [vmem:[%s7 + $0x3e8] sm:$0xff]
    %v3328 = vld [vmem:[%s7 + $0x3f0] sm:$0xff]
    %v3329 = vld [vmem:[%s7 + $0x3f8] sm:$0xff]
    %v3330 = vld [vmem:[%s7 + $0x400] sm:$0xff]
    %v3331 = vld [vmem:[%s7 + $0x408] sm:$0xff]
    %v3332 = vld [vmem:[%s7 + $0x410] sm:$0xff]
    %v3333 = vld [vmem:[%s7 + $0x418] sm:$0xff]
    %v3334 = vld [vmem:[%s7 + $0x420] sm:$0xff]
    %v3335 = vld [vmem:[%s7 + $0x428] sm:$0xff]
    %v3336 = vld [vmem:[%s7 + $0x430] sm:$0xff]
    %v3337 = vld [vmem:[%s7 + $0x438] sm:$0xff]
    %v3338 = vld [vmem:[%s7 + $0x440] sm:$0xff]
    %v3339 = vld [vmem:[%s7 + $0x448] sm:$0xff]
    %v3340 = vld [vmem:[%s7 + $0x450] sm:$0xff]
    %v3341 = vld [vmem:[%s7 + $0x458] sm:$0xff]
    %v3342 = vld [vmem:[%s7 + $0x460] sm:$0xff]
    %v3343 = vld [vmem:[%s7 + $0x468] sm:$0xff]
    %v3344 = vld [vmem:[%s7 + $0x470] sm:$0xff]
    %v3345 = vld [vmem:[%s7 + $0x478] sm:$0xff]
    %v3346 = vld [vmem:[%s7 + $0x480] sm:$0xff]
    %v3347 = vld [vmem:[%s7 + $0x488] sm:$0xff]
    %v3348 = vld [vmem:[%s7 + $0x490] sm:$0xff]
    %v3349 = vld [vmem:[%s7 + $0x498] sm:$0xff]
    %v3350 = vld [vmem:[%s7 + $0x4a0] sm:$0xff]
    %v3351 = vld [vmem:[%s7 + $0x4a8] sm:$0xff]
    %v3352 = vld [vmem:[%s7 + $0x4b0] sm:$0xff]
    %v3353 = vld [vmem:[%s7 + $0x4b8] sm:$0xff]
    %v3354 = vld [vmem:[%s7 + $0x4c0] sm:$0xff]
    %v3355 = vld [vmem:[%s7 + $0x4c8] sm:$0xff]
    %v3356 = vld [vmem:[%s7 + $0x4d0] sm:$0xff]
    %v3357 = vld [vmem:[%s7 + $0x4d8] sm:$0xff]
    %v3358 = vld [vmem:[%s7 + $0x4e0] sm:$0xff]
    %v3359 = vld [vmem:[%s7 + $0x4e8] sm:$0xff]
    %v3360 = vld [vmem:[%s7 + $0x4f0] sm:$0xff]
    %v3361 = vld [vmem:[%s7 + $0x4f8] sm:$0xff]
    %v3362 = vld [vmem:[%s7 + $0x500] sm:$0xff]
    %v3363 = vld [vmem:[%s7 + $0x508] sm:$0xff]
    %v3364 = vld [vmem:[%s7 + $0x510] sm:$0xff]
    %v3365 = vld [vmem:[%s7 + $0x518] sm:$0xff]
    %v3366 = vld [vmem:[%s7 + $0x520] sm:$0xff]
    %v3367 = vld [vmem:[%s7 + $0x528] sm:$0xff]
    %v3368 = vld [vmem:[%s7 + $0x530] sm:$0xff]
    %v3369 = vld [vmem:[%s7 + $0x538] sm:$0xff]
    %v3370 = vld [vmem:[%s7 + $0x540] sm:$0xff]
    %v3371 = vld [vmem:[%s7 + $0x548] sm:$0xff]
    %v3372 = vld [vmem:[%s7 + $0x550] sm:$0xff]
    %v3373 = vld [vmem:[%s7 + $0x558] sm:$0xff]
    %v3374 = vld [vmem:[%s7 + $0x560] sm:$0xff]
    %v3375 = vld [vmem:[%s7 + $0x568] sm:$0xff]
    %v3376 = vld [vmem:[%s7 + $0x570] sm:$0xff]
    %v3377 = vld [vmem:[%s7 + $0x578] sm:$0xff]
    %v3378 = vld [vmem:[%s7 + $0x580] sm:$0xff]
    %v3379 = vld [vmem:[%s7 + $0x588] sm:$0xff]
    %v3380 = vld [vmem:[%s7 + $0x590] sm:$0xff]
    %v3381 = vld [vmem:[%s7 + $0x598] sm:$0xff]
    %v3382 = vld [vmem:[%s7 + $0x5a0] sm:$0xff]
    %v3383 = vld [vmem:[%s7 + $0x5a8] sm:$0xff]
    %v3384 = vld [vmem:[%s7 + $0x5b0] sm:$0xff]
    %v3385 = vld [vmem:[%s7 + $0x5b8] sm:$0xff]
    %v3386 = vld [vmem:[%s7 + $0x5c0] sm:$0xff]
    %v3387 = vld [vmem:[%s7 + $0x5c8] sm:$0xff]
    %v3388 = vld [vmem:[%s7 + $0x5d0] sm:$0xff]
    %v3389 = vld [vmem:[%s7 + $0x5d8] sm:$0xff]
    %v3390 = vld [vmem:[%s7 + $0x5e0] sm:$0xff]
    %v3391 = vld [vmem:[%s7 + $0x5e8] sm:$0xff]
    %v3392 = vld [vmem:[%s7 + $0x5f0] sm:$0xff]
    %v3393 = vld [vmem:[%s7 + $0x5f8] sm:$0xff]
    %v3394 = vld [vmem:[%s7 + $0x600] sm:$0xff]
    %v3395 = vld [vmem:[%s7 + $0x608] sm:$0xff]
    %v3396 = vld [vmem:[%s7 + $0x610] sm:$0xff]
    %v3397 = vld [vmem:[%s7 + $0x618] sm:$0xff]
    %v3398 = vld [vmem:[%s7 + $0x620] sm:$0xff]
    %v3399 = vld [vmem:[%s7 + $0x628] sm:$0xff]
    %v3400 = vld [vmem:[%s7 + $0x630] sm:$0xff]
    %v3401 = vld [vmem:[%s7 + $0x638] sm:$0xff]
    %v3402 = vld [vmem:[%s7 + $0x640] sm:$0xff]
    %v3403 = vld [vmem:[%s7 + $0x648] sm:$0xff]
    %v3404 = vld [vmem:[%s7 + $0x650] sm:$0xff]
    %v3405 = vld [vmem:[%s7 + $0x658] sm:$0xff]
    %v3406 = vld [vmem:[%s7 + $0x660] sm:$0xff]
    %v3407 = vld [vmem:[%s7 + $0x668] sm:$0xff]
    %v3408 = vld [vmem:[%s7 + $0x670] sm:$0xff]
    %v3409 = vld [vmem:[%s7 + $0x678] sm:$0xff]
    %v3410 = vld [vmem:[%s7 + $0x680] sm:$0xff]
    %v3411 = vld [vmem:[%s7 + $0x688] sm:$0xff]
    %v3412 = vld [vmem:[%s7 + $0x690] sm:$0xff]
    %v3413 = vld [vmem:[%s7 + $0x698] sm:$0xff]
    %v3414 = vld [vmem:[%s7 + $0x6a0] sm:$0xff]
    %v3415 = vld [vmem:[%s7 + $0x6a8] sm:$0xff]
    %v3416 = vld [vmem:[%s7 + $0x6b0] sm:$0xff]
    %v3417 = vld [vmem:[%s7 + $0x6b8] sm:$0xff]
    %v3418 = vld [vmem:[%s7 + $0x6c0] sm:$0xff]
    %v3419 = vld [vmem:[%s7 + $0x6c8] sm:$0xff]
    %v3420 = vld [vmem:[%s7 + $0x6d0] sm:$0xff]
    %v3421 = vld [vmem:[%s7 + $0x6d8] sm:$0xff]
    %v3422 = vld [vmem:[%s7 + $0x6e0] sm:$0xff]
    %v3423 = vld [vmem:[%s7 + $0x6e8] sm:$0xff]
    %v3424 = vld [vmem:[%s7 + $0x6f0] sm:$0xff]
    %v3425 = vld [vmem:[%s7 + $0x6f8] sm:$0xff]
    %v3426 = vld [vmem:[%s7 + $0x700] sm:$0xff]
    %v3427 = vld [vmem:[%s7 + $0x708] sm:$0xff]
    %v3428 = vld [vmem:[%s7 + $0x710] sm:$0xff]
    %v3429 = vld [vmem:[%s7 + $0x718] sm:$0xff]
    %v3430 = vld [vmem:[%s7 + $0x720] sm:$0xff]
    %v3431 = vld [vmem:[%s7 + $0x728] sm:$0xff]
    %v3432 = vld [vmem:[%s7 + $0x730] sm:$0xff]
    %v3433 = vld [vmem:[%s7 + $0x738] sm:$0xff]
    %v3434 = vld [vmem:[%s7 + $0x740] sm:$0xff]
    %v3435 = vld [vmem:[%s7 + $0x748] sm:$0xff]
    %v3436 = vld [vmem:[%s7 + $0x750] sm:$0xff]
    %v3437 = vld [vmem:[%s7 + $0x758] sm:$0xff]
    %v3438 = vld [vmem:[%s7 + $0x760] sm:$0xff]
    %v3439 = vld [vmem:[%s7 + $0x768] sm:$0xff]
    %v3440 = vld [vmem:[%s7 + $0x770] sm:$0xff]
    %v3441 = vld [vmem:[%s7 + $0x778] sm:$0xff]
    %v3442 = vld [vmem:[%s7 + $0x780] sm:$0xff]
    %v3443 = vld [vmem:[%s7 + $0x788] sm:$0xff]
    %v3444 = vld [vmem:[%s7 + $0x790] sm:$0xff]
    %v3445 = vld [vmem:[%s7 + $0x798] sm:$0xff]
    %v3446 = vld [vmem:[%s7 + $0x7a0] sm:$0xff]
    %v3447 = vld [vmem:[%s7 + $0x7a8] sm:$0xff]
    %v3448 = vld [vmem:[%s7 + $0x7b0] sm:$0xff]
    %v3449 = vld [vmem:[%s7 + $0x7b8] sm:$0xff]
    %v3450 = vld [vmem:[%s7 + $0x7c0] sm:$0xff]
    %v3451 = vld [vmem:[%s7 + $0x7c8] sm:$0xff]
    %v3452 = vld [vmem:[%s7 + $0x7d0] sm:$0xff]
    %v3453 = vld [vmem:[%s7 + $0x7d8] sm:$0xff]
    %v3454 = vld [vmem:[%s7 + $0x7e0] sm:$0xff]
    %v3455 = vld [vmem:[%s7 + $0x7e8] sm:$0xff]
    %v3456 = vld [vmem:[%s7 + $0x7f0] sm:$0xff]
    %v3457 = vld [vmem:[%s7 + $0x7f8] sm:$0xff]
    %v3458 = vld [vmem:[%s8] sm:$0xf]
    %v3460 = vlaneseq
    %v3461 = vshrl.u32 %v3460, 7
    %v3462 = vsub.s32 0, %v3461
    %v3463 = vrot.slane %v3458, %v3462
    %v3464 = vlaneseq
    %v3465 = vshrl.u32 %v3464, 7
    %v3466 = vsub.s32 1, %v3465
    %v3467 = vrot.slane %v3458, %v3466
    %v3468 = vlaneseq
    %v3469 = vshrl.u32 %v3468, 7
    %v3470 = vsub.s32 2, %v3469
    %v3471 = vrot.slane %v3458, %v3470
    %v3472 = vlaneseq
    %v3473 = vshrl.u32 %v3472, 7
    %v3474 = vsub.s32 3, %v3473
    %v3475 = vrot.slane %v3458, %v3474
    %v3496 = vunpack.c.l.b16 %v3186
    %v3497 = vunpack.c.l.b16 %v3187
    %v3498 = vunpack.c.l.b16 %v3188
    %v3499 = vunpack.c.l.b16 %v3189
    %v3500 = vunpack.c.l.b16 %v3190
    %v3501 = vunpack.c.l.b16 %v3191
    %v3502 = vunpack.c.l.b16 %v3192
    %v3503 = vunpack.c.l.b16 %v3193
    %v3504 = vunpack.c.l.b16 %v3194
    %v3505 = vunpack.c.l.b16 %v3195
    %v3506 = vunpack.c.l.b16 %v3196
    %v3507 = vunpack.c.l.b16 %v3197
    %v3508 = vunpack.c.l.b16 %v3198
    %v3509 = vunpack.c.l.b16 %v3199
    %v3510 = vunpack.c.l.b16 %v3200
    %v3511 = vunpack.c.l.b16 %v3201
    %vm3512 = vcmask 1041409
    %v3513 = vsel %vm3512, %v3504, %v3496
    %v3514 = vsel %vm3512, %v3505, %v3497
    %v3515 = vsel %vm3512, %v3506, %v3498
    %v3516 = vsel %vm3512, %v3507, %v3499
    %v3517 = vsel %vm3512, %v3508, %v3500
    %v3518 = vsel %vm3512, %v3509, %v3501
    %v3519 = vsel %vm3512, %v3510, %v3502
    %v3520 = vsel %vm3512, %v3511, %v3503
    %v3521 = vpack.c.b16 %v3513, %v3513
    %v3522 = vpack.c.b16 %v3514, %v3514
    %v3523 = vpack.c.b16 %v3515, %v3515
    %v3524 = vpack.c.b16 %v3516, %v3516
    %v3525 = vpack.c.b16 %v3517, %v3517
    %v3526 = vpack.c.b16 %v3518, %v3518
    %v3527 = vpack.c.b16 %v3519, %v3519
    %v3528 = vpack.c.b16 %v3520, %v3520
    %v3793 = vunpack.c.l.b16 %v3202
    %v3794 = vunpack.c.h.b16 %v3202
    %v3795 = vunpack.c.l.b16 %v3203
    %v3796 = vunpack.c.h.b16 %v3203
    %v3797 = vunpack.c.l.b16 %v3204
    %v3798 = vunpack.c.h.b16 %v3204
    %v3799 = vunpack.c.l.b16 %v3205
    %v3800 = vunpack.c.h.b16 %v3205
    %v3801 = vunpack.c.l.b16 %v3206
    %v3802 = vunpack.c.h.b16 %v3206
    %v3803 = vunpack.c.l.b16 %v3207
    %v3804 = vunpack.c.h.b16 %v3207
    %v3805 = vunpack.c.l.b16 %v3208
    %v3806 = vunpack.c.h.b16 %v3208
    %v3807 = vunpack.c.l.b16 %v3209
    %v3808 = vunpack.c.h.b16 %v3209
    %v3809 = vunpack.c.l.b16 %v3210
    %v3810 = vunpack.c.h.b16 %v3210
    %v3811 = vunpack.c.l.b16 %v3211
    %v3812 = vunpack.c.h.b16 %v3211
    %v3813 = vunpack.c.l.b16 %v3212
    %v3814 = vunpack.c.h.b16 %v3212
    %v3815 = vunpack.c.l.b16 %v3213
    %v3816 = vunpack.c.h.b16 %v3213
    %v3817 = vunpack.c.l.b16 %v3214
    %v3818 = vunpack.c.h.b16 %v3214
    %v3819 = vunpack.c.l.b16 %v3215
    %v3820 = vunpack.c.h.b16 %v3215
    %v3821 = vunpack.c.l.b16 %v3216
    %v3822 = vunpack.c.h.b16 %v3216
    %v3823 = vunpack.c.l.b16 %v3217
    %v3824 = vunpack.c.h.b16 %v3217
    %v3825 = vunpack.c.l.b16 %v3218
    %v3826 = vunpack.c.h.b16 %v3218
    %v3827 = vunpack.c.l.b16 %v3219
    %v3828 = vunpack.c.h.b16 %v3219
    %v3829 = vunpack.c.l.b16 %v3220
    %v3830 = vunpack.c.h.b16 %v3220
    %v3831 = vunpack.c.l.b16 %v3221
    %v3832 = vunpack.c.h.b16 %v3221
    %v3833 = vunpack.c.l.b16 %v3222
    %v3834 = vunpack.c.h.b16 %v3222
    %v3835 = vunpack.c.l.b16 %v3223
    %v3836 = vunpack.c.h.b16 %v3223
    %v3837 = vunpack.c.l.b16 %v3224
    %v3838 = vunpack.c.h.b16 %v3224
    %v3839 = vunpack.c.l.b16 %v3225
    %v3840 = vunpack.c.h.b16 %v3225
    %v3841 = vunpack.c.l.b16 %v3226
    %v3842 = vunpack.c.h.b16 %v3226
    %v3843 = vunpack.c.l.b16 %v3227
    %v3844 = vunpack.c.h.b16 %v3227
    %v3845 = vunpack.c.l.b16 %v3228
    %v3846 = vunpack.c.h.b16 %v3228
    %v3847 = vunpack.c.l.b16 %v3229
    %v3848 = vunpack.c.h.b16 %v3229
    %v3849 = vunpack.c.l.b16 %v3230
    %v3850 = vunpack.c.h.b16 %v3230
    %v3851 = vunpack.c.l.b16 %v3231
    %v3852 = vunpack.c.h.b16 %v3231
    %v3853 = vunpack.c.l.b16 %v3232
    %v3854 = vunpack.c.h.b16 %v3232
    %v3855 = vunpack.c.l.b16 %v3233
    %v3856 = vunpack.c.h.b16 %v3233
    %v3857 = vunpack.c.l.b16 %v3234
    %v3858 = vunpack.c.h.b16 %v3234
    %v3859 = vunpack.c.l.b16 %v3235
    %v3860 = vunpack.c.h.b16 %v3235
    %v3861 = vunpack.c.l.b16 %v3236
    %v3862 = vunpack.c.h.b16 %v3236
    %v3863 = vunpack.c.l.b16 %v3237
    %v3864 = vunpack.c.h.b16 %v3237
    %v3865 = vunpack.c.l.b16 %v3238
    %v3866 = vunpack.c.h.b16 %v3238
    %v3867 = vunpack.c.l.b16 %v3239
    %v3868 = vunpack.c.h.b16 %v3239
    %v3869 = vunpack.c.l.b16 %v3240
    %v3870 = vunpack.c.h.b16 %v3240
    %v3871 = vunpack.c.l.b16 %v3241
    %v3872 = vunpack.c.h.b16 %v3241
    %v3873 = vunpack.c.l.b16 %v3242
    %v3874 = vunpack.c.h.b16 %v3242
    %v3875 = vunpack.c.l.b16 %v3243
    %v3876 = vunpack.c.h.b16 %v3243
    %v3877 = vunpack.c.l.b16 %v3244
    %v3878 = vunpack.c.h.b16 %v3244
    %v3879 = vunpack.c.l.b16 %v3245
    %v3880 = vunpack.c.h.b16 %v3245
    %v3881 = vunpack.c.l.b16 %v3246
    %v3882 = vunpack.c.h.b16 %v3246
    %v3883 = vunpack.c.l.b16 %v3247
    %v3884 = vunpack.c.h.b16 %v3247
    %v3885 = vunpack.c.l.b16 %v3248
    %v3886 = vunpack.c.h.b16 %v3248
    %v3887 = vunpack.c.l.b16 %v3249
    %v3888 = vunpack.c.h.b16 %v3249
    %v3889 = vunpack.c.l.b16 %v3250
    %v3890 = vunpack.c.h.b16 %v3250
    %v3891 = vunpack.c.l.b16 %v3251
    %v3892 = vunpack.c.h.b16 %v3251
    %v3893 = vunpack.c.l.b16 %v3252
    %v3894 = vunpack.c.h.b16 %v3252
    %v3895 = vunpack.c.l.b16 %v3253
    %v3896 = vunpack.c.h.b16 %v3253
    %v3897 = vunpack.c.l.b16 %v3254
    %v3898 = vunpack.c.h.b16 %v3254
    %v3899 = vunpack.c.l.b16 %v3255
    %v3900 = vunpack.c.h.b16 %v3255
    %v3901 = vunpack.c.l.b16 %v3256
    %v3902 = vunpack.c.h.b16 %v3256
    %v3903 = vunpack.c.l.b16 %v3257
    %v3904 = vunpack.c.h.b16 %v3257
    %v3905 = vunpack.c.l.b16 %v3258
    %v3906 = vunpack.c.h.b16 %v3258
    %v3907 = vunpack.c.l.b16 %v3259
    %v3908 = vunpack.c.h.b16 %v3259
    %v3909 = vunpack.c.l.b16 %v3260
    %v3910 = vunpack.c.h.b16 %v3260
    %v3911 = vunpack.c.l.b16 %v3261
    %v3912 = vunpack.c.h.b16 %v3261
    %v3913 = vunpack.c.l.b16 %v3262
    %v3914 = vunpack.c.h.b16 %v3262
    %v3915 = vunpack.c.l.b16 %v3263
    %v3916 = vunpack.c.h.b16 %v3263
    %v3917 = vunpack.c.l.b16 %v3264
    %v3918 = vunpack.c.h.b16 %v3264
    %v3919 = vunpack.c.l.b16 %v3265
    %v3920 = vunpack.c.h.b16 %v3265
    %v3921 = vunpack.c.l.b16 %v3266
    %v3922 = vunpack.c.h.b16 %v3266
    %v3923 = vunpack.c.l.b16 %v3267
    %v3924 = vunpack.c.h.b16 %v3267
    %v3925 = vunpack.c.l.b16 %v3268
    %v3926 = vunpack.c.h.b16 %v3268
    %v3927 = vunpack.c.l.b16 %v3269
    %v3928 = vunpack.c.h.b16 %v3269
    %v3929 = vunpack.c.l.b16 %v3270
    %v3930 = vunpack.c.h.b16 %v3270
    %v3931 = vunpack.c.l.b16 %v3271
    %v3932 = vunpack.c.h.b16 %v3271
    %v3933 = vunpack.c.l.b16 %v3272
    %v3934 = vunpack.c.h.b16 %v3272
    %v3935 = vunpack.c.l.b16 %v3273
    %v3936 = vunpack.c.h.b16 %v3273
    %v3937 = vunpack.c.l.b16 %v3274
    %v3938 = vunpack.c.h.b16 %v3274
    %v3939 = vunpack.c.l.b16 %v3275
    %v3940 = vunpack.c.h.b16 %v3275
    %v3941 = vunpack.c.l.b16 %v3276
    %v3942 = vunpack.c.h.b16 %v3276
    %v3943 = vunpack.c.l.b16 %v3277
    %v3944 = vunpack.c.h.b16 %v3277
    %v3945 = vunpack.c.l.b16 %v3278
    %v3946 = vunpack.c.h.b16 %v3278
    %v3947 = vunpack.c.l.b16 %v3279
    %v3948 = vunpack.c.h.b16 %v3279
    %v3949 = vunpack.c.l.b16 %v3280
    %v3950 = vunpack.c.h.b16 %v3280
    %v3951 = vunpack.c.l.b16 %v3281
    %v3952 = vunpack.c.h.b16 %v3281
    %v3953 = vunpack.c.l.b16 %v3282
    %v3954 = vunpack.c.h.b16 %v3282
    %v3955 = vunpack.c.l.b16 %v3283
    %v3956 = vunpack.c.h.b16 %v3283
    %v3957 = vunpack.c.l.b16 %v3284
    %v3958 = vunpack.c.h.b16 %v3284
    %v3959 = vunpack.c.l.b16 %v3285
    %v3960 = vunpack.c.h.b16 %v3285
    %v3961 = vunpack.c.l.b16 %v3286
    %v3962 = vunpack.c.h.b16 %v3286
    %v3963 = vunpack.c.l.b16 %v3287
    %v3964 = vunpack.c.h.b16 %v3287
    %v3965 = vunpack.c.l.b16 %v3288
    %v3966 = vunpack.c.h.b16 %v3288
    %v3967 = vunpack.c.l.b16 %v3289
    %v3968 = vunpack.c.h.b16 %v3289
    %v3969 = vunpack.c.l.b16 %v3290
    %v3970 = vunpack.c.h.b16 %v3290
    %v3971 = vunpack.c.l.b16 %v3291
    %v3972 = vunpack.c.h.b16 %v3291
    %v3973 = vunpack.c.l.b16 %v3292
    %v3974 = vunpack.c.h.b16 %v3292
    %v3975 = vunpack.c.l.b16 %v3293
    %v3976 = vunpack.c.h.b16 %v3293
    %v3977 = vunpack.c.l.b16 %v3294
    %v3978 = vunpack.c.h.b16 %v3294
    %v3979 = vunpack.c.l.b16 %v3295
    %v3980 = vunpack.c.h.b16 %v3295
    %v3981 = vunpack.c.l.b16 %v3296
    %v3982 = vunpack.c.h.b16 %v3296
    %v3983 = vunpack.c.l.b16 %v3297
    %v3984 = vunpack.c.h.b16 %v3297
    %v3985 = vunpack.c.l.b16 %v3298
    %v3986 = vunpack.c.h.b16 %v3298
    %v3987 = vunpack.c.l.b16 %v3299
    %v3988 = vunpack.c.h.b16 %v3299
    %v3989 = vunpack.c.l.b16 %v3300
    %v3990 = vunpack.c.h.b16 %v3300
    %v3991 = vunpack.c.l.b16 %v3301
    %v3992 = vunpack.c.h.b16 %v3301
    %v3993 = vunpack.c.l.b16 %v3302
    %v3994 = vunpack.c.h.b16 %v3302
    %v3995 = vunpack.c.l.b16 %v3303
    %v3996 = vunpack.c.h.b16 %v3303
    %v3997 = vunpack.c.l.b16 %v3304
    %v3998 = vunpack.c.h.b16 %v3304
    %v3999 = vunpack.c.l.b16 %v3305
    %v4000 = vunpack.c.h.b16 %v3305
    %v4001 = vunpack.c.l.b16 %v3306
    %v4002 = vunpack.c.h.b16 %v3306
    %v4003 = vunpack.c.l.b16 %v3307
    %v4004 = vunpack.c.h.b16 %v3307
    %v4005 = vunpack.c.l.b16 %v3308
    %v4006 = vunpack.c.h.b16 %v3308
    %v4007 = vunpack.c.l.b16 %v3309
    %v4008 = vunpack.c.h.b16 %v3309
    %v4009 = vunpack.c.l.b16 %v3310
    %v4010 = vunpack.c.h.b16 %v3310
    %v4011 = vunpack.c.l.b16 %v3311
    %v4012 = vunpack.c.h.b16 %v3311
    %v4013 = vunpack.c.l.b16 %v3312
    %v4014 = vunpack.c.h.b16 %v3312
    %v4015 = vunpack.c.l.b16 %v3313
    %v4016 = vunpack.c.h.b16 %v3313
    %v4017 = vunpack.c.l.b16 %v3314
    %v4018 = vunpack.c.h.b16 %v3314
    %v4019 = vunpack.c.l.b16 %v3315
    %v4020 = vunpack.c.h.b16 %v3315
    %v4021 = vunpack.c.l.b16 %v3316
    %v4022 = vunpack.c.h.b16 %v3316
    %v4023 = vunpack.c.l.b16 %v3317
    %v4024 = vunpack.c.h.b16 %v3317
    %v4025 = vunpack.c.l.b16 %v3318
    %v4026 = vunpack.c.h.b16 %v3318
    %v4027 = vunpack.c.l.b16 %v3319
    %v4028 = vunpack.c.h.b16 %v3319
    %v4029 = vunpack.c.l.b16 %v3320
    %v4030 = vunpack.c.h.b16 %v3320
    %v4031 = vunpack.c.l.b16 %v3321
    %v4032 = vunpack.c.h.b16 %v3321
    %v4033 = vunpack.c.l.b16 %v3322
    %v4034 = vunpack.c.h.b16 %v3322
    %v4035 = vunpack.c.l.b16 %v3323
    %v4036 = vunpack.c.h.b16 %v3323
    %v4037 = vunpack.c.l.b16 %v3324
    %v4038 = vunpack.c.h.b16 %v3324
    %v4039 = vunpack.c.l.b16 %v3325
    %v4040 = vunpack.c.h.b16 %v3325
    %v4041 = vunpack.c.l.b16 %v3326
    %v4042 = vunpack.c.h.b16 %v3326
    %v4043 = vunpack.c.l.b16 %v3327
    %v4044 = vunpack.c.h.b16 %v3327
    %v4045 = vunpack.c.l.b16 %v3328
    %v4046 = vunpack.c.h.b16 %v3328
    %v4047 = vunpack.c.l.b16 %v3329
    %v4048 = vunpack.c.h.b16 %v3329
    %v4049 = vunpack.c.l.b16 %v3330
    %v4050 = vunpack.c.h.b16 %v3330
    %v4051 = vunpack.c.l.b16 %v3331
    %v4052 = vunpack.c.h.b16 %v3331
    %v4053 = vunpack.c.l.b16 %v3332
    %v4054 = vunpack.c.h.b16 %v3332
    %v4055 = vunpack.c.l.b16 %v3333
    %v4056 = vunpack.c.h.b16 %v3333
    %v4057 = vunpack.c.l.b16 %v3334
    %v4058 = vunpack.c.h.b16 %v3334
    %v4059 = vunpack.c.l.b16 %v3335
    %v4060 = vunpack.c.h.b16 %v3335
    %v4061 = vunpack.c.l.b16 %v3336
    %v4062 = vunpack.c.h.b16 %v3336
    %v4063 = vunpack.c.l.b16 %v3337
    %v4064 = vunpack.c.h.b16 %v3337
    %v4065 = vunpack.c.l.b16 %v3338
    %v4066 = vunpack.c.h.b16 %v3338
    %v4067 = vunpack.c.l.b16 %v3339
    %v4068 = vunpack.c.h.b16 %v3339
    %v4069 = vunpack.c.l.b16 %v3340
    %v4070 = vunpack.c.h.b16 %v3340
    %v4071 = vunpack.c.l.b16 %v3341
    %v4072 = vunpack.c.h.b16 %v3341
    %v4073 = vunpack.c.l.b16 %v3342
    %v4074 = vunpack.c.h.b16 %v3342
    %v4075 = vunpack.c.l.b16 %v3343
    %v4076 = vunpack.c.h.b16 %v3343
    %v4077 = vunpack.c.l.b16 %v3344
    %v4078 = vunpack.c.h.b16 %v3344
    %v4079 = vunpack.c.l.b16 %v3345
    %v4080 = vunpack.c.h.b16 %v3345
    %v4081 = vunpack.c.l.b16 %v3346
    %v4082 = vunpack.c.h.b16 %v3346
    %v4083 = vunpack.c.l.b16 %v3347
    %v4084 = vunpack.c.h.b16 %v3347
    %v4085 = vunpack.c.l.b16 %v3348
    %v4086 = vunpack.c.h.b16 %v3348
    %v4087 = vunpack.c.l.b16 %v3349
    %v4088 = vunpack.c.h.b16 %v3349
    %v4089 = vunpack.c.l.b16 %v3350
    %v4090 = vunpack.c.h.b16 %v3350
    %v4091 = vunpack.c.l.b16 %v3351
    %v4092 = vunpack.c.h.b16 %v3351
    %v4093 = vunpack.c.l.b16 %v3352
    %v4094 = vunpack.c.h.b16 %v3352
    %v4095 = vunpack.c.l.b16 %v3353
    %v4096 = vunpack.c.h.b16 %v3353
    %v4097 = vunpack.c.l.b16 %v3354
    %v4098 = vunpack.c.h.b16 %v3354
    %v4099 = vunpack.c.l.b16 %v3355
    %v4100 = vunpack.c.h.b16 %v3355
    %v4101 = vunpack.c.l.b16 %v3356
    %v4102 = vunpack.c.h.b16 %v3356
    %v4103 = vunpack.c.l.b16 %v3357
    %v4104 = vunpack.c.h.b16 %v3357
    %v4105 = vunpack.c.l.b16 %v3358
    %v4106 = vunpack.c.h.b16 %v3358
    %v4107 = vunpack.c.l.b16 %v3359
    %v4108 = vunpack.c.h.b16 %v3359
    %v4109 = vunpack.c.l.b16 %v3360
    %v4110 = vunpack.c.h.b16 %v3360
    %v4111 = vunpack.c.l.b16 %v3361
    %v4112 = vunpack.c.h.b16 %v3361
    %v4113 = vunpack.c.l.b16 %v3362
    %v4114 = vunpack.c.h.b16 %v3362
    %v4115 = vunpack.c.l.b16 %v3363
    %v4116 = vunpack.c.h.b16 %v3363
    %v4117 = vunpack.c.l.b16 %v3364
    %v4118 = vunpack.c.h.b16 %v3364
    %v4119 = vunpack.c.l.b16 %v3365
    %v4120 = vunpack.c.h.b16 %v3365
    %v4121 = vunpack.c.l.b16 %v3366
    %v4122 = vunpack.c.h.b16 %v3366
    %v4123 = vunpack.c.l.b16 %v3367
    %v4124 = vunpack.c.h.b16 %v3367
    %v4125 = vunpack.c.l.b16 %v3368
    %v4126 = vunpack.c.h.b16 %v3368
    %v4127 = vunpack.c.l.b16 %v3369
    %v4128 = vunpack.c.h.b16 %v3369
    %v4129 = vunpack.c.l.b16 %v3370
    %v4130 = vunpack.c.h.b16 %v3370
    %v4131 = vunpack.c.l.b16 %v3371
    %v4132 = vunpack.c.h.b16 %v3371
    %v4133 = vunpack.c.l.b16 %v3372
    %v4134 = vunpack.c.h.b16 %v3372
    %v4135 = vunpack.c.l.b16 %v3373
    %v4136 = vunpack.c.h.b16 %v3373
    %v4137 = vunpack.c.l.b16 %v3374
    %v4138 = vunpack.c.h.b16 %v3374
    %v4139 = vunpack.c.l.b16 %v3375
    %v4140 = vunpack.c.h.b16 %v3375
    %v4141 = vunpack.c.l.b16 %v3376
    %v4142 = vunpack.c.h.b16 %v3376
    %v4143 = vunpack.c.l.b16 %v3377
    %v4144 = vunpack.c.h.b16 %v3377
    %v4145 = vunpack.c.l.b16 %v3378
    %v4146 = vunpack.c.h.b16 %v3378
    %v4147 = vunpack.c.l.b16 %v3379
    %v4148 = vunpack.c.h.b16 %v3379
    %v4149 = vunpack.c.l.b16 %v3380
    %v4150 = vunpack.c.h.b16 %v3380
    %v4151 = vunpack.c.l.b16 %v3381
    %v4152 = vunpack.c.h.b16 %v3381
    %v4153 = vunpack.c.l.b16 %v3382
    %v4154 = vunpack.c.h.b16 %v3382
    %v4155 = vunpack.c.l.b16 %v3383
    %v4156 = vunpack.c.h.b16 %v3383
    %v4157 = vunpack.c.l.b16 %v3384
    %v4158 = vunpack.c.h.b16 %v3384
    %v4159 = vunpack.c.l.b16 %v3385
    %v4160 = vunpack.c.h.b16 %v3385
    %v4161 = vunpack.c.l.b16 %v3386
    %v4162 = vunpack.c.h.b16 %v3386
    %v4163 = vunpack.c.l.b16 %v3387
    %v4164 = vunpack.c.h.b16 %v3387
    %v4165 = vunpack.c.l.b16 %v3388
    %v4166 = vunpack.c.h.b16 %v3388
    %v4167 = vunpack.c.l.b16 %v3389
    %v4168 = vunpack.c.h.b16 %v3389
    %v4169 = vunpack.c.l.b16 %v3390
    %v4170 = vunpack.c.h.b16 %v3390
    %v4171 = vunpack.c.l.b16 %v3391
    %v4172 = vunpack.c.h.b16 %v3391
    %v4173 = vunpack.c.l.b16 %v3392
    %v4174 = vunpack.c.h.b16 %v3392
    %v4175 = vunpack.c.l.b16 %v3393
    %v4176 = vunpack.c.h.b16 %v3393
    %v4177 = vunpack.c.l.b16 %v3394
    %v4178 = vunpack.c.h.b16 %v3394
    %v4179 = vunpack.c.l.b16 %v3395
    %v4180 = vunpack.c.h.b16 %v3395
    %v4181 = vunpack.c.l.b16 %v3396
    %v4182 = vunpack.c.h.b16 %v3396
    %v4183 = vunpack.c.l.b16 %v3397
    %v4184 = vunpack.c.h.b16 %v3397
    %v4185 = vunpack.c.l.b16 %v3398
    %v4186 = vunpack.c.h.b16 %v3398
    %v4187 = vunpack.c.l.b16 %v3399
    %v4188 = vunpack.c.h.b16 %v3399
    %v4189 = vunpack.c.l.b16 %v3400
    %v4190 = vunpack.c.h.b16 %v3400
    %v4191 = vunpack.c.l.b16 %v3401
    %v4192 = vunpack.c.h.b16 %v3401
    %v4193 = vunpack.c.l.b16 %v3402
    %v4194 = vunpack.c.h.b16 %v3402
    %v4195 = vunpack.c.l.b16 %v3403
    %v4196 = vunpack.c.h.b16 %v3403
    %v4197 = vunpack.c.l.b16 %v3404
    %v4198 = vunpack.c.h.b16 %v3404
    %v4199 = vunpack.c.l.b16 %v3405
    %v4200 = vunpack.c.h.b16 %v3405
    %v4201 = vunpack.c.l.b16 %v3406
    %v4202 = vunpack.c.h.b16 %v3406
    %v4203 = vunpack.c.l.b16 %v3407
    %v4204 = vunpack.c.h.b16 %v3407
    %v4205 = vunpack.c.l.b16 %v3408
    %v4206 = vunpack.c.h.b16 %v3408
    %v4207 = vunpack.c.l.b16 %v3409
    %v4208 = vunpack.c.h.b16 %v3409
    %v4209 = vunpack.c.l.b16 %v3410
    %v4210 = vunpack.c.h.b16 %v3410
    %v4211 = vunpack.c.l.b16 %v3411
    %v4212 = vunpack.c.h.b16 %v3411
    %v4213 = vunpack.c.l.b16 %v3412
    %v4214 = vunpack.c.h.b16 %v3412
    %v4215 = vunpack.c.l.b16 %v3413
    %v4216 = vunpack.c.h.b16 %v3413
    %v4217 = vunpack.c.l.b16 %v3414
    %v4218 = vunpack.c.h.b16 %v3414
    %v4219 = vunpack.c.l.b16 %v3415
    %v4220 = vunpack.c.h.b16 %v3415
    %v4221 = vunpack.c.l.b16 %v3416
    %v4222 = vunpack.c.h.b16 %v3416
    %v4223 = vunpack.c.l.b16 %v3417
    %v4224 = vunpack.c.h.b16 %v3417
    %v4225 = vunpack.c.l.b16 %v3418
    %v4226 = vunpack.c.h.b16 %v3418
    %v4227 = vunpack.c.l.b16 %v3419
    %v4228 = vunpack.c.h.b16 %v3419
    %v4229 = vunpack.c.l.b16 %v3420
    %v4230 = vunpack.c.h.b16 %v3420
    %v4231 = vunpack.c.l.b16 %v3421
    %v4232 = vunpack.c.h.b16 %v3421
    %v4233 = vunpack.c.l.b16 %v3422
    %v4234 = vunpack.c.h.b16 %v3422
    %v4235 = vunpack.c.l.b16 %v3423
    %v4236 = vunpack.c.h.b16 %v3423
    %v4237 = vunpack.c.l.b16 %v3424
    %v4238 = vunpack.c.h.b16 %v3424
    %v4239 = vunpack.c.l.b16 %v3425
    %v4240 = vunpack.c.h.b16 %v3425
    %v4241 = vunpack.c.l.b16 %v3426
    %v4242 = vunpack.c.h.b16 %v3426
    %v4243 = vunpack.c.l.b16 %v3427
    %v4244 = vunpack.c.h.b16 %v3427
    %v4245 = vunpack.c.l.b16 %v3428
    %v4246 = vunpack.c.h.b16 %v3428
    %v4247 = vunpack.c.l.b16 %v3429
    %v4248 = vunpack.c.h.b16 %v3429
    %v4249 = vunpack.c.l.b16 %v3430
    %v4250 = vunpack.c.h.b16 %v3430
    %v4251 = vunpack.c.l.b16 %v3431
    %v4252 = vunpack.c.h.b16 %v3431
    %v4253 = vunpack.c.l.b16 %v3432
    %v4254 = vunpack.c.h.b16 %v3432
    %v4255 = vunpack.c.l.b16 %v3433
    %v4256 = vunpack.c.h.b16 %v3433
    %v4257 = vunpack.c.l.b16 %v3434
    %v4258 = vunpack.c.h.b16 %v3434
    %v4259 = vunpack.c.l.b16 %v3435
    %v4260 = vunpack.c.h.b16 %v3435
    %v4261 = vunpack.c.l.b16 %v3436
    %v4262 = vunpack.c.h.b16 %v3436
    %v4263 = vunpack.c.l.b16 %v3437
    %v4264 = vunpack.c.h.b16 %v3437
    %v4265 = vunpack.c.l.b16 %v3438
    %v4266 = vunpack.c.h.b16 %v3438
    %v4267 = vunpack.c.l.b16 %v3439
    %v4268 = vunpack.c.h.b16 %v3439
    %v4269 = vunpack.c.l.b16 %v3440
    %v4270 = vunpack.c.h.b16 %v3440
    %v4271 = vunpack.c.l.b16 %v3441
    %v4272 = vunpack.c.h.b16 %v3441
    %v4273 = vunpack.c.l.b16 %v3442
    %v4274 = vunpack.c.h.b16 %v3442
    %v4275 = vunpack.c.l.b16 %v3443
    %v4276 = vunpack.c.h.b16 %v3443
    %v4277 = vunpack.c.l.b16 %v3444
    %v4278 = vunpack.c.h.b16 %v3444
    %v4279 = vunpack.c.l.b16 %v3445
    %v4280 = vunpack.c.h.b16 %v3445
    %v4281 = vunpack.c.l.b16 %v3446
    %v4282 = vunpack.c.h.b16 %v3446
    %v4283 = vunpack.c.l.b16 %v3447
    %v4284 = vunpack.c.h.b16 %v3447
    %v4285 = vunpack.c.l.b16 %v3448
    %v4286 = vunpack.c.h.b16 %v3448
    %v4287 = vunpack.c.l.b16 %v3449
    %v4288 = vunpack.c.h.b16 %v3449
    %v4289 = vunpack.c.l.b16 %v3450
    %v4290 = vunpack.c.h.b16 %v3450
    %v4291 = vunpack.c.l.b16 %v3451
    %v4292 = vunpack.c.h.b16 %v3451
    %v4293 = vunpack.c.l.b16 %v3452
    %v4294 = vunpack.c.h.b16 %v3452
    %v4295 = vunpack.c.l.b16 %v3453
    %v4296 = vunpack.c.h.b16 %v3453
    %v4297 = vunpack.c.l.b16 %v3454
    %v4298 = vunpack.c.h.b16 %v3454
    %v4299 = vunpack.c.l.b16 %v3455
    %v4300 = vunpack.c.h.b16 %v3455
    %v4301 = vunpack.c.l.b16 %v3456
    %v4302 = vunpack.c.h.b16 %v3456
    %v4303 = vunpack.c.l.b16 %v3457
    %v4304 = vunpack.c.h.b16 %v3457
    %v4305 = vpack.c.b16 %v3797, %v3793
    %v4306 = vpack.c.b16 %v3798, %v3794
    %v4307 = vpack.c.b16 %v3799, %v3795
    %v4308 = vpack.c.b16 %v3800, %v3796
    %v4309 = vpack.c.b16 %v3805, %v3801
    %v4310 = vpack.c.b16 %v3806, %v3802
    %v4311 = vpack.c.b16 %v3807, %v3803
    %v4312 = vpack.c.b16 %v3808, %v3804
    %v4313 = vpack.c.b16 %v3813, %v3809
    %v4314 = vpack.c.b16 %v3814, %v3810
    %v4315 = vpack.c.b16 %v3815, %v3811
    %v4316 = vpack.c.b16 %v3816, %v3812
    %v4317 = vpack.c.b16 %v3821, %v3817
    %v4318 = vpack.c.b16 %v3822, %v3818
    %v4319 = vpack.c.b16 %v3823, %v3819
    %v4320 = vpack.c.b16 %v3824, %v3820
    %v4321 = vpack.c.b16 %v3829, %v3825
    %v4322 = vpack.c.b16 %v3830, %v3826
    %v4323 = vpack.c.b16 %v3831, %v3827
    %v4324 = vpack.c.b16 %v3832, %v3828
    %v4325 = vpack.c.b16 %v3837, %v3833
    %v4326 = vpack.c.b16 %v3838, %v3834
    %v4327 = vpack.c.b16 %v3839, %v3835
    %v4328 = vpack.c.b16 %v3840, %v3836
    %v4329 = vpack.c.b16 %v3845, %v3841
    %v4330 = vpack.c.b16 %v3846, %v3842
    %v4331 = vpack.c.b16 %v3847, %v3843
    %v4332 = vpack.c.b16 %v3848, %v3844
    %v4333 = vpack.c.b16 %v3853, %v3849
    %v4334 = vpack.c.b16 %v3854, %v3850
    %v4335 = vpack.c.b16 %v3855, %v3851
    %v4336 = vpack.c.b16 %v3856, %v3852
    %v4337 = vpack.c.b16 %v3861, %v3857
    %v4338 = vpack.c.b16 %v3862, %v3858
    %v4339 = vpack.c.b16 %v3863, %v3859
    %v4340 = vpack.c.b16 %v3864, %v3860
    %v4341 = vpack.c.b16 %v3869, %v3865
    %v4342 = vpack.c.b16 %v3870, %v3866
    %v4343 = vpack.c.b16 %v3871, %v3867
    %v4344 = vpack.c.b16 %v3872, %v3868
    %v4345 = vpack.c.b16 %v3877, %v3873
    %v4346 = vpack.c.b16 %v3878, %v3874
    %v4347 = vpack.c.b16 %v3879, %v3875
    %v4348 = vpack.c.b16 %v3880, %v3876
    %v4349 = vpack.c.b16 %v3885, %v3881
    %v4350 = vpack.c.b16 %v3886, %v3882
    %v4351 = vpack.c.b16 %v3887, %v3883
    %v4352 = vpack.c.b16 %v3888, %v3884
    %v4353 = vpack.c.b16 %v3893, %v3889
    %v4354 = vpack.c.b16 %v3894, %v3890
    %v4355 = vpack.c.b16 %v3895, %v3891
    %v4356 = vpack.c.b16 %v3896, %v3892
    %v4357 = vpack.c.b16 %v3901, %v3897
    %v4358 = vpack.c.b16 %v3902, %v3898
    %v4359 = vpack.c.b16 %v3903, %v3899
    %v4360 = vpack.c.b16 %v3904, %v3900
    %v4361 = vpack.c.b16 %v3909, %v3905
    %v4362 = vpack.c.b16 %v3910, %v3906
    %v4363 = vpack.c.b16 %v3911, %v3907
    %v4364 = vpack.c.b16 %v3912, %v3908
    %v4365 = vpack.c.b16 %v3917, %v3913
    %v4366 = vpack.c.b16 %v3918, %v3914
    %v4367 = vpack.c.b16 %v3919, %v3915
    %v4368 = vpack.c.b16 %v3920, %v3916
    %v4369 = vpack.c.b16 %v3925, %v3921
    %v4370 = vpack.c.b16 %v3926, %v3922
    %v4371 = vpack.c.b16 %v3927, %v3923
    %v4372 = vpack.c.b16 %v3928, %v3924
    %v4373 = vpack.c.b16 %v3933, %v3929
    %v4374 = vpack.c.b16 %v3934, %v3930
    %v4375 = vpack.c.b16 %v3935, %v3931
    %v4376 = vpack.c.b16 %v3936, %v3932
    %v4377 = vpack.c.b16 %v3941, %v3937
    %v4378 = vpack.c.b16 %v3942, %v3938
    %v4379 = vpack.c.b16 %v3943, %v3939
    %v4380 = vpack.c.b16 %v3944, %v3940
    %v4381 = vpack.c.b16 %v3949, %v3945
    %v4382 = vpack.c.b16 %v3950, %v3946
    %v4383 = vpack.c.b16 %v3951, %v3947
    %v4384 = vpack.c.b16 %v3952, %v3948
    %v4385 = vpack.c.b16 %v3957, %v3953
    %v4386 = vpack.c.b16 %v3958, %v3954
    %v4387 = vpack.c.b16 %v3959, %v3955
    %v4388 = vpack.c.b16 %v3960, %v3956
    %v4389 = vpack.c.b16 %v3965, %v3961
    %v4390 = vpack.c.b16 %v3966, %v3962
    %v4391 = vpack.c.b16 %v3967, %v3963
    %v4392 = vpack.c.b16 %v3968, %v3964
    %v4393 = vpack.c.b16 %v3973, %v3969
    %v4394 = vpack.c.b16 %v3974, %v3970
    %v4395 = vpack.c.b16 %v3975, %v3971
    %v4396 = vpack.c.b16 %v3976, %v3972
    %v4397 = vpack.c.b16 %v3981, %v3977
    %v4398 = vpack.c.b16 %v3982, %v3978
    %v4399 = vpack.c.b16 %v3983, %v3979
    %v4400 = vpack.c.b16 %v3984, %v3980
    %v4401 = vpack.c.b16 %v3989, %v3985
    %v4402 = vpack.c.b16 %v3990, %v3986
    %v4403 = vpack.c.b16 %v3991, %v3987
    %v4404 = vpack.c.b16 %v3992, %v3988
    %v4405 = vpack.c.b16 %v3997, %v3993
    %v4406 = vpack.c.b16 %v3998, %v3994
    %v4407 = vpack.c.b16 %v3999, %v3995
    %v4408 = vpack.c.b16 %v4000, %v3996
    %v4409 = vpack.c.b16 %v4005, %v4001
    %v4410 = vpack.c.b16 %v4006, %v4002
    %v4411 = vpack.c.b16 %v4007, %v4003
    %v4412 = vpack.c.b16 %v4008, %v4004
    %v4413 = vpack.c.b16 %v4013, %v4009
    %v4414 = vpack.c.b16 %v4014, %v4010
    %v4415 = vpack.c.b16 %v4015, %v4011
    %v4416 = vpack.c.b16 %v4016, %v4012
    %v4417 = vpack.c.b16 %v4021, %v4017
    %v4418 = vpack.c.b16 %v4022, %v4018
    %v4419 = vpack.c.b16 %v4023, %v4019
    %v4420 = vpack.c.b16 %v4024, %v4020
    %v4421 = vpack.c.b16 %v4029, %v4025
    %v4422 = vpack.c.b16 %v4030, %v4026
    %v4423 = vpack.c.b16 %v4031, %v4027
    %v4424 = vpack.c.b16 %v4032, %v4028
    %v4425 = vpack.c.b16 %v4037, %v4033
    %v4426 = vpack.c.b16 %v4038, %v4034
    %v4427 = vpack.c.b16 %v4039, %v4035
    %v4428 = vpack.c.b16 %v4040, %v4036
    %v4429 = vpack.c.b16 %v4045, %v4041
    %v4430 = vpack.c.b16 %v4046, %v4042
    %v4431 = vpack.c.b16 %v4047, %v4043
    %v4432 = vpack.c.b16 %v4048, %v4044
    %v4433 = vpack.c.b16 %v4053, %v4049
    %v4434 = vpack.c.b16 %v4054, %v4050
    %v4435 = vpack.c.b16 %v4055, %v4051
    %v4436 = vpack.c.b16 %v4056, %v4052
    %v4437 = vpack.c.b16 %v4061, %v4057
    %v4438 = vpack.c.b16 %v4062, %v4058
    %v4439 = vpack.c.b16 %v4063, %v4059
    %v4440 = vpack.c.b16 %v4064, %v4060
    %v4441 = vpack.c.b16 %v4069, %v4065
    %v4442 = vpack.c.b16 %v4070, %v4066
    %v4443 = vpack.c.b16 %v4071, %v4067
    %v4444 = vpack.c.b16 %v4072, %v4068
    %v4445 = vpack.c.b16 %v4077, %v4073
    %v4446 = vpack.c.b16 %v4078, %v4074
    %v4447 = vpack.c.b16 %v4079, %v4075
    %v4448 = vpack.c.b16 %v4080, %v4076
    %v4449 = vpack.c.b16 %v4085, %v4081
    %v4450 = vpack.c.b16 %v4086, %v4082
    %v4451 = vpack.c.b16 %v4087, %v4083
    %v4452 = vpack.c.b16 %v4088, %v4084
    %v4453 = vpack.c.b16 %v4093, %v4089
    %v4454 = vpack.c.b16 %v4094, %v4090
    %v4455 = vpack.c.b16 %v4095, %v4091
    %v4456 = vpack.c.b16 %v4096, %v4092
    %v4457 = vpack.c.b16 %v4101, %v4097
    %v4458 = vpack.c.b16 %v4102, %v4098
    %v4459 = vpack.c.b16 %v4103, %v4099
    %v4460 = vpack.c.b16 %v4104, %v4100
    %v4461 = vpack.c.b16 %v4109, %v4105
    %v4462 = vpack.c.b16 %v4110, %v4106
    %v4463 = vpack.c.b16 %v4111, %v4107
    %v4464 = vpack.c.b16 %v4112, %v4108
    %v4465 = vpack.c.b16 %v4117, %v4113
    %v4466 = vpack.c.b16 %v4118, %v4114
    %v4467 = vpack.c.b16 %v4119, %v4115
    %v4468 = vpack.c.b16 %v4120, %v4116
    %v4469 = vpack.c.b16 %v4125, %v4121
    %v4470 = vpack.c.b16 %v4126, %v4122
    %v4471 = vpack.c.b16 %v4127, %v4123
    %v4472 = vpack.c.b16 %v4128, %v4124
    %v4473 = vpack.c.b16 %v4133, %v4129
    %v4474 = vpack.c.b16 %v4134, %v4130
    %v4475 = vpack.c.b16 %v4135, %v4131
    %v4476 = vpack.c.b16 %v4136, %v4132
    %v4477 = vpack.c.b16 %v4141, %v4137
    %v4478 = vpack.c.b16 %v4142, %v4138
    %v4479 = vpack.c.b16 %v4143, %v4139
    %v4480 = vpack.c.b16 %v4144, %v4140
    %v4481 = vpack.c.b16 %v4149, %v4145
    %v4482 = vpack.c.b16 %v4150, %v4146
    %v4483 = vpack.c.b16 %v4151, %v4147
    %v4484 = vpack.c.b16 %v4152, %v4148
    %v4485 = vpack.c.b16 %v4157, %v4153
    %v4486 = vpack.c.b16 %v4158, %v4154
    %v4487 = vpack.c.b16 %v4159, %v4155
    %v4488 = vpack.c.b16 %v4160, %v4156
    %v4489 = vpack.c.b16 %v4165, %v4161
    %v4490 = vpack.c.b16 %v4166, %v4162
    %v4491 = vpack.c.b16 %v4167, %v4163
    %v4492 = vpack.c.b16 %v4168, %v4164
    %v4493 = vpack.c.b16 %v4173, %v4169
    %v4494 = vpack.c.b16 %v4174, %v4170
    %v4495 = vpack.c.b16 %v4175, %v4171
    %v4496 = vpack.c.b16 %v4176, %v4172
    %v4497 = vpack.c.b16 %v4181, %v4177
    %v4498 = vpack.c.b16 %v4182, %v4178
    %v4499 = vpack.c.b16 %v4183, %v4179
    %v4500 = vpack.c.b16 %v4184, %v4180
    %v4501 = vpack.c.b16 %v4189, %v4185
    %v4502 = vpack.c.b16 %v4190, %v4186
    %v4503 = vpack.c.b16 %v4191, %v4187
    %v4504 = vpack.c.b16 %v4192, %v4188
    %v4505 = vpack.c.b16 %v4197, %v4193
    %v4506 = vpack.c.b16 %v4198, %v4194
    %v4507 = vpack.c.b16 %v4199, %v4195
    %v4508 = vpack.c.b16 %v4200, %v4196
    %v4509 = vpack.c.b16 %v4205, %v4201
    %v4510 = vpack.c.b16 %v4206, %v4202
    %v4511 = vpack.c.b16 %v4207, %v4203
    %v4512 = vpack.c.b16 %v4208, %v4204
    %v4513 = vpack.c.b16 %v4213, %v4209
    %v4514 = vpack.c.b16 %v4214, %v4210
    %v4515 = vpack.c.b16 %v4215, %v4211
    %v4516 = vpack.c.b16 %v4216, %v4212
    %v4517 = vpack.c.b16 %v4221, %v4217
    %v4518 = vpack.c.b16 %v4222, %v4218
    %v4519 = vpack.c.b16 %v4223, %v4219
    %v4520 = vpack.c.b16 %v4224, %v4220
    %v4521 = vpack.c.b16 %v4229, %v4225
    %v4522 = vpack.c.b16 %v4230, %v4226
    %v4523 = vpack.c.b16 %v4231, %v4227
    %v4524 = vpack.c.b16 %v4232, %v4228
    %v4525 = vpack.c.b16 %v4237, %v4233
    %v4526 = vpack.c.b16 %v4238, %v4234
    %v4527 = vpack.c.b16 %v4239, %v4235
    %v4528 = vpack.c.b16 %v4240, %v4236
    %v4529 = vpack.c.b16 %v4245, %v4241
    %v4530 = vpack.c.b16 %v4246, %v4242
    %v4531 = vpack.c.b16 %v4247, %v4243
    %v4532 = vpack.c.b16 %v4248, %v4244
    %v4533 = vpack.c.b16 %v4253, %v4249
    %v4534 = vpack.c.b16 %v4254, %v4250
    %v4535 = vpack.c.b16 %v4255, %v4251
    %v4536 = vpack.c.b16 %v4256, %v4252
    %v4537 = vpack.c.b16 %v4261, %v4257
    %v4538 = vpack.c.b16 %v4262, %v4258
    %v4539 = vpack.c.b16 %v4263, %v4259
    %v4540 = vpack.c.b16 %v4264, %v4260
    %v4541 = vpack.c.b16 %v4269, %v4265
    %v4542 = vpack.c.b16 %v4270, %v4266
    %v4543 = vpack.c.b16 %v4271, %v4267
    %v4544 = vpack.c.b16 %v4272, %v4268
    %v4545 = vpack.c.b16 %v4277, %v4273
    %v4546 = vpack.c.b16 %v4278, %v4274
    %v4547 = vpack.c.b16 %v4279, %v4275
    %v4548 = vpack.c.b16 %v4280, %v4276
    %v4549 = vpack.c.b16 %v4285, %v4281
    %v4550 = vpack.c.b16 %v4286, %v4282
    %v4551 = vpack.c.b16 %v4287, %v4283
    %v4552 = vpack.c.b16 %v4288, %v4284
    %v4553 = vpack.c.b16 %v4293, %v4289
    %v4554 = vpack.c.b16 %v4294, %v4290
    %v4555 = vpack.c.b16 %v4295, %v4291
    %v4556 = vpack.c.b16 %v4296, %v4292
    %v4557 = vpack.c.b16 %v4301, %v4297
    %v4558 = vpack.c.b16 %v4302, %v4298
    %v4559 = vpack.c.b16 %v4303, %v4299
    %v4560 = vpack.c.b16 %v4304, %v4300
    %4817 = vmatprep.subr.bf16.mxu0 %v4334
    %4818 = vmatpush1.bf16.msra.mxu0 %v4333
    %4819 = vmatprep.subr.bf16.mxu0 %v4330
    %4820 = vmatpush1.bf16.msra.mxu0 %v4329
    %4821 = vmatprep.subr.bf16.mxu0 %v4326
    %4822 = vmatpush1.bf16.msra.mxu0 %v4325
    %4823 = vmatprep.subr.bf16.mxu0 %v4322
    %4824 = vmatpush1.bf16.msra.mxu0 %v4321
    %4825 = vmatprep.subr.bf16.mxu0 %v4318
    %4826 = vmatpush1.bf16.msra.mxu0 %v4317
    %4827 = vmatprep.subr.bf16.mxu0 %v4314
    %4828 = vmatpush1.bf16.msra.mxu0 %v4313
    %4829 = vmatprep.subr.bf16.mxu0 %v4310
    %4830 = vmatpush1.bf16.msra.mxu0 %v4309
    %4831 = vmatprep.subr.bf16.mxu0 %v4306
    %4832 = vmatpush1.bf16.msra.mxu0 %v4305
    %4833 = vmatprep.subr.bf16.mxu0 %v4366
    %4834 = vmatpush2.bf16.msra.mxu0 %v4365
    %4835 = vmatprep.subr.bf16.mxu0 %v4362
    %4836 = vmatpush2.bf16.msra.mxu0 %v4361
    %4837 = vmatprep.subr.bf16.mxu0 %v4358
    %4838 = vmatpush2.bf16.msra.mxu0 %v4357
    %4839 = vmatprep.subr.bf16.mxu0 %v4354
    %4840 = vmatpush2.bf16.msra.mxu0 %v4353
    %4841 = vmatprep.subr.bf16.mxu0 %v4350
    %4842 = vmatpush2.bf16.msra.mxu0 %v4349
    %4843 = vmatprep.subr.bf16.mxu0 %v4346
    %4844 = vmatpush2.bf16.msra.mxu0 %v4345
    %4845 = vmatprep.subr.bf16.mxu0 %v4342
    %4846 = vmatpush2.bf16.msra.mxu0 %v4341
    %4847 = vmatprep.subr.bf16.mxu0 %v4338
    %4848 = vmatpush2.bf16.msra.mxu0 %v4337
    %4849 = vmatprep.mubr.bf16.mxu0 %v3522
    %4850 = vmatmul.mubr.bf16.gmra.mxu0 %v3521
    %v4851 = vpop.f32.mrf.mxu0
    %v4852 = vadd.f32 %v3463, %v4851
    %v4853 = vpop.f32.mrf.mxu0
    %v4854 = vadd.f32 %v3467, %v4853
    %v4855 = vpop.f32.mrf.mxu0
    %v4856 = vpop.f32.mrf.mxu0
    %4857 = vdwg.mxu0
    %4858 = vmatprep.subr.bf16.mxu0 %v4398
    %4859 = vmatpush1.bf16.msra.mxu0 %v4397
    %4860 = vmatprep.subr.bf16.mxu0 %v4394
    %4861 = vmatpush1.bf16.msra.mxu0 %v4393
    %4862 = vmatprep.subr.bf16.mxu0 %v4390
    %4863 = vmatpush1.bf16.msra.mxu0 %v4389
    %4864 = vmatprep.subr.bf16.mxu0 %v4386
    %4865 = vmatpush1.bf16.msra.mxu0 %v4385
    %4866 = vmatprep.subr.bf16.mxu0 %v4382
    %4867 = vmatpush1.bf16.msra.mxu0 %v4381
    %4868 = vmatprep.subr.bf16.mxu0 %v4378
    %4869 = vmatpush1.bf16.msra.mxu0 %v4377
    %4870 = vmatprep.subr.bf16.mxu0 %v4374
    %4871 = vmatpush1.bf16.msra.mxu0 %v4373
    %4872 = vmatprep.subr.bf16.mxu0 %v4370
    %4873 = vmatpush1.bf16.msra.mxu0 %v4369
    %4874 = vmatprep.subr.bf16.mxu0 %v4430
    %4875 = vmatpush2.bf16.msra.mxu0 %v4429
    %4876 = vmatprep.subr.bf16.mxu0 %v4426
    %4877 = vmatpush2.bf16.msra.mxu0 %v4425
    %4878 = vmatprep.subr.bf16.mxu0 %v4422
    %4879 = vmatpush2.bf16.msra.mxu0 %v4421
    %4880 = vmatprep.subr.bf16.mxu0 %v4418
    %4881 = vmatpush2.bf16.msra.mxu0 %v4417
    %4882 = vmatprep.subr.bf16.mxu0 %v4414
    %4883 = vmatpush2.bf16.msra.mxu0 %v4413
    %4884 = vmatprep.subr.bf16.mxu0 %v4410
    %4885 = vmatpush2.bf16.msra.mxu0 %v4409
    %4886 = vmatprep.subr.bf16.mxu0 %v4406
    %4887 = vmatpush2.bf16.msra.mxu0 %v4405
    %4888 = vmatprep.subr.bf16.mxu0 %v4402
    %4889 = vmatpush2.bf16.msra.mxu0 %v4401
    %4890 = vmatprep.mubr.bf16.mxu0 %v3524
    %4891 = vmatmul.mubr.bf16.gmra.mxu0 %v3523
    %v4892 = vpop.f32.mrf.mxu0
    %v4893 = vadd.f32 %v4852, %v4892
    %v4894 = vpop.f32.mrf.mxu0
    %v4895 = vadd.f32 %v4854, %v4894
    %v4896 = vpop.f32.mrf.mxu0
    %v4897 = vpop.f32.mrf.mxu0
    %4898 = vdwg.mxu0
    %4899 = vmatprep.subr.bf16.mxu0 %v4462
    %4900 = vmatpush1.bf16.msra.mxu0 %v4461
    %4901 = vmatprep.subr.bf16.mxu0 %v4458
    %4902 = vmatpush1.bf16.msra.mxu0 %v4457
    %4903 = vmatprep.subr.bf16.mxu0 %v4454
    %4904 = vmatpush1.bf16.msra.mxu0 %v4453
    %4905 = vmatprep.subr.bf16.mxu0 %v4450
    %4906 = vmatpush1.bf16.msra.mxu0 %v4449
    %4907 = vmatprep.subr.bf16.mxu0 %v4446
    %4908 = vmatpush1.bf16.msra.mxu0 %v4445
    %4909 = vmatprep.subr.bf16.mxu0 %v4442
    %4910 = vmatpush1.bf16.msra.mxu0 %v4441
    %4911 = vmatprep.subr.bf16.mxu0 %v4438
    %4912 = vmatpush1.bf16.msra.mxu0 %v4437
    %4913 = vmatprep.subr.bf16.mxu0 %v4434
    %4914 = vmatpush1.bf16.msra.mxu0 %v4433
    %4915 = vmatprep.subr.bf16.mxu0 %v4494
    %4916 = vmatpush2.bf16.msra.mxu0 %v4493
    %4917 = vmatprep.subr.bf16.mxu0 %v4490
    %4918 = vmatpush2.bf16.msra.mxu0 %v4489
    %4919 = vmatprep.subr.bf16.mxu0 %v4486
    %4920 = vmatpush2.bf16.msra.mxu0 %v4485
    %4921 = vmatprep.subr.bf16.mxu0 %v4482
    %4922 = vmatpush2.bf16.msra.mxu0 %v4481
    %4923 = vmatprep.subr.bf16.mxu0 %v4478
    %4924 = vmatpush2.bf16.msra.mxu0 %v4477
    %4925 = vmatprep.subr.bf16.mxu0 %v4474
    %4926 = vmatpush2.bf16.msra.mxu0 %v4473
    %4927 = vmatprep.subr.bf16.mxu0 %v4470
    %4928 = vmatpush2.bf16.msra.mxu0 %v4469
    %4929 = vmatprep.subr.bf16.mxu0 %v4466
    %4930 = vmatpush2.bf16.msra.mxu0 %v4465
    %4931 = vmatprep.mubr.bf16.mxu0 %v3526
    %4932 = vmatmul.mubr.bf16.gmra.mxu0 %v3525
    %v4933 = vpop.f32.mrf.mxu0
    %v4934 = vadd.f32 %v4893, %v4933
    %v4935 = vpop.f32.mrf.mxu0
    %v4936 = vadd.f32 %v4895, %v4935
    %v4937 = vpop.f32.mrf.mxu0
    %v4938 = vpop.f32.mrf.mxu0
    %4939 = vdwg.mxu0
    %4940 = vmatprep.subr.bf16.mxu0 %v4526
    %4941 = vmatpush1.bf16.msra.mxu0 %v4525
    %4942 = vmatprep.subr.bf16.mxu0 %v4522
    %4943 = vmatpush1.bf16.msra.mxu0 %v4521
    %4944 = vmatprep.subr.bf16.mxu0 %v4518
    %4945 = vmatpush1.bf16.msra.mxu0 %v4517
    %4946 = vmatprep.subr.bf16.mxu0 %v4514
    %4947 = vmatpush1.bf16.msra.mxu0 %v4513
    %4948 = vmatprep.subr.bf16.mxu0 %v4510
    %4949 = vmatpush1.bf16.msra.mxu0 %v4509
    %4950 = vmatprep.subr.bf16.mxu0 %v4506
    %4951 = vmatpush1.bf16.msra.mxu0 %v4505
    %4952 = vmatprep.subr.bf16.mxu0 %v4502
    %4953 = vmatpush1.bf16.msra.mxu0 %v4501
    %4954 = vmatprep.subr.bf16.mxu0 %v4498
    %4955 = vmatpush1.bf16.msra.mxu0 %v4497
    %4956 = vmatprep.subr.bf16.mxu0 %v4558
    %4957 = vmatpush2.bf16.msra.mxu0 %v4557
    %4958 = vmatprep.subr.bf16.mxu0 %v4554
    %4959 = vmatpush2.bf16.msra.mxu0 %v4553
    %4960 = vmatprep.subr.bf16.mxu0 %v4550
    %4961 = vmatpush2.bf16.msra.mxu0 %v4549
    %4962 = vmatprep.subr.bf16.mxu0 %v4546
    %4963 = vmatpush2.bf16.msra.mxu0 %v4545
    %4964 = vmatprep.subr.bf16.mxu0 %v4542
    %4965 = vmatpush2.bf16.msra.mxu0 %v4541
    %4966 = vmatprep.subr.bf16.mxu0 %v4538
    %4967 = vmatpush2.bf16.msra.mxu0 %v4537
    %4968 = vmatprep.subr.bf16.mxu0 %v4534
    %4969 = vmatpush2.bf16.msra.mxu0 %v4533
    %4970 = vmatprep.subr.bf16.mxu0 %v4530
    %4971 = vmatpush2.bf16.msra.mxu0 %v4529
    %4972 = vmatprep.mubr.bf16.mxu0 %v3528
    %4973 = vmatmul.mubr.bf16.gmra.mxu0 %v3527
    %v4974 = vpop.f32.mrf.mxu0
    %v4975 = vadd.f32 %v4934, %v4974
    %v4976 = vpop.f32.mrf.mxu0
    %v4977 = vadd.f32 %v4936, %v4976
    %v4978 = vpop.f32.mrf.mxu0
    %v4979 = vpop.f32.mrf.mxu0
    %4980 = vdwg.mxu0
    %4981 = vmatprep.subr.bf16.mxu0 %v4336
    %4982 = vmatpush1.bf16.msra.mxu0 %v4335
    %4983 = vmatprep.subr.bf16.mxu0 %v4332
    %4984 = vmatpush1.bf16.msra.mxu0 %v4331
    %4985 = vmatprep.subr.bf16.mxu0 %v4328
    %4986 = vmatpush1.bf16.msra.mxu0 %v4327
    %4987 = vmatprep.subr.bf16.mxu0 %v4324
    %4988 = vmatpush1.bf16.msra.mxu0 %v4323
    %4989 = vmatprep.subr.bf16.mxu0 %v4320
    %4990 = vmatpush1.bf16.msra.mxu0 %v4319
    %4991 = vmatprep.subr.bf16.mxu0 %v4316
    %4992 = vmatpush1.bf16.msra.mxu0 %v4315
    %4993 = vmatprep.subr.bf16.mxu0 %v4312
    %4994 = vmatpush1.bf16.msra.mxu0 %v4311
    %4995 = vmatprep.subr.bf16.mxu0 %v4308
    %4996 = vmatpush1.bf16.msra.mxu0 %v4307
    %4997 = vmatprep.subr.bf16.mxu0 %v4368
    %4998 = vmatpush2.bf16.msra.mxu0 %v4367
    %4999 = vmatprep.subr.bf16.mxu0 %v4364
    %5000 = vmatpush2.bf16.msra.mxu0 %v4363
    %5001 = vmatprep.subr.bf16.mxu0 %v4360
    %5002 = vmatpush2.bf16.msra.mxu0 %v4359
    %5003 = vmatprep.subr.bf16.mxu0 %v4356
    %5004 = vmatpush2.bf16.msra.mxu0 %v4355
    %5005 = vmatprep.subr.bf16.mxu0 %v4352
    %5006 = vmatpush2.bf16.msra.mxu0 %v4351
    %5007 = vmatprep.subr.bf16.mxu0 %v4348
    %5008 = vmatpush2.bf16.msra.mxu0 %v4347
    %5009 = vmatprep.subr.bf16.mxu0 %v4344
    %5010 = vmatpush2.bf16.msra.mxu0 %v4343
    %5011 = vmatprep.subr.bf16.mxu0 %v4340
    %5012 = vmatpush2.bf16.msra.mxu0 %v4339
    %5013 = vmatprep.mubr.bf16.mxu0 %v3522
    %5014 = vmatmul.mubr.bf16.gmra.mxu0 %v3521
    %v5015 = vpop.f32.mrf.mxu0
    %v5016 = vadd.f32 %v3471, %v5015
    %v5017 = vpop.f32.mrf.mxu0
    %v5018 = vadd.f32 %v3475, %v5017
    %v5019 = vpop.f32.mrf.mxu0
    %v5020 = vpop.f32.mrf.mxu0
    %5021 = vdwg.mxu0
    %5022 = vmatprep.subr.bf16.mxu0 %v4400
    %5023 = vmatpush1.bf16.msra.mxu0 %v4399
    %5024 = vmatprep.subr.bf16.mxu0 %v4396
    %5025 = vmatpush1.bf16.msra.mxu0 %v4395
    %5026 = vmatprep.subr.bf16.mxu0 %v4392
    %5027 = vmatpush1.bf16.msra.mxu0 %v4391
    %5028 = vmatprep.subr.bf16.mxu0 %v4388
    %5029 = vmatpush1.bf16.msra.mxu0 %v4387
    %5030 = vmatprep.subr.bf16.mxu0 %v4384
    %5031 = vmatpush1.bf16.msra.mxu0 %v4383
    %5032 = vmatprep.subr.bf16.mxu0 %v4380
    %5033 = vmatpush1.bf16.msra.mxu0 %v4379
    %5034 = vmatprep.subr.bf16.mxu0 %v4376
    %5035 = vmatpush1.bf16.msra.mxu0 %v4375
    %5036 = vmatprep.subr.bf16.mxu0 %v4372
    %5037 = vmatpush1.bf16.msra.mxu0 %v4371
    %5038 = vmatprep.subr.bf16.mxu0 %v4432
    %5039 = vmatpush2.bf16.msra.mxu0 %v4431
    %5040 = vmatprep.subr.bf16.mxu0 %v4428
    %5041 = vmatpush2.bf16.msra.mxu0 %v4427
    %5042 = vmatprep.subr.bf16.mxu0 %v4424
    %5043 = vmatpush2.bf16.msra.mxu0 %v4423
    %5044 = vmatprep.subr.bf16.mxu0 %v4420
    %5045 = vmatpush2.bf16.msra.mxu0 %v4419
    %5046 = vmatprep.subr.bf16.mxu0 %v4416
    %5047 = vmatpush2.bf16.msra.mxu0 %v4415
    %5048 = vmatprep.subr.bf16.mxu0 %v4412
    %5049 = vmatpush2.bf16.msra.mxu0 %v4411
    %5050 = vmatprep.subr.bf16.mxu0 %v4408
    %5051 = vmatpush2.bf16.msra.mxu0 %v4407
    %5052 = vmatprep.subr.bf16.mxu0 %v4404
    %5053 = vmatpush2.bf16.msra.mxu0 %v4403
    %5054 = vmatprep.mubr.bf16.mxu0 %v3524
    %5055 = vmatmul.mubr.bf16.gmra.mxu0 %v3523
    %v5056 = vpop.f32.mrf.mxu0
    %v5057 = vadd.f32 %v5016, %v5056
    %v5058 = vpop.f32.mrf.mxu0
    %v5059 = vadd.f32 %v5018, %v5058
    %v5060 = vpop.f32.mrf.mxu0
    %v5061 = vpop.f32.mrf.mxu0
    %5062 = vdwg.mxu0
    %5063 = vmatprep.subr.bf16.mxu0 %v4464
    %5064 = vmatpush1.bf16.msra.mxu0 %v4463
    %5065 = vmatprep.subr.bf16.mxu0 %v4460
    %5066 = vmatpush1.bf16.msra.mxu0 %v4459
    %5067 = vmatprep.subr.bf16.mxu0 %v4456
    %5068 = vmatpush1.bf16.msra.mxu0 %v4455
    %5069 = vmatprep.subr.bf16.mxu0 %v4452
    %5070 = vmatpush1.bf16.msra.mxu0 %v4451
    %5071 = vmatprep.subr.bf16.mxu0 %v4448
    %5072 = vmatpush1.bf16.msra.mxu0 %v4447
    %5073 = vmatprep.subr.bf16.mxu0 %v4444
    %5074 = vmatpush1.bf16.msra.mxu0 %v4443
    %5075 = vmatprep.subr.bf16.mxu0 %v4440
    %5076 = vmatpush1.bf16.msra.mxu0 %v4439
    %5077 = vmatprep.subr.bf16.mxu0 %v4436
    %5078 = vmatpush1.bf16.msra.mxu0 %v4435
    %5079 = vmatprep.subr.bf16.mxu0 %v4496
    %5080 = vmatpush2.bf16.msra.mxu0 %v4495
    %5081 = vmatprep.subr.bf16.mxu0 %v4492
    %5082 = vmatpush2.bf16.msra.mxu0 %v4491
    %5083 = vmatprep.subr.bf16.mxu0 %v4488
    %5084 = vmatpush2.bf16.msra.mxu0 %v4487
    %5085 = vmatprep.subr.bf16.mxu0 %v4484
    %5086 = vmatpush2.bf16.msra.mxu0 %v4483
    %5087 = vmatprep.subr.bf16.mxu0 %v4480
    %5088 = vmatpush2.bf16.msra.mxu0 %v4479
    %5089 = vmatprep.subr.bf16.mxu0 %v4476
    %5090 = vmatpush2.bf16.msra.mxu0 %v4475
    %5091 = vmatprep.subr.bf16.mxu0 %v4472
    %5092 = vmatpush2.bf16.msra.mxu0 %v4471
    %5093 = vmatprep.subr.bf16.mxu0 %v4468
    %5094 = vmatpush2.bf16.msra.mxu0 %v4467
    %5095 = vmatprep.mubr.bf16.mxu0 %v3526
    %5096 = vmatmul.mubr.bf16.gmra.mxu0 %v3525
    %v5097 = vpop.f32.mrf.mxu0
    %v5098 = vadd.f32 %v5057, %v5097
    %v5099 = vpop.f32.mrf.mxu0
    %v5100 = vadd.f32 %v5059, %v5099
    %v5101 = vpop.f32.mrf.mxu0
    %v5102 = vpop.f32.mrf.mxu0
    %5103 = vdwg.mxu0
    %5104 = vmatprep.subr.bf16.mxu0 %v4528
    %5105 = vmatpush1.bf16.msra.mxu0 %v4527
    %5106 = vmatprep.subr.bf16.mxu0 %v4524
    %5107 = vmatpush1.bf16.msra.mxu0 %v4523
    %5108 = vmatprep.subr.bf16.mxu0 %v4520
    %5109 = vmatpush1.bf16.msra.mxu0 %v4519
    %5110 = vmatprep.subr.bf16.mxu0 %v4516
    %5111 = vmatpush1.bf16.msra.mxu0 %v4515
    %5112 = vmatprep.subr.bf16.mxu0 %v4512
    %5113 = vmatpush1.bf16.msra.mxu0 %v4511
    %5114 = vmatprep.subr.bf16.mxu0 %v4508
    %5115 = vmatpush1.bf16.msra.mxu0 %v4507
    %5116 = vmatprep.subr.bf16.mxu0 %v4504
    %5117 = vmatpush1.bf16.msra.mxu0 %v4503
    %5118 = vmatprep.subr.bf16.mxu0 %v4500
    %5119 = vmatpush1.bf16.msra.mxu0 %v4499
    %5120 = vmatprep.subr.bf16.mxu0 %v4560
    %5121 = vmatpush2.bf16.msra.mxu0 %v4559
    %5122 = vmatprep.subr.bf16.mxu0 %v4556
    %5123 = vmatpush2.bf16.msra.mxu0 %v4555
    %5124 = vmatprep.subr.bf16.mxu0 %v4552
    %5125 = vmatpush2.bf16.msra.mxu0 %v4551
    %5126 = vmatprep.subr.bf16.mxu0 %v4548
    %5127 = vmatpush2.bf16.msra.mxu0 %v4547
    %5128 = vmatprep.subr.bf16.mxu0 %v4544
    %5129 = vmatpush2.bf16.msra.mxu0 %v4543
    %5130 = vmatprep.subr.bf16.mxu0 %v4540
    %5131 = vmatpush2.bf16.msra.mxu0 %v4539
    %5132 = vmatprep.subr.bf16.mxu0 %v4536
    %5133 = vmatpush2.bf16.msra.mxu0 %v4535
    %5134 = vmatprep.subr.bf16.mxu0 %v4532
    %5135 = vmatpush2.bf16.msra.mxu0 %v4531
    %5136 = vmatprep.mubr.bf16.mxu0 %v3528
    %5137 = vmatmul.mubr.bf16.gmra.mxu0 %v3527
    %v5138 = vpop.f32.mrf.mxu0
    %v5139 = vadd.f32 %v5098, %v5138
    %v5140 = vpop.f32.mrf.mxu0
    %v5141 = vadd.f32 %v5100, %v5140
    %v5142 = vpop.f32.mrf.mxu0
    %v5143 = vpop.f32.mrf.mxu0
    %5144 = vdwg.mxu0
    %v5145 = vmax.f32 %v4975, 0.0
    %v5146 = vmax.f32 %v4977, 0.0
    %v5147 = vmax.f32 %v5139, 0.0
    %v5148 = vmax.f32 %v5141, 0.0
    %v5149 = vpack.c.bf16 %v5145, %v5145
    %v5150 = vpack.c.bf16 %v5146, %v5146
    %v5151 = vpack.c.bf16 %v5147, %v5147
    %v5152 = vpack.c.bf16 %v5148, %v5148
    %v5153 = vld [vmem:[%s9] sm:$0xff]
    %v5154 = vld [vmem:[%s9 + $0x8] sm:$0xff]
    %v5155 = vld [vmem:[%s9 + $0x10] sm:$0xff]
    %v5156 = vld [vmem:[%s9 + $0x18] sm:$0xff]
    %v5157 = vld [vmem:[%s9 + $0x20] sm:$0xff]
    %v5158 = vld [vmem:[%s9 + $0x28] sm:$0xff]
    %v5159 = vld [vmem:[%s9 + $0x30] sm:$0xff]
    %v5160 = vld [vmem:[%s9 + $0x38] sm:$0xff]
    %v5161 = vld [vmem:[%s9 + $0x40] sm:$0xff]
    %v5162 = vld [vmem:[%s9 + $0x48] sm:$0xff]
    %v5163 = vld [vmem:[%s9 + $0x50] sm:$0xff]
    %v5164 = vld [vmem:[%s9 + $0x58] sm:$0xff]
    %v5165 = vld [vmem:[%s9 + $0x60] sm:$0xff]
    %v5166 = vld [vmem:[%s9 + $0x68] sm:$0xff]
    %v5167 = vld [vmem:[%s9 + $0x70] sm:$0xff]
    %v5168 = vld [vmem:[%s9 + $0x78] sm:$0xff]
    %v5169 = vld [vmem:[%s9 + $0x80] sm:$0xff]
    %v5170 = vld [vmem:[%s9 + $0x88] sm:$0xff]
    %v5171 = vld [vmem:[%s9 + $0x90] sm:$0xff]
    %v5172 = vld [vmem:[%s9 + $0x98] sm:$0xff]
    %v5173 = vld [vmem:[%s9 + $0xa0] sm:$0xff]
    %v5174 = vld [vmem:[%s9 + $0xa8] sm:$0xff]
    %v5175 = vld [vmem:[%s9 + $0xb0] sm:$0xff]
    %v5176 = vld [vmem:[%s9 + $0xb8] sm:$0xff]
    %v5177 = vld [vmem:[%s9 + $0xc0] sm:$0xff]
    %v5178 = vld [vmem:[%s9 + $0xc8] sm:$0xff]
    %v5179 = vld [vmem:[%s9 + $0xd0] sm:$0xff]
    %v5180 = vld [vmem:[%s9 + $0xd8] sm:$0xff]
    %v5181 = vld [vmem:[%s9 + $0xe0] sm:$0xff]
    %v5182 = vld [vmem:[%s9 + $0xe8] sm:$0xff]
    %v5183 = vld [vmem:[%s9 + $0xf0] sm:$0xff]
    %v5184 = vld [vmem:[%s9 + $0xf8] sm:$0xff]
    %v5185 = vld [vmem:[%s9 + $0x100] sm:$0xff]
    %v5186 = vld [vmem:[%s9 + $0x108] sm:$0xff]
    %v5187 = vld [vmem:[%s9 + $0x110] sm:$0xff]
    %v5188 = vld [vmem:[%s9 + $0x118] sm:$0xff]
    %v5189 = vld [vmem:[%s9 + $0x120] sm:$0xff]
    %v5190 = vld [vmem:[%s9 + $0x128] sm:$0xff]
    %v5191 = vld [vmem:[%s9 + $0x130] sm:$0xff]
    %v5192 = vld [vmem:[%s9 + $0x138] sm:$0xff]
    %v5193 = vld [vmem:[%s9 + $0x140] sm:$0xff]
    %v5194 = vld [vmem:[%s9 + $0x148] sm:$0xff]
    %v5195 = vld [vmem:[%s9 + $0x150] sm:$0xff]
    %v5196 = vld [vmem:[%s9 + $0x158] sm:$0xff]
    %v5197 = vld [vmem:[%s9 + $0x160] sm:$0xff]
    %v5198 = vld [vmem:[%s9 + $0x168] sm:$0xff]
    %v5199 = vld [vmem:[%s9 + $0x170] sm:$0xff]
    %v5200 = vld [vmem:[%s9 + $0x178] sm:$0xff]
    %v5201 = vld [vmem:[%s9 + $0x180] sm:$0xff]
    %v5202 = vld [vmem:[%s9 + $0x188] sm:$0xff]
    %v5203 = vld [vmem:[%s9 + $0x190] sm:$0xff]
    %v5204 = vld [vmem:[%s9 + $0x198] sm:$0xff]
    %v5205 = vld [vmem:[%s9 + $0x1a0] sm:$0xff]
    %v5206 = vld [vmem:[%s9 + $0x1a8] sm:$0xff]
    %v5207 = vld [vmem:[%s9 + $0x1b0] sm:$0xff]
    %v5208 = vld [vmem:[%s9 + $0x1b8] sm:$0xff]
    %v5209 = vld [vmem:[%s9 + $0x1c0] sm:$0xff]
    %v5210 = vld [vmem:[%s9 + $0x1c8] sm:$0xff]
    %v5211 = vld [vmem:[%s9 + $0x1d0] sm:$0xff]
    %v5212 = vld [vmem:[%s9 + $0x1d8] sm:$0xff]
    %v5213 = vld [vmem:[%s9 + $0x1e0] sm:$0xff]
    %v5214 = vld [vmem:[%s9 + $0x1e8] sm:$0xff]
    %v5215 = vld [vmem:[%s9 + $0x1f0] sm:$0xff]
    %v5216 = vld [vmem:[%s9 + $0x1f8] sm:$0xff]
    %v5217 = vld [vmem:[%s10] sm:$0x3]
    %v5219 = vlaneseq
    %v5220 = vshrl.u32 %v5219, 7
    %v5221 = vsub.s32 0, %v5220
    %v5222 = vrot.slane %v5217, %v5221
    %v5223 = vlaneseq
    %v5224 = vshrl.u32 %v5223, 7
    %v5225 = vsub.s32 1, %v5224
    %v5226 = vrot.slane %v5217, %v5225
    %v5293 = vunpack.c.l.b16 %v5153
    %v5294 = vunpack.c.h.b16 %v5153
    %v5295 = vunpack.c.l.b16 %v5154
    %v5296 = vunpack.c.h.b16 %v5154
    %v5297 = vunpack.c.l.b16 %v5155
    %v5298 = vunpack.c.h.b16 %v5155
    %v5299 = vunpack.c.l.b16 %v5156
    %v5300 = vunpack.c.h.b16 %v5156
    %v5301 = vunpack.c.l.b16 %v5157
    %v5302 = vunpack.c.h.b16 %v5157
    %v5303 = vunpack.c.l.b16 %v5158
    %v5304 = vunpack.c.h.b16 %v5158
    %v5305 = vunpack.c.l.b16 %v5159
    %v5306 = vunpack.c.h.b16 %v5159
    %v5307 = vunpack.c.l.b16 %v5160
    %v5308 = vunpack.c.h.b16 %v5160
    %v5309 = vunpack.c.l.b16 %v5161
    %v5310 = vunpack.c.h.b16 %v5161
    %v5311 = vunpack.c.l.b16 %v5162
    %v5312 = vunpack.c.h.b16 %v5162
    %v5313 = vunpack.c.l.b16 %v5163
    %v5314 = vunpack.c.h.b16 %v5163
    %v5315 = vunpack.c.l.b16 %v5164
    %v5316 = vunpack.c.h.b16 %v5164
    %v5317 = vunpack.c.l.b16 %v5165
    %v5318 = vunpack.c.h.b16 %v5165
    %v5319 = vunpack.c.l.b16 %v5166
    %v5320 = vunpack.c.h.b16 %v5166
    %v5321 = vunpack.c.l.b16 %v5167
    %v5322 = vunpack.c.h.b16 %v5167
    %v5323 = vunpack.c.l.b16 %v5168
    %v5324 = vunpack.c.h.b16 %v5168
    %v5325 = vunpack.c.l.b16 %v5169
    %v5326 = vunpack.c.h.b16 %v5169
    %v5327 = vunpack.c.l.b16 %v5170
    %v5328 = vunpack.c.h.b16 %v5170
    %v5329 = vunpack.c.l.b16 %v5171
    %v5330 = vunpack.c.h.b16 %v5171
    %v5331 = vunpack.c.l.b16 %v5172
    %v5332 = vunpack.c.h.b16 %v5172
    %v5333 = vunpack.c.l.b16 %v5173
    %v5334 = vunpack.c.h.b16 %v5173
    %v5335 = vunpack.c.l.b16 %v5174
    %v5336 = vunpack.c.h.b16 %v5174
    %v5337 = vunpack.c.l.b16 %v5175
    %v5338 = vunpack.c.h.b16 %v5175
    %v5339 = vunpack.c.l.b16 %v5176
    %v5340 = vunpack.c.h.b16 %v5176
    %v5341 = vunpack.c.l.b16 %v5177
    %v5342 = vunpack.c.h.b16 %v5177
    %v5343 = vunpack.c.l.b16 %v5178
    %v5344 = vunpack.c.h.b16 %v5178
    %v5345 = vunpack.c.l.b16 %v5179
    %v5346 = vunpack.c.h.b16 %v5179
    %v5347 = vunpack.c.l.b16 %v5180
    %v5348 = vunpack.c.h.b16 %v5180
    %v5349 = vunpack.c.l.b16 %v5181
    %v5350 = vunpack.c.h.b16 %v5181
    %v5351 = vunpack.c.l.b16 %v5182
    %v5352 = vunpack.c.h.b16 %v5182
    %v5353 = vunpack.c.l.b16 %v5183
    %v5354 = vunpack.c.h.b16 %v5183
    %v5355 = vunpack.c.l.b16 %v5184
    %v5356 = vunpack.c.h.b16 %v5184
    %v5357 = vunpack.c.l.b16 %v5185
    %v5358 = vunpack.c.h.b16 %v5185
    %v5359 = vunpack.c.l.b16 %v5186
    %v5360 = vunpack.c.h.b16 %v5186
    %v5361 = vunpack.c.l.b16 %v5187
    %v5362 = vunpack.c.h.b16 %v5187
    %v5363 = vunpack.c.l.b16 %v5188
    %v5364 = vunpack.c.h.b16 %v5188
    %v5365 = vunpack.c.l.b16 %v5189
    %v5366 = vunpack.c.h.b16 %v5189
    %v5367 = vunpack.c.l.b16 %v5190
    %v5368 = vunpack.c.h.b16 %v5190
    %v5369 = vunpack.c.l.b16 %v5191
    %v5370 = vunpack.c.h.b16 %v5191
    %v5371 = vunpack.c.l.b16 %v5192
    %v5372 = vunpack.c.h.b16 %v5192
    %v5373 = vunpack.c.l.b16 %v5193
    %v5374 = vunpack.c.h.b16 %v5193
    %v5375 = vunpack.c.l.b16 %v5194
    %v5376 = vunpack.c.h.b16 %v5194
    %v5377 = vunpack.c.l.b16 %v5195
    %v5378 = vunpack.c.h.b16 %v5195
    %v5379 = vunpack.c.l.b16 %v5196
    %v5380 = vunpack.c.h.b16 %v5196
    %v5381 = vunpack.c.l.b16 %v5197
    %v5382 = vunpack.c.h.b16 %v5197
    %v5383 = vunpack.c.l.b16 %v5198
    %v5384 = vunpack.c.h.b16 %v5198
    %v5385 = vunpack.c.l.b16 %v5199
    %v5386 = vunpack.c.h.b16 %v5199
    %v5387 = vunpack.c.l.b16 %v5200
    %v5388 = vunpack.c.h.b16 %v5200
    %v5389 = vunpack.c.l.b16 %v5201
    %v5390 = vunpack.c.h.b16 %v5201
    %v5391 = vunpack.c.l.b16 %v5202
    %v5392 = vunpack.c.h.b16 %v5202
    %v5393 = vunpack.c.l.b16 %v5203
    %v5394 = vunpack.c.h.b16 %v5203
    %v5395 = vunpack.c.l.b16 %v5204
    %v5396 = vunpack.c.h.b16 %v5204
    %v5397 = vunpack.c.l.b16 %v5205
    %v5398 = vunpack.c.h.b16 %v5205
    %v5399 = vunpack.c.l.b16 %v5206
    %v5400 = vunpack.c.h.b16 %v5206
    %v5401 = vunpack.c.l.b16 %v5207
    %v5402 = vunpack.c.h.b16 %v5207
    %v5403 = vunpack.c.l.b16 %v5208
    %v5404 = vunpack.c.h.b16 %v5208
    %v5405 = vunpack.c.l.b16 %v5209
    %v5406 = vunpack.c.h.b16 %v5209
    %v5407 = vunpack.c.l.b16 %v5210
    %v5408 = vunpack.c.h.b16 %v5210
    %v5409 = vunpack.c.l.b16 %v5211
    %v5410 = vunpack.c.h.b16 %v5211
    %v5411 = vunpack.c.l.b16 %v5212
    %v5412 = vunpack.c.h.b16 %v5212
    %v5413 = vunpack.c.l.b16 %v5213
    %v5414 = vunpack.c.h.b16 %v5213
    %v5415 = vunpack.c.l.b16 %v5214
    %v5416 = vunpack.c.h.b16 %v5214
    %v5417 = vunpack.c.l.b16 %v5215
    %v5418 = vunpack.c.h.b16 %v5215
    %v5419 = vunpack.c.l.b16 %v5216
    %v5420 = vunpack.c.h.b16 %v5216
    %v5421 = vpack.c.b16 %v5295, %v5293
    %v5422 = vpack.c.b16 %v5296, %v5294
    %v5423 = vpack.c.b16 %v5299, %v5297
    %v5424 = vpack.c.b16 %v5300, %v5298
    %v5425 = vpack.c.b16 %v5303, %v5301
    %v5426 = vpack.c.b16 %v5304, %v5302
    %v5427 = vpack.c.b16 %v5307, %v5305
    %v5428 = vpack.c.b16 %v5308, %v5306
    %v5429 = vpack.c.b16 %v5311, %v5309
    %v5430 = vpack.c.b16 %v5312, %v5310
    %v5431 = vpack.c.b16 %v5315, %v5313
    %v5432 = vpack.c.b16 %v5316, %v5314
    %v5433 = vpack.c.b16 %v5319, %v5317
    %v5434 = vpack.c.b16 %v5320, %v5318
    %v5435 = vpack.c.b16 %v5323, %v5321
    %v5436 = vpack.c.b16 %v5324, %v5322
    %v5437 = vpack.c.b16 %v5327, %v5325
    %v5438 = vpack.c.b16 %v5328, %v5326
    %v5439 = vpack.c.b16 %v5331, %v5329
    %v5440 = vpack.c.b16 %v5332, %v5330
    %v5441 = vpack.c.b16 %v5335, %v5333
    %v5442 = vpack.c.b16 %v5336, %v5334
    %v5443 = vpack.c.b16 %v5339, %v5337
    %v5444 = vpack.c.b16 %v5340, %v5338
    %v5445 = vpack.c.b16 %v5343, %v5341
    %v5446 = vpack.c.b16 %v5344, %v5342
    %v5447 = vpack.c.b16 %v5347, %v5345
    %v5448 = vpack.c.b16 %v5348, %v5346
    %v5449 = vpack.c.b16 %v5351, %v5349
    %v5450 = vpack.c.b16 %v5352, %v5350
    %v5451 = vpack.c.b16 %v5355, %v5353
    %v5452 = vpack.c.b16 %v5356, %v5354
    %v5453 = vpack.c.b16 %v5359, %v5357
    %v5454 = vpack.c.b16 %v5360, %v5358
    %v5455 = vpack.c.b16 %v5363, %v5361
    %v5456 = vpack.c.b16 %v5364, %v5362
    %v5457 = vpack.c.b16 %v5367, %v5365
    %v5458 = vpack.c.b16 %v5368, %v5366
    %v5459 = vpack.c.b16 %v5371, %v5369
    %v5460 = vpack.c.b16 %v5372, %v5370
    %v5461 = vpack.c.b16 %v5375, %v5373
    %v5462 = vpack.c.b16 %v5376, %v5374
    %v5463 = vpack.c.b16 %v5379, %v5377
    %v5464 = vpack.c.b16 %v5380, %v5378
    %v5465 = vpack.c.b16 %v5383, %v5381
    %v5466 = vpack.c.b16 %v5384, %v5382
    %v5467 = vpack.c.b16 %v5387, %v5385
    %v5468 = vpack.c.b16 %v5388, %v5386
    %v5469 = vpack.c.b16 %v5391, %v5389
    %v5470 = vpack.c.b16 %v5392, %v5390
    %v5471 = vpack.c.b16 %v5395, %v5393
    %v5472 = vpack.c.b16 %v5396, %v5394
    %v5473 = vpack.c.b16 %v5399, %v5397
    %v5474 = vpack.c.b16 %v5400, %v5398
    %v5475 = vpack.c.b16 %v5403, %v5401
    %v5476 = vpack.c.b16 %v5404, %v5402
    %v5477 = vpack.c.b16 %v5407, %v5405
    %v5478 = vpack.c.b16 %v5408, %v5406
    %v5479 = vpack.c.b16 %v5411, %v5409
    %v5480 = vpack.c.b16 %v5412, %v5410
    %v5481 = vpack.c.b16 %v5415, %v5413
    %v5482 = vpack.c.b16 %v5416, %v5414
    %v5483 = vpack.c.b16 %v5419, %v5417
    %v5484 = vpack.c.b16 %v5420, %v5418
    %5549 = vmatprep.subr.bf16.mxu0 %v5436
    %5550 = vmatpush1.bf16.msra.mxu0 %v5435
    %5551 = vmatprep.subr.bf16.mxu0 %v5434
    %5552 = vmatpush1.bf16.msra.mxu0 %v5433
    %5553 = vmatprep.subr.bf16.mxu0 %v5432
    %5554 = vmatpush1.bf16.msra.mxu0 %v5431
    %5555 = vmatprep.subr.bf16.mxu0 %v5430
    %5556 = vmatpush1.bf16.msra.mxu0 %v5429
    %5557 = vmatprep.subr.bf16.mxu0 %v5428
    %5558 = vmatpush1.bf16.msra.mxu0 %v5427
    %5559 = vmatprep.subr.bf16.mxu0 %v5426
    %5560 = vmatpush1.bf16.msra.mxu0 %v5425
    %5561 = vmatprep.subr.bf16.mxu0 %v5424
    %5562 = vmatpush1.bf16.msra.mxu0 %v5423
    %5563 = vmatprep.subr.bf16.mxu0 %v5422
    %5564 = vmatpush1.bf16.msra.mxu0 %v5421
    %5565 = vmatprep.subr.bf16.mxu0 %v5452
    %5566 = vmatpush2.bf16.msra.mxu0 %v5451
    %5567 = vmatprep.subr.bf16.mxu0 %v5450
    %5568 = vmatpush2.bf16.msra.mxu0 %v5449
    %5569 = vmatprep.subr.bf16.mxu0 %v5448
    %5570 = vmatpush2.bf16.msra.mxu0 %v5447
    %5571 = vmatprep.subr.bf16.mxu0 %v5446
    %5572 = vmatpush2.bf16.msra.mxu0 %v5445
    %5573 = vmatprep.subr.bf16.mxu0 %v5444
    %5574 = vmatpush2.bf16.msra.mxu0 %v5443
    %5575 = vmatprep.subr.bf16.mxu0 %v5442
    %5576 = vmatpush2.bf16.msra.mxu0 %v5441
    %5577 = vmatprep.subr.bf16.mxu0 %v5440
    %5578 = vmatpush2.bf16.msra.mxu0 %v5439
    %5579 = vmatprep.subr.bf16.mxu0 %v5438
    %5580 = vmatpush2.bf16.msra.mxu0 %v5437
    %5581 = vmatprep.mubr.bf16.mxu0 %v5150
    %5582 = vmatmul.mubr.bf16.gmra.mxu0 %v5149
    %v5583 = vpop.f32.mrf.mxu0
    %v5584 = vadd.f32 %v5222, %v5583
    %v5585 = vpop.f32.mrf.mxu0
    %v5586 = vadd.f32 %v5226, %v5585
    %v5587 = vpop.f32.mrf.mxu0
    %v5588 = vpop.f32.mrf.mxu0
    %5589 = vdwg.mxu0
    %5590 = vmatprep.subr.bf16.mxu0 %v5468
    %5591 = vmatpush1.bf16.msra.mxu0 %v5467
    %5592 = vmatprep.subr.bf16.mxu0 %v5466
    %5593 = vmatpush1.bf16.msra.mxu0 %v5465
    %5594 = vmatprep.subr.bf16.mxu0 %v5464
    %5595 = vmatpush1.bf16.msra.mxu0 %v5463
    %5596 = vmatprep.subr.bf16.mxu0 %v5462
    %5597 = vmatpush1.bf16.msra.mxu0 %v5461
    %5598 = vmatprep.subr.bf16.mxu0 %v5460
    %5599 = vmatpush1.bf16.msra.mxu0 %v5459
    %5600 = vmatprep.subr.bf16.mxu0 %v5458
    %5601 = vmatpush1.bf16.msra.mxu0 %v5457
    %5602 = vmatprep.subr.bf16.mxu0 %v5456
    %5603 = vmatpush1.bf16.msra.mxu0 %v5455
    %5604 = vmatprep.subr.bf16.mxu0 %v5454
    %5605 = vmatpush1.bf16.msra.mxu0 %v5453
    %5606 = vmatprep.subr.bf16.mxu0 %v5484
    %5607 = vmatpush2.bf16.msra.mxu0 %v5483
    %5608 = vmatprep.subr.bf16.mxu0 %v5482
    %5609 = vmatpush2.bf16.msra.mxu0 %v5481
    %5610 = vmatprep.subr.bf16.mxu0 %v5480
    %5611 = vmatpush2.bf16.msra.mxu0 %v5479
    %5612 = vmatprep.subr.bf16.mxu0 %v5478
    %5613 = vmatpush2.bf16.msra.mxu0 %v5477
    %5614 = vmatprep.subr.bf16.mxu0 %v5476
    %5615 = vmatpush2.bf16.msra.mxu0 %v5475
    %5616 = vmatprep.subr.bf16.mxu0 %v5474
    %5617 = vmatpush2.bf16.msra.mxu0 %v5473
    %5618 = vmatprep.subr.bf16.mxu0 %v5472
    %5619 = vmatpush2.bf16.msra.mxu0 %v5471
    %5620 = vmatprep.subr.bf16.mxu0 %v5470
    %5621 = vmatpush2.bf16.msra.mxu0 %v5469
    %5622 = vmatprep.mubr.bf16.mxu0 %v5152
    %5623 = vmatmul.mubr.bf16.gmra.mxu0 %v5151
    %v5624 = vpop.f32.mrf.mxu0
    %v5625 = vadd.f32 %v5584, %v5624
    %v5626 = vpop.f32.mrf.mxu0
    %v5627 = vadd.f32 %v5586, %v5626
    %v5628 = vpop.f32.mrf.mxu0
    %v5629 = vpop.f32.mrf.mxu0
    %5630 = vdwg.mxu0
    %v5631 = vmax.f32 %v5625, 0.0
    %v5632 = vmax.f32 %v5627, 0.0
    %v5633 = vpack.c.bf16 %v5631, %v5631
    %v5634 = vpack.c.bf16 %v5632, %v5632
    %v5635 = vld [vmem:[%s11] sm:$0xf]
    %v5636 = vld [vmem:[%s11 + $0x4] sm:$0xf]
    %v5637 = vld [vmem:[%s11 + $0x8] sm:$0xf]
    %v5638 = vld [vmem:[%s11 + $0xc] sm:$0xf]
    %v5639 = vld [vmem:[%s11 + $0x10] sm:$0xf]
    %v5640 = vld [vmem:[%s11 + $0x14] sm:$0xf]
    %v5641 = vld [vmem:[%s11 + $0x18] sm:$0xf]
    %v5642 = vld [vmem:[%s11 + $0x1c] sm:$0xf]
    %v5643 = vld [vmem:[%s11 + $0x20] sm:$0xf]
    %v5644 = vld [vmem:[%s11 + $0x24] sm:$0xf]
    %v5645 = vld [vmem:[%s11 + $0x28] sm:$0xf]
    %v5646 = vld [vmem:[%s11 + $0x2c] sm:$0xf]
    %v5647 = vld [vmem:[%s11 + $0x30] sm:$0xf]
    %v5648 = vld [vmem:[%s11 + $0x34] sm:$0xf]
    %v5649 = vld [vmem:[%s11 + $0x38] sm:$0xf]
    %v5650 = vld [vmem:[%s11 + $0x3c] sm:$0xf]
    %v5651 = vld [vmem:[%s11 + $0x40] sm:$0xf]
    %v5652 = vld [vmem:[%s11 + $0x44] sm:$0xf]
    %v5653 = vld [vmem:[%s11 + $0x48] sm:$0xf]
    %v5654 = vld [vmem:[%s11 + $0x4c] sm:$0xf]
    %v5655 = vld [vmem:[%s11 + $0x50] sm:$0xf]
    %v5656 = vld [vmem:[%s11 + $0x54] sm:$0xf]
    %v5657 = vld [vmem:[%s11 + $0x58] sm:$0xf]
    %v5658 = vld [vmem:[%s11 + $0x5c] sm:$0xf]
    %v5659 = vld [vmem:[%s11 + $0x60] sm:$0xf]
    %v5660 = vld [vmem:[%s11 + $0x64] sm:$0xf]
    %v5661 = vld [vmem:[%s11 + $0x68] sm:$0xf]
    %v5662 = vld [vmem:[%s11 + $0x6c] sm:$0xf]
    %v5663 = vld [vmem:[%s11 + $0x70] sm:$0xf]
    %v5664 = vld [vmem:[%s11 + $0x74] sm:$0xf]
    %v5665 = vld [vmem:[%s11 + $0x78] sm:$0xf]
    %v5666 = vld [vmem:[%s11 + $0x7c] sm:$0xf]
    %v5667 = vld [vmem:[%s12] sm:$0x1]
    %v5669 = vlaneseq
    %v5670 = vshrl.u32 %v5669, 7
    %v5671 = vsub.s32 0, %v5670
    %v5672 = vrot.slane %v5667, %v5671
    %v5706 = vunpack.c.l.b16 %v5635
    %v5707 = vunpack.c.l.b16 %v5636
    %v5708 = vunpack.c.l.b16 %v5637
    %v5709 = vunpack.c.l.b16 %v5638
    %v5710 = vunpack.c.l.b16 %v5639
    %v5711 = vunpack.c.l.b16 %v5640
    %v5712 = vunpack.c.l.b16 %v5641
    %v5713 = vunpack.c.l.b16 %v5642
    %v5714 = vunpack.c.l.b16 %v5643
    %v5715 = vunpack.c.l.b16 %v5644
    %v5716 = vunpack.c.l.b16 %v5645
    %v5717 = vunpack.c.l.b16 %v5646
    %v5718 = vunpack.c.l.b16 %v5647
    %v5719 = vunpack.c.l.b16 %v5648
    %v5720 = vunpack.c.l.b16 %v5649
    %v5721 = vunpack.c.l.b16 %v5650
    %v5722 = vunpack.c.l.b16 %v5651
    %v5723 = vunpack.c.l.b16 %v5652
    %v5724 = vunpack.c.l.b16 %v5653
    %v5725 = vunpack.c.l.b16 %v5654
    %v5726 = vunpack.c.l.b16 %v5655
    %v5727 = vunpack.c.l.b16 %v5656
    %v5728 = vunpack.c.l.b16 %v5657
    %v5729 = vunpack.c.l.b16 %v5658
    %v5730 = vunpack.c.l.b16 %v5659
    %v5731 = vunpack.c.l.b16 %v5660
    %v5732 = vunpack.c.l.b16 %v5661
    %v5733 = vunpack.c.l.b16 %v5662
    %v5734 = vunpack.c.l.b16 %v5663
    %v5735 = vunpack.c.l.b16 %v5664
    %v5736 = vunpack.c.l.b16 %v5665
    %v5737 = vunpack.c.l.b16 %v5666
    %v5738 = vpack.c.b16 %v5707, %v5706
    %v5739 = vpack.c.b16 %v5709, %v5708
    %v5740 = vpack.c.b16 %v5711, %v5710
    %v5741 = vpack.c.b16 %v5713, %v5712
    %v5742 = vpack.c.b16 %v5715, %v5714
    %v5743 = vpack.c.b16 %v5717, %v5716
    %v5744 = vpack.c.b16 %v5719, %v5718
    %v5745 = vpack.c.b16 %v5721, %v5720
    %v5746 = vpack.c.b16 %v5723, %v5722
    %v5747 = vpack.c.b16 %v5725, %v5724
    %v5748 = vpack.c.b16 %v5727, %v5726
    %v5749 = vpack.c.b16 %v5729, %v5728
    %v5750 = vpack.c.b16 %v5731, %v5730
    %v5751 = vpack.c.b16 %v5733, %v5732
    %v5752 = vpack.c.b16 %v5735, %v5734
    %v5753 = vpack.c.b16 %v5737, %v5736
    %5770 = vmatprep.subr.bf16.mxu0 0
    %5771 = vmatpush1.bf16.msra.mxu0 %v5745
    %5772 = vmatprep.subr.bf16.mxu0 0
    %5773 = vmatpush1.bf16.msra.mxu0 %v5744
    %5774 = vmatprep.subr.bf16.mxu0 0
    %5775 = vmatpush1.bf16.msra.mxu0 %v5743
    %5776 = vmatprep.subr.bf16.mxu0 0
    %5777 = vmatpush1.bf16.msra.mxu0 %v5742
    %5778 = vmatprep.subr.bf16.mxu0 0
    %5779 = vmatpush1.bf16.msra.mxu0 %v5741
    %5780 = vmatprep.subr.bf16.mxu0 0
    %5781 = vmatpush1.bf16.msra.mxu0 %v5740
    %5782 = vmatprep.subr.bf16.mxu0 0
    %5783 = vmatpush1.bf16.msra.mxu0 %v5739
    %5784 = vmatprep.subr.bf16.mxu0 0
    %5785 = vmatpush1.bf16.msra.mxu0 %v5738
    %5786 = vmatprep.subr.bf16.mxu0 0
    %5787 = vmatpush2.bf16.msra.mxu0 %v5753
    %5788 = vmatprep.subr.bf16.mxu0 0
    %5789 = vmatpush2.bf16.msra.mxu0 %v5752
    %5790 = vmatprep.subr.bf16.mxu0 0
    %5791 = vmatpush2.bf16.msra.mxu0 %v5751
    %5792 = vmatprep.subr.bf16.mxu0 0
    %5793 = vmatpush2.bf16.msra.mxu0 %v5750
    %5794 = vmatprep.subr.bf16.mxu0 0
    %5795 = vmatpush2.bf16.msra.mxu0 %v5749
    %5796 = vmatprep.subr.bf16.mxu0 0
    %5797 = vmatpush2.bf16.msra.mxu0 %v5748
    %5798 = vmatprep.subr.bf16.mxu0 0
    %5799 = vmatpush2.bf16.msra.mxu0 %v5747
    %5800 = vmatprep.subr.bf16.mxu0 0
    %5801 = vmatpush2.bf16.msra.mxu0 %v5746
    %5802 = vmatprep.mubr.bf16.mxu0 %v5634
    %5803 = vmatmul.mubr.bf16.gmra.mxu0 %v5633
    %v5804 = vpop.f32.mrf.mxu0
    %v5805 = vadd.f32 %v5672, %v5804
    %v5806 = vpop.f32.mrf.mxu0
    %v5807 = vpop.f32.mrf.mxu0
    %v5808 = vpop.f32.mrf.mxu0
    %5809 = vdwg.mxu0
    %v5810 = vlaneseq
    %v5811 = vand.u32 %v5810, 127
    %vm5812 = vcmp.lt.s32.totalorder %v5811, 40
    %v5813 = vsel %vm5812, %v5805, -1e+30
    %vm5814 = vcmask 1041408
    %v5815 = vsel %vm5814, %v5813, -inf
    %5816 = vmax.xlane.f32.xlu0 %v5815
    %v5817 = vpop.xlane.xlu0 %5816
    %v5818 = vsub.f32 %v5813, %v5817
    %v5819 = vmul.f32 %v5818, 1.442695
    %v5820 = vpow.pop %v5819
    %v5821 = vsel %vm5814, %v5820, 0.0
    %5822 = vadd.xlane.f32.xlu0 %v5821
    %v5823 = vpop.xlane.xlu0 %5822
    %v5824 = vlog2.pop %v5823
    %v5825 = vmul.f32 %v5824, 0.6931472
    %v5826 = vadd.f32 %v5825, %v5817
    %v5827 = vsub.f32 %v5813, %v5826
    %5828 = vst [vmem:[#allocation2] sm:$0x3] %v5827
    // Predicated region
    $region54: #{pointnet2_forward.5} parent=1 // pred_check
      _
    $region55: #{pointnet2_forward.5} parent=1 // pred_check_branch
      %5830 = sbr.rel (0) target = $region57
    $region56: #{pointnet2_forward.5} parent=1 // pred_region
      %s5832 = ssub.s32 32, 32
      %5833 = vsyncadd [#allocation3], %s5832
      %s5835 = sshll.u32 [#allocation2], 4
      %s5836 = int_to_ptr.vmem [resolvable:$true] %s5835
      %5838 = dma.vmem_to_hbm [thread:$0]  %s5836, 32, %s13, [#allocation3]
    $region57: #{pointnet2_forward.5} parent=1 // pred_fallthru
      _
    // Predicated region
    $region58: #{pointnet2_forward.5} parent=1 // pred_check
      _
    $region59: #{pointnet2_forward.5} parent=1 // pred_check_branch
      %5840 = sbr.rel (0) target = $region61
    $region60: #{pointnet2_forward.5} parent=1 // pred_region
      %5841 = dma.done [#allocation3], 32
    $region61: #{pointnet2_forward.5} parent=1 // pred_fallthru
      _
    %5842 = vsyncpa [#allocation3], 1

</llo_original>
